<compile_context>
chip_gen: v7x
topology: tpu7x:2x2x1
jax: 0.10.0
libtpu: 0.0.40
codegen_flags: <defaults>
</compile_context>

<pallas_src>
import functools

import jax
import jax.numpy as jnp
from jax import lax
from jax.experimental import pallas as pl
from jax.experimental.pallas import tpu as pltpu


def _aspp_kernel(x_ref, w_ref, b_ref, o_ref, p_ref, acc_ref,
                 *, H, W, Hp, Wp, Cout, taps):
    """One batch element per grid step.

    x_ref   : (1, Hp*Wp, Cin)  bf16  zero-padded NHWC input, spatial flattened
    w_ref   : (Cin, 18*Cout)   bf16  tap (conv j, ky, kx) at columns
                                     [(j*9+ky*3+kx)*Cout : +Cout]
    b_ref   : (1, Cout)        f32   pre-summed bias  b0 + b1
    o_ref   : (1, H, W, Cout)  f32   output block
    p_ref   : (Hp, Wp, 18*Cout) f32  scratch: per-position per-tap partials
    acc_ref : (H, W, Cout)      f32  scratch: tap accumulator
    """
    n_taps = len(taps)

    # Single wide MXU contraction over channels, f32 accumulation.
    #   (Hp*Wp, Cin) x (Cin, 18*Cout) -> (Hp*Wp, 18*Cout)
    p2d = jnp.dot(x_ref[0], w_ref[...], preferred_element_type=jnp.float32)
    p_ref[...] = p2d.reshape(Hp, Wp, n_taps * Cout)

    # Initialise the accumulator from the pre-summed bias plus the first
    # tap's shifted slab (no separate zero/broadcast pass).
    bias = b_ref[...].reshape(1, 1, Cout)
    oy0, ox0 = taps[0]
    acc_ref[...] = p_ref[oy0:oy0 + H, ox0:ox0 + W, 0:Cout] + bias

    # Shift-and-add the remaining Cout-wide slabs on the VPU.
    for t in range(1, n_taps):
        oy, ox = taps[t]
        acc_ref[...] += p_ref[oy:oy + H, ox:ox + W, t * Cout:(t + 1) * Cout]

    o_ref[0] = acc_ref[...].astype(o_ref.dtype)


def aspp_forward(x_nchw, params, dilation_series):
    """Pallas implementation of ASPP.forward (conv0(x) + conv1(x) + biases)."""
    N, Cin, H, W = x_nchw.shape
    d0, d1 = int(dilation_series[0]), int(dilation_series[1])
    pmax = max(d0, d1)
    Hp, Wp = H + 2 * pmax, W + 2 * pmax

    # Glue: NCHW -> NHWC, zero-pad by the max dilation, flatten padded
    # spatial, cast to bf16 (single-pass MXU; accumulation stays f32 inside).
    x = jnp.transpose(x_nchw, (0, 2, 3, 1))
    xp = jnp.pad(x, ((0, 0), (pmax, pmax), (pmax, pmax), (0, 0)))
    xp = xp.reshape(N, Hp * Wp, Cin).astype(jnp.bfloat16)

    (w0, b0), (w1, b1) = params[0], params[1]     # w: (Cout, Cin, 3, 3)
    Cout = w0.shape[0]
    TC = 18 * Cout

    def prep_w(w):
        # (Cout, Cin, ky, kx) -> (Cin, ky, kx, Cout) -> (Cin, 9*Cout)
        # column index inside the conv:  (ky*3 + kx)*Cout + co
        return jnp.transpose(w, (1, 2, 3, 0)).reshape(Cin, 9 * Cout)

    wk = jnp.concatenate([prep_w(w0), prep_w(w1)], axis=1)    # (Cin, 18*Cout)
    wk = wk.astype(jnp.bfloat16)
    bk = (b0 + b1).reshape(1, Cout).astype(jnp.float32)       # pre-summed bias

    # Static (oy, ox) shift per tap, tap order = j*9 + ky*3 + kx.
    taps = []
    for d in (d0, d1):
        for ky in range(3):
            for kx in range(3):
                taps.append((pmax + (ky - 1) * d, pmax + (kx - 1) * d))
    taps = tuple(taps)

    kernel = functools.partial(
        _aspp_kernel, H=H, W=W, Hp=Hp, Wp=Wp, Cout=Cout, taps=taps)

    out_nhwc = pl.pallas_call(
        kernel,
        # Output pinned to f32 (do not silently follow a bf16 input dtype).
        out_shape=jax.ShapeDtypeStruct((N, H, W, Cout), jnp.float32),
        grid_spec=pltpu.PrefetchScalarGridSpec(
            num_scalar_prefetch=0,
            grid=(N,),
            in_specs=[
                pl.BlockSpec((1, Hp * Wp, Cin), lambda n: (n, 0, 0)),
                # Grid-invariant index maps -> weights/bias stay resident.
                pl.BlockSpec((Cin, TC), lambda n: (0, 0)),
                pl.BlockSpec((1, Cout), lambda n: (0, 0)),
            ],
            out_specs=pl.BlockSpec((1, H, W, Cout), lambda n: (n, 0, 0, 0)),
            scratch_shapes=[
                pltpu.VMEM((Hp, Wp, TC), jnp.float32),   # per-tap partials
                pltpu.VMEM((H, W, Cout), jnp.float32),   # tap accumulator
            ],
        ),
        compiler_params=pltpu.CompilerParams(
            dimension_semantics=("parallel",),
            vmem_limit_bytes=32 * 1024 * 1024),
    )(xp, wk, bk)

    # (N, H, W, Cout) -> PyTorch's NCHW convention, back to the input dtype.
    return jnp.transpose(out_nhwc, (0, 3, 1, 2)).astype(x_nchw.dtype)


def init_aspp_params(key, inplanes, dilation_series, num_classes):
    """Deterministic synthetic params matching ASPP.__init__ shapes.

    One conv per dilation entry: weight (num_classes, inplanes, 3, 3)
    ~ Normal(0, 0.01) (as in the module), bias ~ U(-1/sqrt(fan_in), +).
    """
    params = []
    fan_in = inplanes * 3 * 3
    bound = 1.0 / jnp.sqrt(jnp.float32(fan_in))
    for _ in dilation_series:
        key, kw, kb = jax.random.split(key, 3)
        w = 0.01 * jax.random.normal(
            kw, (num_classes, inplanes, 3, 3), dtype=jnp.float32)
        b = jax.random.uniform(
            kb, (num_classes,), dtype=jnp.float32, minval=-bound, maxval=bound)
        params.append((w, b))
    return params


def _ref_conv(x, w, b, d):
    out = lax.conv_general_dilated(
        x, w, window_strides=(1, 1),
        padding=((d, d), (d, d)),
        rhs_dilation=(d, d),
        dimension_numbers=("NCHW", "OIHW", "NCHW"),
        precision=lax.Precision.HIGHEST)
    return out + b.reshape(1, -1, 1, 1)


if __name__ == "__main__":
    # Small shapes consistent with the module: x is NCHW.
    N, Cin, H, W = 2, 4, 16, 16
    num_classes = 8
    dilation_series = [1, 2, 3, 4]   # padding_series == dilation_series
    # (only the first two convs participate in forward, per the module's code)

    key = jax.random.PRNGKey(0)
    key, kx = jax.random.split(key)
    x = jax.random.normal(kx, (N, Cin, H, W), dtype=jnp.float32)
    params = init_aspp_params(key, Cin, dilation_series, num_classes)

    # Round test data to bf16-representable f32 so the kernel's bf16 operand
    # cast is lossless and the comparison against the f32 HIGHEST-precision
    # reference stays tight.
    x = x.astype(jnp.bfloat16).astype(jnp.float32)
    params = [(w.astype(jnp.bfloat16).astype(jnp.float32), b)
              for (w, b) in params]

    out = aspp_forward(x, params, dilation_series)
    out = jax.block_until_ready(out)

    # Pure-JAX reference of the exact forward semantics.
    (w0, b0), (w1, b1) = params[0], params[1]
    ref = _ref_conv(x, w0, b0, dilation_series[0]) + \
          _ref_conv(x, w1, b1, dilation_series[1])

    assert out.shape == (N, num_classes, H, W)
    if not jnp.allclose(out, ref, atol=1e-4, rtol=1e-4):
        raise AssertionError("Pallas ASPP output mismatch vs JAX reference")

    print("KERNEL_OK")
</pallas_src>

<mosaic_0001>
module attributes {stable_mosaic.version = 11 : i64} {
  func.func @_aspp_kernel(%arg0: i32, %arg1: memref<1x400x4xbf16, #tpu.memory_space<vmem>>, %arg2: memref<4x144xbf16, #tpu.memory_space<vmem>>, %arg3: memref<1x8xf32, #tpu.memory_space<vmem>>, %arg4: memref<1x16x16x8xf32, #tpu.memory_space<vmem>>, %arg5: memref<20x20x144xf32, #tpu.memory_space<vmem>>, %arg6: memref<16x16x8xf32, #tpu.memory_space<vmem>>) attributes {dimension_semantics = [#tpu.dimension_semantics<parallel>], iteration_bounds = array<i64: 2>, scalar_prefetch = 0 : i64, scratch_operands = 2 : i64, tpu.core_type = #tpu.core_type<tc>, window_params = [{transform_indices = @transform_0, window_bounds = array<i64: 1, 400, 4>}, {pipeline_mode = #tpu.pipeline_mode<synchronous>, transform_indices = @transform_1, window_bounds = array<i64: 4, 144>}, {pipeline_mode = #tpu.pipeline_mode<synchronous>, transform_indices = @transform_2, window_bounds = array<i64: 1, 8>}, {transform_indices = @transform_3, window_bounds = array<i64: 1, 16, 16, 8>}]} {
    %c0 = arith.constant 0 : index
    %c0_0 = arith.constant 0 : index
    %c0_1 = arith.constant 0 : index
    %0 = vector.load %arg1[%c0, %c0_0, %c0_1] : memref<1x400x4xbf16, #tpu.memory_space<vmem>>, vector<1x400x4xbf16>
    %1 = vector.shape_cast %0 : vector<1x400x4xbf16> to vector<400x4xbf16>
    %c0_2 = arith.constant 0 : index
    %c0_3 = arith.constant 0 : index
    %2 = vector.load %arg2[%c0_2, %c0_3] : memref<4x144xbf16, #tpu.memory_space<vmem>>, vector<4x144xbf16>
    %cst = arith.constant dense<0.000000e+00> : vector<400x144xf32>
    %3 = tpu.matmul %1, %2, %cst {dimension_numbers = #tpu.dot_dimension_numbers<[1], [0], [0], [1], [0, 0, 1, 1], [], []>} : vector<400x4xbf16>, vector<4x144xbf16>, vector<400x144xf32> -> vector<400x144xf32>
    %4 = vector.shape_cast %3 : vector<400x144xf32> to vector<20x20x144xf32>
    %c0_4 = arith.constant 0 : index
    %c0_5 = arith.constant 0 : index
    %c0_6 = arith.constant 0 : index
    %5 = vector.load %arg5[%c0_4, %c0_5, %c0_6] : memref<20x20x144xf32, #tpu.memory_space<vmem>>, vector<20x20x144xf32>
    tpu.vector_store %arg5[%c0_4, %c0_5, %c0_6], %4 {strides = array<i32>} : memref<20x20x144xf32, #tpu.memory_space<vmem>>, vector<20x20x144xf32>,
    %c0_7 = arith.constant 0 : index
    %c0_8 = arith.constant 0 : index
    %6 = vector.load %arg3[%c0_7, %c0_8] : memref<1x8xf32, #tpu.memory_space<vmem>>, vector<1x8xf32>
    %7 = vector.shape_cast %6 : vector<1x8xf32> to vector<1x1x8xf32>
    %c1 = arith.constant 1 : index
    %c1_9 = arith.constant 1 : index
    %c0_10 = arith.constant 0 : index
    %8 = vector.load %arg5[%c1, %c1_9, %c0_10] : memref<20x20x144xf32, #tpu.memory_space<vmem>>, vector<16x16x8xf32>
    %9 = vector.broadcast %7 : vector<1x1x8xf32> to vector<16x16x8xf32>
    %10 = arith.addf %8, %9 : vector<16x16x8xf32>
    %c0_11 = arith.constant 0 : index
    %c0_12 = arith.constant 0 : index
    %c0_13 = arith.constant 0 : index
    %11 = vector.load %arg6[%c0_11, %c0_12, %c0_13] : memref<16x16x8xf32, #tpu.memory_space<vmem>>, vector<16x16x8xf32>
    tpu.vector_store %arg6[%c0_11, %c0_12, %c0_13], %10 {strides = array<i32>} : memref<16x16x8xf32, #tpu.memory_space<vmem>>, vector<16x16x8xf32>,
    %c0_14 = arith.constant 0 : index
    %c0_15 = arith.constant 0 : index
    %c0_16 = arith.constant 0 : index
    %12 = vector.load %arg6[%c0_14, %c0_15, %c0_16] : memref<16x16x8xf32, #tpu.memory_space<vmem>>, vector<16x16x8xf32>
    %c1_17 = arith.constant 1 : index
    %c2 = arith.constant 2 : index
    %c8 = arith.constant 8 : index
    %13 = vector.load %arg5[%c1_17, %c2, %c8] : memref<20x20x144xf32, #tpu.memory_space<vmem>>, vector<16x16x8xf32>
    %14 = arith.addf %12, %13 : vector<16x16x8xf32>
    %c0_18 = arith.constant 0 : index
    %c0_19 = arith.constant 0 : index
    %c0_20 = arith.constant 0 : index
    %15 = vector.load %arg6[%c0_18, %c0_19, %c0_20] : memref<16x16x8xf32, #tpu.memory_space<vmem>>, vector<16x16x8xf32>
    tpu.vector_store %arg6[%c0_18, %c0_19, %c0_20], %14 {strides = array<i32>} : memref<16x16x8xf32, #tpu.memory_space<vmem>>, vector<16x16x8xf32>,
    %c0_21 = arith.constant 0 : index
    %c0_22 = arith.constant 0 : index
    %c0_23 = arith.constant 0 : index
    %16 = vector.load %arg6[%c0_21, %c0_22, %c0_23] : memref<16x16x8xf32, #tpu.memory_space<vmem>>, vector<16x16x8xf32>
    %c1_24 = arith.constant 1 : index
    %c3 = arith.constant 3 : index
    %c16 = arith.constant 16 : index
    %17 = vector.load %arg5[%c1_24, %c3, %c16] : memref<20x20x144xf32, #tpu.memory_space<vmem>>, vector<16x16x8xf32>
    %18 = arith.addf %16, %17 : vector<16x16x8xf32>
    %c0_25 = arith.constant 0 : index
    %c0_26 = arith.constant 0 : index
    %c0_27 = arith.constant 0 : index
    %19 = vector.load %arg6[%c0_25, %c0_26, %c0_27] : memref<16x16x8xf32, #tpu.memory_space<vmem>>, vector<16x16x8xf32>
    tpu.vector_store %arg6[%c0_25, %c0_26, %c0_27], %18 {strides = array<i32>} : memref<16x16x8xf32, #tpu.memory_space<vmem>>, vector<16x16x8xf32>,
    %c0_28 = arith.constant 0 : index
    %c0_29 = arith.constant 0 : index
    %c0_30 = arith.constant 0 : index
    %20 = vector.load %arg6[%c0_28, %c0_29, %c0_30] : memref<16x16x8xf32, #tpu.memory_space<vmem>>, vector<16x16x8xf32>
    %c2_31 = arith.constant 2 : index
    %c1_32 = arith.constant 1 : index
    %c24 = arith.constant 24 : index
    %21 = vector.load %arg5[%c2_31, %c1_32, %c24] : memref<20x20x144xf32, #tpu.memory_space<vmem>>, vector<16x16x8xf32>
    %22 = arith.addf %20, %21 : vector<16x16x8xf32>
    %c0_33 = arith.constant 0 : index
    %c0_34 = arith.constant 0 : index
    %c0_35 = arith.constant 0 : index
    %23 = vector.load %arg6[%c0_33, %c0_34, %c0_35] : memref<16x16x8xf32, #tpu.memory_space<vmem>>, vector<16x16x8xf32>
    tpu.vector_store %arg6[%c0_33, %c0_34, %c0_35], %22 {strides = array<i32>} : memref<16x16x8xf32, #tpu.memory_space<vmem>>, vector<16x16x8xf32>,
    %c0_36 = arith.constant 0 : index
    %c0_37 = arith.constant 0 : index
    %c0_38 = arith.constant 0 : index
    %24 = vector.load %arg6[%c0_36, %c0_37, %c0_38] : memref<16x16x8xf32, #tpu.memory_space<vmem>>, vector<16x16x8xf32>
    %c2_39 = arith.constant 2 : index
    %c2_40 = arith.constant 2 : index
    %c32 = arith.constant 32 : index
    %25 = vector.load %arg5[%c2_39, %c2_40, %c32] : memref<20x20x144xf32, #tpu.memory_space<vmem>>, vector<16x16x8xf32>
    %26 = arith.addf %24, %25 : vector<16x16x8xf32>
    %c0_41 = arith.constant 0 : index
    %c0_42 = arith.constant 0 : index
    %c0_43 = arith.constant 0 : index
    %27 = vector.load %arg6[%c0_41, %c0_42, %c0_43] : memref<16x16x8xf32, #tpu.memory_space<vmem>>, vector<16x16x8xf32>
    tpu.vector_store %arg6[%c0_41, %c0_42, %c0_43], %26 {strides = array<i32>} : memref<16x16x8xf32, #tpu.memory_space<vmem>>, vector<16x16x8xf32>,
    %c0_44 = arith.constant 0 : index
    %c0_45 = arith.constant 0 : index
    %c0_46 = arith.constant 0 : index
    %28 = vector.load %arg6[%c0_44, %c0_45, %c0_46] : memref<16x16x8xf32, #tpu.memory_space<vmem>>, vector<16x16x8xf32>
    %c2_47 = arith.constant 2 : index
    %c3_48 = arith.constant 3 : index
    %c40 = arith.constant 40 : index
    %29 = vector.load %arg5[%c2_47, %c3_48, %c40] : memref<20x20x144xf32, #tpu.memory_space<vmem>>, vector<16x16x8xf32>
    %30 = arith.addf %28, %29 : vector<16x16x8xf32>
    %c0_49 = arith.constant 0 : index
    %c0_50 = arith.constant 0 : index
    %c0_51 = arith.constant 0 : index
    %31 = vector.load %arg6[%c0_49, %c0_50, %c0_51] : memref<16x16x8xf32, #tpu.memory_space<vmem>>, vector<16x16x8xf32>
    tpu.vector_store %arg6[%c0_49, %c0_50, %c0_51], %30 {strides = array<i32>} : memref<16x16x8xf32, #tpu.memory_space<vmem>>, vector<16x16x8xf32>,
    %c0_52 = arith.constant 0 : index
    %c0_53 = arith.constant 0 : index
    %c0_54 = arith.constant 0 : index
    %32 = vector.load %arg6[%c0_52, %c0_53, %c0_54] : memref<16x16x8xf32, #tpu.memory_space<vmem>>, vector<16x16x8xf32>
    %c3_55 = arith.constant 3 : index
    %c1_56 = arith.constant 1 : index
    %c48 = arith.constant 48 : index
    %33 = vector.load %arg5[%c3_55, %c1_56, %c48] : memref<20x20x144xf32, #tpu.memory_space<vmem>>, vector<16x16x8xf32>
    %34 = arith.addf %32, %33 : vector<16x16x8xf32>
    %c0_57 = arith.constant 0 : index
    %c0_58 = arith.constant 0 : index
    %c0_59 = arith.constant 0 : index
    %35 = vector.load %arg6[%c0_57, %c0_58, %c0_59] : memref<16x16x8xf32, #tpu.memory_space<vmem>>, vector<16x16x8xf32>
    tpu.vector_store %arg6[%c0_57, %c0_58, %c0_59], %34 {strides = array<i32>} : memref<16x16x8xf32, #tpu.memory_space<vmem>>, vector<16x16x8xf32>,
    %c0_60 = arith.constant 0 : index
    %c0_61 = arith.constant 0 : index
    %c0_62 = arith.constant 0 : index
    %36 = vector.load %arg6[%c0_60, %c0_61, %c0_62] : memref<16x16x8xf32, #tpu.memory_space<vmem>>, vector<16x16x8xf32>
    %c3_63 = arith.constant 3 : index
    %c2_64 = arith.constant 2 : index
    %c56 = arith.constant 56 : index
    %37 = vector.load %arg5[%c3_63, %c2_64, %c56] : memref<20x20x144xf32, #tpu.memory_space<vmem>>, vector<16x16x8xf32>
    %38 = arith.addf %36, %37 : vector<16x16x8xf32>
    %c0_65 = arith.constant 0 : index
    %c0_66 = arith.constant 0 : index
    %c0_67 = arith.constant 0 : index
    %39 = vector.load %arg6[%c0_65, %c0_66, %c0_67] : memref<16x16x8xf32, #tpu.memory_space<vmem>>, vector<16x16x8xf32>
    tpu.vector_store %arg6[%c0_65, %c0_66, %c0_67], %38 {strides = array<i32>} : memref<16x16x8xf32, #tpu.memory_space<vmem>>, vector<16x16x8xf32>,
    %c0_68 = arith.constant 0 : index
    %c0_69 = arith.constant 0 : index
    %c0_70 = arith.constant 0 : index
    %40 = vector.load %arg6[%c0_68, %c0_69, %c0_70] : memref<16x16x8xf32, #tpu.memory_space<vmem>>, vector<16x16x8xf32>
    %c3_71 = arith.constant 3 : index
    %c3_72 = arith.constant 3 : index
    %c64 = arith.constant 64 : index
    %41 = vector.load %arg5[%c3_71, %c3_72, %c64] : memref<20x20x144xf32, #tpu.memory_space<vmem>>, vector<16x16x8xf32>
    %42 = arith.addf %40, %41 : vector<16x16x8xf32>
    %c0_73 = arith.constant 0 : index
    %c0_74 = arith.constant 0 : index
    %c0_75 = arith.constant 0 : index
    %43 = vector.load %arg6[%c0_73, %c0_74, %c0_75] : memref<16x16x8xf32, #tpu.memory_space<vmem>>, vector<16x16x8xf32>
    tpu.vector_store %arg6[%c0_73, %c0_74, %c0_75], %42 {strides = array<i32>} : memref<16x16x8xf32, #tpu.memory_space<vmem>>, vector<16x16x8xf32>,
    %c0_76 = arith.constant 0 : index
    %c0_77 = arith.constant 0 : index
    %c0_78 = arith.constant 0 : index
    %44 = vector.load %arg6[%c0_76, %c0_77, %c0_78] : memref<16x16x8xf32, #tpu.memory_space<vmem>>, vector<16x16x8xf32>
    %c0_79 = arith.constant 0 : index
    %c0_80 = arith.constant 0 : index
    %c72 = arith.constant 72 : index
    %45 = vector.load %arg5[%c0_79, %c0_80, %c72] : memref<20x20x144xf32, #tpu.memory_space<vmem>>, vector<16x16x8xf32>
    %46 = arith.addf %44, %45 : vector<16x16x8xf32>
    %c0_81 = arith.constant 0 : index
    %c0_82 = arith.constant 0 : index
    %c0_83 = arith.constant 0 : index
    %47 = vector.load %arg6[%c0_81, %c0_82, %c0_83] : memref<16x16x8xf32, #tpu.memory_space<vmem>>, vector<16x16x8xf32>
    tpu.vector_store %arg6[%c0_81, %c0_82, %c0_83], %46 {strides = array<i32>} : memref<16x16x8xf32, #tpu.memory_space<vmem>>, vector<16x16x8xf32>,
    %c0_84 = arith.constant 0 : index
    %c0_85 = arith.constant 0 : index
    %c0_86 = arith.constant 0 : index
    %48 = vector.load %arg6[%c0_84, %c0_85, %c0_86] : memref<16x16x8xf32, #tpu.memory_space<vmem>>, vector<16x16x8xf32>
    %c0_87 = arith.constant 0 : index
    %c2_88 = arith.constant 2 : index
    %c80 = arith.constant 80 : index
    %49 = vector.load %arg5[%c0_87, %c2_88, %c80] : memref<20x20x144xf32, #tpu.memory_space<vmem>>, vector<16x16x8xf32>
    %50 = arith.addf %48, %49 : vector<16x16x8xf32>
    %c0_89 = arith.constant 0 : index
    %c0_90 = arith.constant 0 : index
    %c0_91 = arith.constant 0 : index
    %51 = vector.load %arg6[%c0_89, %c0_90, %c0_91] : memref<16x16x8xf32, #tpu.memory_space<vmem>>, vector<16x16x8xf32>
    tpu.vector_store %arg6[%c0_89, %c0_90, %c0_91], %50 {strides = array<i32>} : memref<16x16x8xf32, #tpu.memory_space<vmem>>, vector<16x16x8xf32>,
    %c0_92 = arith.constant 0 : index
    %c0_93 = arith.constant 0 : index
    %c0_94 = arith.constant 0 : index
    %52 = vector.load %arg6[%c0_92, %c0_93, %c0_94] : memref<16x16x8xf32, #tpu.memory_space<vmem>>, vector<16x16x8xf32>
    %c0_95 = arith.constant 0 : index
    %c4 = arith.constant 4 : index
    %c88 = arith.constant 88 : index
    %53 = vector.load %arg5[%c0_95, %c4, %c88] : memref<20x20x144xf32, #tpu.memory_space<vmem>>, vector<16x16x8xf32>
    %54 = arith.addf %52, %53 : vector<16x16x8xf32>
    %c0_96 = arith.constant 0 : index
    %c0_97 = arith.constant 0 : index
    %c0_98 = arith.constant 0 : index
    %55 = vector.load %arg6[%c0_96, %c0_97, %c0_98] : memref<16x16x8xf32, #tpu.memory_space<vmem>>, vector<16x16x8xf32>
    tpu.vector_store %arg6[%c0_96, %c0_97, %c0_98], %54 {strides = array<i32>} : memref<16x16x8xf32, #tpu.memory_space<vmem>>, vector<16x16x8xf32>,
    %c0_99 = arith.constant 0 : index
    %c0_100 = arith.constant 0 : index
    %c0_101 = arith.constant 0 : index
    %56 = vector.load %arg6[%c0_99, %c0_100, %c0_101] : memref<16x16x8xf32, #tpu.memory_space<vmem>>, vector<16x16x8xf32>
    %c2_102 = arith.constant 2 : index
    %c0_103 = arith.constant 0 : index
    %c96 = arith.constant 96 : index
    %57 = vector.load %arg5[%c2_102, %c0_103, %c96] : memref<20x20x144xf32, #tpu.memory_space<vmem>>, vector<16x16x8xf32>
    %58 = arith.addf %56, %57 : vector<16x16x8xf32>
    %c0_104 = arith.constant 0 : index
    %c0_105 = arith.constant 0 : index
    %c0_106 = arith.constant 0 : index
    %59 = vector.load %arg6[%c0_104, %c0_105, %c0_106] : memref<16x16x8xf32, #tpu.memory_space<vmem>>, vector<16x16x8xf32>
    tpu.vector_store %arg6[%c0_104, %c0_105, %c0_106], %58 {strides = array<i32>} : memref<16x16x8xf32, #tpu.memory_space<vmem>>, vector<16x16x8xf32>,
    %c0_107 = arith.constant 0 : index
    %c0_108 = arith.constant 0 : index
    %c0_109 = arith.constant 0 : index
    %60 = vector.load %arg6[%c0_107, %c0_108, %c0_109] : memref<16x16x8xf32, #tpu.memory_space<vmem>>, vector<16x16x8xf32>
    %c2_110 = arith.constant 2 : index
    %c2_111 = arith.constant 2 : index
    %c104 = arith.constant 104 : index
    %61 = vector.load %arg5[%c2_110, %c2_111, %c104] : memref<20x20x144xf32, #tpu.memory_space<vmem>>, vector<16x16x8xf32>
    %62 = arith.addf %60, %61 : vector<16x16x8xf32>
    %c0_112 = arith.constant 0 : index
    %c0_113 = arith.constant 0 : index
    %c0_114 = arith.constant 0 : index
    %63 = vector.load %arg6[%c0_112, %c0_113, %c0_114] : memref<16x16x8xf32, #tpu.memory_space<vmem>>, vector<16x16x8xf32>
    tpu.vector_store %arg6[%c0_112, %c0_113, %c0_114], %62 {strides = array<i32>} : memref<16x16x8xf32, #tpu.memory_space<vmem>>, vector<16x16x8xf32>,
    %c0_115 = arith.constant 0 : index
    %c0_116 = arith.constant 0 : index
    %c0_117 = arith.constant 0 : index
    %64 = vector.load %arg6[%c0_115, %c0_116, %c0_117] : memref<16x16x8xf32, #tpu.memory_space<vmem>>, vector<16x16x8xf32>
    %c2_118 = arith.constant 2 : index
    %c4_119 = arith.constant 4 : index
    %c112 = arith.constant 112 : index
    %65 = vector.load %arg5[%c2_118, %c4_119, %c112] : memref<20x20x144xf32, #tpu.memory_space<vmem>>, vector<16x16x8xf32>
    %66 = arith.addf %64, %65 : vector<16x16x8xf32>
    %c0_120 = arith.constant 0 : index
    %c0_121 = arith.constant 0 : index
    %c0_122 = arith.constant 0 : index
    %67 = vector.load %arg6[%c0_120, %c0_121, %c0_122] : memref<16x16x8xf32, #tpu.memory_space<vmem>>, vector<16x16x8xf32>
    tpu.vector_store %arg6[%c0_120, %c0_121, %c0_122], %66 {strides = array<i32>} : memref<16x16x8xf32, #tpu.memory_space<vmem>>, vector<16x16x8xf32>,
    %c0_123 = arith.constant 0 : index
    %c0_124 = arith.constant 0 : index
    %c0_125 = arith.constant 0 : index
    %68 = vector.load %arg6[%c0_123, %c0_124, %c0_125] : memref<16x16x8xf32, #tpu.memory_space<vmem>>, vector<16x16x8xf32>
    %c4_126 = arith.constant 4 : index
    %c0_127 = arith.constant 0 : index
    %c120 = arith.constant 120 : index
    %69 = vector.load %arg5[%c4_126, %c0_127, %c120] : memref<20x20x144xf32, #tpu.memory_space<vmem>>, vector<16x16x8xf32>
    %70 = arith.addf %68, %69 : vector<16x16x8xf32>
    %c0_128 = arith.constant 0 : index
    %c0_129 = arith.constant 0 : index
    %c0_130 = arith.constant 0 : index
    %71 = vector.load %arg6[%c0_128, %c0_129, %c0_130] : memref<16x16x8xf32, #tpu.memory_space<vmem>>, vector<16x16x8xf32>
    tpu.vector_store %arg6[%c0_128, %c0_129, %c0_130], %70 {strides = array<i32>} : memref<16x16x8xf32, #tpu.memory_space<vmem>>, vector<16x16x8xf32>,
    %c0_131 = arith.constant 0 : index
    %c0_132 = arith.constant 0 : index
    %c0_133 = arith.constant 0 : index
    %72 = vector.load %arg6[%c0_131, %c0_132, %c0_133] : memref<16x16x8xf32, #tpu.memory_space<vmem>>, vector<16x16x8xf32>
    %c4_134 = arith.constant 4 : index
    %c2_135 = arith.constant 2 : index
    %c128 = arith.constant 128 : index
    %73 = vector.load %arg5[%c4_134, %c2_135, %c128] : memref<20x20x144xf32, #tpu.memory_space<vmem>>, vector<16x16x8xf32>
    %74 = arith.addf %72, %73 : vector<16x16x8xf32>
    %c0_136 = arith.constant 0 : index
    %c0_137 = arith.constant 0 : index
    %c0_138 = arith.constant 0 : index
    %75 = vector.load %arg6[%c0_136, %c0_137, %c0_138] : memref<16x16x8xf32, #tpu.memory_space<vmem>>, vector<16x16x8xf32>
    tpu.vector_store %arg6[%c0_136, %c0_137, %c0_138], %74 {strides = array<i32>} : memref<16x16x8xf32, #tpu.memory_space<vmem>>, vector<16x16x8xf32>,
    %c0_139 = arith.constant 0 : index
    %c0_140 = arith.constant 0 : index
    %c0_141 = arith.constant 0 : index
    %76 = vector.load %arg6[%c0_139, %c0_140, %c0_141] : memref<16x16x8xf32, #tpu.memory_space<vmem>>, vector<16x16x8xf32>
    %c4_142 = arith.constant 4 : index
    %c4_143 = arith.constant 4 : index
    %c136 = arith.constant 136 : index
    %77 = vector.load %arg5[%c4_142, %c4_143, %c136] : memref<20x20x144xf32, #tpu.memory_space<vmem>>, vector<16x16x8xf32>
    %78 = arith.addf %76, %77 : vector<16x16x8xf32>
    %c0_144 = arith.constant 0 : index
    %c0_145 = arith.constant 0 : index
    %c0_146 = arith.constant 0 : index
    %79 = vector.load %arg6[%c0_144, %c0_145, %c0_146] : memref<16x16x8xf32, #tpu.memory_space<vmem>>, vector<16x16x8xf32>
    tpu.vector_store %arg6[%c0_144, %c0_145, %c0_146], %78 {strides = array<i32>} : memref<16x16x8xf32, #tpu.memory_space<vmem>>, vector<16x16x8xf32>,
    %c0_147 = arith.constant 0 : index
    %c0_148 = arith.constant 0 : index
    %c0_149 = arith.constant 0 : index
    %80 = vector.load %arg6[%c0_147, %c0_148, %c0_149] : memref<16x16x8xf32, #tpu.memory_space<vmem>>, vector<16x16x8xf32>
    %c0_150 = arith.constant 0 : index
    %c0_151 = arith.constant 0 : index
    %c0_152 = arith.constant 0 : index
    %c0_153 = arith.constant 0 : index
    %81 = vector.load %arg4[%c0_150, %c0_151, %c0_152, %c0_153] : memref<1x16x16x8xf32, #tpu.memory_space<vmem>>, vector<1x16x16x8xf32>
    %82 = vector.shape_cast %81 : vector<1x16x16x8xf32> to vector<16x16x8xf32>
    %83 = vector.shape_cast %80 : vector<16x16x8xf32> to vector<1x16x16x8xf32>
    tpu.vector_store %arg4[%c0_150, %c0_151, %c0_152, %c0_153], %83 {strides = array<i32>} : memref<1x16x16x8xf32, #tpu.memory_space<vmem>>, vector<1x16x16x8xf32>,
    return
  }
  func.func @transform_0(%arg0: i32) -> (i32, i32, i32) {
    %c0_i32 = arith.constant 0 : i32
    %c0_i32_0 = arith.constant 0 : i32
    %c0_i32_1 = arith.constant 0 : i32
    return %arg0, %c0_i32, %c0_i32_0 : i32, i32, i32
  }
  func.func @transform_1(%arg0: i32) -> (i32, i32) {
    %c0_i32 = arith.constant 0 : i32
    %c0_i32_0 = arith.constant 0 : i32
    %c0_i32_1 = arith.constant 0 : i32
    return %c0_i32, %c0_i32_0 : i32, i32
  }
  func.func @transform_2(%arg0: i32) -> (i32, i32) {
    %c0_i32 = arith.constant 0 : i32
    %c0_i32_0 = arith.constant 0 : i32
    %c0_i32_1 = arith.constant 0 : i32
    return %c0_i32, %c0_i32_0 : i32, i32
  }
  func.func @transform_3(%arg0: i32) -> (i32, i32, i32, i32) {
    %c0_i32 = arith.constant 0 : i32
    %c0_i32_0 = arith.constant 0 : i32
    %c0_i32_1 = arith.constant 0 : i32
    %c0_i32_2 = arith.constant 0 : i32
    return %arg0, %c0_i32, %c0_i32_0, %c0_i32_1 : i32, i32, i32, i32
  }
}

</mosaic_0001>

<llo_original>
// kernel: tpu_custom_call.1
$region0: #{tpu_custom_call.1}
  #allocation0 [shape = 'u32[]', space=smem, size = 0x4, offset = 0x4, fixed_abs, tag = 'smem constant byte address 0x4 - core index']
  #allocation1 [shape = 'u32[144,128]{1,0:T(1,128)}', space=vmem, size = 0x12000, scoped, tag = 'internal scratch']
  #allocation2 [shape = 'f32[20,20,144]{2,1,0:T(8,128)}', space=vmem, size = 0x78000, scoped, tag = 'scratch operand']
  #allocation3 [shape = 'f32[16,16,8]{2,1,0:T(8,128)}', space=vmem, size = 0x20000, scoped, tag = 'scratch operand']
  %s0 = inlined_call_operand.vmem [shape: bf16[2,400,4], index: 0, kind: input, shape index: {}]
  %s1 = inlined_call_operand.vmem [shape: bf16[4,144], index: 1, kind: input, shape index: {}]
  %s2 = inlined_call_operand.vmem [shape: f32[1,8], index: 2, kind: input, shape index: {}]
  %s3 = inlined_call_operand.vmem [shape: f32[2,16,16,8], index: 3, kind: output, shape index: {}]
  %s4 = sld [smem:[#allocation0]]
  $region45: #{tpu_custom_call.1} parent=0
    _
  %s6 = ssub.s32 1, %s4
  %s7 = scalar_select 0, %s6, %s4
  loop: start=0, step=1, limit=4
  $region2: #{tpu_custom_call.1} parent=0 // loop_pre_header
    _
  $region3: #{tpu_custom_call.1} parent=0 // loop_header
    %s9 = sphi 0, %s13
    %p10 = scmp.ge.s32.totalorder %s9, 4
    %s19 = sphi 0, %s21
    %s22 = sphi 0, %s19
    %s23 = sphi 0, %s22
    %s39 = sphi 0, %s23
    %s43 = sphi 0, %s43
    %s45 = sphi 0, %s43
    %s46 = sphi 0, %s45
    %s60 = sphi 0, %s46
    %s64 = sphi 0, %s64
    %s66 = sphi 0, %s64
    %s67 = sphi 0, %s66
    %s81 = sphi 0, %s67
    %s87 = sphi 0, %s89
    %s90 = sphi 0, %s87
    %s91 = sphi 0, %s90
    %s107 = sphi 0, %s91
  $region4: #{tpu_custom_call.1} parent=0 // loop_header_branch
    %12 = sbr.rel (%p10) target = $region8
  $region5: #{tpu_custom_call.1} parent=0 // loop_body
    %s14 = ssub.s32 %s9, 1
    %s15 = ssub.s32 %s9, 2
    %s16 = sadd.s32 %s9, 1
    %s17 = ssub.s32 %s9, %s16
    %p18 = scmp.eq.s32.totalorder %s17, 0
    %s20 = sadd.s32 %s19, 1
    %s21 = scalar_select %p18, %s19, %s20
    %p24 = pneg %p18
    %p25 = scmp.eq.s32.totalorder %s9, 1
    %p26 = por %p24, %p25
    %p27 = scmp.ne.s32.totalorder %s19, %s22
    %p28 = scmp.eq.s32.totalorder %s9, 0
    %p29 = por %p27, %p28
    %p30 = scmp.ne.s32.totalorder %s19, %s22
    %p31 = scmp.eq.s32.totalorder %s14, 1
    %p32 = por %p30, %p31
    %p33 = scmp.ne.s32.totalorder %s22, %s23
    %p34 = scmp.eq.s32.totalorder %s14, 0
    %p35 = por %p33, %p34
    %p36 = scmp.ne.s32.totalorder %s22, %s23
    %p37 = scmp.eq.s32.totalorder %s15, 1
    %p38 = por %p36, %p37
    %p40 = scmp.ne.s32.totalorder %s23, %s39
    %p41 = scmp.eq.s32.totalorder %s15, 0
    %p42 = por %p40, %p41
    %s44 = sadd.s32 %s43, 1
    %p47 = scmp.eq.s32.totalorder %s9, 1
    %p48 = scmp.ne.s32.totalorder %s43, %s45
    %p49 = scmp.eq.s32.totalorder %s9, 0
    %p50 = por %p48, %p49
    %p51 = scmp.ne.s32.totalorder %s43, %s45
    %p52 = scmp.eq.s32.totalorder %s14, 1
    %p53 = por %p51, %p52
    %p54 = scmp.ne.s32.totalorder %s45, %s46
    %p55 = scmp.eq.s32.totalorder %s14, 0
    %p56 = por %p54, %p55
    %p57 = scmp.ne.s32.totalorder %s45, %s46
    %p58 = scmp.eq.s32.totalorder %s15, 1
    %p59 = por %p57, %p58
    %p61 = scmp.ne.s32.totalorder %s46, %s60
    %p62 = scmp.eq.s32.totalorder %s15, 0
    %p63 = por %p61, %p62
    %s65 = sadd.s32 %s64, 1
    %p68 = scmp.eq.s32.totalorder %s9, 1
    %p69 = scmp.ne.s32.totalorder %s64, %s66
    %p70 = scmp.eq.s32.totalorder %s9, 0
    %p71 = por %p69, %p70
    %p72 = scmp.ne.s32.totalorder %s64, %s66
    %p73 = scmp.eq.s32.totalorder %s14, 1
    %p74 = por %p72, %p73
    %p75 = scmp.ne.s32.totalorder %s66, %s67
    %p76 = scmp.eq.s32.totalorder %s14, 0
    %p77 = por %p75, %p76
    %p78 = scmp.ne.s32.totalorder %s66, %s67
    %p79 = scmp.eq.s32.totalorder %s15, 1
    %p80 = por %p78, %p79
    %p82 = scmp.ne.s32.totalorder %s67, %s81
    %p83 = scmp.eq.s32.totalorder %s15, 0
    %p84 = por %p82, %p83
    %s85 = ssub.s32 %s9, %s16
    %p86 = scmp.eq.s32.totalorder %s85, 0
    %s88 = sadd.s32 %s87, 1
    %s89 = scalar_select %p86, %s87, %s88
    %p92 = pneg %p86
    %p93 = scmp.eq.s32.totalorder %s9, 1
    %p94 = por %p92, %p93
    %p95 = scmp.ne.s32.totalorder %s87, %s90
    %p96 = scmp.eq.s32.totalorder %s9, 0
    %p97 = por %p95, %p96
    %p98 = scmp.ne.s32.totalorder %s87, %s90
    %p99 = scmp.eq.s32.totalorder %s14, 1
    %p100 = por %p98, %p99
    %p101 = scmp.ne.s32.totalorder %s90, %s91
    %p102 = scmp.eq.s32.totalorder %s14, 0
    %p103 = por %p101, %p102
    %p104 = scmp.ne.s32.totalorder %s90, %s91
    %p105 = scmp.eq.s32.totalorder %s15, 1
    %p106 = por %p104, %p105
    %p108 = scmp.ne.s32.totalorder %s91, %s107
    %p109 = scmp.eq.s32.totalorder %s15, 0
    %p110 = por %p108, %p109
    %p111 = scmp.le.s32.totalorder 1, %s9
    %p112 = scmp.lt.s32.totalorder %s9, 3
    %p113 = pnand %p111, %p112
    %p114 = pneg %p113
    // Predicated region
    $region9: #{tpu_custom_call.1} parent=5 // pred_check
      _
    $region10: #{tpu_custom_call.1} parent=5 // pred_check_branch
      %116 = sbr.rel (%p113) target = $region12
    $region11: #{tpu_custom_call.1} parent=5 // pred_region
      %s117 = ssub.s32 %s9, 1
      // Predicated region
      $region13: #{tpu_custom_call.1} parent=11 // pred_check
        %p118 = pneg %p56
      $region14: #{tpu_custom_call.1} parent=11 // pred_check_branch
        %120 = sbr.rel (%p118) target = $region16
      $region15: #{tpu_custom_call.1} parent=11 // pred_region
        _
      $region16: #{tpu_custom_call.1} parent=11 // pred_fallthru
        _
      // Predicated region
      $region17: #{tpu_custom_call.1} parent=11 // pred_check
        %p121 = pneg %p77
      $region18: #{tpu_custom_call.1} parent=11 // pred_check_branch
        %123 = sbr.rel (%p121) target = $region20
      $region19: #{tpu_custom_call.1} parent=11 // pred_region
        _
      $region20: #{tpu_custom_call.1} parent=11 // pred_fallthru
        _
    $region12: #{tpu_custom_call.1} parent=5 // pred_fallthru
      _
    %p124 = scmp.lt.s32.totalorder %s9, 2
    // Predicated region
    $region21: #{tpu_custom_call.1} parent=5 // pred_check
      %p125 = pneg %p124
    $region22: #{tpu_custom_call.1} parent=5 // pred_check_branch
      %127 = sbr.rel (%p125) target = $region24
    $region23: #{tpu_custom_call.1} parent=5 // pred_region
      // Predicated region
      $region25: #{tpu_custom_call.1} parent=23 // pred_check
        %p128 = pneg %p29
      $region26: #{tpu_custom_call.1} parent=23 // pred_check_branch
        %130 = sbr.rel (%p128) target = $region28
      $region27: #{tpu_custom_call.1} parent=23 // pred_region
        %p131 = scmp.lt.s32.totalorder %s9, 1
        %s132 = scalar_select %p131, %s9, 1
        %s133 = smul.addr %s132, 50
        %s134 = smul.addr %s133, 4
        %s135 = scalar_lea.vmem %s0, %s134
      $region28: #{tpu_custom_call.1} parent=23 // pred_fallthru
        _
    $region24: #{tpu_custom_call.1} parent=5 // pred_fallthru
      _
    %p136 = scmp.le.s32.totalorder 1, %s9
    %p137 = scmp.lt.s32.totalorder %s9, 3
    %p138 = pnand %p136, %p137
    %p139 = pneg %p138
    // Predicated region
    $region29: #{tpu_custom_call.1} parent=5 // pred_check
      _
    $region30: #{tpu_custom_call.1} parent=5 // pred_check_branch
      %141 = sbr.rel (%p138) target = $region32
    $region31: #{tpu_custom_call.1} parent=5 // pred_region
      %s142 = ssub.s32 %s9, 1
      %p143 = scmp.lt.s32.totalorder %s14, 1
      %s144 = scalar_select %p143, %s14, 1
      %s145 = smul.addr %s144, 50
      %s146 = smul.addr %s145, 4
      %s147 = scalar_lea.vmem %s0, %s146
      %p148 = pneg %p35
      %p149 = pneg %p32
      %p150 = pneg %p56
      %p151 = pneg %p53
      %p152 = pneg %p77
      %p153 = pneg %p74
      %p154 = pneg %p103
      %p155 = pneg %p100
      %p156 = scmp.lt.s32.totalorder %s14, 1
      %s157 = scalar_select %p156, %s14, 1
      %s158 = smul.addr %s157, 32
      %s159 = smul.addr %s158, 8
      %s160 = scalar_lea.vmem %s3, %s159
      %p161 = scmp.lt.s32.totalorder %s14, 1
      %s162 = scalar_select %p161, %s14, 1
      %s163 = smul.addr %s162, 50
      %s164 = smul.addr %s163, 4
      %s165 = scalar_lea.vmem %s0, %s164
      %p166 = scmp.lt.s32.totalorder %s14, 1
      %s167 = scalar_select %p166, %s14, 1
      %s168 = smul.addr %s167, 32
      %s169 = smul.addr %s168, 8
      %s170 = scalar_lea.vmem %s3, %s169
      %v172 = vld [vmem:[%s165] sm:$0xf]
      %v173 = vld [vmem:[%s165 + $0x4] sm:$0xf]
      %v174 = vld [vmem:[%s165 + $0x8] sm:$0xf]
      %v175 = vld [vmem:[%s165 + $0xc] sm:$0xf]
      %v176 = vld [vmem:[%s165 + $0x10] sm:$0xf]
      %v177 = vld [vmem:[%s165 + $0x14] sm:$0xf]
      %v178 = vld [vmem:[%s165 + $0x18] sm:$0xf]
      %v179 = vld [vmem:[%s165 + $0x1c] sm:$0xf]
      %v180 = vld [vmem:[%s165 + $0x20] sm:$0xf]
      %v181 = vld [vmem:[%s165 + $0x24] sm:$0xf]
      %v182 = vld [vmem:[%s165 + $0x28] sm:$0xf]
      %v183 = vld [vmem:[%s165 + $0x2c] sm:$0xf]
      %v184 = vld [vmem:[%s165 + $0x30] sm:$0xf]
      %v185 = vld [vmem:[%s165 + $0x34] sm:$0xf]
      %v186 = vld [vmem:[%s165 + $0x38] sm:$0xf]
      %v187 = vld [vmem:[%s165 + $0x3c] sm:$0xf]
      %v188 = vld [vmem:[%s165 + $0x40] sm:$0xf]
      %v189 = vld [vmem:[%s165 + $0x44] sm:$0xf]
      %v190 = vld [vmem:[%s165 + $0x48] sm:$0xf]
      %v191 = vld [vmem:[%s165 + $0x4c] sm:$0xf]
      %v192 = vld [vmem:[%s165 + $0x50] sm:$0xf]
      %v193 = vld [vmem:[%s165 + $0x54] sm:$0xf]
      %v194 = vld [vmem:[%s165 + $0x58] sm:$0xf]
      %v195 = vld [vmem:[%s165 + $0x5c] sm:$0xf]
      %v196 = vld [vmem:[%s165 + $0x60] sm:$0xf]
      %v197 = vld [vmem:[%s165 + $0x64] sm:$0xf]
      %v198 = vld [vmem:[%s165 + $0x68] sm:$0xf]
      %v199 = vld [vmem:[%s165 + $0x6c] sm:$0xf]
      %v200 = vld [vmem:[%s165 + $0x70] sm:$0xf]
      %v201 = vld [vmem:[%s165 + $0x74] sm:$0xf]
      %v202 = vld [vmem:[%s165 + $0x78] sm:$0xf]
      %v203 = vld [vmem:[%s165 + $0x7c] sm:$0xf]
      %v204 = vld [vmem:[%s165 + $0x80] sm:$0xf]
      %v205 = vld [vmem:[%s165 + $0x84] sm:$0xf]
      %v206 = vld [vmem:[%s165 + $0x88] sm:$0xf]
      %v207 = vld [vmem:[%s165 + $0x8c] sm:$0xf]
      %v208 = vld [vmem:[%s165 + $0x90] sm:$0xf]
      %v209 = vld [vmem:[%s165 + $0x94] sm:$0xf]
      %v210 = vld [vmem:[%s165 + $0x98] sm:$0xf]
      %v211 = vld [vmem:[%s165 + $0x9c] sm:$0xf]
      %v212 = vld [vmem:[%s165 + $0xa0] sm:$0xf]
      %v213 = vld [vmem:[%s165 + $0xa4] sm:$0xf]
      %v214 = vld [vmem:[%s165 + $0xa8] sm:$0xf]
      %v215 = vld [vmem:[%s165 + $0xac] sm:$0xf]
      %v216 = vld [vmem:[%s165 + $0xb0] sm:$0xf]
      %v217 = vld [vmem:[%s165 + $0xb4] sm:$0xf]
      %v218 = vld [vmem:[%s165 + $0xb8] sm:$0xf]
      %v219 = vld [vmem:[%s165 + $0xbc] sm:$0xf]
      %v220 = vld [vmem:[%s165 + $0xc0] sm:$0xf]
      %v221 = vld [vmem:[%s165 + $0xc4] sm:$0xf]
      %v222 = vld [vmem:[%s1] sm:$0xf]
      %v273 = vunpack.c.l.b16 %v172
      %v274 = vunpack.c.l.b16 %v173
      %v275 = vunpack.c.l.b16 %v174
      %v276 = vunpack.c.l.b16 %v175
      %v277 = vunpack.c.l.b16 %v176
      %v278 = vunpack.c.l.b16 %v177
      %v279 = vunpack.c.l.b16 %v178
      %v280 = vunpack.c.l.b16 %v179
      %v281 = vunpack.c.l.b16 %v180
      %v282 = vunpack.c.l.b16 %v181
      %v283 = vunpack.c.l.b16 %v182
      %v284 = vunpack.c.l.b16 %v183
      %v285 = vunpack.c.l.b16 %v184
      %v286 = vunpack.c.l.b16 %v185
      %v287 = vunpack.c.l.b16 %v186
      %v288 = vunpack.c.l.b16 %v187
      %v289 = vunpack.c.l.b16 %v188
      %v290 = vunpack.c.l.b16 %v189
      %v291 = vunpack.c.l.b16 %v190
      %v292 = vunpack.c.l.b16 %v191
      %v293 = vunpack.c.l.b16 %v192
      %v294 = vunpack.c.l.b16 %v193
      %v295 = vunpack.c.l.b16 %v194
      %v296 = vunpack.c.l.b16 %v195
      %v297 = vunpack.c.l.b16 %v196
      %v298 = vunpack.c.l.b16 %v197
      %v299 = vunpack.c.l.b16 %v198
      %v300 = vunpack.c.l.b16 %v199
      %v301 = vunpack.c.l.b16 %v200
      %v302 = vunpack.c.l.b16 %v201
      %v303 = vunpack.c.l.b16 %v202
      %v304 = vunpack.c.l.b16 %v203
      %v305 = vunpack.c.l.b16 %v204
      %v306 = vunpack.c.l.b16 %v205
      %v307 = vunpack.c.l.b16 %v206
      %v308 = vunpack.c.l.b16 %v207
      %v309 = vunpack.c.l.b16 %v208
      %v310 = vunpack.c.l.b16 %v209
      %v311 = vunpack.c.l.b16 %v210
      %v312 = vunpack.c.l.b16 %v211
      %v313 = vunpack.c.l.b16 %v212
      %v314 = vunpack.c.l.b16 %v213
      %v315 = vunpack.c.l.b16 %v214
      %v316 = vunpack.c.l.b16 %v215
      %v317 = vunpack.c.l.b16 %v216
      %v318 = vunpack.c.l.b16 %v217
      %v319 = vunpack.c.l.b16 %v218
      %v320 = vunpack.c.l.b16 %v219
      %v321 = vunpack.c.l.b16 %v220
      %v322 = vunpack.c.l.b16 %v221
      %v323 = vpack.c.b16 %v274, %v273
      %v324 = vpack.c.b16 %v276, %v275
      %v325 = vpack.c.b16 %v278, %v277
      %v326 = vpack.c.b16 %v280, %v279
      %v327 = vpack.c.b16 %v282, %v281
      %v328 = vpack.c.b16 %v284, %v283
      %v329 = vpack.c.b16 %v286, %v285
      %v330 = vpack.c.b16 %v288, %v287
      %v331 = vpack.c.b16 %v290, %v289
      %v332 = vpack.c.b16 %v292, %v291
      %v333 = vpack.c.b16 %v294, %v293
      %v334 = vpack.c.b16 %v296, %v295
      %v335 = vpack.c.b16 %v298, %v297
      %v336 = vpack.c.b16 %v300, %v299
      %v337 = vpack.c.b16 %v302, %v301
      %v338 = vpack.c.b16 %v304, %v303
      %v339 = vpack.c.b16 %v306, %v305
      %v340 = vpack.c.b16 %v308, %v307
      %v341 = vpack.c.b16 %v310, %v309
      %v342 = vpack.c.b16 %v312, %v311
      %v343 = vpack.c.b16 %v314, %v313
      %v344 = vpack.c.b16 %v316, %v315
      %v345 = vpack.c.b16 %v318, %v317
      %v346 = vpack.c.b16 %v320, %v319
      %v347 = vpack.c.b16 %v322, %v321
      %v350 = vunpack.c.l.s4 1983009808
      %v351 = vunpack.c.0.s8 %v350
      %v352 = vlaneseq
      %v353 = vshrl.u32 %v352, 7
      %v354 = vsub.s32 %v351, %v353
      %v355 = vrot.slane %v222, %v354
      %v356 = vcombine.high %v355, %v355
      %vm357 = vcmask 31744
      %v359 = vsel %vm357, %v323, 0
      %v362 = vsel %vm357, %v324, 0
      %v365 = vsel %vm357, %v325, 0
      %v368 = vsel %vm357, %v326, 0
      %v371 = vsel %vm357, %v327, 0
      %v374 = vsel %vm357, %v328, 0
      %v377 = vsel %vm357, %v329, 0
      %v380 = vsel %vm357, %v330, 0
      %v383 = vsel %vm357, %v331, 0
      %v386 = vsel %vm357, %v332, 0
      %v389 = vsel %vm357, %v333, 0
      %v392 = vsel %vm357, %v334, 0
      %v395 = vsel %vm357, %v335, 0
      %v398 = vsel %vm357, %v336, 0
      %v401 = vsel %vm357, %v337, 0
      %v404 = vsel %vm357, %v338, 0
      %v407 = vsel %vm357, %v339, 0
      %v410 = vsel %vm357, %v340, 0
      %v413 = vsel %vm357, %v341, 0
      %v416 = vsel %vm357, %v342, 0
      %v419 = vsel %vm357, %v343, 0
      %v422 = vsel %vm357, %v344, 0
      %v425 = vsel %vm357, %v345, 0
      %v428 = vsel %vm357, %v346, 0
      %v431 = vsel %vm357, %v347, 0
      %vm433 = vcmask 1041408
      %v435 = vsel %vm433, %v355, 0
      %v438 = vsel %vm433, %v356, 0
      %440 = vmatprep.subr.bf16.mxu0 %v438
      %441 = vmatpush1.bf16.msra.mxu0 %v435
      %442 = vmatprep.subr.bf16.mxu0 0
      %443 = vmatpush1.bf16.msra.mxu0 0
      %444 = vmatprep.subr.bf16.mxu0 0
      %445 = vmatpush1.bf16.msra.mxu0 0
      %446 = vmatprep.subr.bf16.mxu0 0
      %447 = vmatpush1.bf16.msra.mxu0 0
      %448 = vmatprep.subr.bf16.mxu0 0
      %449 = vmatpush1.bf16.msra.mxu0 0
      %450 = vmatprep.subr.bf16.mxu0 0
      %451 = vmatpush1.bf16.msra.mxu0 0
      %452 = vmatprep.subr.bf16.mxu0 0
      %453 = vmatpush1.bf16.msra.mxu0 0
      %454 = vmatprep.subr.bf16.mxu0 0
      %455 = vmatpush1.bf16.msra.mxu0 0
      %456 = vmatprep.subr.bf16.mxu0 0
      %457 = vmatpush1.bf16.msra.mxu0 0
      %458 = vmatprep.subr.bf16.mxu0 0
      %459 = vmatpush1.bf16.msra.mxu0 0
      %460 = vmatprep.subr.bf16.mxu0 0
      %461 = vmatpush1.bf16.msra.mxu0 0
      %462 = vmatprep.subr.bf16.mxu0 0
      %463 = vmatpush1.bf16.msra.mxu0 0
      %464 = vmatprep.subr.bf16.mxu0 0
      %465 = vmatpush1.bf16.msra.mxu0 0
      %466 = vmatprep.subr.bf16.mxu0 0
      %467 = vmatpush1.bf16.msra.mxu0 0
      %468 = vmatprep.subr.bf16.mxu0 0
      %469 = vmatpush1.bf16.msra.mxu0 0
      %470 = vmatprep.subr.bf16.mxu0 0
      %471 = vmatpush1.bf16.msra.mxu0 0
      %472 = vmatprep.mubr.bf16.mxu0 0
      %473 = vmatmul.mubr.bf16.gmra.mrb[0].mxu0 %v359
      %v474 = vpop.f32.mrb[0].mxu0
      %v475 = vadd.f32 0.0, %v474
      %v476 = vpop.f32.mrb[0].mxu0
      %v477 = vadd.f32 0.0, %v476
      %v478 = vpop.f32.mrb[0].mxu0
      %v479 = vadd.f32 0.0, %v478
      %v480 = vpop.f32.mrb[0].mxu0
      %v481 = vadd.f32 0.0, %v480
      %482 = vmatprep.mubr.bf16.mxu0 0
      %483 = vmatmul.mubr.bf16.gmra.mrb[0].mxu0 %v362
      %v484 = vpop.f32.mrb[0].mxu0
      %v485 = vadd.f32 0.0, %v484
      %v486 = vpop.f32.mrb[0].mxu0
      %v487 = vadd.f32 0.0, %v486
      %v488 = vpop.f32.mrb[0].mxu0
      %v489 = vadd.f32 0.0, %v488
      %v490 = vpop.f32.mrb[0].mxu0
      %v491 = vadd.f32 0.0, %v490
      %492 = vmatprep.mubr.bf16.mxu0 0
      %493 = vmatmul.mubr.bf16.gmra.mrb[0].mxu0 %v365
      %v494 = vpop.f32.mrb[0].mxu0
      %v495 = vadd.f32 0.0, %v494
      %v496 = vpop.f32.mrb[0].mxu0
      %v497 = vadd.f32 0.0, %v496
      %v498 = vpop.f32.mrb[0].mxu0
      %v499 = vadd.f32 0.0, %v498
      %v500 = vpop.f32.mrb[0].mxu0
      %v501 = vadd.f32 0.0, %v500
      %502 = vmatprep.mubr.bf16.mxu0 0
      %503 = vmatmul.mubr.bf16.gmra.mrb[0].mxu0 %v368
      %v504 = vpop.f32.mrb[0].mxu0
      %v505 = vadd.f32 0.0, %v504
      %v506 = vpop.f32.mrb[0].mxu0
      %v507 = vadd.f32 0.0, %v506
      %v508 = vpop.f32.mrb[0].mxu0
      %v509 = vadd.f32 0.0, %v508
      %v510 = vpop.f32.mrb[0].mxu0
      %v511 = vadd.f32 0.0, %v510
      %512 = vmatprep.mubr.bf16.mxu0 0
      %513 = vmatmul.mubr.bf16.gmra.mrb[0].mxu0 %v371
      %v514 = vpop.f32.mrb[0].mxu0
      %v515 = vadd.f32 0.0, %v514
      %v516 = vpop.f32.mrb[0].mxu0
      %v517 = vadd.f32 0.0, %v516
      %v518 = vpop.f32.mrb[0].mxu0
      %v519 = vadd.f32 0.0, %v518
      %v520 = vpop.f32.mrb[0].mxu0
      %v521 = vadd.f32 0.0, %v520
      %522 = vmatprep.mubr.bf16.mxu0 0
      %523 = vmatmul.mubr.bf16.gmra.mrb[0].mxu0 %v374
      %v524 = vpop.f32.mrb[0].mxu0
      %v525 = vadd.f32 0.0, %v524
      %v526 = vpop.f32.mrb[0].mxu0
      %v527 = vadd.f32 0.0, %v526
      %v528 = vpop.f32.mrb[0].mxu0
      %v529 = vadd.f32 0.0, %v528
      %v530 = vpop.f32.mrb[0].mxu0
      %v531 = vadd.f32 0.0, %v530
      %532 = vmatprep.mubr.bf16.mxu0 0
      %533 = vmatmul.mubr.bf16.gmra.mrb[0].mxu0 %v377
      %v534 = vpop.f32.mrb[0].mxu0
      %v535 = vadd.f32 0.0, %v534
      %v536 = vpop.f32.mrb[0].mxu0
      %v537 = vadd.f32 0.0, %v536
      %v538 = vpop.f32.mrb[0].mxu0
      %v539 = vadd.f32 0.0, %v538
      %v540 = vpop.f32.mrb[0].mxu0
      %v541 = vadd.f32 0.0, %v540
      %542 = vmatprep.mubr.bf16.mxu0 0
      %543 = vmatmul.mubr.bf16.gmra.mrb[0].mxu0 %v380
      %v544 = vpop.f32.mrb[0].mxu0
      %v545 = vadd.f32 0.0, %v544
      %v546 = vpop.f32.mrb[0].mxu0
      %v547 = vadd.f32 0.0, %v546
      %v548 = vpop.f32.mrb[0].mxu0
      %v549 = vadd.f32 0.0, %v548
      %v550 = vpop.f32.mrb[0].mxu0
      %v551 = vadd.f32 0.0, %v550
      %552 = vmatprep.mubr.bf16.mxu0 0
      %553 = vmatmul.mubr.bf16.gmra.mrb[0].mxu0 %v383
      %v554 = vpop.f32.mrb[0].mxu0
      %v555 = vadd.f32 0.0, %v554
      %v556 = vpop.f32.mrb[0].mxu0
      %v557 = vadd.f32 0.0, %v556
      %v558 = vpop.f32.mrb[0].mxu0
      %v559 = vadd.f32 0.0, %v558
      %v560 = vpop.f32.mrb[0].mxu0
      %v561 = vadd.f32 0.0, %v560
      %562 = vmatprep.mubr.bf16.mxu0 0
      %563 = vmatmul.mubr.bf16.gmra.mrb[0].mxu0 %v386
      %v564 = vpop.f32.mrb[0].mxu0
      %v565 = vadd.f32 0.0, %v564
      %v566 = vpop.f32.mrb[0].mxu0
      %v567 = vadd.f32 0.0, %v566
      %v568 = vpop.f32.mrb[0].mxu0
      %v569 = vadd.f32 0.0, %v568
      %v570 = vpop.f32.mrb[0].mxu0
      %v571 = vadd.f32 0.0, %v570
      %572 = vmatprep.mubr.bf16.mxu0 0
      %573 = vmatmul.mubr.bf16.gmra.mrb[0].mxu0 %v389
      %v574 = vpop.f32.mrb[0].mxu0
      %v575 = vadd.f32 0.0, %v574
      %v576 = vpop.f32.mrb[0].mxu0
      %v577 = vadd.f32 0.0, %v576
      %v578 = vpop.f32.mrb[0].mxu0
      %v579 = vadd.f32 0.0, %v578
      %v580 = vpop.f32.mrb[0].mxu0
      %v581 = vadd.f32 0.0, %v580
      %582 = vmatprep.mubr.bf16.mxu0 0
      %583 = vmatmul.mubr.bf16.gmra.mrb[0].mxu0 %v392
      %v584 = vpop.f32.mrb[0].mxu0
      %v585 = vadd.f32 0.0, %v584
      %v586 = vpop.f32.mrb[0].mxu0
      %v587 = vadd.f32 0.0, %v586
      %v588 = vpop.f32.mrb[0].mxu0
      %v589 = vadd.f32 0.0, %v588
      %v590 = vpop.f32.mrb[0].mxu0
      %v591 = vadd.f32 0.0, %v590
      %592 = vmatprep.mubr.bf16.mxu0 0
      %593 = vmatmul.mubr.bf16.gmra.mrb[0].mxu0 %v395
      %v594 = vpop.f32.mrb[0].mxu0
      %v595 = vadd.f32 0.0, %v594
      %v596 = vpop.f32.mrb[0].mxu0
      %v597 = vadd.f32 0.0, %v596
      %v598 = vpop.f32.mrb[0].mxu0
      %v599 = vadd.f32 0.0, %v598
      %v600 = vpop.f32.mrb[0].mxu0
      %v601 = vadd.f32 0.0, %v600
      %602 = vmatprep.mubr.bf16.mxu0 0
      %603 = vmatmul.mubr.bf16.gmra.mrb[0].mxu0 %v398
      %v604 = vpop.f32.mrb[0].mxu0
      %v605 = vadd.f32 0.0, %v604
      %v606 = vpop.f32.mrb[0].mxu0
      %v607 = vadd.f32 0.0, %v606
      %v608 = vpop.f32.mrb[0].mxu0
      %v609 = vadd.f32 0.0, %v608
      %v610 = vpop.f32.mrb[0].mxu0
      %v611 = vadd.f32 0.0, %v610
      %612 = vmatprep.mubr.bf16.mxu0 0
      %613 = vmatmul.mubr.bf16.gmra.mrb[0].mxu0 %v401
      %v614 = vpop.f32.mrb[0].mxu0
      %v615 = vadd.f32 0.0, %v614
      %v616 = vpop.f32.mrb[0].mxu0
      %v617 = vadd.f32 0.0, %v616
      %v618 = vpop.f32.mrb[0].mxu0
      %v619 = vadd.f32 0.0, %v618
      %v620 = vpop.f32.mrb[0].mxu0
      %v621 = vadd.f32 0.0, %v620
      %622 = vmatprep.mubr.bf16.mxu0 0
      %623 = vmatmul.mubr.bf16.gmra.mrb[0].mxu0 %v404
      %v624 = vpop.f32.mrb[0].mxu0
      %v625 = vadd.f32 0.0, %v624
      %v626 = vpop.f32.mrb[0].mxu0
      %v627 = vadd.f32 0.0, %v626
      %v628 = vpop.f32.mrb[0].mxu0
      %v629 = vadd.f32 0.0, %v628
      %v630 = vpop.f32.mrb[0].mxu0
      %v631 = vadd.f32 0.0, %v630
      %632 = vmatprep.mubr.bf16.mxu0 0
      %633 = vmatmul.mubr.bf16.gmra.mrb[0].mxu0 %v407
      %v634 = vpop.f32.mrb[0].mxu0
      %v635 = vadd.f32 0.0, %v634
      %v636 = vpop.f32.mrb[0].mxu0
      %v637 = vadd.f32 0.0, %v636
      %v638 = vpop.f32.mrb[0].mxu0
      %v639 = vadd.f32 0.0, %v638
      %v640 = vpop.f32.mrb[0].mxu0
      %v641 = vadd.f32 0.0, %v640
      %642 = vmatprep.mubr.bf16.mxu0 0
      %643 = vmatmul.mubr.bf16.gmra.mrb[0].mxu0 %v410
      %v644 = vpop.f32.mrb[0].mxu0
      %v645 = vadd.f32 0.0, %v644
      %v646 = vpop.f32.mrb[0].mxu0
      %v647 = vadd.f32 0.0, %v646
      %v648 = vpop.f32.mrb[0].mxu0
      %v649 = vadd.f32 0.0, %v648
      %v650 = vpop.f32.mrb[0].mxu0
      %v651 = vadd.f32 0.0, %v650
      %652 = vmatprep.mubr.bf16.mxu0 0
      %653 = vmatmul.mubr.bf16.gmra.mrb[0].mxu0 %v413
      %v654 = vpop.f32.mrb[0].mxu0
      %v655 = vadd.f32 0.0, %v654
      %v656 = vpop.f32.mrb[0].mxu0
      %v657 = vadd.f32 0.0, %v656
      %v658 = vpop.f32.mrb[0].mxu0
      %v659 = vadd.f32 0.0, %v658
      %v660 = vpop.f32.mrb[0].mxu0
      %v661 = vadd.f32 0.0, %v660
      %662 = vmatprep.mubr.bf16.mxu0 0
      %663 = vmatmul.mubr.bf16.gmra.mrb[0].mxu0 %v416
      %v664 = vpop.f32.mrb[0].mxu0
      %v665 = vadd.f32 0.0, %v664
      %v666 = vpop.f32.mrb[0].mxu0
      %v667 = vadd.f32 0.0, %v666
      %v668 = vpop.f32.mrb[0].mxu0
      %v669 = vadd.f32 0.0, %v668
      %v670 = vpop.f32.mrb[0].mxu0
      %v671 = vadd.f32 0.0, %v670
      %672 = vmatprep.mubr.bf16.mxu0 0
      %673 = vmatmul.mubr.bf16.gmra.mrb[0].mxu0 %v419
      %v674 = vpop.f32.mrb[0].mxu0
      %v675 = vadd.f32 0.0, %v674
      %v676 = vpop.f32.mrb[0].mxu0
      %v677 = vadd.f32 0.0, %v676
      %v678 = vpop.f32.mrb[0].mxu0
      %v679 = vadd.f32 0.0, %v678
      %v680 = vpop.f32.mrb[0].mxu0
      %v681 = vadd.f32 0.0, %v680
      %682 = vmatprep.mubr.bf16.mxu0 0
      %683 = vmatmul.mubr.bf16.gmra.mrb[0].mxu0 %v422
      %v684 = vpop.f32.mrb[0].mxu0
      %v685 = vadd.f32 0.0, %v684
      %v686 = vpop.f32.mrb[0].mxu0
      %v687 = vadd.f32 0.0, %v686
      %v688 = vpop.f32.mrb[0].mxu0
      %v689 = vadd.f32 0.0, %v688
      %v690 = vpop.f32.mrb[0].mxu0
      %v691 = vadd.f32 0.0, %v690
      %692 = vmatprep.mubr.bf16.mxu0 0
      %693 = vmatmul.mubr.bf16.gmra.mrb[0].mxu0 %v425
      %v694 = vpop.f32.mrb[0].mxu0
      %v695 = vadd.f32 0.0, %v694
      %v696 = vpop.f32.mrb[0].mxu0
      %v697 = vadd.f32 0.0, %v696
      %v698 = vpop.f32.mrb[0].mxu0
      %v699 = vadd.f32 0.0, %v698
      %v700 = vpop.f32.mrb[0].mxu0
      %v701 = vadd.f32 0.0, %v700
      %702 = vmatprep.mubr.bf16.mxu0 0
      %703 = vmatmul.mubr.bf16.gmra.mrb[0].mxu0 %v428
      %v704 = vpop.f32.mrb[0].mxu0
      %v705 = vadd.f32 0.0, %v704
      %v706 = vpop.f32.mrb[0].mxu0
      %v707 = vadd.f32 0.0, %v706
      %v708 = vpop.f32.mrb[0].mxu0
      %v709 = vadd.f32 0.0, %v708
      %v710 = vpop.f32.mrb[0].mxu0
      %v711 = vadd.f32 0.0, %v710
      %712 = vmatprep.mubr.bf16.mxu0 0
      %713 = vmatmul.mubr.bf16.gmra.mrb[0].mxu0 %v431
      %v714 = vpop.f32.mrb[0].mxu0
      %v715 = vadd.f32 0.0, %v714
      %v716 = vpop.f32.mrb[0].mxu0
      %v717 = vadd.f32 0.0, %v716
      %v718 = vpop.f32.mrb[0].mxu0
      %v719 = vadd.f32 0.0, %v718
      %v720 = vpop.f32.mrb[0].mxu0
      %v721 = vadd.f32 0.0, %v720
      %722 = vdwg.mxu0
      %v823 = vcombine.low %v475, %v477
      %v824 = vcombine.high %v475, %v477
      %v825 = vcombine.low %v479, %v481
      %v826 = vcombine.high %v479, %v481
      %v827 = vcombine.low %v485, %v487
      %v828 = vcombine.high %v485, %v487
      %v829 = vcombine.low %v489, %v491
      %v830 = vcombine.high %v489, %v491
      %v831 = vcombine.low %v495, %v497
      %v832 = vcombine.high %v495, %v497
      %v833 = vcombine.low %v499, %v501
      %v834 = vcombine.high %v499, %v501
      %v835 = vcombine.low %v505, %v507
      %v836 = vcombine.high %v505, %v507
      %v837 = vcombine.low %v509, %v511
      %v838 = vcombine.high %v509, %v511
      %v839 = vcombine.low %v515, %v517
      %v840 = vcombine.high %v515, %v517
      %v841 = vcombine.low %v519, %v521
      %v842 = vcombine.high %v519, %v521
      %v843 = vcombine.low %v525, %v527
      %v844 = vcombine.high %v525, %v527
      %v845 = vcombine.low %v529, %v531
      %v846 = vcombine.high %v529, %v531
      %v847 = vcombine.low %v535, %v537
      %v848 = vcombine.high %v535, %v537
      %v849 = vcombine.low %v539, %v541
      %v850 = vcombine.high %v539, %v541
      %v851 = vcombine.low %v545, %v547
      %v852 = vcombine.high %v545, %v547
      %v853 = vcombine.low %v549, %v551
      %v854 = vcombine.high %v549, %v551
      %v855 = vcombine.low %v555, %v557
      %v856 = vcombine.high %v555, %v557
      %v857 = vcombine.low %v559, %v561
      %v858 = vcombine.high %v559, %v561
      %v859 = vcombine.low %v565, %v567
      %v860 = vcombine.high %v565, %v567
      %v861 = vcombine.low %v569, %v571
      %v862 = vcombine.high %v569, %v571
      %v863 = vcombine.low %v575, %v577
      %v864 = vcombine.high %v575, %v577
      %v865 = vcombine.low %v579, %v581
      %v866 = vcombine.high %v579, %v581
      %v867 = vcombine.low %v585, %v587
      %v868 = vcombine.high %v585, %v587
      %v869 = vcombine.low %v589, %v591
      %v870 = vcombine.high %v589, %v591
      %v871 = vcombine.low %v595, %v597
      %v872 = vcombine.high %v595, %v597
      %v873 = vcombine.low %v599, %v601
      %v874 = vcombine.high %v599, %v601
      %v875 = vcombine.low %v605, %v607
      %v876 = vcombine.high %v605, %v607
      %v877 = vcombine.low %v609, %v611
      %v878 = vcombine.high %v609, %v611
      %v879 = vcombine.low %v615, %v617
      %v880 = vcombine.high %v615, %v617
      %v881 = vcombine.low %v619, %v621
      %v882 = vcombine.high %v619, %v621
      %v883 = vcombine.low %v625, %v627
      %v884 = vcombine.high %v625, %v627
      %v885 = vcombine.low %v629, %v631
      %v886 = vcombine.high %v629, %v631
      %v887 = vcombine.low %v635, %v637
      %v888 = vcombine.high %v635, %v637
      %v889 = vcombine.low %v639, %v641
      %v890 = vcombine.high %v639, %v641
      %v891 = vcombine.low %v645, %v647
      %v892 = vcombine.high %v645, %v647
      %v893 = vcombine.low %v649, %v651
      %v894 = vcombine.high %v649, %v651
      %v895 = vcombine.low %v655, %v657
      %v896 = vcombine.high %v655, %v657
      %v897 = vcombine.low %v659, %v661
      %v898 = vcombine.high %v659, %v661
      %v899 = vcombine.low %v665, %v667
      %v900 = vcombine.high %v665, %v667
      %v901 = vcombine.low %v669, %v671
      %v902 = vcombine.high %v669, %v671
      %v903 = vcombine.low %v675, %v677
      %v904 = vcombine.high %v675, %v677
      %v905 = vcombine.low %v679, %v681
      %v906 = vcombine.high %v679, %v681
      %v907 = vcombine.low %v685, %v687
      %v908 = vcombine.high %v685, %v687
      %v909 = vcombine.low %v689, %v691
      %v910 = vcombine.high %v689, %v691
      %v911 = vcombine.low %v695, %v697
      %v912 = vcombine.high %v695, %v697
      %v913 = vcombine.low %v699, %v701
      %v914 = vcombine.high %v699, %v701
      %v915 = vcombine.low %v705, %v707
      %v916 = vcombine.high %v705, %v707
      %v917 = vcombine.low %v709, %v711
      %v918 = vcombine.high %v709, %v711
      %v919 = vcombine.low %v715, %v717
      %v920 = vcombine.high %v715, %v717
      %v921 = vcombine.low %v719, %v721
      %v922 = vcombine.high %v719, %v721
      %v943 = vcombine.low %v823, %v824
      %v944 = vcombine.high %v823, %v824
      %v945 = vcombine.low %v825, %v826
      %v946 = vcombine.high %v825, %v826
      %v947 = vcombine.high %v827, %v827
      %v948 = vcombine.low %v828, %v829
      %v949 = vcombine.high %v828, %v829
      %v950 = vcombine.low %v830, %v831
      %v951 = vcombine.high %v830, %v831
      %v952 = vcombine.high %v832, %v832
      %v953 = vcombine.low %v833, %v834
      %v954 = vcombine.high %v833, %v834
      %v955 = vcombine.low %v835, %v836
      %v956 = vcombine.high %v835, %v836
      %v957 = vcombine.high %v837, %v837
      %v958 = vcombine.low %v838, %v839
      %v959 = vcombine.high %v838, %v839
      %v960 = vcombine.low %v840, %v841
      %v961 = vcombine.high %v840, %v841
      %v962 = vcombine.high %v842, %v842
      %v963 = vcombine.low %v843, %v844
      %v964 = vcombine.high %v843, %v844
      %v965 = vcombine.low %v845, %v846
      %v966 = vcombine.high %v845, %v846
      %v967 = vcombine.high %v847, %v847
      %v968 = vcombine.low %v848, %v849
      %v969 = vcombine.high %v848, %v849
      %v970 = vcombine.low %v850, %v851
      %v971 = vcombine.high %v850, %v851
      %v972 = vcombine.high %v852, %v852
      %v973 = vcombine.low %v853, %v854
      %v974 = vcombine.high %v853, %v854
      %v975 = vcombine.low %v855, %v856
      %v976 = vcombine.high %v855, %v856
      %v977 = vcombine.high %v857, %v857
      %v978 = vcombine.low %v858, %v859
      %v979 = vcombine.high %v858, %v859
      %v980 = vcombine.low %v860, %v861
      %v981 = vcombine.high %v860, %v861
      %v982 = vcombine.high %v862, %v862
      %v983 = vcombine.low %v863, %v864
      %v984 = vcombine.high %v863, %v864
      %v985 = vcombine.low %v865, %v866
      %v986 = vcombine.high %v865, %v866
      %v987 = vcombine.high %v867, %v867
      %v988 = vcombine.low %v868, %v869
      %v989 = vcombine.high %v868, %v869
      %v990 = vcombine.low %v870, %v871
      %v991 = vcombine.high %v870, %v871
      %v992 = vcombine.high %v872, %v872
      %v993 = vcombine.low %v873, %v874
      %v994 = vcombine.high %v873, %v874
      %v995 = vcombine.low %v875, %v876
      %v996 = vcombine.high %v875, %v876
      %v997 = vcombine.high %v877, %v877
      %v998 = vcombine.low %v878, %v879
      %v999 = vcombine.high %v878, %v879
      %v1000 = vcombine.low %v880, %v881
      %v1001 = vcombine.high %v880, %v881
      %v1002 = vcombine.high %v882, %v882
      %v1003 = vcombine.low %v883, %v884
      %v1004 = vcombine.high %v883, %v884
      %v1005 = vcombine.low %v885, %v886
      %v1006 = vcombine.high %v885, %v886
      %v1007 = vcombine.high %v887, %v887
      %v1008 = vcombine.low %v888, %v889
      %v1009 = vcombine.high %v888, %v889
      %v1010 = vcombine.low %v890, %v891
      %v1011 = vcombine.high %v890, %v891
      %v1012 = vcombine.high %v892, %v892
      %v1013 = vcombine.low %v893, %v894
      %v1014 = vcombine.high %v893, %v894
      %v1015 = vcombine.low %v895, %v896
      %v1016 = vcombine.high %v895, %v896
      %v1017 = vcombine.high %v897, %v897
      %v1018 = vcombine.low %v898, %v899
      %v1019 = vcombine.high %v898, %v899
      %v1020 = vcombine.low %v900, %v901
      %v1021 = vcombine.high %v900, %v901
      %v1022 = vcombine.high %v902, %v902
      %v1023 = vcombine.low %v903, %v904
      %v1024 = vcombine.high %v903, %v904
      %v1025 = vcombine.low %v905, %v906
      %v1026 = vcombine.high %v905, %v906
      %v1027 = vcombine.high %v907, %v907
      %v1028 = vcombine.low %v908, %v909
      %v1029 = vcombine.high %v908, %v909
      %v1030 = vcombine.low %v910, %v911
      %v1031 = vcombine.high %v910, %v911
      %v1032 = vcombine.high %v912, %v912
      %v1033 = vcombine.low %v913, %v914
      %v1034 = vcombine.high %v913, %v914
      %v1035 = vcombine.low %v915, %v916
      %v1036 = vcombine.high %v915, %v916
      %v1037 = vcombine.high %v917, %v917
      %v1038 = vcombine.low %v918, %v919
      %v1039 = vcombine.high %v918, %v919
      %v1040 = vcombine.low %v920, %v921
      %v1041 = vcombine.high %v920, %v921
      %v1042 = vcombine.high %v922, %v922
      %1143 = vst [vmem:[#allocation2] sm:$0xff] %v943
      %vm1144 = vcmask 130048
      %1145 = vst.msk [vmem:[#allocation2 + $0x8] sm:$0xff] %vm1144, %v944
      %1146 = vst [vmem:[#allocation2 + $0x10] sm:$0xff] %v945
      %1147 = vst.msk [vmem:[#allocation2 + $0x18] sm:$0xff] %vm1144, %v946
      %1148 = vst [vmem:[#allocation2 + $0x20] sm:$0xf] %v827
      %vm1149 = vcmask 125952
      %1150 = vst.msk [vmem:[#allocation2 + $0x28] sm:$0xf] %vm1149, %v947
      %1151 = vst [vmem:[#allocation2 + $0x30] sm:$0xff] %v948
      %1152 = vst.msk [vmem:[#allocation2 + $0x38] sm:$0xff] %vm1144, %v949
      %1153 = vst [vmem:[#allocation2 + $0x40] sm:$0xff] %v950
      %1154 = vst.msk [vmem:[#allocation2 + $0x48] sm:$0xff] %vm1144, %v951
      %1155 = vst [vmem:[#allocation2 + $0x50] sm:$0xf] %v832
      %1156 = vst.msk [vmem:[#allocation2 + $0x58] sm:$0xf] %vm1149, %v952
      %1157 = vst [vmem:[#allocation2 + $0x60] sm:$0xff] %v953
      %1158 = vst.msk [vmem:[#allocation2 + $0x68] sm:$0xff] %vm1144, %v954
      %1159 = vst [vmem:[#allocation2 + $0x70] sm:$0xff] %v955
      %1160 = vst.msk [vmem:[#allocation2 + $0x78] sm:$0xff] %vm1144, %v956
      %1161 = vst [vmem:[#allocation2 + $0x80] sm:$0xf] %v837
      %1162 = vst.msk [vmem:[#allocation2 + $0x88] sm:$0xf] %vm1149, %v957
      %1163 = vst [vmem:[#allocation2 + $0x90] sm:$0xff] %v958
      %1164 = vst.msk [vmem:[#allocation2 + $0x98] sm:$0xff] %vm1144, %v959
      %1165 = vst [vmem:[#allocation2 + $0xa0] sm:$0xff] %v960
      %1166 = vst.msk [vmem:[#allocation2 + $0xa8] sm:$0xff] %vm1144, %v961
      %1167 = vst [vmem:[#allocation2 + $0xb0] sm:$0xf] %v842
      %1168 = vst.msk [vmem:[#allocation2 + $0xb8] sm:$0xf] %vm1149, %v962
      %1169 = vst [vmem:[#allocation2 + $0xc0] sm:$0xff] %v963
      %1170 = vst.msk [vmem:[#allocation2 + $0xc8] sm:$0xff] %vm1144, %v964
      %1171 = vst [vmem:[#allocation2 + $0xd0] sm:$0xff] %v965
      %1172 = vst.msk [vmem:[#allocation2 + $0xd8] sm:$0xff] %vm1144, %v966
      %1173 = vst [vmem:[#allocation2 + $0xe0] sm:$0xf] %v847
      %1174 = vst.msk [vmem:[#allocation2 + $0xe8] sm:$0xf] %vm1149, %v967
      %1175 = vst [vmem:[#allocation2 + $0xf0] sm:$0xff] %v968
      %1176 = vst.msk [vmem:[#allocation2 + $0xf8] sm:$0xff] %vm1144, %v969
      %1177 = vst [vmem:[#allocation2 + $0x100] sm:$0xff] %v970
      %1178 = vst.msk [vmem:[#allocation2 + $0x108] sm:$0xff] %vm1144, %v971
      %1179 = vst [vmem:[#allocation2 + $0x110] sm:$0xf] %v852
      %1180 = vst.msk [vmem:[#allocation2 + $0x118] sm:$0xf] %vm1149, %v972
      %1181 = vst [vmem:[#allocation2 + $0x120] sm:$0xff] %v973
      %1182 = vst.msk [vmem:[#allocation2 + $0x128] sm:$0xff] %vm1144, %v974
      %1183 = vst [vmem:[#allocation2 + $0x130] sm:$0xff] %v975
      %1184 = vst.msk [vmem:[#allocation2 + $0x138] sm:$0xff] %vm1144, %v976
      %1185 = vst [vmem:[#allocation2 + $0x140] sm:$0xf] %v857
      %1186 = vst.msk [vmem:[#allocation2 + $0x148] sm:$0xf] %vm1149, %v977
      %1187 = vst [vmem:[#allocation2 + $0x150] sm:$0xff] %v978
      %1188 = vst.msk [vmem:[#allocation2 + $0x158] sm:$0xff] %vm1144, %v979
      %1189 = vst [vmem:[#allocation2 + $0x160] sm:$0xff] %v980
      %1190 = vst.msk [vmem:[#allocation2 + $0x168] sm:$0xff] %vm1144, %v981
      %1191 = vst [vmem:[#allocation2 + $0x170] sm:$0xf] %v862
      %1192 = vst.msk [vmem:[#allocation2 + $0x178] sm:$0xf] %vm1149, %v982
      %1193 = vst [vmem:[#allocation2 + $0x180] sm:$0xff] %v983
      %1194 = vst.msk [vmem:[#allocation2 + $0x188] sm:$0xff] %vm1144, %v984
      %1195 = vst [vmem:[#allocation2 + $0x190] sm:$0xff] %v985
      %1196 = vst.msk [vmem:[#allocation2 + $0x198] sm:$0xff] %vm1144, %v986
      %1197 = vst [vmem:[#allocation2 + $0x1a0] sm:$0xf] %v867
      %1198 = vst.msk [vmem:[#allocation2 + $0x1a8] sm:$0xf] %vm1149, %v987
      %1199 = vst [vmem:[#allocation2 + $0x1b0] sm:$0xff] %v988
      %1200 = vst.msk [vmem:[#allocation2 + $0x1b8] sm:$0xff] %vm1144, %v989
      %1201 = vst [vmem:[#allocation2 + $0x1c0] sm:$0xff] %v990
      %1202 = vst.msk [vmem:[#allocation2 + $0x1c8] sm:$0xff] %vm1144, %v991
      %1203 = vst [vmem:[#allocation2 + $0x1d0] sm:$0xf] %v872
      %1204 = vst.msk [vmem:[#allocation2 + $0x1d8] sm:$0xf] %vm1149, %v992
      %1205 = vst [vmem:[#allocation2 + $0x1e0] sm:$0xff] %v993
      %1206 = vst.msk [vmem:[#allocation2 + $0x1e8] sm:$0xff] %vm1144, %v994
      %1207 = vst [vmem:[#allocation2 + $0x1f0] sm:$0xff] %v995
      %1208 = vst.msk [vmem:[#allocation2 + $0x1f8] sm:$0xff] %vm1144, %v996
      %1209 = vst [vmem:[#allocation2 + $0x200] sm:$0xf] %v877
      %1210 = vst.msk [vmem:[#allocation2 + $0x208] sm:$0xf] %vm1149, %v997
      %1211 = vst [vmem:[#allocation2 + $0x210] sm:$0xff] %v998
      %1212 = vst.msk [vmem:[#allocation2 + $0x218] sm:$0xff] %vm1144, %v999
      %1213 = vst [vmem:[#allocation2 + $0x220] sm:$0xff] %v1000
      %1214 = vst.msk [vmem:[#allocation2 + $0x228] sm:$0xff] %vm1144, %v1001
      %1215 = vst [vmem:[#allocation2 + $0x230] sm:$0xf] %v882
      %1216 = vst.msk [vmem:[#allocation2 + $0x238] sm:$0xf] %vm1149, %v1002
      %1217 = vst [vmem:[#allocation2 + $0x240] sm:$0xff] %v1003
      %1218 = vst.msk [vmem:[#allocation2 + $0x248] sm:$0xff] %vm1144, %v1004
      %1219 = vst [vmem:[#allocation2 + $0x250] sm:$0xff] %v1005
      %1220 = vst.msk [vmem:[#allocation2 + $0x258] sm:$0xff] %vm1144, %v1006
      %1221 = vst [vmem:[#allocation2 + $0x260] sm:$0xf] %v887
      %1222 = vst.msk [vmem:[#allocation2 + $0x268] sm:$0xf] %vm1149, %v1007
      %1223 = vst [vmem:[#allocation2 + $0x270] sm:$0xff] %v1008
      %1224 = vst.msk [vmem:[#allocation2 + $0x278] sm:$0xff] %vm1144, %v1009
      %1225 = vst [vmem:[#allocation2 + $0x280] sm:$0xff] %v1010
      %1226 = vst.msk [vmem:[#allocation2 + $0x288] sm:$0xff] %vm1144, %v1011
      %1227 = vst [vmem:[#allocation2 + $0x290] sm:$0xf] %v892
      %1228 = vst.msk [vmem:[#allocation2 + $0x298] sm:$0xf] %vm1149, %v1012
      %1229 = vst [vmem:[#allocation2 + $0x2a0] sm:$0xff] %v1013
      %1230 = vst.msk [vmem:[#allocation2 + $0x2a8] sm:$0xff] %vm1144, %v1014
      %1231 = vst [vmem:[#allocation2 + $0x2b0] sm:$0xff] %v1015
      %1232 = vst.msk [vmem:[#allocation2 + $0x2b8] sm:$0xff] %vm1144, %v1016
      %1233 = vst [vmem:[#allocation2 + $0x2c0] sm:$0xf] %v897
      %1234 = vst.msk [vmem:[#allocation2 + $0x2c8] sm:$0xf] %vm1149, %v1017
      %1235 = vst [vmem:[#allocation2 + $0x2d0] sm:$0xff] %v1018
      %1236 = vst.msk [vmem:[#allocation2 + $0x2d8] sm:$0xff] %vm1144, %v1019
      %1237 = vst [vmem:[#allocation2 + $0x2e0] sm:$0xff] %v1020
      %1238 = vst.msk [vmem:[#allocation2 + $0x2e8] sm:$0xff] %vm1144, %v1021
      %1239 = vst [vmem:[#allocation2 + $0x2f0] sm:$0xf] %v902
      %1240 = vst.msk [vmem:[#allocation2 + $0x2f8] sm:$0xf] %vm1149, %v1022
      %1241 = vst [vmem:[#allocation2 + $0x300] sm:$0xff] %v1023
      %1242 = vst.msk [vmem:[#allocation2 + $0x308] sm:$0xff] %vm1144, %v1024
      %1243 = vst [vmem:[#allocation2 + $0x310] sm:$0xff] %v1025
      %1244 = vst.msk [vmem:[#allocation2 + $0x318] sm:$0xff] %vm1144, %v1026
      %1245 = vst [vmem:[#allocation2 + $0x320] sm:$0xf] %v907
      %1246 = vst.msk [vmem:[#allocation2 + $0x328] sm:$0xf] %vm1149, %v1027
      %1247 = vst [vmem:[#allocation2 + $0x330] sm:$0xff] %v1028
      %1248 = vst.msk [vmem:[#allocation2 + $0x338] sm:$0xff] %vm1144, %v1029
      %1249 = vst [vmem:[#allocation2 + $0x340] sm:$0xff] %v1030
      %1250 = vst.msk [vmem:[#allocation2 + $0x348] sm:$0xff] %vm1144, %v1031
      %1251 = vst [vmem:[#allocation2 + $0x350] sm:$0xf] %v912
      %1252 = vst.msk [vmem:[#allocation2 + $0x358] sm:$0xf] %vm1149, %v1032
      %1253 = vst [vmem:[#allocation2 + $0x360] sm:$0xff] %v1033
      %1254 = vst.msk [vmem:[#allocation2 + $0x368] sm:$0xff] %vm1144, %v1034
      %1255 = vst [vmem:[#allocation2 + $0x370] sm:$0xff] %v1035
      %1256 = vst.msk [vmem:[#allocation2 + $0x378] sm:$0xff] %vm1144, %v1036
      %1257 = vst [vmem:[#allocation2 + $0x380] sm:$0xf] %v917
      %1258 = vst.msk [vmem:[#allocation2 + $0x388] sm:$0xf] %vm1149, %v1037
      %1259 = vst [vmem:[#allocation2 + $0x390] sm:$0xff] %v1038
      %1260 = vst.msk [vmem:[#allocation2 + $0x398] sm:$0xff] %vm1144, %v1039
      %1261 = vst [vmem:[#allocation2 + $0x3a0] sm:$0xff] %v1040
      %1262 = vst.msk [vmem:[#allocation2 + $0x3a8] sm:$0xff] %vm1144, %v1041
      %1263 = vst [vmem:[#allocation2 + $0x3b0] sm:$0xf] %v922
      %1264 = vst.msk [vmem:[#allocation2 + $0x3b8] sm:$0xf] %vm1149, %v1042
      %v1265 = vld [vmem:[%s2] sm:$0x1]
      %s1266 = scalar_lea.vmem [#allocation2], 48
      %v1267 = vld [vmem:[%s1266] sm:$0xfe]
      %v1268 = vld [vmem:[%s1266 + $0x10] sm:$0xff]
      %v1269 = vld [vmem:[%s1266 + $0x20] sm:$0x1]
      %v1270 = vld [vmem:[%s1266 + $0x30] sm:$0xfe]
      %v1271 = vld [vmem:[%s1266 + $0x40] sm:$0xff]
      %v1272 = vld [vmem:[%s1266 + $0x50] sm:$0x1]
      %v1273 = vld [vmem:[%s1266 + $0x60] sm:$0xfe]
      %v1274 = vld [vmem:[%s1266 + $0x70] sm:$0xff]
      %v1275 = vld [vmem:[%s1266 + $0x80] sm:$0x1]
      %v1276 = vld [vmem:[%s1266 + $0x90] sm:$0xfe]
      %v1277 = vld [vmem:[%s1266 + $0xa0] sm:$0xff]
      %v1278 = vld [vmem:[%s1266 + $0xb0] sm:$0x1]
      %v1279 = vld [vmem:[%s1266 + $0xc0] sm:$0xfe]
      %v1280 = vld [vmem:[%s1266 + $0xd0] sm:$0xff]
      %v1281 = vld [vmem:[%s1266 + $0xe0] sm:$0x1]
      %v1282 = vld [vmem:[%s1266 + $0xf0] sm:$0xfe]
      %v1283 = vld [vmem:[%s1266 + $0x100] sm:$0xff]
      %v1284 = vld [vmem:[%s1266 + $0x110] sm:$0x1]
      %v1285 = vld [vmem:[%s1266 + $0x120] sm:$0xfe]
      %v1286 = vld [vmem:[%s1266 + $0x130] sm:$0xff]
      %v1287 = vld [vmem:[%s1266 + $0x140] sm:$0x1]
      %v1288 = vld [vmem:[%s1266 + $0x150] sm:$0xfe]
      %v1289 = vld [vmem:[%s1266 + $0x160] sm:$0xff]
      %v1290 = vld [vmem:[%s1266 + $0x170] sm:$0x1]
      %v1291 = vld [vmem:[%s1266 + $0x180] sm:$0xfe]
      %v1292 = vld [vmem:[%s1266 + $0x190] sm:$0xff]
      %v1293 = vld [vmem:[%s1266 + $0x1a0] sm:$0x1]
      %v1294 = vld [vmem:[%s1266 + $0x1b0] sm:$0xfe]
      %v1295 = vld [vmem:[%s1266 + $0x1c0] sm:$0xff]
      %v1296 = vld [vmem:[%s1266 + $0x1d0] sm:$0x1]
      %v1297 = vld [vmem:[%s1266 + $0x1e0] sm:$0xfe]
      %v1298 = vld [vmem:[%s1266 + $0x1f0] sm:$0xff]
      %v1299 = vld [vmem:[%s1266 + $0x200] sm:$0x1]
      %v1300 = vld [vmem:[%s1266 + $0x210] sm:$0xfe]
      %v1301 = vld [vmem:[%s1266 + $0x220] sm:$0xff]
      %v1302 = vld [vmem:[%s1266 + $0x230] sm:$0x1]
      %v1303 = vld [vmem:[%s1266 + $0x240] sm:$0xfe]
      %v1304 = vld [vmem:[%s1266 + $0x250] sm:$0xff]
      %v1305 = vld [vmem:[%s1266 + $0x260] sm:$0x1]
      %v1306 = vld [vmem:[%s1266 + $0x270] sm:$0xfe]
      %v1307 = vld [vmem:[%s1266 + $0x280] sm:$0xff]
      %v1308 = vld [vmem:[%s1266 + $0x290] sm:$0x1]
      %v1309 = vld [vmem:[%s1266 + $0x2a0] sm:$0xfe]
      %v1310 = vld [vmem:[%s1266 + $0x2b0] sm:$0xff]
      %v1311 = vld [vmem:[%s1266 + $0x2c0] sm:$0x1]
      %v1312 = vld [vmem:[%s1266 + $0x2d0] sm:$0xfe]
      %v1313 = vld [vmem:[%s1266 + $0x2e0] sm:$0xff]
      %v1314 = vld [vmem:[%s1266 + $0x2f0] sm:$0x1]
      %v1316 = vlaneseq
      %v1317 = vshrl.u32 %v1316, 7
      %v1318 = vsub.s32 0, %v1317
      %v1319 = vrot.slane %v1265, %v1318
      %v1321 = vadd.f32 %v1267, %v1319
      %v1322 = vadd.f32 %v1268, %v1319
      %v1323 = vadd.f32 %v1269, %v1319
      %v1324 = vadd.f32 %v1270, %v1319
      %v1325 = vadd.f32 %v1271, %v1319
      %v1326 = vadd.f32 %v1272, %v1319
      %v1327 = vadd.f32 %v1273, %v1319
      %v1328 = vadd.f32 %v1274, %v1319
      %v1329 = vadd.f32 %v1275, %v1319
      %v1330 = vadd.f32 %v1276, %v1319
      %v1331 = vadd.f32 %v1277, %v1319
      %v1332 = vadd.f32 %v1278, %v1319
      %v1333 = vadd.f32 %v1279, %v1319
      %v1334 = vadd.f32 %v1280, %v1319
      %v1335 = vadd.f32 %v1281, %v1319
      %v1336 = vadd.f32 %v1282, %v1319
      %v1337 = vadd.f32 %v1283, %v1319
      %v1338 = vadd.f32 %v1284, %v1319
      %v1339 = vadd.f32 %v1285, %v1319
      %v1340 = vadd.f32 %v1286, %v1319
      %v1341 = vadd.f32 %v1287, %v1319
      %v1342 = vadd.f32 %v1288, %v1319
      %v1343 = vadd.f32 %v1289, %v1319
      %v1344 = vadd.f32 %v1290, %v1319
      %v1345 = vadd.f32 %v1291, %v1319
      %v1346 = vadd.f32 %v1292, %v1319
      %v1347 = vadd.f32 %v1293, %v1319
      %v1348 = vadd.f32 %v1294, %v1319
      %v1349 = vadd.f32 %v1295, %v1319
      %v1350 = vadd.f32 %v1296, %v1319
      %v1351 = vadd.f32 %v1297, %v1319
      %v1352 = vadd.f32 %v1298, %v1319
      %v1353 = vadd.f32 %v1299, %v1319
      %v1354 = vadd.f32 %v1300, %v1319
      %v1355 = vadd.f32 %v1301, %v1319
      %v1356 = vadd.f32 %v1302, %v1319
      %v1357 = vadd.f32 %v1303, %v1319
      %v1358 = vadd.f32 %v1304, %v1319
      %v1359 = vadd.f32 %v1305, %v1319
      %v1360 = vadd.f32 %v1306, %v1319
      %v1361 = vadd.f32 %v1307, %v1319
      %v1362 = vadd.f32 %v1308, %v1319
      %v1363 = vadd.f32 %v1309, %v1319
      %v1364 = vadd.f32 %v1310, %v1319
      %v1365 = vadd.f32 %v1311, %v1319
      %v1366 = vadd.f32 %v1312, %v1319
      %v1367 = vadd.f32 %v1313, %v1319
      %v1368 = vadd.f32 %v1314, %v1319
      %vm1369 = vcmask 64513
      %1370 = vst.msk [vmem:[#allocation3 - $0x1] sm:$0xfe] %vm1369, %v1321
      %vm1371 = vcmask 64512
      %1372 = vst.msk [vmem:[#allocation3 + $0x7] sm:$0xff] %vm1371, %v1322
      %vm1373 = vcmask 57344
      %1374 = vst.msk [vmem:[#allocation3 + $0xf] sm:$0x1] %vm1373, %v1323
      %1375 = vst.msk [vmem:[#allocation3 + $0xf] sm:$0xfe] %vm1369, %v1324
      %1376 = vst.msk [vmem:[#allocation3 + $0x17] sm:$0xff] %vm1371, %v1325
      %1377 = vst.msk [vmem:[#allocation3 + $0x1f] sm:$0x1] %vm1373, %v1326
      %1378 = vst.msk [vmem:[#allocation3 + $0x1f] sm:$0xfe] %vm1369, %v1327
      %1379 = vst.msk [vmem:[#allocation3 + $0x27] sm:$0xff] %vm1371, %v1328
      %1380 = vst.msk [vmem:[#allocation3 + $0x2f] sm:$0x1] %vm1373, %v1329
      %1381 = vst.msk [vmem:[#allocation3 + $0x2f] sm:$0xfe] %vm1369, %v1330
      %1382 = vst.msk [vmem:[#allocation3 + $0x37] sm:$0xff] %vm1371, %v1331
      %1383 = vst.msk [vmem:[#allocation3 + $0x3f] sm:$0x1] %vm1373, %v1332
      %1384 = vst.msk [vmem:[#allocation3 + $0x3f] sm:$0xfe] %vm1369, %v1333
      %1385 = vst.msk [vmem:[#allocation3 + $0x47] sm:$0xff] %vm1371, %v1334
      %1386 = vst.msk [vmem:[#allocation3 + $0x4f] sm:$0x1] %vm1373, %v1335
      %1387 = vst.msk [vmem:[#allocation3 + $0x4f] sm:$0xfe] %vm1369, %v1336
      %1388 = vst.msk [vmem:[#allocation3 + $0x57] sm:$0xff] %vm1371, %v1337
      %1389 = vst.msk [vmem:[#allocation3 + $0x5f] sm:$0x1] %vm1373, %v1338
      %1390 = vst.msk [vmem:[#allocation3 + $0x5f] sm:$0xfe] %vm1369, %v1339
      %1391 = vst.msk [vmem:[#allocation3 + $0x67] sm:$0xff] %vm1371, %v1340
      %1392 = vst.msk [vmem:[#allocation3 + $0x6f] sm:$0x1] %vm1373, %v1341
      %1393 = vst.msk [vmem:[#allocation3 + $0x6f] sm:$0xfe] %vm1369, %v1342
      %1394 = vst.msk [vmem:[#allocation3 + $0x77] sm:$0xff] %vm1371, %v1343
      %1395 = vst.msk [vmem:[#allocation3 + $0x7f] sm:$0x1] %vm1373, %v1344
      %1396 = vst.msk [vmem:[#allocation3 + $0x7f] sm:$0xfe] %vm1369, %v1345
      %1397 = vst.msk [vmem:[#allocation3 + $0x87] sm:$0xff] %vm1371, %v1346
      %1398 = vst.msk [vmem:[#allocation3 + $0x8f] sm:$0x1] %vm1373, %v1347
      %1399 = vst.msk [vmem:[#allocation3 + $0x8f] sm:$0xfe] %vm1369, %v1348
      %1400 = vst.msk [vmem:[#allocation3 + $0x97] sm:$0xff] %vm1371, %v1349
      %1401 = vst.msk [vmem:[#allocation3 + $0x9f] sm:$0x1] %vm1373, %v1350
      %1402 = vst.msk [vmem:[#allocation3 + $0x9f] sm:$0xfe] %vm1369, %v1351
      %1403 = vst.msk [vmem:[#allocation3 + $0xa7] sm:$0xff] %vm1371, %v1352
      %1404 = vst.msk [vmem:[#allocation3 + $0xaf] sm:$0x1] %vm1373, %v1353
      %1405 = vst.msk [vmem:[#allocation3 + $0xaf] sm:$0xfe] %vm1369, %v1354
      %1406 = vst.msk [vmem:[#allocation3 + $0xb7] sm:$0xff] %vm1371, %v1355
      %1407 = vst.msk [vmem:[#allocation3 + $0xbf] sm:$0x1] %vm1373, %v1356
      %1408 = vst.msk [vmem:[#allocation3 + $0xbf] sm:$0xfe] %vm1369, %v1357
      %1409 = vst.msk [vmem:[#allocation3 + $0xc7] sm:$0xff] %vm1371, %v1358
      %1410 = vst.msk [vmem:[#allocation3 + $0xcf] sm:$0x1] %vm1373, %v1359
      %1411 = vst.msk [vmem:[#allocation3 + $0xcf] sm:$0xfe] %vm1369, %v1360
      %1412 = vst.msk [vmem:[#allocation3 + $0xd7] sm:$0xff] %vm1371, %v1361
      %1413 = vst.msk [vmem:[#allocation3 + $0xdf] sm:$0x1] %vm1373, %v1362
      %1414 = vst.msk [vmem:[#allocation3 + $0xdf] sm:$0xfe] %vm1369, %v1363
      %1415 = vst.msk [vmem:[#allocation3 + $0xe7] sm:$0xff] %vm1371, %v1364
      %1416 = vst.msk [vmem:[#allocation3 + $0xef] sm:$0x1] %vm1373, %v1365
      %1417 = vst.msk [vmem:[#allocation3 + $0xef] sm:$0xfe] %vm1369, %v1366
      %1418 = vst.msk [vmem:[#allocation3 + $0xf7] sm:$0xff] %vm1371, %v1367
      %1419 = vst.msk [vmem:[#allocation3 + $0xff] sm:$0x1] %vm1373, %v1368
      %v1420 = vld [vmem:[#allocation3] sm:$0xff]
      %v1421 = vld [vmem:[#allocation3 + $0x8] sm:$0xff]
      %v1422 = vld [vmem:[#allocation3 + $0x10] sm:$0xff]
      %v1423 = vld [vmem:[#allocation3 + $0x18] sm:$0xff]
      %v1424 = vld [vmem:[#allocation3 + $0x20] sm:$0xff]
      %v1425 = vld [vmem:[#allocation3 + $0x28] sm:$0xff]
      %v1426 = vld [vmem:[#allocation3 + $0x30] sm:$0xff]
      %v1427 = vld [vmem:[#allocation3 + $0x38] sm:$0xff]
      %v1428 = vld [vmem:[#allocation3 + $0x40] sm:$0xff]
      %v1429 = vld [vmem:[#allocation3 + $0x48] sm:$0xff]
      %v1430 = vld [vmem:[#allocation3 + $0x50] sm:$0xff]
      %v1431 = vld [vmem:[#allocation3 + $0x58] sm:$0xff]
      %v1432 = vld [vmem:[#allocation3 + $0x60] sm:$0xff]
      %v1433 = vld [vmem:[#allocation3 + $0x68] sm:$0xff]
      %v1434 = vld [vmem:[#allocation3 + $0x70] sm:$0xff]
      %v1435 = vld [vmem:[#allocation3 + $0x78] sm:$0xff]
      %v1436 = vld [vmem:[#allocation3 + $0x80] sm:$0xff]
      %v1437 = vld [vmem:[#allocation3 + $0x88] sm:$0xff]
      %v1438 = vld [vmem:[#allocation3 + $0x90] sm:$0xff]
      %v1439 = vld [vmem:[#allocation3 + $0x98] sm:$0xff]
      %v1440 = vld [vmem:[#allocation3 + $0xa0] sm:$0xff]
      %v1441 = vld [vmem:[#allocation3 + $0xa8] sm:$0xff]
      %v1442 = vld [vmem:[#allocation3 + $0xb0] sm:$0xff]
      %v1443 = vld [vmem:[#allocation3 + $0xb8] sm:$0xff]
      %v1444 = vld [vmem:[#allocation3 + $0xc0] sm:$0xff]
      %v1445 = vld [vmem:[#allocation3 + $0xc8] sm:$0xff]
      %v1446 = vld [vmem:[#allocation3 + $0xd0] sm:$0xff]
      %v1447 = vld [vmem:[#allocation3 + $0xd8] sm:$0xff]
      %v1448 = vld [vmem:[#allocation3 + $0xe0] sm:$0xff]
      %v1449 = vld [vmem:[#allocation3 + $0xe8] sm:$0xff]
      %v1450 = vld [vmem:[#allocation3 + $0xf0] sm:$0xff]
      %v1451 = vld [vmem:[#allocation3 + $0xf8] sm:$0xff]
      %v1452 = vld [vmem:[%s1266] sm:$0xfc]
      %v1453 = vld [vmem:[%s1266 + $0x10] sm:$0xff]
      %v1454 = vld [vmem:[%s1266 + $0x20] sm:$0x3]
      %v1455 = vld [vmem:[%s1266 + $0x30] sm:$0xfc]
      %v1456 = vld [vmem:[%s1266 + $0x40] sm:$0xff]
      %v1457 = vld [vmem:[%s1266 + $0x50] sm:$0x3]
      %v1458 = vld [vmem:[%s1266 + $0x60] sm:$0xfc]
      %v1459 = vld [vmem:[%s1266 + $0x70] sm:$0xff]
      %v1460 = vld [vmem:[%s1266 + $0x80] sm:$0x3]
      %v1461 = vld [vmem:[%s1266 + $0x90] sm:$0xfc]
      %v1462 = vld [vmem:[%s1266 + $0xa0] sm:$0xff]
      %v1463 = vld [vmem:[%s1266 + $0xb0] sm:$0x3]
      %v1464 = vld [vmem:[%s1266 + $0xc0] sm:$0xfc]
      %v1465 = vld [vmem:[%s1266 + $0xd0] sm:$0xff]
      %v1466 = vld [vmem:[%s1266 + $0xe0] sm:$0x3]
      %v1467 = vld [vmem:[%s1266 + $0xf0] sm:$0xfc]
      %v1468 = vld [vmem:[%s1266 + $0x100] sm:$0xff]
      %v1469 = vld [vmem:[%s1266 + $0x110] sm:$0x3]
      %v1470 = vld [vmem:[%s1266 + $0x120] sm:$0xfc]
      %v1471 = vld [vmem:[%s1266 + $0x130] sm:$0xff]
      %v1472 = vld [vmem:[%s1266 + $0x140] sm:$0x3]
      %v1473 = vld [vmem:[%s1266 + $0x150] sm:$0xfc]
      %v1474 = vld [vmem:[%s1266 + $0x160] sm:$0xff]
      %v1475 = vld [vmem:[%s1266 + $0x170] sm:$0x3]
      %v1476 = vld [vmem:[%s1266 + $0x180] sm:$0xfc]
      %v1477 = vld [vmem:[%s1266 + $0x190] sm:$0xff]
      %v1478 = vld [vmem:[%s1266 + $0x1a0] sm:$0x3]
      %v1479 = vld [vmem:[%s1266 + $0x1b0] sm:$0xfc]
      %v1480 = vld [vmem:[%s1266 + $0x1c0] sm:$0xff]
      %v1481 = vld [vmem:[%s1266 + $0x1d0] sm:$0x3]
      %v1482 = vld [vmem:[%s1266 + $0x1e0] sm:$0xfc]
      %v1483 = vld [vmem:[%s1266 + $0x1f0] sm:$0xff]
      %v1484 = vld [vmem:[%s1266 + $0x200] sm:$0x3]
      %v1485 = vld [vmem:[%s1266 + $0x210] sm:$0xfc]
      %v1486 = vld [vmem:[%s1266 + $0x220] sm:$0xff]
      %v1487 = vld [vmem:[%s1266 + $0x230] sm:$0x3]
      %v1488 = vld [vmem:[%s1266 + $0x240] sm:$0xfc]
      %v1489 = vld [vmem:[%s1266 + $0x250] sm:$0xff]
      %v1490 = vld [vmem:[%s1266 + $0x260] sm:$0x3]
      %v1491 = vld [vmem:[%s1266 + $0x270] sm:$0xfc]
      %v1492 = vld [vmem:[%s1266 + $0x280] sm:$0xff]
      %v1493 = vld [vmem:[%s1266 + $0x290] sm:$0x3]
      %v1494 = vld [vmem:[%s1266 + $0x2a0] sm:$0xfc]
      %v1495 = vld [vmem:[%s1266 + $0x2b0] sm:$0xff]
      %v1496 = vld [vmem:[%s1266 + $0x2c0] sm:$0x3]
      %v1497 = vld [vmem:[%s1266 + $0x2d0] sm:$0xfc]
      %v1498 = vld [vmem:[%s1266 + $0x2e0] sm:$0xff]
      %v1499 = vld [vmem:[%s1266 + $0x2f0] sm:$0x3]
      %vm1548 = vcmask 1045504
      %v1549 = vrot.slane %v1452, 2
      %v1550 = vrot.slane %v1453, 2
      %v1551 = vsel %vm1548, %v1549, %v1550
      %v1552 = vrot.slane %v1454, 2
      %v1553 = vsel %vm1548, %v1550, %v1552
      %v1554 = vrot.slane %v1455, 2
      %v1555 = vrot.slane %v1456, 2
      %v1556 = vsel %vm1548, %v1554, %v1555
      %v1557 = vrot.slane %v1457, 2
      %v1558 = vsel %vm1548, %v1555, %v1557
      %v1559 = vrot.slane %v1458, 2
      %v1560 = vrot.slane %v1459, 2
      %v1561 = vsel %vm1548, %v1559, %v1560
      %v1562 = vrot.slane %v1460, 2
      %v1563 = vsel %vm1548, %v1560, %v1562
      %v1564 = vrot.slane %v1461, 2
      %v1565 = vrot.slane %v1462, 2
      %v1566 = vsel %vm1548, %v1564, %v1565
      %v1567 = vrot.slane %v1463, 2
      %v1568 = vsel %vm1548, %v1565, %v1567
      %v1569 = vrot.slane %v1464, 2
      %v1570 = vrot.slane %v1465, 2
      %v1571 = vsel %vm1548, %v1569, %v1570
      %v1572 = vrot.slane %v1466, 2
      %v1573 = vsel %vm1548, %v1570, %v1572
      %v1574 = vrot.slane %v1467, 2
      %v1575 = vrot.slane %v1468, 2
      %v1576 = vsel %vm1548, %v1574, %v1575
      %v1577 = vrot.slane %v1469, 2
      %v1578 = vsel %vm1548, %v1575, %v1577
      %v1579 = vrot.slane %v1470, 2
      %v1580 = vrot.slane %v1471, 2
      %v1581 = vsel %vm1548, %v1579, %v1580
      %v1582 = vrot.slane %v1472, 2
      %v1583 = vsel %vm1548, %v1580, %v1582
      %v1584 = vrot.slane %v1473, 2
      %v1585 = vrot.slane %v1474, 2
      %v1586 = vsel %vm1548, %v1584, %v1585
      %v1587 = vrot.slane %v1475, 2
      %v1588 = vsel %vm1548, %v1585, %v1587
      %v1589 = vrot.slane %v1476, 2
      %v1590 = vrot.slane %v1477, 2
      %v1591 = vsel %vm1548, %v1589, %v1590
      %v1592 = vrot.slane %v1478, 2
      %v1593 = vsel %vm1548, %v1590, %v1592
      %v1594 = vrot.slane %v1479, 2
      %v1595 = vrot.slane %v1480, 2
      %v1596 = vsel %vm1548, %v1594, %v1595
      %v1597 = vrot.slane %v1481, 2
      %v1598 = vsel %vm1548, %v1595, %v1597
      %v1599 = vrot.slane %v1482, 2
      %v1600 = vrot.slane %v1483, 2
      %v1601 = vsel %vm1548, %v1599, %v1600
      %v1602 = vrot.slane %v1484, 2
      %v1603 = vsel %vm1548, %v1600, %v1602
      %v1604 = vrot.slane %v1485, 2
      %v1605 = vrot.slane %v1486, 2
      %v1606 = vsel %vm1548, %v1604, %v1605
      %v1607 = vrot.slane %v1487, 2
      %v1608 = vsel %vm1548, %v1605, %v1607
      %v1609 = vrot.slane %v1488, 2
      %v1610 = vrot.slane %v1489, 2
      %v1611 = vsel %vm1548, %v1609, %v1610
      %v1612 = vrot.slane %v1490, 2
      %v1613 = vsel %vm1548, %v1610, %v1612
      %v1614 = vrot.slane %v1491, 2
      %v1615 = vrot.slane %v1492, 2
      %v1616 = vsel %vm1548, %v1614, %v1615
      %v1617 = vrot.slane %v1493, 2
      %v1618 = vsel %vm1548, %v1615, %v1617
      %v1619 = vrot.slane %v1494, 2
      %v1620 = vrot.slane %v1495, 2
      %v1621 = vsel %vm1548, %v1619, %v1620
      %v1622 = vrot.slane %v1496, 2
      %v1623 = vsel %vm1548, %v1620, %v1622
      %v1624 = vrot.slane %v1497, 2
      %v1625 = vrot.slane %v1498, 2
      %v1626 = vsel %vm1548, %v1624, %v1625
      %v1627 = vrot.slane %v1499, 2
      %v1628 = vsel %vm1548, %v1625, %v1627
      %1629 = vrot.lane.b32.xlu0 %v1551, 120
      %v1630 = vpop.permute.xlu0 %1629
      %1631 = vrot.lane.b32.xlu0 %v1553, 120
      %v1632 = vpop.permute.xlu0 %1631
      %1633 = vrot.lane.b32.xlu0 %v1556, 120
      %v1634 = vpop.permute.xlu0 %1633
      %1635 = vrot.lane.b32.xlu0 %v1558, 120
      %v1636 = vpop.permute.xlu0 %1635
      %1637 = vrot.lane.b32.xlu0 %v1561, 120
      %v1638 = vpop.permute.xlu0 %1637
      %1639 = vrot.lane.b32.xlu0 %v1563, 120
      %v1640 = vpop.permute.xlu0 %1639
      %1641 = vrot.lane.b32.xlu0 %v1566, 120
      %v1642 = vpop.permute.xlu0 %1641
      %1643 = vrot.lane.b32.xlu0 %v1568, 120
      %v1644 = vpop.permute.xlu0 %1643
      %1645 = vrot.lane.b32.xlu0 %v1571, 120
      %v1646 = vpop.permute.xlu0 %1645
      %1647 = vrot.lane.b32.xlu0 %v1573, 120
      %v1648 = vpop.permute.xlu0 %1647
      %1649 = vrot.lane.b32.xlu0 %v1576, 120
      %v1650 = vpop.permute.xlu0 %1649
      %1651 = vrot.lane.b32.xlu0 %v1578, 120
      %v1652 = vpop.permute.xlu0 %1651
      %1653 = vrot.lane.b32.xlu0 %v1581, 120
      %v1654 = vpop.permute.xlu0 %1653
      %1655 = vrot.lane.b32.xlu0 %v1583, 120
      %v1656 = vpop.permute.xlu0 %1655
      %1657 = vrot.lane.b32.xlu0 %v1586, 120
      %v1658 = vpop.permute.xlu0 %1657
      %1659 = vrot.lane.b32.xlu0 %v1588, 120
      %v1660 = vpop.permute.xlu0 %1659
      %1661 = vrot.lane.b32.xlu0 %v1591, 120
      %v1662 = vpop.permute.xlu0 %1661
      %1663 = vrot.lane.b32.xlu0 %v1593, 120
      %v1664 = vpop.permute.xlu0 %1663
      %1665 = vrot.lane.b32.xlu0 %v1596, 120
      %v1666 = vpop.permute.xlu0 %1665
      %1667 = vrot.lane.b32.xlu0 %v1598, 120
      %v1668 = vpop.permute.xlu0 %1667
      %1669 = vrot.lane.b32.xlu0 %v1601, 120
      %v1670 = vpop.permute.xlu0 %1669
      %1671 = vrot.lane.b32.xlu0 %v1603, 120
      %v1672 = vpop.permute.xlu0 %1671
      %1673 = vrot.lane.b32.xlu0 %v1606, 120
      %v1674 = vpop.permute.xlu0 %1673
      %1675 = vrot.lane.b32.xlu0 %v1608, 120
      %v1676 = vpop.permute.xlu0 %1675
      %1677 = vrot.lane.b32.xlu0 %v1611, 120
      %v1678 = vpop.permute.xlu0 %1677
      %1679 = vrot.lane.b32.xlu0 %v1613, 120
      %v1680 = vpop.permute.xlu0 %1679
      %1681 = vrot.lane.b32.xlu0 %v1616, 120
      %v1682 = vpop.permute.xlu0 %1681
      %1683 = vrot.lane.b32.xlu0 %v1618, 120
      %v1684 = vpop.permute.xlu0 %1683
      %1685 = vrot.lane.b32.xlu0 %v1621, 120
      %v1686 = vpop.permute.xlu0 %1685
      %1687 = vrot.lane.b32.xlu0 %v1623, 120
      %v1688 = vpop.permute.xlu0 %1687
      %1689 = vrot.lane.b32.xlu0 %v1626, 120
      %v1690 = vpop.permute.xlu0 %1689
      %1691 = vrot.lane.b32.xlu0 %v1628, 120
      %v1692 = vpop.permute.xlu0 %1691
      %v1725 = vadd.f32 %v1420, %v1630
      %v1726 = vadd.f32 %v1421, %v1632
      %v1727 = vadd.f32 %v1422, %v1634
      %v1728 = vadd.f32 %v1423, %v1636
      %v1729 = vadd.f32 %v1424, %v1638
      %v1730 = vadd.f32 %v1425, %v1640
      %v1731 = vadd.f32 %v1426, %v1642
      %v1732 = vadd.f32 %v1427, %v1644
      %v1733 = vadd.f32 %v1428, %v1646
      %v1734 = vadd.f32 %v1429, %v1648
      %v1735 = vadd.f32 %v1430, %v1650
      %v1736 = vadd.f32 %v1431, %v1652
      %v1737 = vadd.f32 %v1432, %v1654
      %v1738 = vadd.f32 %v1433, %v1656
      %v1739 = vadd.f32 %v1434, %v1658
      %v1740 = vadd.f32 %v1435, %v1660
      %v1741 = vadd.f32 %v1436, %v1662
      %v1742 = vadd.f32 %v1437, %v1664
      %v1743 = vadd.f32 %v1438, %v1666
      %v1744 = vadd.f32 %v1439, %v1668
      %v1745 = vadd.f32 %v1440, %v1670
      %v1746 = vadd.f32 %v1441, %v1672
      %v1747 = vadd.f32 %v1442, %v1674
      %v1748 = vadd.f32 %v1443, %v1676
      %v1749 = vadd.f32 %v1444, %v1678
      %v1750 = vadd.f32 %v1445, %v1680
      %v1751 = vadd.f32 %v1446, %v1682
      %v1752 = vadd.f32 %v1447, %v1684
      %v1753 = vadd.f32 %v1448, %v1686
      %v1754 = vadd.f32 %v1449, %v1688
      %v1755 = vadd.f32 %v1450, %v1690
      %v1756 = vadd.f32 %v1451, %v1692
      %1757 = vst.msk [vmem:[#allocation3] sm:$0xff] %vm1371, %v1725
      %1758 = vst.msk [vmem:[#allocation3 + $0x8] sm:$0xff] %vm1371, %v1726
      %1759 = vst.msk [vmem:[#allocation3 + $0x10] sm:$0xff] %vm1371, %v1727
      %1760 = vst.msk [vmem:[#allocation3 + $0x18] sm:$0xff] %vm1371, %v1728
      %1761 = vst.msk [vmem:[#allocation3 + $0x20] sm:$0xff] %vm1371, %v1729
      %1762 = vst.msk [vmem:[#allocation3 + $0x28] sm:$0xff] %vm1371, %v1730
      %1763 = vst.msk [vmem:[#allocation3 + $0x30] sm:$0xff] %vm1371, %v1731
      %1764 = vst.msk [vmem:[#allocation3 + $0x38] sm:$0xff] %vm1371, %v1732
      %1765 = vst.msk [vmem:[#allocation3 + $0x40] sm:$0xff] %vm1371, %v1733
      %1766 = vst.msk [vmem:[#allocation3 + $0x48] sm:$0xff] %vm1371, %v1734
      %1767 = vst.msk [vmem:[#allocation3 + $0x50] sm:$0xff] %vm1371, %v1735
      %1768 = vst.msk [vmem:[#allocation3 + $0x58] sm:$0xff] %vm1371, %v1736
      %1769 = vst.msk [vmem:[#allocation3 + $0x60] sm:$0xff] %vm1371, %v1737
      %1770 = vst.msk [vmem:[#allocation3 + $0x68] sm:$0xff] %vm1371, %v1738
      %1771 = vst.msk [vmem:[#allocation3 + $0x70] sm:$0xff] %vm1371, %v1739
      %1772 = vst.msk [vmem:[#allocation3 + $0x78] sm:$0xff] %vm1371, %v1740
      %1773 = vst.msk [vmem:[#allocation3 + $0x80] sm:$0xff] %vm1371, %v1741
      %1774 = vst.msk [vmem:[#allocation3 + $0x88] sm:$0xff] %vm1371, %v1742
      %1775 = vst.msk [vmem:[#allocation3 + $0x90] sm:$0xff] %vm1371, %v1743
      %1776 = vst.msk [vmem:[#allocation3 + $0x98] sm:$0xff] %vm1371, %v1744
      %1777 = vst.msk [vmem:[#allocation3 + $0xa0] sm:$0xff] %vm1371, %v1745
      %1778 = vst.msk [vmem:[#allocation3 + $0xa8] sm:$0xff] %vm1371, %v1746
      %1779 = vst.msk [vmem:[#allocation3 + $0xb0] sm:$0xff] %vm1371, %v1747
      %1780 = vst.msk [vmem:[#allocation3 + $0xb8] sm:$0xff] %vm1371, %v1748
      %1781 = vst.msk [vmem:[#allocation3 + $0xc0] sm:$0xff] %vm1371, %v1749
      %1782 = vst.msk [vmem:[#allocation3 + $0xc8] sm:$0xff] %vm1371, %v1750
      %1783 = vst.msk [vmem:[#allocation3 + $0xd0] sm:$0xff] %vm1371, %v1751
      %1784 = vst.msk [vmem:[#allocation3 + $0xd8] sm:$0xff] %vm1371, %v1752
      %1785 = vst.msk [vmem:[#allocation3 + $0xe0] sm:$0xff] %vm1371, %v1753
      %1786 = vst.msk [vmem:[#allocation3 + $0xe8] sm:$0xff] %vm1371, %v1754
      %1787 = vst.msk [vmem:[#allocation3 + $0xf0] sm:$0xff] %vm1371, %v1755
      %1788 = vst.msk [vmem:[#allocation3 + $0xf8] sm:$0xff] %vm1371, %v1756
      %v1789 = vld [vmem:[#allocation3] sm:$0xff]
      %v1790 = vld [vmem:[#allocation3 + $0x8] sm:$0xff]
      %v1791 = vld [vmem:[#allocation3 + $0x10] sm:$0xff]
      %v1792 = vld [vmem:[#allocation3 + $0x18] sm:$0xff]
      %v1793 = vld [vmem:[#allocation3 + $0x20] sm:$0xff]
      %v1794 = vld [vmem:[#allocation3 + $0x28] sm:$0xff]
      %v1795 = vld [vmem:[#allocation3 + $0x30] sm:$0xff]
      %v1796 = vld [vmem:[#allocation3 + $0x38] sm:$0xff]
      %v1797 = vld [vmem:[#allocation3 + $0x40] sm:$0xff]
      %v1798 = vld [vmem:[#allocation3 + $0x48] sm:$0xff]
      %v1799 = vld [vmem:[#allocation3 + $0x50] sm:$0xff]
      %v1800 = vld [vmem:[#allocation3 + $0x58] sm:$0xff]
      %v1801 = vld [vmem:[#allocation3 + $0x60] sm:$0xff]
      %v1802 = vld [vmem:[#allocation3 + $0x68] sm:$0xff]
      %v1803 = vld [vmem:[#allocation3 + $0x70] sm:$0xff]
      %v1804 = vld [vmem:[#allocation3 + $0x78] sm:$0xff]
      %v1805 = vld [vmem:[#allocation3 + $0x80] sm:$0xff]
      %v1806 = vld [vmem:[#allocation3 + $0x88] sm:$0xff]
      %v1807 = vld [vmem:[#allocation3 + $0x90] sm:$0xff]
      %v1808 = vld [vmem:[#allocation3 + $0x98] sm:$0xff]
      %v1809 = vld [vmem:[#allocation3 + $0xa0] sm:$0xff]
      %v1810 = vld [vmem:[#allocation3 + $0xa8] sm:$0xff]
      %v1811 = vld [vmem:[#allocation3 + $0xb0] sm:$0xff]
      %v1812 = vld [vmem:[#allocation3 + $0xb8] sm:$0xff]
      %v1813 = vld [vmem:[#allocation3 + $0xc0] sm:$0xff]
      %v1814 = vld [vmem:[#allocation3 + $0xc8] sm:$0xff]
      %v1815 = vld [vmem:[#allocation3 + $0xd0] sm:$0xff]
      %v1816 = vld [vmem:[#allocation3 + $0xd8] sm:$0xff]
      %v1817 = vld [vmem:[#allocation3 + $0xe0] sm:$0xff]
      %v1818 = vld [vmem:[#allocation3 + $0xe8] sm:$0xff]
      %v1819 = vld [vmem:[#allocation3 + $0xf0] sm:$0xff]
      %v1820 = vld [vmem:[#allocation3 + $0xf8] sm:$0xff]
      %v1821 = vld [vmem:[%s1266] sm:$0xf8]
      %v1822 = vld [vmem:[%s1266 + $0x10] sm:$0xff]
      %v1823 = vld [vmem:[%s1266 + $0x20] sm:$0x7]
      %v1824 = vld [vmem:[%s1266 + $0x30] sm:$0xf8]
      %v1825 = vld [vmem:[%s1266 + $0x40] sm:$0xff]
      %v1826 = vld [vmem:[%s1266 + $0x50] sm:$0x7]
      %v1827 = vld [vmem:[%s1266 + $0x60] sm:$0xf8]
      %v1828 = vld [vmem:[%s1266 + $0x70] sm:$0xff]
      %v1829 = vld [vmem:[%s1266 + $0x80] sm:$0x7]
      %v1830 = vld [vmem:[%s1266 + $0x90] sm:$0xf8]
      %v1831 = vld [vmem:[%s1266 + $0xa0] sm:$0xff]
      %v1832 = vld [vmem:[%s1266 + $0xb0] sm:$0x7]
      %v1833 = vld [vmem:[%s1266 + $0xc0] sm:$0xf8]
      %v1834 = vld [vmem:[%s1266 + $0xd0] sm:$0xff]
      %v1835 = vld [vmem:[%s1266 + $0xe0] sm:$0x7]
      %v1836 = vld [vmem:[%s1266 + $0xf0] sm:$0xf8]
      %v1837 = vld [vmem:[%s1266 + $0x100] sm:$0xff]
      %v1838 = vld [vmem:[%s1266 + $0x110] sm:$0x7]
      %v1839 = vld [vmem:[%s1266 + $0x120] sm:$0xf8]
      %v1840 = vld [vmem:[%s1266 + $0x130] sm:$0xff]
      %v1841 = vld [vmem:[%s1266 + $0x140] sm:$0x7]
      %v1842 = vld [vmem:[%s1266 + $0x150] sm:$0xf8]
      %v1843 = vld [vmem:[%s1266 + $0x160] sm:$0xff]
      %v1844 = vld [vmem:[%s1266 + $0x170] sm:$0x7]
      %v1845 = vld [vmem:[%s1266 + $0x180] sm:$0xf8]
      %v1846 = vld [vmem:[%s1266 + $0x190] sm:$0xff]
      %v1847 = vld [vmem:[%s1266 + $0x1a0] sm:$0x7]
      %v1848 = vld [vmem:[%s1266 + $0x1b0] sm:$0xf8]
      %v1849 = vld [vmem:[%s1266 + $0x1c0] sm:$0xff]
      %v1850 = vld [vmem:[%s1266 + $0x1d0] sm:$0x7]
      %v1851 = vld [vmem:[%s1266 + $0x1e0] sm:$0xf8]
      %v1852 = vld [vmem:[%s1266 + $0x1f0] sm:$0xff]
      %v1853 = vld [vmem:[%s1266 + $0x200] sm:$0x7]
      %v1854 = vld [vmem:[%s1266 + $0x210] sm:$0xf8]
      %v1855 = vld [vmem:[%s1266 + $0x220] sm:$0xff]
      %v1856 = vld [vmem:[%s1266 + $0x230] sm:$0x7]
      %v1857 = vld [vmem:[%s1266 + $0x240] sm:$0xf8]
      %v1858 = vld [vmem:[%s1266 + $0x250] sm:$0xff]
      %v1859 = vld [vmem:[%s1266 + $0x260] sm:$0x7]
      %v1860 = vld [vmem:[%s1266 + $0x270] sm:$0xf8]
      %v1861 = vld [vmem:[%s1266 + $0x280] sm:$0xff]
      %v1862 = vld [vmem:[%s1266 + $0x290] sm:$0x7]
      %v1863 = vld [vmem:[%s1266 + $0x2a0] sm:$0xf8]
      %v1864 = vld [vmem:[%s1266 + $0x2b0] sm:$0xff]
      %v1865 = vld [vmem:[%s1266 + $0x2c0] sm:$0x7]
      %v1866 = vld [vmem:[%s1266 + $0x2d0] sm:$0xf8]
      %v1867 = vld [vmem:[%s1266 + $0x2e0] sm:$0xff]
      %v1868 = vld [vmem:[%s1266 + $0x2f0] sm:$0x7]
      %vm1917 = vcmask 1044480
      %v1918 = vrot.slane %v1821, 3
      %v1919 = vrot.slane %v1822, 3
      %v1920 = vsel %vm1917, %v1918, %v1919
      %v1921 = vrot.slane %v1823, 3
      %v1922 = vsel %vm1917, %v1919, %v1921
      %v1923 = vrot.slane %v1824, 3
      %v1924 = vrot.slane %v1825, 3
      %v1925 = vsel %vm1917, %v1923, %v1924
      %v1926 = vrot.slane %v1826, 3
      %v1927 = vsel %vm1917, %v1924, %v1926
      %v1928 = vrot.slane %v1827, 3
      %v1929 = vrot.slane %v1828, 3
      %v1930 = vsel %vm1917, %v1928, %v1929
      %v1931 = vrot.slane %v1829, 3
      %v1932 = vsel %vm1917, %v1929, %v1931
      %v1933 = vrot.slane %v1830, 3
      %v1934 = vrot.slane %v1831, 3
      %v1935 = vsel %vm1917, %v1933, %v1934
      %v1936 = vrot.slane %v1832, 3
      %v1937 = vsel %vm1917, %v1934, %v1936
      %v1938 = vrot.slane %v1833, 3
      %v1939 = vrot.slane %v1834, 3
      %v1940 = vsel %vm1917, %v1938, %v1939
      %v1941 = vrot.slane %v1835, 3
      %v1942 = vsel %vm1917, %v1939, %v1941
      %v1943 = vrot.slane %v1836, 3
      %v1944 = vrot.slane %v1837, 3
      %v1945 = vsel %vm1917, %v1943, %v1944
      %v1946 = vrot.slane %v1838, 3
      %v1947 = vsel %vm1917, %v1944, %v1946
      %v1948 = vrot.slane %v1839, 3
      %v1949 = vrot.slane %v1840, 3
      %v1950 = vsel %vm1917, %v1948, %v1949
      %v1951 = vrot.slane %v1841, 3
      %v1952 = vsel %vm1917, %v1949, %v1951
      %v1953 = vrot.slane %v1842, 3
      %v1954 = vrot.slane %v1843, 3
      %v1955 = vsel %vm1917, %v1953, %v1954
      %v1956 = vrot.slane %v1844, 3
      %v1957 = vsel %vm1917, %v1954, %v1956
      %v1958 = vrot.slane %v1845, 3
      %v1959 = vrot.slane %v1846, 3
      %v1960 = vsel %vm1917, %v1958, %v1959
      %v1961 = vrot.slane %v1847, 3
      %v1962 = vsel %vm1917, %v1959, %v1961
      %v1963 = vrot.slane %v1848, 3
      %v1964 = vrot.slane %v1849, 3
      %v1965 = vsel %vm1917, %v1963, %v1964
      %v1966 = vrot.slane %v1850, 3
      %v1967 = vsel %vm1917, %v1964, %v1966
      %v1968 = vrot.slane %v1851, 3
      %v1969 = vrot.slane %v1852, 3
      %v1970 = vsel %vm1917, %v1968, %v1969
      %v1971 = vrot.slane %v1853, 3
      %v1972 = vsel %vm1917, %v1969, %v1971
      %v1973 = vrot.slane %v1854, 3
      %v1974 = vrot.slane %v1855, 3
      %v1975 = vsel %vm1917, %v1973, %v1974
      %v1976 = vrot.slane %v1856, 3
      %v1977 = vsel %vm1917, %v1974, %v1976
      %v1978 = vrot.slane %v1857, 3
      %v1979 = vrot.slane %v1858, 3
      %v1980 = vsel %vm1917, %v1978, %v1979
      %v1981 = vrot.slane %v1859, 3
      %v1982 = vsel %vm1917, %v1979, %v1981
      %v1983 = vrot.slane %v1860, 3
      %v1984 = vrot.slane %v1861, 3
      %v1985 = vsel %vm1917, %v1983, %v1984
      %v1986 = vrot.slane %v1862, 3
      %v1987 = vsel %vm1917, %v1984, %v1986
      %v1988 = vrot.slane %v1863, 3
      %v1989 = vrot.slane %v1864, 3
      %v1990 = vsel %vm1917, %v1988, %v1989
      %v1991 = vrot.slane %v1865, 3
      %v1992 = vsel %vm1917, %v1989, %v1991
      %v1993 = vrot.slane %v1866, 3
      %v1994 = vrot.slane %v1867, 3
      %v1995 = vsel %vm1917, %v1993, %v1994
      %v1996 = vrot.slane %v1868, 3
      %v1997 = vsel %vm1917, %v1994, %v1996
      %1998 = vrot.lane.b32.xlu0 %v1920, 112
      %v1999 = vpop.permute.xlu0 %1998
      %2000 = vrot.lane.b32.xlu0 %v1922, 112
      %v2001 = vpop.permute.xlu0 %2000
      %2002 = vrot.lane.b32.xlu0 %v1925, 112
      %v2003 = vpop.permute.xlu0 %2002
      %2004 = vrot.lane.b32.xlu0 %v1927, 112
      %v2005 = vpop.permute.xlu0 %2004
      %2006 = vrot.lane.b32.xlu0 %v1930, 112
      %v2007 = vpop.permute.xlu0 %2006
      %2008 = vrot.lane.b32.xlu0 %v1932, 112
      %v2009 = vpop.permute.xlu0 %2008
      %2010 = vrot.lane.b32.xlu0 %v1935, 112
      %v2011 = vpop.permute.xlu0 %2010
      %2012 = vrot.lane.b32.xlu0 %v1937, 112
      %v2013 = vpop.permute.xlu0 %2012
      %2014 = vrot.lane.b32.xlu0 %v1940, 112
      %v2015 = vpop.permute.xlu0 %2014
      %2016 = vrot.lane.b32.xlu0 %v1942, 112
      %v2017 = vpop.permute.xlu0 %2016
      %2018 = vrot.lane.b32.xlu0 %v1945, 112
      %v2019 = vpop.permute.xlu0 %2018
      %2020 = vrot.lane.b32.xlu0 %v1947, 112
      %v2021 = vpop.permute.xlu0 %2020
      %2022 = vrot.lane.b32.xlu0 %v1950, 112
      %v2023 = vpop.permute.xlu0 %2022
      %2024 = vrot.lane.b32.xlu0 %v1952, 112
      %v2025 = vpop.permute.xlu0 %2024
      %2026 = vrot.lane.b32.xlu0 %v1955, 112
      %v2027 = vpop.permute.xlu0 %2026
      %2028 = vrot.lane.b32.xlu0 %v1957, 112
      %v2029 = vpop.permute.xlu0 %2028
      %2030 = vrot.lane.b32.xlu0 %v1960, 112
      %v2031 = vpop.permute.xlu0 %2030
      %2032 = vrot.lane.b32.xlu0 %v1962, 112
      %v2033 = vpop.permute.xlu0 %2032
      %2034 = vrot.lane.b32.xlu0 %v1965, 112
      %v2035 = vpop.permute.xlu0 %2034
      %2036 = vrot.lane.b32.xlu0 %v1967, 112
      %v2037 = vpop.permute.xlu0 %2036
      %2038 = vrot.lane.b32.xlu0 %v1970, 112
      %v2039 = vpop.permute.xlu0 %2038
      %2040 = vrot.lane.b32.xlu0 %v1972, 112
      %v2041 = vpop.permute.xlu0 %2040
      %2042 = vrot.lane.b32.xlu0 %v1975, 112
      %v2043 = vpop.permute.xlu0 %2042
      %2044 = vrot.lane.b32.xlu0 %v1977, 112
      %v2045 = vpop.permute.xlu0 %2044
      %2046 = vrot.lane.b32.xlu0 %v1980, 112
      %v2047 = vpop.permute.xlu0 %2046
      %2048 = vrot.lane.b32.xlu0 %v1982, 112
      %v2049 = vpop.permute.xlu0 %2048
      %2050 = vrot.lane.b32.xlu0 %v1985, 112
      %v2051 = vpop.permute.xlu0 %2050
      %2052 = vrot.lane.b32.xlu0 %v1987, 112
      %v2053 = vpop.permute.xlu0 %2052
      %2054 = vrot.lane.b32.xlu0 %v1990, 112
      %v2055 = vpop.permute.xlu0 %2054
      %2056 = vrot.lane.b32.xlu0 %v1992, 112
      %v2057 = vpop.permute.xlu0 %2056
      %2058 = vrot.lane.b32.xlu0 %v1995, 112
      %v2059 = vpop.permute.xlu0 %2058
      %2060 = vrot.lane.b32.xlu0 %v1997, 112
      %v2061 = vpop.permute.xlu0 %2060
      %v2094 = vadd.f32 %v1789, %v1999
      %v2095 = vadd.f32 %v1790, %v2001
      %v2096 = vadd.f32 %v1791, %v2003
      %v2097 = vadd.f32 %v1792, %v2005
      %v2098 = vadd.f32 %v1793, %v2007
      %v2099 = vadd.f32 %v1794, %v2009
      %v2100 = vadd.f32 %v1795, %v2011
      %v2101 = vadd.f32 %v1796, %v2013
      %v2102 = vadd.f32 %v1797, %v2015
      %v2103 = vadd.f32 %v1798, %v2017
      %v2104 = vadd.f32 %v1799, %v2019
      %v2105 = vadd.f32 %v1800, %v2021
      %v2106 = vadd.f32 %v1801, %v2023
      %v2107 = vadd.f32 %v1802, %v2025
      %v2108 = vadd.f32 %v1803, %v2027
      %v2109 = vadd.f32 %v1804, %v2029
      %v2110 = vadd.f32 %v1805, %v2031
      %v2111 = vadd.f32 %v1806, %v2033
      %v2112 = vadd.f32 %v1807, %v2035
      %v2113 = vadd.f32 %v1808, %v2037
      %v2114 = vadd.f32 %v1809, %v2039
      %v2115 = vadd.f32 %v1810, %v2041
      %v2116 = vadd.f32 %v1811, %v2043
      %v2117 = vadd.f32 %v1812, %v2045
      %v2118 = vadd.f32 %v1813, %v2047
      %v2119 = vadd.f32 %v1814, %v2049
      %v2120 = vadd.f32 %v1815, %v2051
      %v2121 = vadd.f32 %v1816, %v2053
      %v2122 = vadd.f32 %v1817, %v2055
      %v2123 = vadd.f32 %v1818, %v2057
      %v2124 = vadd.f32 %v1819, %v2059
      %v2125 = vadd.f32 %v1820, %v2061
      %2126 = vst.msk [vmem:[#allocation3] sm:$0xff] %vm1371, %v2094
      %2127 = vst.msk [vmem:[#allocation3 + $0x8] sm:$0xff] %vm1371, %v2095
      %2128 = vst.msk [vmem:[#allocation3 + $0x10] sm:$0xff] %vm1371, %v2096
      %2129 = vst.msk [vmem:[#allocation3 + $0x18] sm:$0xff] %vm1371, %v2097
      %2130 = vst.msk [vmem:[#allocation3 + $0x20] sm:$0xff] %vm1371, %v2098
      %2131 = vst.msk [vmem:[#allocation3 + $0x28] sm:$0xff] %vm1371, %v2099
      %2132 = vst.msk [vmem:[#allocation3 + $0x30] sm:$0xff] %vm1371, %v2100
      %2133 = vst.msk [vmem:[#allocation3 + $0x38] sm:$0xff] %vm1371, %v2101
      %2134 = vst.msk [vmem:[#allocation3 + $0x40] sm:$0xff] %vm1371, %v2102
      %2135 = vst.msk [vmem:[#allocation3 + $0x48] sm:$0xff] %vm1371, %v2103
      %2136 = vst.msk [vmem:[#allocation3 + $0x50] sm:$0xff] %vm1371, %v2104
      %2137 = vst.msk [vmem:[#allocation3 + $0x58] sm:$0xff] %vm1371, %v2105
      %2138 = vst.msk [vmem:[#allocation3 + $0x60] sm:$0xff] %vm1371, %v2106
      %2139 = vst.msk [vmem:[#allocation3 + $0x68] sm:$0xff] %vm1371, %v2107
      %2140 = vst.msk [vmem:[#allocation3 + $0x70] sm:$0xff] %vm1371, %v2108
      %2141 = vst.msk [vmem:[#allocation3 + $0x78] sm:$0xff] %vm1371, %v2109
      %2142 = vst.msk [vmem:[#allocation3 + $0x80] sm:$0xff] %vm1371, %v2110
      %2143 = vst.msk [vmem:[#allocation3 + $0x88] sm:$0xff] %vm1371, %v2111
      %2144 = vst.msk [vmem:[#allocation3 + $0x90] sm:$0xff] %vm1371, %v2112
      %2145 = vst.msk [vmem:[#allocation3 + $0x98] sm:$0xff] %vm1371, %v2113
      %2146 = vst.msk [vmem:[#allocation3 + $0xa0] sm:$0xff] %vm1371, %v2114
      %2147 = vst.msk [vmem:[#allocation3 + $0xa8] sm:$0xff] %vm1371, %v2115
      %2148 = vst.msk [vmem:[#allocation3 + $0xb0] sm:$0xff] %vm1371, %v2116
      %2149 = vst.msk [vmem:[#allocation3 + $0xb8] sm:$0xff] %vm1371, %v2117
      %2150 = vst.msk [vmem:[#allocation3 + $0xc0] sm:$0xff] %vm1371, %v2118
      %2151 = vst.msk [vmem:[#allocation3 + $0xc8] sm:$0xff] %vm1371, %v2119
      %2152 = vst.msk [vmem:[#allocation3 + $0xd0] sm:$0xff] %vm1371, %v2120
      %2153 = vst.msk [vmem:[#allocation3 + $0xd8] sm:$0xff] %vm1371, %v2121
      %2154 = vst.msk [vmem:[#allocation3 + $0xe0] sm:$0xff] %vm1371, %v2122
      %2155 = vst.msk [vmem:[#allocation3 + $0xe8] sm:$0xff] %vm1371, %v2123
      %2156 = vst.msk [vmem:[#allocation3 + $0xf0] sm:$0xff] %vm1371, %v2124
      %2157 = vst.msk [vmem:[#allocation3 + $0xf8] sm:$0xff] %vm1371, %v2125
      %v2158 = vld [vmem:[#allocation3] sm:$0xff]
      %v2159 = vld [vmem:[#allocation3 + $0x8] sm:$0xff]
      %v2160 = vld [vmem:[#allocation3 + $0x10] sm:$0xff]
      %v2161 = vld [vmem:[#allocation3 + $0x18] sm:$0xff]
      %v2162 = vld [vmem:[#allocation3 + $0x20] sm:$0xff]
      %v2163 = vld [vmem:[#allocation3 + $0x28] sm:$0xff]
      %v2164 = vld [vmem:[#allocation3 + $0x30] sm:$0xff]
      %v2165 = vld [vmem:[#allocation3 + $0x38] sm:$0xff]
      %v2166 = vld [vmem:[#allocation3 + $0x40] sm:$0xff]
      %v2167 = vld [vmem:[#allocation3 + $0x48] sm:$0xff]
      %v2168 = vld [vmem:[#allocation3 + $0x50] sm:$0xff]
      %v2169 = vld [vmem:[#allocation3 + $0x58] sm:$0xff]
      %v2170 = vld [vmem:[#allocation3 + $0x60] sm:$0xff]
      %v2171 = vld [vmem:[#allocation3 + $0x68] sm:$0xff]
      %v2172 = vld [vmem:[#allocation3 + $0x70] sm:$0xff]
      %v2173 = vld [vmem:[#allocation3 + $0x78] sm:$0xff]
      %v2174 = vld [vmem:[#allocation3 + $0x80] sm:$0xff]
      %v2175 = vld [vmem:[#allocation3 + $0x88] sm:$0xff]
      %v2176 = vld [vmem:[#allocation3 + $0x90] sm:$0xff]
      %v2177 = vld [vmem:[#allocation3 + $0x98] sm:$0xff]
      %v2178 = vld [vmem:[#allocation3 + $0xa0] sm:$0xff]
      %v2179 = vld [vmem:[#allocation3 + $0xa8] sm:$0xff]
      %v2180 = vld [vmem:[#allocation3 + $0xb0] sm:$0xff]
      %v2181 = vld [vmem:[#allocation3 + $0xb8] sm:$0xff]
      %v2182 = vld [vmem:[#allocation3 + $0xc0] sm:$0xff]
      %v2183 = vld [vmem:[#allocation3 + $0xc8] sm:$0xff]
      %v2184 = vld [vmem:[#allocation3 + $0xd0] sm:$0xff]
      %v2185 = vld [vmem:[#allocation3 + $0xd8] sm:$0xff]
      %v2186 = vld [vmem:[#allocation3 + $0xe0] sm:$0xff]
      %v2187 = vld [vmem:[#allocation3 + $0xe8] sm:$0xff]
      %v2188 = vld [vmem:[#allocation3 + $0xf0] sm:$0xff]
      %v2189 = vld [vmem:[#allocation3 + $0xf8] sm:$0xff]
      %s2190 = scalar_lea.vmem [#allocation2], 96
      %v2191 = vld [vmem:[%s2190] sm:$0xfe]
      %v2192 = vld [vmem:[%s2190 + $0x10] sm:$0xff]
      %v2193 = vld [vmem:[%s2190 + $0x20] sm:$0x1]
      %v2194 = vld [vmem:[%s2190 + $0x30] sm:$0xfe]
      %v2195 = vld [vmem:[%s2190 + $0x40] sm:$0xff]
      %v2196 = vld [vmem:[%s2190 + $0x50] sm:$0x1]
      %v2197 = vld [vmem:[%s2190 + $0x60] sm:$0xfe]
      %v2198 = vld [vmem:[%s2190 + $0x70] sm:$0xff]
      %v2199 = vld [vmem:[%s2190 + $0x80] sm:$0x1]
      %v2200 = vld [vmem:[%s2190 + $0x90] sm:$0xfe]
      %v2201 = vld [vmem:[%s2190 + $0xa0] sm:$0xff]
      %v2202 = vld [vmem:[%s2190 + $0xb0] sm:$0x1]
      %v2203 = vld [vmem:[%s2190 + $0xc0] sm:$0xfe]
      %v2204 = vld [vmem:[%s2190 + $0xd0] sm:$0xff]
      %v2205 = vld [vmem:[%s2190 + $0xe0] sm:$0x1]
      %v2206 = vld [vmem:[%s2190 + $0xf0] sm:$0xfe]
      %v2207 = vld [vmem:[%s2190 + $0x100] sm:$0xff]
      %v2208 = vld [vmem:[%s2190 + $0x110] sm:$0x1]
      %v2209 = vld [vmem:[%s2190 + $0x120] sm:$0xfe]
      %v2210 = vld [vmem:[%s2190 + $0x130] sm:$0xff]
      %v2211 = vld [vmem:[%s2190 + $0x140] sm:$0x1]
      %v2212 = vld [vmem:[%s2190 + $0x150] sm:$0xfe]
      %v2213 = vld [vmem:[%s2190 + $0x160] sm:$0xff]
      %v2214 = vld [vmem:[%s2190 + $0x170] sm:$0x1]
      %v2215 = vld [vmem:[%s2190 + $0x180] sm:$0xfe]
      %v2216 = vld [vmem:[%s2190 + $0x190] sm:$0xff]
      %v2217 = vld [vmem:[%s2190 + $0x1a0] sm:$0x1]
      %v2218 = vld [vmem:[%s2190 + $0x1b0] sm:$0xfe]
      %v2219 = vld [vmem:[%s2190 + $0x1c0] sm:$0xff]
      %v2220 = vld [vmem:[%s2190 + $0x1d0] sm:$0x1]
      %v2221 = vld [vmem:[%s2190 + $0x1e0] sm:$0xfe]
      %v2222 = vld [vmem:[%s2190 + $0x1f0] sm:$0xff]
      %v2223 = vld [vmem:[%s2190 + $0x200] sm:$0x1]
      %v2224 = vld [vmem:[%s2190 + $0x210] sm:$0xfe]
      %v2225 = vld [vmem:[%s2190 + $0x220] sm:$0xff]
      %v2226 = vld [vmem:[%s2190 + $0x230] sm:$0x1]
      %v2227 = vld [vmem:[%s2190 + $0x240] sm:$0xfe]
      %v2228 = vld [vmem:[%s2190 + $0x250] sm:$0xff]
      %v2229 = vld [vmem:[%s2190 + $0x260] sm:$0x1]
      %v2230 = vld [vmem:[%s2190 + $0x270] sm:$0xfe]
      %v2231 = vld [vmem:[%s2190 + $0x280] sm:$0xff]
      %v2232 = vld [vmem:[%s2190 + $0x290] sm:$0x1]
      %v2233 = vld [vmem:[%s2190 + $0x2a0] sm:$0xfe]
      %v2234 = vld [vmem:[%s2190 + $0x2b0] sm:$0xff]
      %v2235 = vld [vmem:[%s2190 + $0x2c0] sm:$0x1]
      %v2236 = vld [vmem:[%s2190 + $0x2d0] sm:$0xfe]
      %v2237 = vld [vmem:[%s2190 + $0x2e0] sm:$0xff]
      %v2238 = vld [vmem:[%s2190 + $0x2f0] sm:$0x1]
      %vm2287 = vcmask 1046528
      %v2288 = vrot.slane %v2191, 1
      %v2289 = vrot.slane %v2192, 1
      %v2290 = vsel %vm2287, %v2288, %v2289
      %v2291 = vrot.slane %v2193, 1
      %v2292 = vsel %vm2287, %v2289, %v2291
      %v2293 = vrot.slane %v2194, 1
      %v2294 = vrot.slane %v2195, 1
      %v2295 = vsel %vm2287, %v2293, %v2294
      %v2296 = vrot.slane %v2196, 1
      %v2297 = vsel %vm2287, %v2294, %v2296
      %v2298 = vrot.slane %v2197, 1
      %v2299 = vrot.slane %v2198, 1
      %v2300 = vsel %vm2287, %v2298, %v2299
      %v2301 = vrot.slane %v2199, 1
      %v2302 = vsel %vm2287, %v2299, %v2301
      %v2303 = vrot.slane %v2200, 1
      %v2304 = vrot.slane %v2201, 1
      %v2305 = vsel %vm2287, %v2303, %v2304
      %v2306 = vrot.slane %v2202, 1
      %v2307 = vsel %vm2287, %v2304, %v2306
      %v2308 = vrot.slane %v2203, 1
      %v2309 = vrot.slane %v2204, 1
      %v2310 = vsel %vm2287, %v2308, %v2309
      %v2311 = vrot.slane %v2205, 1
      %v2312 = vsel %vm2287, %v2309, %v2311
      %v2313 = vrot.slane %v2206, 1
      %v2314 = vrot.slane %v2207, 1
      %v2315 = vsel %vm2287, %v2313, %v2314
      %v2316 = vrot.slane %v2208, 1
      %v2317 = vsel %vm2287, %v2314, %v2316
      %v2318 = vrot.slane %v2209, 1
      %v2319 = vrot.slane %v2210, 1
      %v2320 = vsel %vm2287, %v2318, %v2319
      %v2321 = vrot.slane %v2211, 1
      %v2322 = vsel %vm2287, %v2319, %v2321
      %v2323 = vrot.slane %v2212, 1
      %v2324 = vrot.slane %v2213, 1
      %v2325 = vsel %vm2287, %v2323, %v2324
      %v2326 = vrot.slane %v2214, 1
      %v2327 = vsel %vm2287, %v2324, %v2326
      %v2328 = vrot.slane %v2215, 1
      %v2329 = vrot.slane %v2216, 1
      %v2330 = vsel %vm2287, %v2328, %v2329
      %v2331 = vrot.slane %v2217, 1
      %v2332 = vsel %vm2287, %v2329, %v2331
      %v2333 = vrot.slane %v2218, 1
      %v2334 = vrot.slane %v2219, 1
      %v2335 = vsel %vm2287, %v2333, %v2334
      %v2336 = vrot.slane %v2220, 1
      %v2337 = vsel %vm2287, %v2334, %v2336
      %v2338 = vrot.slane %v2221, 1
      %v2339 = vrot.slane %v2222, 1
      %v2340 = vsel %vm2287, %v2338, %v2339
      %v2341 = vrot.slane %v2223, 1
      %v2342 = vsel %vm2287, %v2339, %v2341
      %v2343 = vrot.slane %v2224, 1
      %v2344 = vrot.slane %v2225, 1
      %v2345 = vsel %vm2287, %v2343, %v2344
      %v2346 = vrot.slane %v2226, 1
      %v2347 = vsel %vm2287, %v2344, %v2346
      %v2348 = vrot.slane %v2227, 1
      %v2349 = vrot.slane %v2228, 1
      %v2350 = vsel %vm2287, %v2348, %v2349
      %v2351 = vrot.slane %v2229, 1
      %v2352 = vsel %vm2287, %v2349, %v2351
      %v2353 = vrot.slane %v2230, 1
      %v2354 = vrot.slane %v2231, 1
      %v2355 = vsel %vm2287, %v2353, %v2354
      %v2356 = vrot.slane %v2232, 1
      %v2357 = vsel %vm2287, %v2354, %v2356
      %v2358 = vrot.slane %v2233, 1
      %v2359 = vrot.slane %v2234, 1
      %v2360 = vsel %vm2287, %v2358, %v2359
      %v2361 = vrot.slane %v2235, 1
      %v2362 = vsel %vm2287, %v2359, %v2361
      %v2363 = vrot.slane %v2236, 1
      %v2364 = vrot.slane %v2237, 1
      %v2365 = vsel %vm2287, %v2363, %v2364
      %v2366 = vrot.slane %v2238, 1
      %v2367 = vsel %vm2287, %v2364, %v2366
      %2368 = vrot.lane.b32.xlu0 %v2290, 104
      %v2369 = vpop.permute.xlu0 %2368
      %2370 = vrot.lane.b32.xlu0 %v2292, 104
      %v2371 = vpop.permute.xlu0 %2370
      %2372 = vrot.lane.b32.xlu0 %v2295, 104
      %v2373 = vpop.permute.xlu0 %2372
      %2374 = vrot.lane.b32.xlu0 %v2297, 104
      %v2375 = vpop.permute.xlu0 %2374
      %2376 = vrot.lane.b32.xlu0 %v2300, 104
      %v2377 = vpop.permute.xlu0 %2376
      %2378 = vrot.lane.b32.xlu0 %v2302, 104
      %v2379 = vpop.permute.xlu0 %2378
      %2380 = vrot.lane.b32.xlu0 %v2305, 104
      %v2381 = vpop.permute.xlu0 %2380
      %2382 = vrot.lane.b32.xlu0 %v2307, 104
      %v2383 = vpop.permute.xlu0 %2382
      %2384 = vrot.lane.b32.xlu0 %v2310, 104
      %v2385 = vpop.permute.xlu0 %2384
      %2386 = vrot.lane.b32.xlu0 %v2312, 104
      %v2387 = vpop.permute.xlu0 %2386
      %2388 = vrot.lane.b32.xlu0 %v2315, 104
      %v2389 = vpop.permute.xlu0 %2388
      %2390 = vrot.lane.b32.xlu0 %v2317, 104
      %v2391 = vpop.permute.xlu0 %2390
      %2392 = vrot.lane.b32.xlu0 %v2320, 104
      %v2393 = vpop.permute.xlu0 %2392
      %2394 = vrot.lane.b32.xlu0 %v2322, 104
      %v2395 = vpop.permute.xlu0 %2394
      %2396 = vrot.lane.b32.xlu0 %v2325, 104
      %v2397 = vpop.permute.xlu0 %2396
      %2398 = vrot.lane.b32.xlu0 %v2327, 104
      %v2399 = vpop.permute.xlu0 %2398
      %2400 = vrot.lane.b32.xlu0 %v2330, 104
      %v2401 = vpop.permute.xlu0 %2400
      %2402 = vrot.lane.b32.xlu0 %v2332, 104
      %v2403 = vpop.permute.xlu0 %2402
      %2404 = vrot.lane.b32.xlu0 %v2335, 104
      %v2405 = vpop.permute.xlu0 %2404
      %2406 = vrot.lane.b32.xlu0 %v2337, 104
      %v2407 = vpop.permute.xlu0 %2406
      %2408 = vrot.lane.b32.xlu0 %v2340, 104
      %v2409 = vpop.permute.xlu0 %2408
      %2410 = vrot.lane.b32.xlu0 %v2342, 104
      %v2411 = vpop.permute.xlu0 %2410
      %2412 = vrot.lane.b32.xlu0 %v2345, 104
      %v2413 = vpop.permute.xlu0 %2412
      %2414 = vrot.lane.b32.xlu0 %v2347, 104
      %v2415 = vpop.permute.xlu0 %2414
      %2416 = vrot.lane.b32.xlu0 %v2350, 104
      %v2417 = vpop.permute.xlu0 %2416
      %2418 = vrot.lane.b32.xlu0 %v2352, 104
      %v2419 = vpop.permute.xlu0 %2418
      %2420 = vrot.lane.b32.xlu0 %v2355, 104
      %v2421 = vpop.permute.xlu0 %2420
      %2422 = vrot.lane.b32.xlu0 %v2357, 104
      %v2423 = vpop.permute.xlu0 %2422
      %2424 = vrot.lane.b32.xlu0 %v2360, 104
      %v2425 = vpop.permute.xlu0 %2424
      %2426 = vrot.lane.b32.xlu0 %v2362, 104
      %v2427 = vpop.permute.xlu0 %2426
      %2428 = vrot.lane.b32.xlu0 %v2365, 104
      %v2429 = vpop.permute.xlu0 %2428
      %2430 = vrot.lane.b32.xlu0 %v2367, 104
      %v2431 = vpop.permute.xlu0 %2430
      %v2464 = vadd.f32 %v2158, %v2369
      %v2465 = vadd.f32 %v2159, %v2371
      %v2466 = vadd.f32 %v2160, %v2373
      %v2467 = vadd.f32 %v2161, %v2375
      %v2468 = vadd.f32 %v2162, %v2377
      %v2469 = vadd.f32 %v2163, %v2379
      %v2470 = vadd.f32 %v2164, %v2381
      %v2471 = vadd.f32 %v2165, %v2383
      %v2472 = vadd.f32 %v2166, %v2385
      %v2473 = vadd.f32 %v2167, %v2387
      %v2474 = vadd.f32 %v2168, %v2389
      %v2475 = vadd.f32 %v2169, %v2391
      %v2476 = vadd.f32 %v2170, %v2393
      %v2477 = vadd.f32 %v2171, %v2395
      %v2478 = vadd.f32 %v2172, %v2397
      %v2479 = vadd.f32 %v2173, %v2399
      %v2480 = vadd.f32 %v2174, %v2401
      %v2481 = vadd.f32 %v2175, %v2403
      %v2482 = vadd.f32 %v2176, %v2405
      %v2483 = vadd.f32 %v2177, %v2407
      %v2484 = vadd.f32 %v2178, %v2409
      %v2485 = vadd.f32 %v2179, %v2411
      %v2486 = vadd.f32 %v2180, %v2413
      %v2487 = vadd.f32 %v2181, %v2415
      %v2488 = vadd.f32 %v2182, %v2417
      %v2489 = vadd.f32 %v2183, %v2419
      %v2490 = vadd.f32 %v2184, %v2421
      %v2491 = vadd.f32 %v2185, %v2423
      %v2492 = vadd.f32 %v2186, %v2425
      %v2493 = vadd.f32 %v2187, %v2427
      %v2494 = vadd.f32 %v2188, %v2429
      %v2495 = vadd.f32 %v2189, %v2431
      %2496 = vst.msk [vmem:[#allocation3] sm:$0xff] %vm1371, %v2464
      %2497 = vst.msk [vmem:[#allocation3 + $0x8] sm:$0xff] %vm1371, %v2465
      %2498 = vst.msk [vmem:[#allocation3 + $0x10] sm:$0xff] %vm1371, %v2466
      %2499 = vst.msk [vmem:[#allocation3 + $0x18] sm:$0xff] %vm1371, %v2467
      %2500 = vst.msk [vmem:[#allocation3 + $0x20] sm:$0xff] %vm1371, %v2468
      %2501 = vst.msk [vmem:[#allocation3 + $0x28] sm:$0xff] %vm1371, %v2469
      %2502 = vst.msk [vmem:[#allocation3 + $0x30] sm:$0xff] %vm1371, %v2470
      %2503 = vst.msk [vmem:[#allocation3 + $0x38] sm:$0xff] %vm1371, %v2471
      %2504 = vst.msk [vmem:[#allocation3 + $0x40] sm:$0xff] %vm1371, %v2472
      %2505 = vst.msk [vmem:[#allocation3 + $0x48] sm:$0xff] %vm1371, %v2473
      %2506 = vst.msk [vmem:[#allocation3 + $0x50] sm:$0xff] %vm1371, %v2474
      %2507 = vst.msk [vmem:[#allocation3 + $0x58] sm:$0xff] %vm1371, %v2475
      %2508 = vst.msk [vmem:[#allocation3 + $0x60] sm:$0xff] %vm1371, %v2476
      %2509 = vst.msk [vmem:[#allocation3 + $0x68] sm:$0xff] %vm1371, %v2477
      %2510 = vst.msk [vmem:[#allocation3 + $0x70] sm:$0xff] %vm1371, %v2478
      %2511 = vst.msk [vmem:[#allocation3 + $0x78] sm:$0xff] %vm1371, %v2479
      %2512 = vst.msk [vmem:[#allocation3 + $0x80] sm:$0xff] %vm1371, %v2480
      %2513 = vst.msk [vmem:[#allocation3 + $0x88] sm:$0xff] %vm1371, %v2481
      %2514 = vst.msk [vmem:[#allocation3 + $0x90] sm:$0xff] %vm1371, %v2482
      %2515 = vst.msk [vmem:[#allocation3 + $0x98] sm:$0xff] %vm1371, %v2483
      %2516 = vst.msk [vmem:[#allocation3 + $0xa0] sm:$0xff] %vm1371, %v2484
      %2517 = vst.msk [vmem:[#allocation3 + $0xa8] sm:$0xff] %vm1371, %v2485
      %2518 = vst.msk [vmem:[#allocation3 + $0xb0] sm:$0xff] %vm1371, %v2486
      %2519 = vst.msk [vmem:[#allocation3 + $0xb8] sm:$0xff] %vm1371, %v2487
      %2520 = vst.msk [vmem:[#allocation3 + $0xc0] sm:$0xff] %vm1371, %v2488
      %2521 = vst.msk [vmem:[#allocation3 + $0xc8] sm:$0xff] %vm1371, %v2489
      %2522 = vst.msk [vmem:[#allocation3 + $0xd0] sm:$0xff] %vm1371, %v2490
      %2523 = vst.msk [vmem:[#allocation3 + $0xd8] sm:$0xff] %vm1371, %v2491
      %2524 = vst.msk [vmem:[#allocation3 + $0xe0] sm:$0xff] %vm1371, %v2492
      %2525 = vst.msk [vmem:[#allocation3 + $0xe8] sm:$0xff] %vm1371, %v2493
      %2526 = vst.msk [vmem:[#allocation3 + $0xf0] sm:$0xff] %vm1371, %v2494
      %2527 = vst.msk [vmem:[#allocation3 + $0xf8] sm:$0xff] %vm1371, %v2495
      %v2528 = vld [vmem:[#allocation3] sm:$0xff]
      %v2529 = vld [vmem:[#allocation3 + $0x8] sm:$0xff]
      %v2530 = vld [vmem:[#allocation3 + $0x10] sm:$0xff]
      %v2531 = vld [vmem:[#allocation3 + $0x18] sm:$0xff]
      %v2532 = vld [vmem:[#allocation3 + $0x20] sm:$0xff]
      %v2533 = vld [vmem:[#allocation3 + $0x28] sm:$0xff]
      %v2534 = vld [vmem:[#allocation3 + $0x30] sm:$0xff]
      %v2535 = vld [vmem:[#allocation3 + $0x38] sm:$0xff]
      %v2536 = vld [vmem:[#allocation3 + $0x40] sm:$0xff]
      %v2537 = vld [vmem:[#allocation3 + $0x48] sm:$0xff]
      %v2538 = vld [vmem:[#allocation3 + $0x50] sm:$0xff]
      %v2539 = vld [vmem:[#allocation3 + $0x58] sm:$0xff]
      %v2540 = vld [vmem:[#allocation3 + $0x60] sm:$0xff]
      %v2541 = vld [vmem:[#allocation3 + $0x68] sm:$0xff]
      %v2542 = vld [vmem:[#allocation3 + $0x70] sm:$0xff]
      %v2543 = vld [vmem:[#allocation3 + $0x78] sm:$0xff]
      %v2544 = vld [vmem:[#allocation3 + $0x80] sm:$0xff]
      %v2545 = vld [vmem:[#allocation3 + $0x88] sm:$0xff]
      %v2546 = vld [vmem:[#allocation3 + $0x90] sm:$0xff]
      %v2547 = vld [vmem:[#allocation3 + $0x98] sm:$0xff]
      %v2548 = vld [vmem:[#allocation3 + $0xa0] sm:$0xff]
      %v2549 = vld [vmem:[#allocation3 + $0xa8] sm:$0xff]
      %v2550 = vld [vmem:[#allocation3 + $0xb0] sm:$0xff]
      %v2551 = vld [vmem:[#allocation3 + $0xb8] sm:$0xff]
      %v2552 = vld [vmem:[#allocation3 + $0xc0] sm:$0xff]
      %v2553 = vld [vmem:[#allocation3 + $0xc8] sm:$0xff]
      %v2554 = vld [vmem:[#allocation3 + $0xd0] sm:$0xff]
      %v2555 = vld [vmem:[#allocation3 + $0xd8] sm:$0xff]
      %v2556 = vld [vmem:[#allocation3 + $0xe0] sm:$0xff]
      %v2557 = vld [vmem:[#allocation3 + $0xe8] sm:$0xff]
      %v2558 = vld [vmem:[#allocation3 + $0xf0] sm:$0xff]
      %v2559 = vld [vmem:[#allocation3 + $0xf8] sm:$0xff]
      %v2560 = vld [vmem:[%s2190] sm:$0xfc]
      %v2561 = vld [vmem:[%s2190 + $0x10] sm:$0xff]
      %v2562 = vld [vmem:[%s2190 + $0x20] sm:$0x3]
      %v2563 = vld [vmem:[%s2190 + $0x30] sm:$0xfc]
      %v2564 = vld [vmem:[%s2190 + $0x40] sm:$0xff]
      %v2565 = vld [vmem:[%s2190 + $0x50] sm:$0x3]
      %v2566 = vld [vmem:[%s2190 + $0x60] sm:$0xfc]
      %v2567 = vld [vmem:[%s2190 + $0x70] sm:$0xff]
      %v2568 = vld [vmem:[%s2190 + $0x80] sm:$0x3]
      %v2569 = vld [vmem:[%s2190 + $0x90] sm:$0xfc]
      %v2570 = vld [vmem:[%s2190 + $0xa0] sm:$0xff]
      %v2571 = vld [vmem:[%s2190 + $0xb0] sm:$0x3]
      %v2572 = vld [vmem:[%s2190 + $0xc0] sm:$0xfc]
      %v2573 = vld [vmem:[%s2190 + $0xd0] sm:$0xff]
      %v2574 = vld [vmem:[%s2190 + $0xe0] sm:$0x3]
      %v2575 = vld [vmem:[%s2190 + $0xf0] sm:$0xfc]
      %v2576 = vld [vmem:[%s2190 + $0x100] sm:$0xff]
      %v2577 = vld [vmem:[%s2190 + $0x110] sm:$0x3]
      %v2578 = vld [vmem:[%s2190 + $0x120] sm:$0xfc]
      %v2579 = vld [vmem:[%s2190 + $0x130] sm:$0xff]
      %v2580 = vld [vmem:[%s2190 + $0x140] sm:$0x3]
      %v2581 = vld [vmem:[%s2190 + $0x150] sm:$0xfc]
      %v2582 = vld [vmem:[%s2190 + $0x160] sm:$0xff]
      %v2583 = vld [vmem:[%s2190 + $0x170] sm:$0x3]
      %v2584 = vld [vmem:[%s2190 + $0x180] sm:$0xfc]
      %v2585 = vld [vmem:[%s2190 + $0x190] sm:$0xff]
      %v2586 = vld [vmem:[%s2190 + $0x1a0] sm:$0x3]
      %v2587 = vld [vmem:[%s2190 + $0x1b0] sm:$0xfc]
      %v2588 = vld [vmem:[%s2190 + $0x1c0] sm:$0xff]
      %v2589 = vld [vmem:[%s2190 + $0x1d0] sm:$0x3]
      %v2590 = vld [vmem:[%s2190 + $0x1e0] sm:$0xfc]
      %v2591 = vld [vmem:[%s2190 + $0x1f0] sm:$0xff]
      %v2592 = vld [vmem:[%s2190 + $0x200] sm:$0x3]
      %v2593 = vld [vmem:[%s2190 + $0x210] sm:$0xfc]
      %v2594 = vld [vmem:[%s2190 + $0x220] sm:$0xff]
      %v2595 = vld [vmem:[%s2190 + $0x230] sm:$0x3]
      %v2596 = vld [vmem:[%s2190 + $0x240] sm:$0xfc]
      %v2597 = vld [vmem:[%s2190 + $0x250] sm:$0xff]
      %v2598 = vld [vmem:[%s2190 + $0x260] sm:$0x3]
      %v2599 = vld [vmem:[%s2190 + $0x270] sm:$0xfc]
      %v2600 = vld [vmem:[%s2190 + $0x280] sm:$0xff]
      %v2601 = vld [vmem:[%s2190 + $0x290] sm:$0x3]
      %v2602 = vld [vmem:[%s2190 + $0x2a0] sm:$0xfc]
      %v2603 = vld [vmem:[%s2190 + $0x2b0] sm:$0xff]
      %v2604 = vld [vmem:[%s2190 + $0x2c0] sm:$0x3]
      %v2605 = vld [vmem:[%s2190 + $0x2d0] sm:$0xfc]
      %v2606 = vld [vmem:[%s2190 + $0x2e0] sm:$0xff]
      %v2607 = vld [vmem:[%s2190 + $0x2f0] sm:$0x3]
      %v2656 = vrot.slane %v2560, 2
      %v2657 = vrot.slane %v2561, 2
      %v2658 = vsel %vm1548, %v2656, %v2657
      %v2659 = vrot.slane %v2562, 2
      %v2660 = vsel %vm1548, %v2657, %v2659
      %v2661 = vrot.slane %v2563, 2
      %v2662 = vrot.slane %v2564, 2
      %v2663 = vsel %vm1548, %v2661, %v2662
      %v2664 = vrot.slane %v2565, 2
      %v2665 = vsel %vm1548, %v2662, %v2664
      %v2666 = vrot.slane %v2566, 2
      %v2667 = vrot.slane %v2567, 2
      %v2668 = vsel %vm1548, %v2666, %v2667
      %v2669 = vrot.slane %v2568, 2
      %v2670 = vsel %vm1548, %v2667, %v2669
      %v2671 = vrot.slane %v2569, 2
      %v2672 = vrot.slane %v2570, 2
      %v2673 = vsel %vm1548, %v2671, %v2672
      %v2674 = vrot.slane %v2571, 2
      %v2675 = vsel %vm1548, %v2672, %v2674
      %v2676 = vrot.slane %v2572, 2
      %v2677 = vrot.slane %v2573, 2
      %v2678 = vsel %vm1548, %v2676, %v2677
      %v2679 = vrot.slane %v2574, 2
      %v2680 = vsel %vm1548, %v2677, %v2679
      %v2681 = vrot.slane %v2575, 2
      %v2682 = vrot.slane %v2576, 2
      %v2683 = vsel %vm1548, %v2681, %v2682
      %v2684 = vrot.slane %v2577, 2
      %v2685 = vsel %vm1548, %v2682, %v2684
      %v2686 = vrot.slane %v2578, 2
      %v2687 = vrot.slane %v2579, 2
      %v2688 = vsel %vm1548, %v2686, %v2687
      %v2689 = vrot.slane %v2580, 2
      %v2690 = vsel %vm1548, %v2687, %v2689
      %v2691 = vrot.slane %v2581, 2
      %v2692 = vrot.slane %v2582, 2
      %v2693 = vsel %vm1548, %v2691, %v2692
      %v2694 = vrot.slane %v2583, 2
      %v2695 = vsel %vm1548, %v2692, %v2694
      %v2696 = vrot.slane %v2584, 2
      %v2697 = vrot.slane %v2585, 2
      %v2698 = vsel %vm1548, %v2696, %v2697
      %v2699 = vrot.slane %v2586, 2
      %v2700 = vsel %vm1548, %v2697, %v2699
      %v2701 = vrot.slane %v2587, 2
      %v2702 = vrot.slane %v2588, 2
      %v2703 = vsel %vm1548, %v2701, %v2702
      %v2704 = vrot.slane %v2589, 2
      %v2705 = vsel %vm1548, %v2702, %v2704
      %v2706 = vrot.slane %v2590, 2
      %v2707 = vrot.slane %v2591, 2
      %v2708 = vsel %vm1548, %v2706, %v2707
      %v2709 = vrot.slane %v2592, 2
      %v2710 = vsel %vm1548, %v2707, %v2709
      %v2711 = vrot.slane %v2593, 2
      %v2712 = vrot.slane %v2594, 2
      %v2713 = vsel %vm1548, %v2711, %v2712
      %v2714 = vrot.slane %v2595, 2
      %v2715 = vsel %vm1548, %v2712, %v2714
      %v2716 = vrot.slane %v2596, 2
      %v2717 = vrot.slane %v2597, 2
      %v2718 = vsel %vm1548, %v2716, %v2717
      %v2719 = vrot.slane %v2598, 2
      %v2720 = vsel %vm1548, %v2717, %v2719
      %v2721 = vrot.slane %v2599, 2
      %v2722 = vrot.slane %v2600, 2
      %v2723 = vsel %vm1548, %v2721, %v2722
      %v2724 = vrot.slane %v2601, 2
      %v2725 = vsel %vm1548, %v2722, %v2724
      %v2726 = vrot.slane %v2602, 2
      %v2727 = vrot.slane %v2603, 2
      %v2728 = vsel %vm1548, %v2726, %v2727
      %v2729 = vrot.slane %v2604, 2
      %v2730 = vsel %vm1548, %v2727, %v2729
      %v2731 = vrot.slane %v2605, 2
      %v2732 = vrot.slane %v2606, 2
      %v2733 = vsel %vm1548, %v2731, %v2732
      %v2734 = vrot.slane %v2607, 2
      %v2735 = vsel %vm1548, %v2732, %v2734
      %2736 = vrot.lane.b32.xlu0 %v2658, 96
      %v2737 = vpop.permute.xlu0 %2736
      %2738 = vrot.lane.b32.xlu0 %v2660, 96
      %v2739 = vpop.permute.xlu0 %2738
      %2740 = vrot.lane.b32.xlu0 %v2663, 96
      %v2741 = vpop.permute.xlu0 %2740
      %2742 = vrot.lane.b32.xlu0 %v2665, 96
      %v2743 = vpop.permute.xlu0 %2742
      %2744 = vrot.lane.b32.xlu0 %v2668, 96
      %v2745 = vpop.permute.xlu0 %2744
      %2746 = vrot.lane.b32.xlu0 %v2670, 96
      %v2747 = vpop.permute.xlu0 %2746
      %2748 = vrot.lane.b32.xlu0 %v2673, 96
      %v2749 = vpop.permute.xlu0 %2748
      %2750 = vrot.lane.b32.xlu0 %v2675, 96
      %v2751 = vpop.permute.xlu0 %2750
      %2752 = vrot.lane.b32.xlu0 %v2678, 96
      %v2753 = vpop.permute.xlu0 %2752
      %2754 = vrot.lane.b32.xlu0 %v2680, 96
      %v2755 = vpop.permute.xlu0 %2754
      %2756 = vrot.lane.b32.xlu0 %v2683, 96
      %v2757 = vpop.permute.xlu0 %2756
      %2758 = vrot.lane.b32.xlu0 %v2685, 96
      %v2759 = vpop.permute.xlu0 %2758
      %2760 = vrot.lane.b32.xlu0 %v2688, 96
      %v2761 = vpop.permute.xlu0 %2760
      %2762 = vrot.lane.b32.xlu0 %v2690, 96
      %v2763 = vpop.permute.xlu0 %2762
      %2764 = vrot.lane.b32.xlu0 %v2693, 96
      %v2765 = vpop.permute.xlu0 %2764
      %2766 = vrot.lane.b32.xlu0 %v2695, 96
      %v2767 = vpop.permute.xlu0 %2766
      %2768 = vrot.lane.b32.xlu0 %v2698, 96
      %v2769 = vpop.permute.xlu0 %2768
      %2770 = vrot.lane.b32.xlu0 %v2700, 96
      %v2771 = vpop.permute.xlu0 %2770
      %2772 = vrot.lane.b32.xlu0 %v2703, 96
      %v2773 = vpop.permute.xlu0 %2772
      %2774 = vrot.lane.b32.xlu0 %v2705, 96
      %v2775 = vpop.permute.xlu0 %2774
      %2776 = vrot.lane.b32.xlu0 %v2708, 96
      %v2777 = vpop.permute.xlu0 %2776
      %2778 = vrot.lane.b32.xlu0 %v2710, 96
      %v2779 = vpop.permute.xlu0 %2778
      %2780 = vrot.lane.b32.xlu0 %v2713, 96
      %v2781 = vpop.permute.xlu0 %2780
      %2782 = vrot.lane.b32.xlu0 %v2715, 96
      %v2783 = vpop.permute.xlu0 %2782
      %2784 = vrot.lane.b32.xlu0 %v2718, 96
      %v2785 = vpop.permute.xlu0 %2784
      %2786 = vrot.lane.b32.xlu0 %v2720, 96
      %v2787 = vpop.permute.xlu0 %2786
      %2788 = vrot.lane.b32.xlu0 %v2723, 96
      %v2789 = vpop.permute.xlu0 %2788
      %2790 = vrot.lane.b32.xlu0 %v2725, 96
      %v2791 = vpop.permute.xlu0 %2790
      %2792 = vrot.lane.b32.xlu0 %v2728, 96
      %v2793 = vpop.permute.xlu0 %2792
      %2794 = vrot.lane.b32.xlu0 %v2730, 96
      %v2795 = vpop.permute.xlu0 %2794
      %2796 = vrot.lane.b32.xlu0 %v2733, 96
      %v2797 = vpop.permute.xlu0 %2796
      %2798 = vrot.lane.b32.xlu0 %v2735, 96
      %v2799 = vpop.permute.xlu0 %2798
      %v2832 = vadd.f32 %v2528, %v2737
      %v2833 = vadd.f32 %v2529, %v2739
      %v2834 = vadd.f32 %v2530, %v2741
      %v2835 = vadd.f32 %v2531, %v2743
      %v2836 = vadd.f32 %v2532, %v2745
      %v2837 = vadd.f32 %v2533, %v2747
      %v2838 = vadd.f32 %v2534, %v2749
      %v2839 = vadd.f32 %v2535, %v2751
      %v2840 = vadd.f32 %v2536, %v2753
      %v2841 = vadd.f32 %v2537, %v2755
      %v2842 = vadd.f32 %v2538, %v2757
      %v2843 = vadd.f32 %v2539, %v2759
      %v2844 = vadd.f32 %v2540, %v2761
      %v2845 = vadd.f32 %v2541, %v2763
      %v2846 = vadd.f32 %v2542, %v2765
      %v2847 = vadd.f32 %v2543, %v2767
      %v2848 = vadd.f32 %v2544, %v2769
      %v2849 = vadd.f32 %v2545, %v2771
      %v2850 = vadd.f32 %v2546, %v2773
      %v2851 = vadd.f32 %v2547, %v2775
      %v2852 = vadd.f32 %v2548, %v2777
      %v2853 = vadd.f32 %v2549, %v2779
      %v2854 = vadd.f32 %v2550, %v2781
      %v2855 = vadd.f32 %v2551, %v2783
      %v2856 = vadd.f32 %v2552, %v2785
      %v2857 = vadd.f32 %v2553, %v2787
      %v2858 = vadd.f32 %v2554, %v2789
      %v2859 = vadd.f32 %v2555, %v2791
      %v2860 = vadd.f32 %v2556, %v2793
      %v2861 = vadd.f32 %v2557, %v2795
      %v2862 = vadd.f32 %v2558, %v2797
      %v2863 = vadd.f32 %v2559, %v2799
      %2864 = vst.msk [vmem:[#allocation3] sm:$0xff] %vm1371, %v2832
      %2865 = vst.msk [vmem:[#allocation3 + $0x8] sm:$0xff] %vm1371, %v2833
      %2866 = vst.msk [vmem:[#allocation3 + $0x10] sm:$0xff] %vm1371, %v2834
      %2867 = vst.msk [vmem:[#allocation3 + $0x18] sm:$0xff] %vm1371, %v2835
      %2868 = vst.msk [vmem:[#allocation3 + $0x20] sm:$0xff] %vm1371, %v2836
      %2869 = vst.msk [vmem:[#allocation3 + $0x28] sm:$0xff] %vm1371, %v2837
      %2870 = vst.msk [vmem:[#allocation3 + $0x30] sm:$0xff] %vm1371, %v2838
      %2871 = vst.msk [vmem:[#allocation3 + $0x38] sm:$0xff] %vm1371, %v2839
      %2872 = vst.msk [vmem:[#allocation3 + $0x40] sm:$0xff] %vm1371, %v2840
      %2873 = vst.msk [vmem:[#allocation3 + $0x48] sm:$0xff] %vm1371, %v2841
      %2874 = vst.msk [vmem:[#allocation3 + $0x50] sm:$0xff] %vm1371, %v2842
      %2875 = vst.msk [vmem:[#allocation3 + $0x58] sm:$0xff] %vm1371, %v2843
      %2876 = vst.msk [vmem:[#allocation3 + $0x60] sm:$0xff] %vm1371, %v2844
      %2877 = vst.msk [vmem:[#allocation3 + $0x68] sm:$0xff] %vm1371, %v2845
      %2878 = vst.msk [vmem:[#allocation3 + $0x70] sm:$0xff] %vm1371, %v2846
      %2879 = vst.msk [vmem:[#allocation3 + $0x78] sm:$0xff] %vm1371, %v2847
      %2880 = vst.msk [vmem:[#allocation3 + $0x80] sm:$0xff] %vm1371, %v2848
      %2881 = vst.msk [vmem:[#allocation3 + $0x88] sm:$0xff] %vm1371, %v2849
      %2882 = vst.msk [vmem:[#allocation3 + $0x90] sm:$0xff] %vm1371, %v2850
      %2883 = vst.msk [vmem:[#allocation3 + $0x98] sm:$0xff] %vm1371, %v2851
      %2884 = vst.msk [vmem:[#allocation3 + $0xa0] sm:$0xff] %vm1371, %v2852
      %2885 = vst.msk [vmem:[#allocation3 + $0xa8] sm:$0xff] %vm1371, %v2853
      %2886 = vst.msk [vmem:[#allocation3 + $0xb0] sm:$0xff] %vm1371, %v2854
      %2887 = vst.msk [vmem:[#allocation3 + $0xb8] sm:$0xff] %vm1371, %v2855
      %2888 = vst.msk [vmem:[#allocation3 + $0xc0] sm:$0xff] %vm1371, %v2856
      %2889 = vst.msk [vmem:[#allocation3 + $0xc8] sm:$0xff] %vm1371, %v2857
      %2890 = vst.msk [vmem:[#allocation3 + $0xd0] sm:$0xff] %vm1371, %v2858
      %2891 = vst.msk [vmem:[#allocation3 + $0xd8] sm:$0xff] %vm1371, %v2859
      %2892 = vst.msk [vmem:[#allocation3 + $0xe0] sm:$0xff] %vm1371, %v2860
      %2893 = vst.msk [vmem:[#allocation3 + $0xe8] sm:$0xff] %vm1371, %v2861
      %2894 = vst.msk [vmem:[#allocation3 + $0xf0] sm:$0xff] %vm1371, %v2862
      %2895 = vst.msk [vmem:[#allocation3 + $0xf8] sm:$0xff] %vm1371, %v2863
      %v2896 = vld [vmem:[#allocation3] sm:$0xff]
      %v2897 = vld [vmem:[#allocation3 + $0x8] sm:$0xff]
      %v2898 = vld [vmem:[#allocation3 + $0x10] sm:$0xff]
      %v2899 = vld [vmem:[#allocation3 + $0x18] sm:$0xff]
      %v2900 = vld [vmem:[#allocation3 + $0x20] sm:$0xff]
      %v2901 = vld [vmem:[#allocation3 + $0x28] sm:$0xff]
      %v2902 = vld [vmem:[#allocation3 + $0x30] sm:$0xff]
      %v2903 = vld [vmem:[#allocation3 + $0x38] sm:$0xff]
      %v2904 = vld [vmem:[#allocation3 + $0x40] sm:$0xff]
      %v2905 = vld [vmem:[#allocation3 + $0x48] sm:$0xff]
      %v2906 = vld [vmem:[#allocation3 + $0x50] sm:$0xff]
      %v2907 = vld [vmem:[#allocation3 + $0x58] sm:$0xff]
      %v2908 = vld [vmem:[#allocation3 + $0x60] sm:$0xff]
      %v2909 = vld [vmem:[#allocation3 + $0x68] sm:$0xff]
      %v2910 = vld [vmem:[#allocation3 + $0x70] sm:$0xff]
      %v2911 = vld [vmem:[#allocation3 + $0x78] sm:$0xff]
      %v2912 = vld [vmem:[#allocation3 + $0x80] sm:$0xff]
      %v2913 = vld [vmem:[#allocation3 + $0x88] sm:$0xff]
      %v2914 = vld [vmem:[#allocation3 + $0x90] sm:$0xff]
      %v2915 = vld [vmem:[#allocation3 + $0x98] sm:$0xff]
      %v2916 = vld [vmem:[#allocation3 + $0xa0] sm:$0xff]
      %v2917 = vld [vmem:[#allocation3 + $0xa8] sm:$0xff]
      %v2918 = vld [vmem:[#allocation3 + $0xb0] sm:$0xff]
      %v2919 = vld [vmem:[#allocation3 + $0xb8] sm:$0xff]
      %v2920 = vld [vmem:[#allocation3 + $0xc0] sm:$0xff]
      %v2921 = vld [vmem:[#allocation3 + $0xc8] sm:$0xff]
      %v2922 = vld [vmem:[#allocation3 + $0xd0] sm:$0xff]
      %v2923 = vld [vmem:[#allocation3 + $0xd8] sm:$0xff]
      %v2924 = vld [vmem:[#allocation3 + $0xe0] sm:$0xff]
      %v2925 = vld [vmem:[#allocation3 + $0xe8] sm:$0xff]
      %v2926 = vld [vmem:[#allocation3 + $0xf0] sm:$0xff]
      %v2927 = vld [vmem:[#allocation3 + $0xf8] sm:$0xff]
      %v2928 = vld [vmem:[%s2190] sm:$0xf8]
      %v2929 = vld [vmem:[%s2190 + $0x10] sm:$0xff]
      %v2930 = vld [vmem:[%s2190 + $0x20] sm:$0x7]
      %v2931 = vld [vmem:[%s2190 + $0x30] sm:$0xf8]
      %v2932 = vld [vmem:[%s2190 + $0x40] sm:$0xff]
      %v2933 = vld [vmem:[%s2190 + $0x50] sm:$0x7]
      %v2934 = vld [vmem:[%s2190 + $0x60] sm:$0xf8]
      %v2935 = vld [vmem:[%s2190 + $0x70] sm:$0xff]
      %v2936 = vld [vmem:[%s2190 + $0x80] sm:$0x7]
      %v2937 = vld [vmem:[%s2190 + $0x90] sm:$0xf8]
      %v2938 = vld [vmem:[%s2190 + $0xa0] sm:$0xff]
      %v2939 = vld [vmem:[%s2190 + $0xb0] sm:$0x7]
      %v2940 = vld [vmem:[%s2190 + $0xc0] sm:$0xf8]
      %v2941 = vld [vmem:[%s2190 + $0xd0] sm:$0xff]
      %v2942 = vld [vmem:[%s2190 + $0xe0] sm:$0x7]
      %v2943 = vld [vmem:[%s2190 + $0xf0] sm:$0xf8]
      %v2944 = vld [vmem:[%s2190 + $0x100] sm:$0xff]
      %v2945 = vld [vmem:[%s2190 + $0x110] sm:$0x7]
      %v2946 = vld [vmem:[%s2190 + $0x120] sm:$0xf8]
      %v2947 = vld [vmem:[%s2190 + $0x130] sm:$0xff]
      %v2948 = vld [vmem:[%s2190 + $0x140] sm:$0x7]
      %v2949 = vld [vmem:[%s2190 + $0x150] sm:$0xf8]
      %v2950 = vld [vmem:[%s2190 + $0x160] sm:$0xff]
      %v2951 = vld [vmem:[%s2190 + $0x170] sm:$0x7]
      %v2952 = vld [vmem:[%s2190 + $0x180] sm:$0xf8]
      %v2953 = vld [vmem:[%s2190 + $0x190] sm:$0xff]
      %v2954 = vld [vmem:[%s2190 + $0x1a0] sm:$0x7]
      %v2955 = vld [vmem:[%s2190 + $0x1b0] sm:$0xf8]
      %v2956 = vld [vmem:[%s2190 + $0x1c0] sm:$0xff]
      %v2957 = vld [vmem:[%s2190 + $0x1d0] sm:$0x7]
      %v2958 = vld [vmem:[%s2190 + $0x1e0] sm:$0xf8]
      %v2959 = vld [vmem:[%s2190 + $0x1f0] sm:$0xff]
      %v2960 = vld [vmem:[%s2190 + $0x200] sm:$0x7]
      %v2961 = vld [vmem:[%s2190 + $0x210] sm:$0xf8]
      %v2962 = vld [vmem:[%s2190 + $0x220] sm:$0xff]
      %v2963 = vld [vmem:[%s2190 + $0x230] sm:$0x7]
      %v2964 = vld [vmem:[%s2190 + $0x240] sm:$0xf8]
      %v2965 = vld [vmem:[%s2190 + $0x250] sm:$0xff]
      %v2966 = vld [vmem:[%s2190 + $0x260] sm:$0x7]
      %v2967 = vld [vmem:[%s2190 + $0x270] sm:$0xf8]
      %v2968 = vld [vmem:[%s2190 + $0x280] sm:$0xff]
      %v2969 = vld [vmem:[%s2190 + $0x290] sm:$0x7]
      %v2970 = vld [vmem:[%s2190 + $0x2a0] sm:$0xf8]
      %v2971 = vld [vmem:[%s2190 + $0x2b0] sm:$0xff]
      %v2972 = vld [vmem:[%s2190 + $0x2c0] sm:$0x7]
      %v2973 = vld [vmem:[%s2190 + $0x2d0] sm:$0xf8]
      %v2974 = vld [vmem:[%s2190 + $0x2e0] sm:$0xff]
      %v2975 = vld [vmem:[%s2190 + $0x2f0] sm:$0x7]
      %v3024 = vrot.slane %v2928, 3
      %v3025 = vrot.slane %v2929, 3
      %v3026 = vsel %vm1917, %v3024, %v3025
      %v3027 = vrot.slane %v2930, 3
      %v3028 = vsel %vm1917, %v3025, %v3027
      %v3029 = vrot.slane %v2931, 3
      %v3030 = vrot.slane %v2932, 3
      %v3031 = vsel %vm1917, %v3029, %v3030
      %v3032 = vrot.slane %v2933, 3
      %v3033 = vsel %vm1917, %v3030, %v3032
      %v3034 = vrot.slane %v2934, 3
      %v3035 = vrot.slane %v2935, 3
      %v3036 = vsel %vm1917, %v3034, %v3035
      %v3037 = vrot.slane %v2936, 3
      %v3038 = vsel %vm1917, %v3035, %v3037
      %v3039 = vrot.slane %v2937, 3
      %v3040 = vrot.slane %v2938, 3
      %v3041 = vsel %vm1917, %v3039, %v3040
      %v3042 = vrot.slane %v2939, 3
      %v3043 = vsel %vm1917, %v3040, %v3042
      %v3044 = vrot.slane %v2940, 3
      %v3045 = vrot.slane %v2941, 3
      %v3046 = vsel %vm1917, %v3044, %v3045
      %v3047 = vrot.slane %v2942, 3
      %v3048 = vsel %vm1917, %v3045, %v3047
      %v3049 = vrot.slane %v2943, 3
      %v3050 = vrot.slane %v2944, 3
      %v3051 = vsel %vm1917, %v3049, %v3050
      %v3052 = vrot.slane %v2945, 3
      %v3053 = vsel %vm1917, %v3050, %v3052
      %v3054 = vrot.slane %v2946, 3
      %v3055 = vrot.slane %v2947, 3
      %v3056 = vsel %vm1917, %v3054, %v3055
      %v3057 = vrot.slane %v2948, 3
      %v3058 = vsel %vm1917, %v3055, %v3057
      %v3059 = vrot.slane %v2949, 3
      %v3060 = vrot.slane %v2950, 3
      %v3061 = vsel %vm1917, %v3059, %v3060
      %v3062 = vrot.slane %v2951, 3
      %v3063 = vsel %vm1917, %v3060, %v3062
      %v3064 = vrot.slane %v2952, 3
      %v3065 = vrot.slane %v2953, 3
      %v3066 = vsel %vm1917, %v3064, %v3065
      %v3067 = vrot.slane %v2954, 3
      %v3068 = vsel %vm1917, %v3065, %v3067
      %v3069 = vrot.slane %v2955, 3
      %v3070 = vrot.slane %v2956, 3
      %v3071 = vsel %vm1917, %v3069, %v3070
      %v3072 = vrot.slane %v2957, 3
      %v3073 = vsel %vm1917, %v3070, %v3072
      %v3074 = vrot.slane %v2958, 3
      %v3075 = vrot.slane %v2959, 3
      %v3076 = vsel %vm1917, %v3074, %v3075
      %v3077 = vrot.slane %v2960, 3
      %v3078 = vsel %vm1917, %v3075, %v3077
      %v3079 = vrot.slane %v2961, 3
      %v3080 = vrot.slane %v2962, 3
      %v3081 = vsel %vm1917, %v3079, %v3080
      %v3082 = vrot.slane %v2963, 3
      %v3083 = vsel %vm1917, %v3080, %v3082
      %v3084 = vrot.slane %v2964, 3
      %v3085 = vrot.slane %v2965, 3
      %v3086 = vsel %vm1917, %v3084, %v3085
      %v3087 = vrot.slane %v2966, 3
      %v3088 = vsel %vm1917, %v3085, %v3087
      %v3089 = vrot.slane %v2967, 3
      %v3090 = vrot.slane %v2968, 3
      %v3091 = vsel %vm1917, %v3089, %v3090
      %v3092 = vrot.slane %v2969, 3
      %v3093 = vsel %vm1917, %v3090, %v3092
      %v3094 = vrot.slane %v2970, 3
      %v3095 = vrot.slane %v2971, 3
      %v3096 = vsel %vm1917, %v3094, %v3095
      %v3097 = vrot.slane %v2972, 3
      %v3098 = vsel %vm1917, %v3095, %v3097
      %v3099 = vrot.slane %v2973, 3
      %v3100 = vrot.slane %v2974, 3
      %v3101 = vsel %vm1917, %v3099, %v3100
      %v3102 = vrot.slane %v2975, 3
      %v3103 = vsel %vm1917, %v3100, %v3102
      %3104 = vrot.lane.b32.xlu0 %v3026, 88
      %v3105 = vpop.permute.xlu0 %3104
      %3106 = vrot.lane.b32.xlu0 %v3028, 88
      %v3107 = vpop.permute.xlu0 %3106
      %3108 = vrot.lane.b32.xlu0 %v3031, 88
      %v3109 = vpop.permute.xlu0 %3108
      %3110 = vrot.lane.b32.xlu0 %v3033, 88
      %v3111 = vpop.permute.xlu0 %3110
      %3112 = vrot.lane.b32.xlu0 %v3036, 88
      %v3113 = vpop.permute.xlu0 %3112
      %3114 = vrot.lane.b32.xlu0 %v3038, 88
      %v3115 = vpop.permute.xlu0 %3114
      %3116 = vrot.lane.b32.xlu0 %v3041, 88
      %v3117 = vpop.permute.xlu0 %3116
      %3118 = vrot.lane.b32.xlu0 %v3043, 88
      %v3119 = vpop.permute.xlu0 %3118
      %3120 = vrot.lane.b32.xlu0 %v3046, 88
      %v3121 = vpop.permute.xlu0 %3120
      %3122 = vrot.lane.b32.xlu0 %v3048, 88
      %v3123 = vpop.permute.xlu0 %3122
      %3124 = vrot.lane.b32.xlu0 %v3051, 88
      %v3125 = vpop.permute.xlu0 %3124
      %3126 = vrot.lane.b32.xlu0 %v3053, 88
      %v3127 = vpop.permute.xlu0 %3126
      %3128 = vrot.lane.b32.xlu0 %v3056, 88
      %v3129 = vpop.permute.xlu0 %3128
      %3130 = vrot.lane.b32.xlu0 %v3058, 88
      %v3131 = vpop.permute.xlu0 %3130
      %3132 = vrot.lane.b32.xlu0 %v3061, 88
      %v3133 = vpop.permute.xlu0 %3132
      %3134 = vrot.lane.b32.xlu0 %v3063, 88
      %v3135 = vpop.permute.xlu0 %3134
      %3136 = vrot.lane.b32.xlu0 %v3066, 88
      %v3137 = vpop.permute.xlu0 %3136
      %3138 = vrot.lane.b32.xlu0 %v3068, 88
      %v3139 = vpop.permute.xlu0 %3138
      %3140 = vrot.lane.b32.xlu0 %v3071, 88
      %v3141 = vpop.permute.xlu0 %3140
      %3142 = vrot.lane.b32.xlu0 %v3073, 88
      %v3143 = vpop.permute.xlu0 %3142
      %3144 = vrot.lane.b32.xlu0 %v3076, 88
      %v3145 = vpop.permute.xlu0 %3144
      %3146 = vrot.lane.b32.xlu0 %v3078, 88
      %v3147 = vpop.permute.xlu0 %3146
      %3148 = vrot.lane.b32.xlu0 %v3081, 88
      %v3149 = vpop.permute.xlu0 %3148
      %3150 = vrot.lane.b32.xlu0 %v3083, 88
      %v3151 = vpop.permute.xlu0 %3150
      %3152 = vrot.lane.b32.xlu0 %v3086, 88
      %v3153 = vpop.permute.xlu0 %3152
      %3154 = vrot.lane.b32.xlu0 %v3088, 88
      %v3155 = vpop.permute.xlu0 %3154
      %3156 = vrot.lane.b32.xlu0 %v3091, 88
      %v3157 = vpop.permute.xlu0 %3156
      %3158 = vrot.lane.b32.xlu0 %v3093, 88
      %v3159 = vpop.permute.xlu0 %3158
      %3160 = vrot.lane.b32.xlu0 %v3096, 88
      %v3161 = vpop.permute.xlu0 %3160
      %3162 = vrot.lane.b32.xlu0 %v3098, 88
      %v3163 = vpop.permute.xlu0 %3162
      %3164 = vrot.lane.b32.xlu0 %v3101, 88
      %v3165 = vpop.permute.xlu0 %3164
      %3166 = vrot.lane.b32.xlu0 %v3103, 88
      %v3167 = vpop.permute.xlu0 %3166
      %v3200 = vadd.f32 %v2896, %v3105
      %v3201 = vadd.f32 %v2897, %v3107
      %v3202 = vadd.f32 %v2898, %v3109
      %v3203 = vadd.f32 %v2899, %v3111
      %v3204 = vadd.f32 %v2900, %v3113
      %v3205 = vadd.f32 %v2901, %v3115
      %v3206 = vadd.f32 %v2902, %v3117
      %v3207 = vadd.f32 %v2903, %v3119
      %v3208 = vadd.f32 %v2904, %v3121
      %v3209 = vadd.f32 %v2905, %v3123
      %v3210 = vadd.f32 %v2906, %v3125
      %v3211 = vadd.f32 %v2907, %v3127
      %v3212 = vadd.f32 %v2908, %v3129
      %v3213 = vadd.f32 %v2909, %v3131
      %v3214 = vadd.f32 %v2910, %v3133
      %v3215 = vadd.f32 %v2911, %v3135
      %v3216 = vadd.f32 %v2912, %v3137
      %v3217 = vadd.f32 %v2913, %v3139
      %v3218 = vadd.f32 %v2914, %v3141
      %v3219 = vadd.f32 %v2915, %v3143
      %v3220 = vadd.f32 %v2916, %v3145
      %v3221 = vadd.f32 %v2917, %v3147
      %v3222 = vadd.f32 %v2918, %v3149
      %v3223 = vadd.f32 %v2919, %v3151
      %v3224 = vadd.f32 %v2920, %v3153
      %v3225 = vadd.f32 %v2921, %v3155
      %v3226 = vadd.f32 %v2922, %v3157
      %v3227 = vadd.f32 %v2923, %v3159
      %v3228 = vadd.f32 %v2924, %v3161
      %v3229 = vadd.f32 %v2925, %v3163
      %v3230 = vadd.f32 %v2926, %v3165
      %v3231 = vadd.f32 %v2927, %v3167
      %3232 = vst.msk [vmem:[#allocation3] sm:$0xff] %vm1371, %v3200
      %3233 = vst.msk [vmem:[#allocation3 + $0x8] sm:$0xff] %vm1371, %v3201
      %3234 = vst.msk [vmem:[#allocation3 + $0x10] sm:$0xff] %vm1371, %v3202
      %3235 = vst.msk [vmem:[#allocation3 + $0x18] sm:$0xff] %vm1371, %v3203
      %3236 = vst.msk [vmem:[#allocation3 + $0x20] sm:$0xff] %vm1371, %v3204
      %3237 = vst.msk [vmem:[#allocation3 + $0x28] sm:$0xff] %vm1371, %v3205
      %3238 = vst.msk [vmem:[#allocation3 + $0x30] sm:$0xff] %vm1371, %v3206
      %3239 = vst.msk [vmem:[#allocation3 + $0x38] sm:$0xff] %vm1371, %v3207
      %3240 = vst.msk [vmem:[#allocation3 + $0x40] sm:$0xff] %vm1371, %v3208
      %3241 = vst.msk [vmem:[#allocation3 + $0x48] sm:$0xff] %vm1371, %v3209
      %3242 = vst.msk [vmem:[#allocation3 + $0x50] sm:$0xff] %vm1371, %v3210
      %3243 = vst.msk [vmem:[#allocation3 + $0x58] sm:$0xff] %vm1371, %v3211
      %3244 = vst.msk [vmem:[#allocation3 + $0x60] sm:$0xff] %vm1371, %v3212
      %3245 = vst.msk [vmem:[#allocation3 + $0x68] sm:$0xff] %vm1371, %v3213
      %3246 = vst.msk [vmem:[#allocation3 + $0x70] sm:$0xff] %vm1371, %v3214
      %3247 = vst.msk [vmem:[#allocation3 + $0x78] sm:$0xff] %vm1371, %v3215
      %3248 = vst.msk [vmem:[#allocation3 + $0x80] sm:$0xff] %vm1371, %v3216
      %3249 = vst.msk [vmem:[#allocation3 + $0x88] sm:$0xff] %vm1371, %v3217
      %3250 = vst.msk [vmem:[#allocation3 + $0x90] sm:$0xff] %vm1371, %v3218
      %3251 = vst.msk [vmem:[#allocation3 + $0x98] sm:$0xff] %vm1371, %v3219
      %3252 = vst.msk [vmem:[#allocation3 + $0xa0] sm:$0xff] %vm1371, %v3220
      %3253 = vst.msk [vmem:[#allocation3 + $0xa8] sm:$0xff] %vm1371, %v3221
      %3254 = vst.msk [vmem:[#allocation3 + $0xb0] sm:$0xff] %vm1371, %v3222
      %3255 = vst.msk [vmem:[#allocation3 + $0xb8] sm:$0xff] %vm1371, %v3223
      %3256 = vst.msk [vmem:[#allocation3 + $0xc0] sm:$0xff] %vm1371, %v3224
      %3257 = vst.msk [vmem:[#allocation3 + $0xc8] sm:$0xff] %vm1371, %v3225
      %3258 = vst.msk [vmem:[#allocation3 + $0xd0] sm:$0xff] %vm1371, %v3226
      %3259 = vst.msk [vmem:[#allocation3 + $0xd8] sm:$0xff] %vm1371, %v3227
      %3260 = vst.msk [vmem:[#allocation3 + $0xe0] sm:$0xff] %vm1371, %v3228
      %3261 = vst.msk [vmem:[#allocation3 + $0xe8] sm:$0xff] %vm1371, %v3229
      %3262 = vst.msk [vmem:[#allocation3 + $0xf0] sm:$0xff] %vm1371, %v3230
      %3263 = vst.msk [vmem:[#allocation3 + $0xf8] sm:$0xff] %vm1371, %v3231
      %v3264 = vld [vmem:[#allocation3] sm:$0xff]
      %v3265 = vld [vmem:[#allocation3 + $0x8] sm:$0xff]
      %v3266 = vld [vmem:[#allocation3 + $0x10] sm:$0xff]
      %v3267 = vld [vmem:[#allocation3 + $0x18] sm:$0xff]
      %v3268 = vld [vmem:[#allocation3 + $0x20] sm:$0xff]
      %v3269 = vld [vmem:[#allocation3 + $0x28] sm:$0xff]
      %v3270 = vld [vmem:[#allocation3 + $0x30] sm:$0xff]
      %v3271 = vld [vmem:[#allocation3 + $0x38] sm:$0xff]
      %v3272 = vld [vmem:[#allocation3 + $0x40] sm:$0xff]
      %v3273 = vld [vmem:[#allocation3 + $0x48] sm:$0xff]
      %v3274 = vld [vmem:[#allocation3 + $0x50] sm:$0xff]
      %v3275 = vld [vmem:[#allocation3 + $0x58] sm:$0xff]
      %v3276 = vld [vmem:[#allocation3 + $0x60] sm:$0xff]
      %v3277 = vld [vmem:[#allocation3 + $0x68] sm:$0xff]
      %v3278 = vld [vmem:[#allocation3 + $0x70] sm:$0xff]
      %v3279 = vld [vmem:[#allocation3 + $0x78] sm:$0xff]
      %v3280 = vld [vmem:[#allocation3 + $0x80] sm:$0xff]
      %v3281 = vld [vmem:[#allocation3 + $0x88] sm:$0xff]
      %v3282 = vld [vmem:[#allocation3 + $0x90] sm:$0xff]
      %v3283 = vld [vmem:[#allocation3 + $0x98] sm:$0xff]
      %v3284 = vld [vmem:[#allocation3 + $0xa0] sm:$0xff]
      %v3285 = vld [vmem:[#allocation3 + $0xa8] sm:$0xff]
      %v3286 = vld [vmem:[#allocation3 + $0xb0] sm:$0xff]
      %v3287 = vld [vmem:[#allocation3 + $0xb8] sm:$0xff]
      %v3288 = vld [vmem:[#allocation3 + $0xc0] sm:$0xff]
      %v3289 = vld [vmem:[#allocation3 + $0xc8] sm:$0xff]
      %v3290 = vld [vmem:[#allocation3 + $0xd0] sm:$0xff]
      %v3291 = vld [vmem:[#allocation3 + $0xd8] sm:$0xff]
      %v3292 = vld [vmem:[#allocation3 + $0xe0] sm:$0xff]
      %v3293 = vld [vmem:[#allocation3 + $0xe8] sm:$0xff]
      %v3294 = vld [vmem:[#allocation3 + $0xf0] sm:$0xff]
      %v3295 = vld [vmem:[#allocation3 + $0xf8] sm:$0xff]
      %s3296 = scalar_lea.vmem [#allocation2], 144
      %v3297 = vld [vmem:[%s3296] sm:$0xfe]
      %v3298 = vld [vmem:[%s3296 + $0x10] sm:$0xff]
      %v3299 = vld [vmem:[%s3296 + $0x20] sm:$0x1]
      %v3300 = vld [vmem:[%s3296 + $0x30] sm:$0xfe]
      %v3301 = vld [vmem:[%s3296 + $0x40] sm:$0xff]
      %v3302 = vld [vmem:[%s3296 + $0x50] sm:$0x1]
      %v3303 = vld [vmem:[%s3296 + $0x60] sm:$0xfe]
      %v3304 = vld [vmem:[%s3296 + $0x70] sm:$0xff]
      %v3305 = vld [vmem:[%s3296 + $0x80] sm:$0x1]
      %v3306 = vld [vmem:[%s3296 + $0x90] sm:$0xfe]
      %v3307 = vld [vmem:[%s3296 + $0xa0] sm:$0xff]
      %v3308 = vld [vmem:[%s3296 + $0xb0] sm:$0x1]
      %v3309 = vld [vmem:[%s3296 + $0xc0] sm:$0xfe]
      %v3310 = vld [vmem:[%s3296 + $0xd0] sm:$0xff]
      %v3311 = vld [vmem:[%s3296 + $0xe0] sm:$0x1]
      %v3312 = vld [vmem:[%s3296 + $0xf0] sm:$0xfe]
      %v3313 = vld [vmem:[%s3296 + $0x100] sm:$0xff]
      %v3314 = vld [vmem:[%s3296 + $0x110] sm:$0x1]
      %v3315 = vld [vmem:[%s3296 + $0x120] sm:$0xfe]
      %v3316 = vld [vmem:[%s3296 + $0x130] sm:$0xff]
      %v3317 = vld [vmem:[%s3296 + $0x140] sm:$0x1]
      %v3318 = vld [vmem:[%s3296 + $0x150] sm:$0xfe]
      %v3319 = vld [vmem:[%s3296 + $0x160] sm:$0xff]
      %v3320 = vld [vmem:[%s3296 + $0x170] sm:$0x1]
      %v3321 = vld [vmem:[%s3296 + $0x180] sm:$0xfe]
      %v3322 = vld [vmem:[%s3296 + $0x190] sm:$0xff]
      %v3323 = vld [vmem:[%s3296 + $0x1a0] sm:$0x1]
      %v3324 = vld [vmem:[%s3296 + $0x1b0] sm:$0xfe]
      %v3325 = vld [vmem:[%s3296 + $0x1c0] sm:$0xff]
      %v3326 = vld [vmem:[%s3296 + $0x1d0] sm:$0x1]
      %v3327 = vld [vmem:[%s3296 + $0x1e0] sm:$0xfe]
      %v3328 = vld [vmem:[%s3296 + $0x1f0] sm:$0xff]
      %v3329 = vld [vmem:[%s3296 + $0x200] sm:$0x1]
      %v3330 = vld [vmem:[%s3296 + $0x210] sm:$0xfe]
      %v3331 = vld [vmem:[%s3296 + $0x220] sm:$0xff]
      %v3332 = vld [vmem:[%s3296 + $0x230] sm:$0x1]
      %v3333 = vld [vmem:[%s3296 + $0x240] sm:$0xfe]
      %v3334 = vld [vmem:[%s3296 + $0x250] sm:$0xff]
      %v3335 = vld [vmem:[%s3296 + $0x260] sm:$0x1]
      %v3336 = vld [vmem:[%s3296 + $0x270] sm:$0xfe]
      %v3337 = vld [vmem:[%s3296 + $0x280] sm:$0xff]
      %v3338 = vld [vmem:[%s3296 + $0x290] sm:$0x1]
      %v3339 = vld [vmem:[%s3296 + $0x2a0] sm:$0xfe]
      %v3340 = vld [vmem:[%s3296 + $0x2b0] sm:$0xff]
      %v3341 = vld [vmem:[%s3296 + $0x2c0] sm:$0x1]
      %v3342 = vld [vmem:[%s3296 + $0x2d0] sm:$0xfe]
      %v3343 = vld [vmem:[%s3296 + $0x2e0] sm:$0xff]
      %v3344 = vld [vmem:[%s3296 + $0x2f0] sm:$0x1]
      %v3393 = vrot.slane %v3297, 1
      %v3394 = vrot.slane %v3298, 1
      %v3395 = vsel %vm2287, %v3393, %v3394
      %v3396 = vrot.slane %v3299, 1
      %v3397 = vsel %vm2287, %v3394, %v3396
      %v3398 = vrot.slane %v3300, 1
      %v3399 = vrot.slane %v3301, 1
      %v3400 = vsel %vm2287, %v3398, %v3399
      %v3401 = vrot.slane %v3302, 1
      %v3402 = vsel %vm2287, %v3399, %v3401
      %v3403 = vrot.slane %v3303, 1
      %v3404 = vrot.slane %v3304, 1
      %v3405 = vsel %vm2287, %v3403, %v3404
      %v3406 = vrot.slane %v3305, 1
      %v3407 = vsel %vm2287, %v3404, %v3406
      %v3408 = vrot.slane %v3306, 1
      %v3409 = vrot.slane %v3307, 1
      %v3410 = vsel %vm2287, %v3408, %v3409
      %v3411 = vrot.slane %v3308, 1
      %v3412 = vsel %vm2287, %v3409, %v3411
      %v3413 = vrot.slane %v3309, 1
      %v3414 = vrot.slane %v3310, 1
      %v3415 = vsel %vm2287, %v3413, %v3414
      %v3416 = vrot.slane %v3311, 1
      %v3417 = vsel %vm2287, %v3414, %v3416
      %v3418 = vrot.slane %v3312, 1
      %v3419 = vrot.slane %v3313, 1
      %v3420 = vsel %vm2287, %v3418, %v3419
      %v3421 = vrot.slane %v3314, 1
      %v3422 = vsel %vm2287, %v3419, %v3421
      %v3423 = vrot.slane %v3315, 1
      %v3424 = vrot.slane %v3316, 1
      %v3425 = vsel %vm2287, %v3423, %v3424
      %v3426 = vrot.slane %v3317, 1
      %v3427 = vsel %vm2287, %v3424, %v3426
      %v3428 = vrot.slane %v3318, 1
      %v3429 = vrot.slane %v3319, 1
      %v3430 = vsel %vm2287, %v3428, %v3429
      %v3431 = vrot.slane %v3320, 1
      %v3432 = vsel %vm2287, %v3429, %v3431
      %v3433 = vrot.slane %v3321, 1
      %v3434 = vrot.slane %v3322, 1
      %v3435 = vsel %vm2287, %v3433, %v3434
      %v3436 = vrot.slane %v3323, 1
      %v3437 = vsel %vm2287, %v3434, %v3436
      %v3438 = vrot.slane %v3324, 1
      %v3439 = vrot.slane %v3325, 1
      %v3440 = vsel %vm2287, %v3438, %v3439
      %v3441 = vrot.slane %v3326, 1
      %v3442 = vsel %vm2287, %v3439, %v3441
      %v3443 = vrot.slane %v3327, 1
      %v3444 = vrot.slane %v3328, 1
      %v3445 = vsel %vm2287, %v3443, %v3444
      %v3446 = vrot.slane %v3329, 1
      %v3447 = vsel %vm2287, %v3444, %v3446
      %v3448 = vrot.slane %v3330, 1
      %v3449 = vrot.slane %v3331, 1
      %v3450 = vsel %vm2287, %v3448, %v3449
      %v3451 = vrot.slane %v3332, 1
      %v3452 = vsel %vm2287, %v3449, %v3451
      %v3453 = vrot.slane %v3333, 1
      %v3454 = vrot.slane %v3334, 1
      %v3455 = vsel %vm2287, %v3453, %v3454
      %v3456 = vrot.slane %v3335, 1
      %v3457 = vsel %vm2287, %v3454, %v3456
      %v3458 = vrot.slane %v3336, 1
      %v3459 = vrot.slane %v3337, 1
      %v3460 = vsel %vm2287, %v3458, %v3459
      %v3461 = vrot.slane %v3338, 1
      %v3462 = vsel %vm2287, %v3459, %v3461
      %v3463 = vrot.slane %v3339, 1
      %v3464 = vrot.slane %v3340, 1
      %v3465 = vsel %vm2287, %v3463, %v3464
      %v3466 = vrot.slane %v3341, 1
      %v3467 = vsel %vm2287, %v3464, %v3466
      %v3468 = vrot.slane %v3342, 1
      %v3469 = vrot.slane %v3343, 1
      %v3470 = vsel %vm2287, %v3468, %v3469
      %v3471 = vrot.slane %v3344, 1
      %v3472 = vsel %vm2287, %v3469, %v3471
      %3473 = vrot.lane.b32.xlu0 %v3395, 80
      %v3474 = vpop.permute.xlu0 %3473
      %3475 = vrot.lane.b32.xlu0 %v3397, 80
      %v3476 = vpop.permute.xlu0 %3475
      %3477 = vrot.lane.b32.xlu0 %v3400, 80
      %v3478 = vpop.permute.xlu0 %3477
      %3479 = vrot.lane.b32.xlu0 %v3402, 80
      %v3480 = vpop.permute.xlu0 %3479
      %3481 = vrot.lane.b32.xlu0 %v3405, 80
      %v3482 = vpop.permute.xlu0 %3481
      %3483 = vrot.lane.b32.xlu0 %v3407, 80
      %v3484 = vpop.permute.xlu0 %3483
      %3485 = vrot.lane.b32.xlu0 %v3410, 80
      %v3486 = vpop.permute.xlu0 %3485
      %3487 = vrot.lane.b32.xlu0 %v3412, 80
      %v3488 = vpop.permute.xlu0 %3487
      %3489 = vrot.lane.b32.xlu0 %v3415, 80
      %v3490 = vpop.permute.xlu0 %3489
      %3491 = vrot.lane.b32.xlu0 %v3417, 80
      %v3492 = vpop.permute.xlu0 %3491
      %3493 = vrot.lane.b32.xlu0 %v3420, 80
      %v3494 = vpop.permute.xlu0 %3493
      %3495 = vrot.lane.b32.xlu0 %v3422, 80
      %v3496 = vpop.permute.xlu0 %3495
      %3497 = vrot.lane.b32.xlu0 %v3425, 80
      %v3498 = vpop.permute.xlu0 %3497
      %3499 = vrot.lane.b32.xlu0 %v3427, 80
      %v3500 = vpop.permute.xlu0 %3499
      %3501 = vrot.lane.b32.xlu0 %v3430, 80
      %v3502 = vpop.permute.xlu0 %3501
      %3503 = vrot.lane.b32.xlu0 %v3432, 80
      %v3504 = vpop.permute.xlu0 %3503
      %3505 = vrot.lane.b32.xlu0 %v3435, 80
      %v3506 = vpop.permute.xlu0 %3505
      %3507 = vrot.lane.b32.xlu0 %v3437, 80
      %v3508 = vpop.permute.xlu0 %3507
      %3509 = vrot.lane.b32.xlu0 %v3440, 80
      %v3510 = vpop.permute.xlu0 %3509
      %3511 = vrot.lane.b32.xlu0 %v3442, 80
      %v3512 = vpop.permute.xlu0 %3511
      %3513 = vrot.lane.b32.xlu0 %v3445, 80
      %v3514 = vpop.permute.xlu0 %3513
      %3515 = vrot.lane.b32.xlu0 %v3447, 80
      %v3516 = vpop.permute.xlu0 %3515
      %3517 = vrot.lane.b32.xlu0 %v3450, 80
      %v3518 = vpop.permute.xlu0 %3517
      %3519 = vrot.lane.b32.xlu0 %v3452, 80
      %v3520 = vpop.permute.xlu0 %3519
      %3521 = vrot.lane.b32.xlu0 %v3455, 80
      %v3522 = vpop.permute.xlu0 %3521
      %3523 = vrot.lane.b32.xlu0 %v3457, 80
      %v3524 = vpop.permute.xlu0 %3523
      %3525 = vrot.lane.b32.xlu0 %v3460, 80
      %v3526 = vpop.permute.xlu0 %3525
      %3527 = vrot.lane.b32.xlu0 %v3462, 80
      %v3528 = vpop.permute.xlu0 %3527
      %3529 = vrot.lane.b32.xlu0 %v3465, 80
      %v3530 = vpop.permute.xlu0 %3529
      %3531 = vrot.lane.b32.xlu0 %v3467, 80
      %v3532 = vpop.permute.xlu0 %3531
      %3533 = vrot.lane.b32.xlu0 %v3470, 80
      %v3534 = vpop.permute.xlu0 %3533
      %3535 = vrot.lane.b32.xlu0 %v3472, 80
      %v3536 = vpop.permute.xlu0 %3535
      %v3569 = vadd.f32 %v3264, %v3474
      %v3570 = vadd.f32 %v3265, %v3476
      %v3571 = vadd.f32 %v3266, %v3478
      %v3572 = vadd.f32 %v3267, %v3480
      %v3573 = vadd.f32 %v3268, %v3482
      %v3574 = vadd.f32 %v3269, %v3484
      %v3575 = vadd.f32 %v3270, %v3486
      %v3576 = vadd.f32 %v3271, %v3488
      %v3577 = vadd.f32 %v3272, %v3490
      %v3578 = vadd.f32 %v3273, %v3492
      %v3579 = vadd.f32 %v3274, %v3494
      %v3580 = vadd.f32 %v3275, %v3496
      %v3581 = vadd.f32 %v3276, %v3498
      %v3582 = vadd.f32 %v3277, %v3500
      %v3583 = vadd.f32 %v3278, %v3502
      %v3584 = vadd.f32 %v3279, %v3504
      %v3585 = vadd.f32 %v3280, %v3506
      %v3586 = vadd.f32 %v3281, %v3508
      %v3587 = vadd.f32 %v3282, %v3510
      %v3588 = vadd.f32 %v3283, %v3512
      %v3589 = vadd.f32 %v3284, %v3514
      %v3590 = vadd.f32 %v3285, %v3516
      %v3591 = vadd.f32 %v3286, %v3518
      %v3592 = vadd.f32 %v3287, %v3520
      %v3593 = vadd.f32 %v3288, %v3522
      %v3594 = vadd.f32 %v3289, %v3524
      %v3595 = vadd.f32 %v3290, %v3526
      %v3596 = vadd.f32 %v3291, %v3528
      %v3597 = vadd.f32 %v3292, %v3530
      %v3598 = vadd.f32 %v3293, %v3532
      %v3599 = vadd.f32 %v3294, %v3534
      %v3600 = vadd.f32 %v3295, %v3536
      %3601 = vst.msk [vmem:[#allocation3] sm:$0xff] %vm1371, %v3569
      %3602 = vst.msk [vmem:[#allocation3 + $0x8] sm:$0xff] %vm1371, %v3570
      %3603 = vst.msk [vmem:[#allocation3 + $0x10] sm:$0xff] %vm1371, %v3571
      %3604 = vst.msk [vmem:[#allocation3 + $0x18] sm:$0xff] %vm1371, %v3572
      %3605 = vst.msk [vmem:[#allocation3 + $0x20] sm:$0xff] %vm1371, %v3573
      %3606 = vst.msk [vmem:[#allocation3 + $0x28] sm:$0xff] %vm1371, %v3574
      %3607 = vst.msk [vmem:[#allocation3 + $0x30] sm:$0xff] %vm1371, %v3575
      %3608 = vst.msk [vmem:[#allocation3 + $0x38] sm:$0xff] %vm1371, %v3576
      %3609 = vst.msk [vmem:[#allocation3 + $0x40] sm:$0xff] %vm1371, %v3577
      %3610 = vst.msk [vmem:[#allocation3 + $0x48] sm:$0xff] %vm1371, %v3578
      %3611 = vst.msk [vmem:[#allocation3 + $0x50] sm:$0xff] %vm1371, %v3579
      %3612 = vst.msk [vmem:[#allocation3 + $0x58] sm:$0xff] %vm1371, %v3580
      %3613 = vst.msk [vmem:[#allocation3 + $0x60] sm:$0xff] %vm1371, %v3581
      %3614 = vst.msk [vmem:[#allocation3 + $0x68] sm:$0xff] %vm1371, %v3582
      %3615 = vst.msk [vmem:[#allocation3 + $0x70] sm:$0xff] %vm1371, %v3583
      %3616 = vst.msk [vmem:[#allocation3 + $0x78] sm:$0xff] %vm1371, %v3584
      %3617 = vst.msk [vmem:[#allocation3 + $0x80] sm:$0xff] %vm1371, %v3585
      %3618 = vst.msk [vmem:[#allocation3 + $0x88] sm:$0xff] %vm1371, %v3586
      %3619 = vst.msk [vmem:[#allocation3 + $0x90] sm:$0xff] %vm1371, %v3587
      %3620 = vst.msk [vmem:[#allocation3 + $0x98] sm:$0xff] %vm1371, %v3588
      %3621 = vst.msk [vmem:[#allocation3 + $0xa0] sm:$0xff] %vm1371, %v3589
      %3622 = vst.msk [vmem:[#allocation3 + $0xa8] sm:$0xff] %vm1371, %v3590
      %3623 = vst.msk [vmem:[#allocation3 + $0xb0] sm:$0xff] %vm1371, %v3591
      %3624 = vst.msk [vmem:[#allocation3 + $0xb8] sm:$0xff] %vm1371, %v3592
      %3625 = vst.msk [vmem:[#allocation3 + $0xc0] sm:$0xff] %vm1371, %v3593
      %3626 = vst.msk [vmem:[#allocation3 + $0xc8] sm:$0xff] %vm1371, %v3594
      %3627 = vst.msk [vmem:[#allocation3 + $0xd0] sm:$0xff] %vm1371, %v3595
      %3628 = vst.msk [vmem:[#allocation3 + $0xd8] sm:$0xff] %vm1371, %v3596
      %3629 = vst.msk [vmem:[#allocation3 + $0xe0] sm:$0xff] %vm1371, %v3597
      %3630 = vst.msk [vmem:[#allocation3 + $0xe8] sm:$0xff] %vm1371, %v3598
      %3631 = vst.msk [vmem:[#allocation3 + $0xf0] sm:$0xff] %vm1371, %v3599
      %3632 = vst.msk [vmem:[#allocation3 + $0xf8] sm:$0xff] %vm1371, %v3600
      %v3633 = vld [vmem:[#allocation3] sm:$0xff]
      %v3634 = vld [vmem:[#allocation3 + $0x8] sm:$0xff]
      %v3635 = vld [vmem:[#allocation3 + $0x10] sm:$0xff]
      %v3636 = vld [vmem:[#allocation3 + $0x18] sm:$0xff]
      %v3637 = vld [vmem:[#allocation3 + $0x20] sm:$0xff]
      %v3638 = vld [vmem:[#allocation3 + $0x28] sm:$0xff]
      %v3639 = vld [vmem:[#allocation3 + $0x30] sm:$0xff]
      %v3640 = vld [vmem:[#allocation3 + $0x38] sm:$0xff]
      %v3641 = vld [vmem:[#allocation3 + $0x40] sm:$0xff]
      %v3642 = vld [vmem:[#allocation3 + $0x48] sm:$0xff]
      %v3643 = vld [vmem:[#allocation3 + $0x50] sm:$0xff]
      %v3644 = vld [vmem:[#allocation3 + $0x58] sm:$0xff]
      %v3645 = vld [vmem:[#allocation3 + $0x60] sm:$0xff]
      %v3646 = vld [vmem:[#allocation3 + $0x68] sm:$0xff]
      %v3647 = vld [vmem:[#allocation3 + $0x70] sm:$0xff]
      %v3648 = vld [vmem:[#allocation3 + $0x78] sm:$0xff]
      %v3649 = vld [vmem:[#allocation3 + $0x80] sm:$0xff]
      %v3650 = vld [vmem:[#allocation3 + $0x88] sm:$0xff]
      %v3651 = vld [vmem:[#allocation3 + $0x90] sm:$0xff]
      %v3652 = vld [vmem:[#allocation3 + $0x98] sm:$0xff]
      %v3653 = vld [vmem:[#allocation3 + $0xa0] sm:$0xff]
      %v3654 = vld [vmem:[#allocation3 + $0xa8] sm:$0xff]
      %v3655 = vld [vmem:[#allocation3 + $0xb0] sm:$0xff]
      %v3656 = vld [vmem:[#allocation3 + $0xb8] sm:$0xff]
      %v3657 = vld [vmem:[#allocation3 + $0xc0] sm:$0xff]
      %v3658 = vld [vmem:[#allocation3 + $0xc8] sm:$0xff]
      %v3659 = vld [vmem:[#allocation3 + $0xd0] sm:$0xff]
      %v3660 = vld [vmem:[#allocation3 + $0xd8] sm:$0xff]
      %v3661 = vld [vmem:[#allocation3 + $0xe0] sm:$0xff]
      %v3662 = vld [vmem:[#allocation3 + $0xe8] sm:$0xff]
      %v3663 = vld [vmem:[#allocation3 + $0xf0] sm:$0xff]
      %v3664 = vld [vmem:[#allocation3 + $0xf8] sm:$0xff]
      %v3665 = vld [vmem:[%s3296] sm:$0xfc]
      %v3666 = vld [vmem:[%s3296 + $0x10] sm:$0xff]
      %v3667 = vld [vmem:[%s3296 + $0x20] sm:$0x3]
      %v3668 = vld [vmem:[%s3296 + $0x30] sm:$0xfc]
      %v3669 = vld [vmem:[%s3296 + $0x40] sm:$0xff]
      %v3670 = vld [vmem:[%s3296 + $0x50] sm:$0x3]
      %v3671 = vld [vmem:[%s3296 + $0x60] sm:$0xfc]
      %v3672 = vld [vmem:[%s3296 + $0x70] sm:$0xff]
      %v3673 = vld [vmem:[%s3296 + $0x80] sm:$0x3]
      %v3674 = vld [vmem:[%s3296 + $0x90] sm:$0xfc]
      %v3675 = vld [vmem:[%s3296 + $0xa0] sm:$0xff]
      %v3676 = vld [vmem:[%s3296 + $0xb0] sm:$0x3]
      %v3677 = vld [vmem:[%s3296 + $0xc0] sm:$0xfc]
      %v3678 = vld [vmem:[%s3296 + $0xd0] sm:$0xff]
      %v3679 = vld [vmem:[%s3296 + $0xe0] sm:$0x3]
      %v3680 = vld [vmem:[%s3296 + $0xf0] sm:$0xfc]
      %v3681 = vld [vmem:[%s3296 + $0x100] sm:$0xff]
      %v3682 = vld [vmem:[%s3296 + $0x110] sm:$0x3]
      %v3683 = vld [vmem:[%s3296 + $0x120] sm:$0xfc]
      %v3684 = vld [vmem:[%s3296 + $0x130] sm:$0xff]
      %v3685 = vld [vmem:[%s3296 + $0x140] sm:$0x3]
      %v3686 = vld [vmem:[%s3296 + $0x150] sm:$0xfc]
      %v3687 = vld [vmem:[%s3296 + $0x160] sm:$0xff]
      %v3688 = vld [vmem:[%s3296 + $0x170] sm:$0x3]
      %v3689 = vld [vmem:[%s3296 + $0x180] sm:$0xfc]
      %v3690 = vld [vmem:[%s3296 + $0x190] sm:$0xff]
      %v3691 = vld [vmem:[%s3296 + $0x1a0] sm:$0x3]
      %v3692 = vld [vmem:[%s3296 + $0x1b0] sm:$0xfc]
      %v3693 = vld [vmem:[%s3296 + $0x1c0] sm:$0xff]
      %v3694 = vld [vmem:[%s3296 + $0x1d0] sm:$0x3]
      %v3695 = vld [vmem:[%s3296 + $0x1e0] sm:$0xfc]
      %v3696 = vld [vmem:[%s3296 + $0x1f0] sm:$0xff]
      %v3697 = vld [vmem:[%s3296 + $0x200] sm:$0x3]
      %v3698 = vld [vmem:[%s3296 + $0x210] sm:$0xfc]
      %v3699 = vld [vmem:[%s3296 + $0x220] sm:$0xff]
      %v3700 = vld [vmem:[%s3296 + $0x230] sm:$0x3]
      %v3701 = vld [vmem:[%s3296 + $0x240] sm:$0xfc]
      %v3702 = vld [vmem:[%s3296 + $0x250] sm:$0xff]
      %v3703 = vld [vmem:[%s3296 + $0x260] sm:$0x3]
      %v3704 = vld [vmem:[%s3296 + $0x270] sm:$0xfc]
      %v3705 = vld [vmem:[%s3296 + $0x280] sm:$0xff]
      %v3706 = vld [vmem:[%s3296 + $0x290] sm:$0x3]
      %v3707 = vld [vmem:[%s3296 + $0x2a0] sm:$0xfc]
      %v3708 = vld [vmem:[%s3296 + $0x2b0] sm:$0xff]
      %v3709 = vld [vmem:[%s3296 + $0x2c0] sm:$0x3]
      %v3710 = vld [vmem:[%s3296 + $0x2d0] sm:$0xfc]
      %v3711 = vld [vmem:[%s3296 + $0x2e0] sm:$0xff]
      %v3712 = vld [vmem:[%s3296 + $0x2f0] sm:$0x3]
      %v3761 = vrot.slane %v3665, 2
      %v3762 = vrot.slane %v3666, 2
      %v3763 = vsel %vm1548, %v3761, %v3762
      %v3764 = vrot.slane %v3667, 2
      %v3765 = vsel %vm1548, %v3762, %v3764
      %v3766 = vrot.slane %v3668, 2
      %v3767 = vrot.slane %v3669, 2
      %v3768 = vsel %vm1548, %v3766, %v3767
      %v3769 = vrot.slane %v3670, 2
      %v3770 = vsel %vm1548, %v3767, %v3769
      %v3771 = vrot.slane %v3671, 2
      %v3772 = vrot.slane %v3672, 2
      %v3773 = vsel %vm1548, %v3771, %v3772
      %v3774 = vrot.slane %v3673, 2
      %v3775 = vsel %vm1548, %v3772, %v3774
      %v3776 = vrot.slane %v3674, 2
      %v3777 = vrot.slane %v3675, 2
      %v3778 = vsel %vm1548, %v3776, %v3777
      %v3779 = vrot.slane %v3676, 2
      %v3780 = vsel %vm1548, %v3777, %v3779
      %v3781 = vrot.slane %v3677, 2
      %v3782 = vrot.slane %v3678, 2
      %v3783 = vsel %vm1548, %v3781, %v3782
      %v3784 = vrot.slane %v3679, 2
      %v3785 = vsel %vm1548, %v3782, %v3784
      %v3786 = vrot.slane %v3680, 2
      %v3787 = vrot.slane %v3681, 2
      %v3788 = vsel %vm1548, %v3786, %v3787
      %v3789 = vrot.slane %v3682, 2
      %v3790 = vsel %vm1548, %v3787, %v3789
      %v3791 = vrot.slane %v3683, 2
      %v3792 = vrot.slane %v3684, 2
      %v3793 = vsel %vm1548, %v3791, %v3792
      %v3794 = vrot.slane %v3685, 2
      %v3795 = vsel %vm1548, %v3792, %v3794
      %v3796 = vrot.slane %v3686, 2
      %v3797 = vrot.slane %v3687, 2
      %v3798 = vsel %vm1548, %v3796, %v3797
      %v3799 = vrot.slane %v3688, 2
      %v3800 = vsel %vm1548, %v3797, %v3799
      %v3801 = vrot.slane %v3689, 2
      %v3802 = vrot.slane %v3690, 2
      %v3803 = vsel %vm1548, %v3801, %v3802
      %v3804 = vrot.slane %v3691, 2
      %v3805 = vsel %vm1548, %v3802, %v3804
      %v3806 = vrot.slane %v3692, 2
      %v3807 = vrot.slane %v3693, 2
      %v3808 = vsel %vm1548, %v3806, %v3807
      %v3809 = vrot.slane %v3694, 2
      %v3810 = vsel %vm1548, %v3807, %v3809
      %v3811 = vrot.slane %v3695, 2
      %v3812 = vrot.slane %v3696, 2
      %v3813 = vsel %vm1548, %v3811, %v3812
      %v3814 = vrot.slane %v3697, 2
      %v3815 = vsel %vm1548, %v3812, %v3814
      %v3816 = vrot.slane %v3698, 2
      %v3817 = vrot.slane %v3699, 2
      %v3818 = vsel %vm1548, %v3816, %v3817
      %v3819 = vrot.slane %v3700, 2
      %v3820 = vsel %vm1548, %v3817, %v3819
      %v3821 = vrot.slane %v3701, 2
      %v3822 = vrot.slane %v3702, 2
      %v3823 = vsel %vm1548, %v3821, %v3822
      %v3824 = vrot.slane %v3703, 2
      %v3825 = vsel %vm1548, %v3822, %v3824
      %v3826 = vrot.slane %v3704, 2
      %v3827 = vrot.slane %v3705, 2
      %v3828 = vsel %vm1548, %v3826, %v3827
      %v3829 = vrot.slane %v3706, 2
      %v3830 = vsel %vm1548, %v3827, %v3829
      %v3831 = vrot.slane %v3707, 2
      %v3832 = vrot.slane %v3708, 2
      %v3833 = vsel %vm1548, %v3831, %v3832
      %v3834 = vrot.slane %v3709, 2
      %v3835 = vsel %vm1548, %v3832, %v3834
      %v3836 = vrot.slane %v3710, 2
      %v3837 = vrot.slane %v3711, 2
      %v3838 = vsel %vm1548, %v3836, %v3837
      %v3839 = vrot.slane %v3712, 2
      %v3840 = vsel %vm1548, %v3837, %v3839
      %3841 = vrot.lane.b32.xlu0 %v3763, 72
      %v3842 = vpop.permute.xlu0 %3841
      %3843 = vrot.lane.b32.xlu0 %v3765, 72
      %v3844 = vpop.permute.xlu0 %3843
      %3845 = vrot.lane.b32.xlu0 %v3768, 72
      %v3846 = vpop.permute.xlu0 %3845
      %3847 = vrot.lane.b32.xlu0 %v3770, 72
      %v3848 = vpop.permute.xlu0 %3847
      %3849 = vrot.lane.b32.xlu0 %v3773, 72
      %v3850 = vpop.permute.xlu0 %3849
      %3851 = vrot.lane.b32.xlu0 %v3775, 72
      %v3852 = vpop.permute.xlu0 %3851
      %3853 = vrot.lane.b32.xlu0 %v3778, 72
      %v3854 = vpop.permute.xlu0 %3853
      %3855 = vrot.lane.b32.xlu0 %v3780, 72
      %v3856 = vpop.permute.xlu0 %3855
      %3857 = vrot.lane.b32.xlu0 %v3783, 72
      %v3858 = vpop.permute.xlu0 %3857
      %3859 = vrot.lane.b32.xlu0 %v3785, 72
      %v3860 = vpop.permute.xlu0 %3859
      %3861 = vrot.lane.b32.xlu0 %v3788, 72
      %v3862 = vpop.permute.xlu0 %3861
      %3863 = vrot.lane.b32.xlu0 %v3790, 72
      %v3864 = vpop.permute.xlu0 %3863
      %3865 = vrot.lane.b32.xlu0 %v3793, 72
      %v3866 = vpop.permute.xlu0 %3865
      %3867 = vrot.lane.b32.xlu0 %v3795, 72
      %v3868 = vpop.permute.xlu0 %3867
      %3869 = vrot.lane.b32.xlu0 %v3798, 72
      %v3870 = vpop.permute.xlu0 %3869
      %3871 = vrot.lane.b32.xlu0 %v3800, 72
      %v3872 = vpop.permute.xlu0 %3871
      %3873 = vrot.lane.b32.xlu0 %v3803, 72
      %v3874 = vpop.permute.xlu0 %3873
      %3875 = vrot.lane.b32.xlu0 %v3805, 72
      %v3876 = vpop.permute.xlu0 %3875
      %3877 = vrot.lane.b32.xlu0 %v3808, 72
      %v3878 = vpop.permute.xlu0 %3877
      %3879 = vrot.lane.b32.xlu0 %v3810, 72
      %v3880 = vpop.permute.xlu0 %3879
      %3881 = vrot.lane.b32.xlu0 %v3813, 72
      %v3882 = vpop.permute.xlu0 %3881
      %3883 = vrot.lane.b32.xlu0 %v3815, 72
      %v3884 = vpop.permute.xlu0 %3883
      %3885 = vrot.lane.b32.xlu0 %v3818, 72
      %v3886 = vpop.permute.xlu0 %3885
      %3887 = vrot.lane.b32.xlu0 %v3820, 72
      %v3888 = vpop.permute.xlu0 %3887
      %3889 = vrot.lane.b32.xlu0 %v3823, 72
      %v3890 = vpop.permute.xlu0 %3889
      %3891 = vrot.lane.b32.xlu0 %v3825, 72
      %v3892 = vpop.permute.xlu0 %3891
      %3893 = vrot.lane.b32.xlu0 %v3828, 72
      %v3894 = vpop.permute.xlu0 %3893
      %3895 = vrot.lane.b32.xlu0 %v3830, 72
      %v3896 = vpop.permute.xlu0 %3895
      %3897 = vrot.lane.b32.xlu0 %v3833, 72
      %v3898 = vpop.permute.xlu0 %3897
      %3899 = vrot.lane.b32.xlu0 %v3835, 72
      %v3900 = vpop.permute.xlu0 %3899
      %3901 = vrot.lane.b32.xlu0 %v3838, 72
      %v3902 = vpop.permute.xlu0 %3901
      %3903 = vrot.lane.b32.xlu0 %v3840, 72
      %v3904 = vpop.permute.xlu0 %3903
      %v3937 = vadd.f32 %v3633, %v3842
      %v3938 = vadd.f32 %v3634, %v3844
      %v3939 = vadd.f32 %v3635, %v3846
      %v3940 = vadd.f32 %v3636, %v3848
      %v3941 = vadd.f32 %v3637, %v3850
      %v3942 = vadd.f32 %v3638, %v3852
      %v3943 = vadd.f32 %v3639, %v3854
      %v3944 = vadd.f32 %v3640, %v3856
      %v3945 = vadd.f32 %v3641, %v3858
      %v3946 = vadd.f32 %v3642, %v3860
      %v3947 = vadd.f32 %v3643, %v3862
      %v3948 = vadd.f32 %v3644, %v3864
      %v3949 = vadd.f32 %v3645, %v3866
      %v3950 = vadd.f32 %v3646, %v3868
      %v3951 = vadd.f32 %v3647, %v3870
      %v3952 = vadd.f32 %v3648, %v3872
      %v3953 = vadd.f32 %v3649, %v3874
      %v3954 = vadd.f32 %v3650, %v3876
      %v3955 = vadd.f32 %v3651, %v3878
      %v3956 = vadd.f32 %v3652, %v3880
      %v3957 = vadd.f32 %v3653, %v3882
      %v3958 = vadd.f32 %v3654, %v3884
      %v3959 = vadd.f32 %v3655, %v3886
      %v3960 = vadd.f32 %v3656, %v3888
      %v3961 = vadd.f32 %v3657, %v3890
      %v3962 = vadd.f32 %v3658, %v3892
      %v3963 = vadd.f32 %v3659, %v3894
      %v3964 = vadd.f32 %v3660, %v3896
      %v3965 = vadd.f32 %v3661, %v3898
      %v3966 = vadd.f32 %v3662, %v3900
      %v3967 = vadd.f32 %v3663, %v3902
      %v3968 = vadd.f32 %v3664, %v3904
      %3969 = vst.msk [vmem:[#allocation3] sm:$0xff] %vm1371, %v3937
      %3970 = vst.msk [vmem:[#allocation3 + $0x8] sm:$0xff] %vm1371, %v3938
      %3971 = vst.msk [vmem:[#allocation3 + $0x10] sm:$0xff] %vm1371, %v3939
      %3972 = vst.msk [vmem:[#allocation3 + $0x18] sm:$0xff] %vm1371, %v3940
      %3973 = vst.msk [vmem:[#allocation3 + $0x20] sm:$0xff] %vm1371, %v3941
      %3974 = vst.msk [vmem:[#allocation3 + $0x28] sm:$0xff] %vm1371, %v3942
      %3975 = vst.msk [vmem:[#allocation3 + $0x30] sm:$0xff] %vm1371, %v3943
      %3976 = vst.msk [vmem:[#allocation3 + $0x38] sm:$0xff] %vm1371, %v3944
      %3977 = vst.msk [vmem:[#allocation3 + $0x40] sm:$0xff] %vm1371, %v3945
      %3978 = vst.msk [vmem:[#allocation3 + $0x48] sm:$0xff] %vm1371, %v3946
      %3979 = vst.msk [vmem:[#allocation3 + $0x50] sm:$0xff] %vm1371, %v3947
      %3980 = vst.msk [vmem:[#allocation3 + $0x58] sm:$0xff] %vm1371, %v3948
      %3981 = vst.msk [vmem:[#allocation3 + $0x60] sm:$0xff] %vm1371, %v3949
      %3982 = vst.msk [vmem:[#allocation3 + $0x68] sm:$0xff] %vm1371, %v3950
      %3983 = vst.msk [vmem:[#allocation3 + $0x70] sm:$0xff] %vm1371, %v3951
      %3984 = vst.msk [vmem:[#allocation3 + $0x78] sm:$0xff] %vm1371, %v3952
      %3985 = vst.msk [vmem:[#allocation3 + $0x80] sm:$0xff] %vm1371, %v3953
      %3986 = vst.msk [vmem:[#allocation3 + $0x88] sm:$0xff] %vm1371, %v3954
      %3987 = vst.msk [vmem:[#allocation3 + $0x90] sm:$0xff] %vm1371, %v3955
      %3988 = vst.msk [vmem:[#allocation3 + $0x98] sm:$0xff] %vm1371, %v3956
      %3989 = vst.msk [vmem:[#allocation3 + $0xa0] sm:$0xff] %vm1371, %v3957
      %3990 = vst.msk [vmem:[#allocation3 + $0xa8] sm:$0xff] %vm1371, %v3958
      %3991 = vst.msk [vmem:[#allocation3 + $0xb0] sm:$0xff] %vm1371, %v3959
      %3992 = vst.msk [vmem:[#allocation3 + $0xb8] sm:$0xff] %vm1371, %v3960
      %3993 = vst.msk [vmem:[#allocation3 + $0xc0] sm:$0xff] %vm1371, %v3961
      %3994 = vst.msk [vmem:[#allocation3 + $0xc8] sm:$0xff] %vm1371, %v3962
      %3995 = vst.msk [vmem:[#allocation3 + $0xd0] sm:$0xff] %vm1371, %v3963
      %3996 = vst.msk [vmem:[#allocation3 + $0xd8] sm:$0xff] %vm1371, %v3964
      %3997 = vst.msk [vmem:[#allocation3 + $0xe0] sm:$0xff] %vm1371, %v3965
      %3998 = vst.msk [vmem:[#allocation3 + $0xe8] sm:$0xff] %vm1371, %v3966
      %3999 = vst.msk [vmem:[#allocation3 + $0xf0] sm:$0xff] %vm1371, %v3967
      %4000 = vst.msk [vmem:[#allocation3 + $0xf8] sm:$0xff] %vm1371, %v3968
      %v4001 = vld [vmem:[#allocation3] sm:$0xff]
      %v4002 = vld [vmem:[#allocation3 + $0x8] sm:$0xff]
      %v4003 = vld [vmem:[#allocation3 + $0x10] sm:$0xff]
      %v4004 = vld [vmem:[#allocation3 + $0x18] sm:$0xff]
      %v4005 = vld [vmem:[#allocation3 + $0x20] sm:$0xff]
      %v4006 = vld [vmem:[#allocation3 + $0x28] sm:$0xff]
      %v4007 = vld [vmem:[#allocation3 + $0x30] sm:$0xff]
      %v4008 = vld [vmem:[#allocation3 + $0x38] sm:$0xff]
      %v4009 = vld [vmem:[#allocation3 + $0x40] sm:$0xff]
      %v4010 = vld [vmem:[#allocation3 + $0x48] sm:$0xff]
      %v4011 = vld [vmem:[#allocation3 + $0x50] sm:$0xff]
      %v4012 = vld [vmem:[#allocation3 + $0x58] sm:$0xff]
      %v4013 = vld [vmem:[#allocation3 + $0x60] sm:$0xff]
      %v4014 = vld [vmem:[#allocation3 + $0x68] sm:$0xff]
      %v4015 = vld [vmem:[#allocation3 + $0x70] sm:$0xff]
      %v4016 = vld [vmem:[#allocation3 + $0x78] sm:$0xff]
      %v4017 = vld [vmem:[#allocation3 + $0x80] sm:$0xff]
      %v4018 = vld [vmem:[#allocation3 + $0x88] sm:$0xff]
      %v4019 = vld [vmem:[#allocation3 + $0x90] sm:$0xff]
      %v4020 = vld [vmem:[#allocation3 + $0x98] sm:$0xff]
      %v4021 = vld [vmem:[#allocation3 + $0xa0] sm:$0xff]
      %v4022 = vld [vmem:[#allocation3 + $0xa8] sm:$0xff]
      %v4023 = vld [vmem:[#allocation3 + $0xb0] sm:$0xff]
      %v4024 = vld [vmem:[#allocation3 + $0xb8] sm:$0xff]
      %v4025 = vld [vmem:[#allocation3 + $0xc0] sm:$0xff]
      %v4026 = vld [vmem:[#allocation3 + $0xc8] sm:$0xff]
      %v4027 = vld [vmem:[#allocation3 + $0xd0] sm:$0xff]
      %v4028 = vld [vmem:[#allocation3 + $0xd8] sm:$0xff]
      %v4029 = vld [vmem:[#allocation3 + $0xe0] sm:$0xff]
      %v4030 = vld [vmem:[#allocation3 + $0xe8] sm:$0xff]
      %v4031 = vld [vmem:[#allocation3 + $0xf0] sm:$0xff]
      %v4032 = vld [vmem:[#allocation3 + $0xf8] sm:$0xff]
      %v4033 = vld [vmem:[%s3296] sm:$0xf8]
      %v4034 = vld [vmem:[%s3296 + $0x10] sm:$0xff]
      %v4035 = vld [vmem:[%s3296 + $0x20] sm:$0x7]
      %v4036 = vld [vmem:[%s3296 + $0x30] sm:$0xf8]
      %v4037 = vld [vmem:[%s3296 + $0x40] sm:$0xff]
      %v4038 = vld [vmem:[%s3296 + $0x50] sm:$0x7]
      %v4039 = vld [vmem:[%s3296 + $0x60] sm:$0xf8]
      %v4040 = vld [vmem:[%s3296 + $0x70] sm:$0xff]
      %v4041 = vld [vmem:[%s3296 + $0x80] sm:$0x7]
      %v4042 = vld [vmem:[%s3296 + $0x90] sm:$0xf8]
      %v4043 = vld [vmem:[%s3296 + $0xa0] sm:$0xff]
      %v4044 = vld [vmem:[%s3296 + $0xb0] sm:$0x7]
      %v4045 = vld [vmem:[%s3296 + $0xc0] sm:$0xf8]
      %v4046 = vld [vmem:[%s3296 + $0xd0] sm:$0xff]
      %v4047 = vld [vmem:[%s3296 + $0xe0] sm:$0x7]
      %v4048 = vld [vmem:[%s3296 + $0xf0] sm:$0xf8]
      %v4049 = vld [vmem:[%s3296 + $0x100] sm:$0xff]
      %v4050 = vld [vmem:[%s3296 + $0x110] sm:$0x7]
      %v4051 = vld [vmem:[%s3296 + $0x120] sm:$0xf8]
      %v4052 = vld [vmem:[%s3296 + $0x130] sm:$0xff]
      %v4053 = vld [vmem:[%s3296 + $0x140] sm:$0x7]
      %v4054 = vld [vmem:[%s3296 + $0x150] sm:$0xf8]
      %v4055 = vld [vmem:[%s3296 + $0x160] sm:$0xff]
      %v4056 = vld [vmem:[%s3296 + $0x170] sm:$0x7]
      %v4057 = vld [vmem:[%s3296 + $0x180] sm:$0xf8]
      %v4058 = vld [vmem:[%s3296 + $0x190] sm:$0xff]
      %v4059 = vld [vmem:[%s3296 + $0x1a0] sm:$0x7]
      %v4060 = vld [vmem:[%s3296 + $0x1b0] sm:$0xf8]
      %v4061 = vld [vmem:[%s3296 + $0x1c0] sm:$0xff]
      %v4062 = vld [vmem:[%s3296 + $0x1d0] sm:$0x7]
      %v4063 = vld [vmem:[%s3296 + $0x1e0] sm:$0xf8]
      %v4064 = vld [vmem:[%s3296 + $0x1f0] sm:$0xff]
      %v4065 = vld [vmem:[%s3296 + $0x200] sm:$0x7]
      %v4066 = vld [vmem:[%s3296 + $0x210] sm:$0xf8]
      %v4067 = vld [vmem:[%s3296 + $0x220] sm:$0xff]
      %v4068 = vld [vmem:[%s3296 + $0x230] sm:$0x7]
      %v4069 = vld [vmem:[%s3296 + $0x240] sm:$0xf8]
      %v4070 = vld [vmem:[%s3296 + $0x250] sm:$0xff]
      %v4071 = vld [vmem:[%s3296 + $0x260] sm:$0x7]
      %v4072 = vld [vmem:[%s3296 + $0x270] sm:$0xf8]
      %v4073 = vld [vmem:[%s3296 + $0x280] sm:$0xff]
      %v4074 = vld [vmem:[%s3296 + $0x290] sm:$0x7]
      %v4075 = vld [vmem:[%s3296 + $0x2a0] sm:$0xf8]
      %v4076 = vld [vmem:[%s3296 + $0x2b0] sm:$0xff]
      %v4077 = vld [vmem:[%s3296 + $0x2c0] sm:$0x7]
      %v4078 = vld [vmem:[%s3296 + $0x2d0] sm:$0xf8]
      %v4079 = vld [vmem:[%s3296 + $0x2e0] sm:$0xff]
      %v4080 = vld [vmem:[%s3296 + $0x2f0] sm:$0x7]
      %v4129 = vrot.slane %v4033, 3
      %v4130 = vrot.slane %v4034, 3
      %v4131 = vsel %vm1917, %v4129, %v4130
      %v4132 = vrot.slane %v4035, 3
      %v4133 = vsel %vm1917, %v4130, %v4132
      %v4134 = vrot.slane %v4036, 3
      %v4135 = vrot.slane %v4037, 3
      %v4136 = vsel %vm1917, %v4134, %v4135
      %v4137 = vrot.slane %v4038, 3
      %v4138 = vsel %vm1917, %v4135, %v4137
      %v4139 = vrot.slane %v4039, 3
      %v4140 = vrot.slane %v4040, 3
      %v4141 = vsel %vm1917, %v4139, %v4140
      %v4142 = vrot.slane %v4041, 3
      %v4143 = vsel %vm1917, %v4140, %v4142
      %v4144 = vrot.slane %v4042, 3
      %v4145 = vrot.slane %v4043, 3
      %v4146 = vsel %vm1917, %v4144, %v4145
      %v4147 = vrot.slane %v4044, 3
      %v4148 = vsel %vm1917, %v4145, %v4147
      %v4149 = vrot.slane %v4045, 3
      %v4150 = vrot.slane %v4046, 3
      %v4151 = vsel %vm1917, %v4149, %v4150
      %v4152 = vrot.slane %v4047, 3
      %v4153 = vsel %vm1917, %v4150, %v4152
      %v4154 = vrot.slane %v4048, 3
      %v4155 = vrot.slane %v4049, 3
      %v4156 = vsel %vm1917, %v4154, %v4155
      %v4157 = vrot.slane %v4050, 3
      %v4158 = vsel %vm1917, %v4155, %v4157
      %v4159 = vrot.slane %v4051, 3
      %v4160 = vrot.slane %v4052, 3
      %v4161 = vsel %vm1917, %v4159, %v4160
      %v4162 = vrot.slane %v4053, 3
      %v4163 = vsel %vm1917, %v4160, %v4162
      %v4164 = vrot.slane %v4054, 3
      %v4165 = vrot.slane %v4055, 3
      %v4166 = vsel %vm1917, %v4164, %v4165
      %v4167 = vrot.slane %v4056, 3
      %v4168 = vsel %vm1917, %v4165, %v4167
      %v4169 = vrot.slane %v4057, 3
      %v4170 = vrot.slane %v4058, 3
      %v4171 = vsel %vm1917, %v4169, %v4170
      %v4172 = vrot.slane %v4059, 3
      %v4173 = vsel %vm1917, %v4170, %v4172
      %v4174 = vrot.slane %v4060, 3
      %v4175 = vrot.slane %v4061, 3
      %v4176 = vsel %vm1917, %v4174, %v4175
      %v4177 = vrot.slane %v4062, 3
      %v4178 = vsel %vm1917, %v4175, %v4177
      %v4179 = vrot.slane %v4063, 3
      %v4180 = vrot.slane %v4064, 3
      %v4181 = vsel %vm1917, %v4179, %v4180
      %v4182 = vrot.slane %v4065, 3
      %v4183 = vsel %vm1917, %v4180, %v4182
      %v4184 = vrot.slane %v4066, 3
      %v4185 = vrot.slane %v4067, 3
      %v4186 = vsel %vm1917, %v4184, %v4185
      %v4187 = vrot.slane %v4068, 3
      %v4188 = vsel %vm1917, %v4185, %v4187
      %v4189 = vrot.slane %v4069, 3
      %v4190 = vrot.slane %v4070, 3
      %v4191 = vsel %vm1917, %v4189, %v4190
      %v4192 = vrot.slane %v4071, 3
      %v4193 = vsel %vm1917, %v4190, %v4192
      %v4194 = vrot.slane %v4072, 3
      %v4195 = vrot.slane %v4073, 3
      %v4196 = vsel %vm1917, %v4194, %v4195
      %v4197 = vrot.slane %v4074, 3
      %v4198 = vsel %vm1917, %v4195, %v4197
      %v4199 = vrot.slane %v4075, 3
      %v4200 = vrot.slane %v4076, 3
      %v4201 = vsel %vm1917, %v4199, %v4200
      %v4202 = vrot.slane %v4077, 3
      %v4203 = vsel %vm1917, %v4200, %v4202
      %v4204 = vrot.slane %v4078, 3
      %v4205 = vrot.slane %v4079, 3
      %v4206 = vsel %vm1917, %v4204, %v4205
      %v4207 = vrot.slane %v4080, 3
      %v4208 = vsel %vm1917, %v4205, %v4207
      %4209 = vrot.lane.b32.xlu0 %v4131, 64
      %v4210 = vpop.permute.xlu0 %4209
      %4211 = vrot.lane.b32.xlu0 %v4133, 64
      %v4212 = vpop.permute.xlu0 %4211
      %4213 = vrot.lane.b32.xlu0 %v4136, 64
      %v4214 = vpop.permute.xlu0 %4213
      %4215 = vrot.lane.b32.xlu0 %v4138, 64
      %v4216 = vpop.permute.xlu0 %4215
      %4217 = vrot.lane.b32.xlu0 %v4141, 64
      %v4218 = vpop.permute.xlu0 %4217
      %4219 = vrot.lane.b32.xlu0 %v4143, 64
      %v4220 = vpop.permute.xlu0 %4219
      %4221 = vrot.lane.b32.xlu0 %v4146, 64
      %v4222 = vpop.permute.xlu0 %4221
      %4223 = vrot.lane.b32.xlu0 %v4148, 64
      %v4224 = vpop.permute.xlu0 %4223
      %4225 = vrot.lane.b32.xlu0 %v4151, 64
      %v4226 = vpop.permute.xlu0 %4225
      %4227 = vrot.lane.b32.xlu0 %v4153, 64
      %v4228 = vpop.permute.xlu0 %4227
      %4229 = vrot.lane.b32.xlu0 %v4156, 64
      %v4230 = vpop.permute.xlu0 %4229
      %4231 = vrot.lane.b32.xlu0 %v4158, 64
      %v4232 = vpop.permute.xlu0 %4231
      %4233 = vrot.lane.b32.xlu0 %v4161, 64
      %v4234 = vpop.permute.xlu0 %4233
      %4235 = vrot.lane.b32.xlu0 %v4163, 64
      %v4236 = vpop.permute.xlu0 %4235
      %4237 = vrot.lane.b32.xlu0 %v4166, 64
      %v4238 = vpop.permute.xlu0 %4237
      %4239 = vrot.lane.b32.xlu0 %v4168, 64
      %v4240 = vpop.permute.xlu0 %4239
      %4241 = vrot.lane.b32.xlu0 %v4171, 64
      %v4242 = vpop.permute.xlu0 %4241
      %4243 = vrot.lane.b32.xlu0 %v4173, 64
      %v4244 = vpop.permute.xlu0 %4243
      %4245 = vrot.lane.b32.xlu0 %v4176, 64
      %v4246 = vpop.permute.xlu0 %4245
      %4247 = vrot.lane.b32.xlu0 %v4178, 64
      %v4248 = vpop.permute.xlu0 %4247
      %4249 = vrot.lane.b32.xlu0 %v4181, 64
      %v4250 = vpop.permute.xlu0 %4249
      %4251 = vrot.lane.b32.xlu0 %v4183, 64
      %v4252 = vpop.permute.xlu0 %4251
      %4253 = vrot.lane.b32.xlu0 %v4186, 64
      %v4254 = vpop.permute.xlu0 %4253
      %4255 = vrot.lane.b32.xlu0 %v4188, 64
      %v4256 = vpop.permute.xlu0 %4255
      %4257 = vrot.lane.b32.xlu0 %v4191, 64
      %v4258 = vpop.permute.xlu0 %4257
      %4259 = vrot.lane.b32.xlu0 %v4193, 64
      %v4260 = vpop.permute.xlu0 %4259
      %4261 = vrot.lane.b32.xlu0 %v4196, 64
      %v4262 = vpop.permute.xlu0 %4261
      %4263 = vrot.lane.b32.xlu0 %v4198, 64
      %v4264 = vpop.permute.xlu0 %4263
      %4265 = vrot.lane.b32.xlu0 %v4201, 64
      %v4266 = vpop.permute.xlu0 %4265
      %4267 = vrot.lane.b32.xlu0 %v4203, 64
      %v4268 = vpop.permute.xlu0 %4267
      %4269 = vrot.lane.b32.xlu0 %v4206, 64
      %v4270 = vpop.permute.xlu0 %4269
      %4271 = vrot.lane.b32.xlu0 %v4208, 64
      %v4272 = vpop.permute.xlu0 %4271
      %v4305 = vadd.f32 %v4001, %v4210
      %v4306 = vadd.f32 %v4002, %v4212
      %v4307 = vadd.f32 %v4003, %v4214
      %v4308 = vadd.f32 %v4004, %v4216
      %v4309 = vadd.f32 %v4005, %v4218
      %v4310 = vadd.f32 %v4006, %v4220
      %v4311 = vadd.f32 %v4007, %v4222
      %v4312 = vadd.f32 %v4008, %v4224
      %v4313 = vadd.f32 %v4009, %v4226
      %v4314 = vadd.f32 %v4010, %v4228
      %v4315 = vadd.f32 %v4011, %v4230
      %v4316 = vadd.f32 %v4012, %v4232
      %v4317 = vadd.f32 %v4013, %v4234
      %v4318 = vadd.f32 %v4014, %v4236
      %v4319 = vadd.f32 %v4015, %v4238
      %v4320 = vadd.f32 %v4016, %v4240
      %v4321 = vadd.f32 %v4017, %v4242
      %v4322 = vadd.f32 %v4018, %v4244
      %v4323 = vadd.f32 %v4019, %v4246
      %v4324 = vadd.f32 %v4020, %v4248
      %v4325 = vadd.f32 %v4021, %v4250
      %v4326 = vadd.f32 %v4022, %v4252
      %v4327 = vadd.f32 %v4023, %v4254
      %v4328 = vadd.f32 %v4024, %v4256
      %v4329 = vadd.f32 %v4025, %v4258
      %v4330 = vadd.f32 %v4026, %v4260
      %v4331 = vadd.f32 %v4027, %v4262
      %v4332 = vadd.f32 %v4028, %v4264
      %v4333 = vadd.f32 %v4029, %v4266
      %v4334 = vadd.f32 %v4030, %v4268
      %v4335 = vadd.f32 %v4031, %v4270
      %v4336 = vadd.f32 %v4032, %v4272
      %4337 = vst.msk [vmem:[#allocation3] sm:$0xff] %vm1371, %v4305
      %4338 = vst.msk [vmem:[#allocation3 + $0x8] sm:$0xff] %vm1371, %v4306
      %4339 = vst.msk [vmem:[#allocation3 + $0x10] sm:$0xff] %vm1371, %v4307
      %4340 = vst.msk [vmem:[#allocation3 + $0x18] sm:$0xff] %vm1371, %v4308
      %4341 = vst.msk [vmem:[#allocation3 + $0x20] sm:$0xff] %vm1371, %v4309
      %4342 = vst.msk [vmem:[#allocation3 + $0x28] sm:$0xff] %vm1371, %v4310
      %4343 = vst.msk [vmem:[#allocation3 + $0x30] sm:$0xff] %vm1371, %v4311
      %4344 = vst.msk [vmem:[#allocation3 + $0x38] sm:$0xff] %vm1371, %v4312
      %4345 = vst.msk [vmem:[#allocation3 + $0x40] sm:$0xff] %vm1371, %v4313
      %4346 = vst.msk [vmem:[#allocation3 + $0x48] sm:$0xff] %vm1371, %v4314
      %4347 = vst.msk [vmem:[#allocation3 + $0x50] sm:$0xff] %vm1371, %v4315
      %4348 = vst.msk [vmem:[#allocation3 + $0x58] sm:$0xff] %vm1371, %v4316
      %4349 = vst.msk [vmem:[#allocation3 + $0x60] sm:$0xff] %vm1371, %v4317
      %4350 = vst.msk [vmem:[#allocation3 + $0x68] sm:$0xff] %vm1371, %v4318
      %4351 = vst.msk [vmem:[#allocation3 + $0x70] sm:$0xff] %vm1371, %v4319
      %4352 = vst.msk [vmem:[#allocation3 + $0x78] sm:$0xff] %vm1371, %v4320
      %4353 = vst.msk [vmem:[#allocation3 + $0x80] sm:$0xff] %vm1371, %v4321
      %4354 = vst.msk [vmem:[#allocation3 + $0x88] sm:$0xff] %vm1371, %v4322
      %4355 = vst.msk [vmem:[#allocation3 + $0x90] sm:$0xff] %vm1371, %v4323
      %4356 = vst.msk [vmem:[#allocation3 + $0x98] sm:$0xff] %vm1371, %v4324
      %4357 = vst.msk [vmem:[#allocation3 + $0xa0] sm:$0xff] %vm1371, %v4325
      %4358 = vst.msk [vmem:[#allocation3 + $0xa8] sm:$0xff] %vm1371, %v4326
      %4359 = vst.msk [vmem:[#allocation3 + $0xb0] sm:$0xff] %vm1371, %v4327
      %4360 = vst.msk [vmem:[#allocation3 + $0xb8] sm:$0xff] %vm1371, %v4328
      %4361 = vst.msk [vmem:[#allocation3 + $0xc0] sm:$0xff] %vm1371, %v4329
      %4362 = vst.msk [vmem:[#allocation3 + $0xc8] sm:$0xff] %vm1371, %v4330
      %4363 = vst.msk [vmem:[#allocation3 + $0xd0] sm:$0xff] %vm1371, %v4331
      %4364 = vst.msk [vmem:[#allocation3 + $0xd8] sm:$0xff] %vm1371, %v4332
      %4365 = vst.msk [vmem:[#allocation3 + $0xe0] sm:$0xff] %vm1371, %v4333
      %4366 = vst.msk [vmem:[#allocation3 + $0xe8] sm:$0xff] %vm1371, %v4334
      %4367 = vst.msk [vmem:[#allocation3 + $0xf0] sm:$0xff] %vm1371, %v4335
      %4368 = vst.msk [vmem:[#allocation3 + $0xf8] sm:$0xff] %vm1371, %v4336
      %v4369 = vld [vmem:[#allocation3] sm:$0xff]
      %v4370 = vld [vmem:[#allocation3 + $0x8] sm:$0xff]
      %v4371 = vld [vmem:[#allocation3 + $0x10] sm:$0xff]
      %v4372 = vld [vmem:[#allocation3 + $0x18] sm:$0xff]
      %v4373 = vld [vmem:[#allocation3 + $0x20] sm:$0xff]
      %v4374 = vld [vmem:[#allocation3 + $0x28] sm:$0xff]
      %v4375 = vld [vmem:[#allocation3 + $0x30] sm:$0xff]
      %v4376 = vld [vmem:[#allocation3 + $0x38] sm:$0xff]
      %v4377 = vld [vmem:[#allocation3 + $0x40] sm:$0xff]
      %v4378 = vld [vmem:[#allocation3 + $0x48] sm:$0xff]
      %v4379 = vld [vmem:[#allocation3 + $0x50] sm:$0xff]
      %v4380 = vld [vmem:[#allocation3 + $0x58] sm:$0xff]
      %v4381 = vld [vmem:[#allocation3 + $0x60] sm:$0xff]
      %v4382 = vld [vmem:[#allocation3 + $0x68] sm:$0xff]
      %v4383 = vld [vmem:[#allocation3 + $0x70] sm:$0xff]
      %v4384 = vld [vmem:[#allocation3 + $0x78] sm:$0xff]
      %v4385 = vld [vmem:[#allocation3 + $0x80] sm:$0xff]
      %v4386 = vld [vmem:[#allocation3 + $0x88] sm:$0xff]
      %v4387 = vld [vmem:[#allocation3 + $0x90] sm:$0xff]
      %v4388 = vld [vmem:[#allocation3 + $0x98] sm:$0xff]
      %v4389 = vld [vmem:[#allocation3 + $0xa0] sm:$0xff]
      %v4390 = vld [vmem:[#allocation3 + $0xa8] sm:$0xff]
      %v4391 = vld [vmem:[#allocation3 + $0xb0] sm:$0xff]
      %v4392 = vld [vmem:[#allocation3 + $0xb8] sm:$0xff]
      %v4393 = vld [vmem:[#allocation3 + $0xc0] sm:$0xff]
      %v4394 = vld [vmem:[#allocation3 + $0xc8] sm:$0xff]
      %v4395 = vld [vmem:[#allocation3 + $0xd0] sm:$0xff]
      %v4396 = vld [vmem:[#allocation3 + $0xd8] sm:$0xff]
      %v4397 = vld [vmem:[#allocation3 + $0xe0] sm:$0xff]
      %v4398 = vld [vmem:[#allocation3 + $0xe8] sm:$0xff]
      %v4399 = vld [vmem:[#allocation3 + $0xf0] sm:$0xff]
      %v4400 = vld [vmem:[#allocation3 + $0xf8] sm:$0xff]
      %v4401 = vld [vmem:[#allocation2] sm:$0xff]
      %v4402 = vld [vmem:[#allocation2 + $0x10] sm:$0xff]
      %v4403 = vld [vmem:[#allocation2 + $0x30] sm:$0xff]
      %v4404 = vld [vmem:[#allocation2 + $0x40] sm:$0xff]
      %v4405 = vld [vmem:[#allocation2 + $0x60] sm:$0xff]
      %v4406 = vld [vmem:[#allocation2 + $0x70] sm:$0xff]
      %v4407 = vld [vmem:[#allocation2 + $0x90] sm:$0xff]
      %v4408 = vld [vmem:[#allocation2 + $0xa0] sm:$0xff]
      %v4409 = vld [vmem:[#allocation2 + $0xc0] sm:$0xff]
      %v4410 = vld [vmem:[#allocation2 + $0xd0] sm:$0xff]
      %v4411 = vld [vmem:[#allocation2 + $0xf0] sm:$0xff]
      %v4412 = vld [vmem:[#allocation2 + $0x100] sm:$0xff]
      %v4413 = vld [vmem:[#allocation2 + $0x120] sm:$0xff]
      %v4414 = vld [vmem:[#allocation2 + $0x130] sm:$0xff]
      %v4415 = vld [vmem:[#allocation2 + $0x150] sm:$0xff]
      %v4416 = vld [vmem:[#allocation2 + $0x160] sm:$0xff]
      %v4417 = vld [vmem:[#allocation2 + $0x180] sm:$0xff]
      %v4418 = vld [vmem:[#allocation2 + $0x190] sm:$0xff]
      %v4419 = vld [vmem:[#allocation2 + $0x1b0] sm:$0xff]
      %v4420 = vld [vmem:[#allocation2 + $0x1c0] sm:$0xff]
      %v4421 = vld [vmem:[#allocation2 + $0x1e0] sm:$0xff]
      %v4422 = vld [vmem:[#allocation2 + $0x1f0] sm:$0xff]
      %v4423 = vld [vmem:[#allocation2 + $0x210] sm:$0xff]
      %v4424 = vld [vmem:[#allocation2 + $0x220] sm:$0xff]
      %v4425 = vld [vmem:[#allocation2 + $0x240] sm:$0xff]
      %v4426 = vld [vmem:[#allocation2 + $0x250] sm:$0xff]
      %v4427 = vld [vmem:[#allocation2 + $0x270] sm:$0xff]
      %v4428 = vld [vmem:[#allocation2 + $0x280] sm:$0xff]
      %v4429 = vld [vmem:[#allocation2 + $0x2a0] sm:$0xff]
      %v4430 = vld [vmem:[#allocation2 + $0x2b0] sm:$0xff]
      %v4431 = vld [vmem:[#allocation2 + $0x2d0] sm:$0xff]
      %v4432 = vld [vmem:[#allocation2 + $0x2e0] sm:$0xff]
      %4465 = vrot.lane.b32.xlu0 %v4401, 56
      %v4466 = vpop.permute.xlu0 %4465
      %4467 = vrot.lane.b32.xlu0 %v4402, 56
      %v4468 = vpop.permute.xlu0 %4467
      %4469 = vrot.lane.b32.xlu0 %v4403, 56
      %v4470 = vpop.permute.xlu0 %4469
      %4471 = vrot.lane.b32.xlu0 %v4404, 56
      %v4472 = vpop.permute.xlu0 %4471
      %4473 = vrot.lane.b32.xlu0 %v4405, 56
      %v4474 = vpop.permute.xlu0 %4473
      %4475 = vrot.lane.b32.xlu0 %v4406, 56
      %v4476 = vpop.permute.xlu0 %4475
      %4477 = vrot.lane.b32.xlu0 %v4407, 56
      %v4478 = vpop.permute.xlu0 %4477
      %4479 = vrot.lane.b32.xlu0 %v4408, 56
      %v4480 = vpop.permute.xlu0 %4479
      %4481 = vrot.lane.b32.xlu0 %v4409, 56
      %v4482 = vpop.permute.xlu0 %4481
      %4483 = vrot.lane.b32.xlu0 %v4410, 56
      %v4484 = vpop.permute.xlu0 %4483
      %4485 = vrot.lane.b32.xlu0 %v4411, 56
      %v4486 = vpop.permute.xlu0 %4485
      %4487 = vrot.lane.b32.xlu0 %v4412, 56
      %v4488 = vpop.permute.xlu0 %4487
      %4489 = vrot.lane.b32.xlu0 %v4413, 56
      %v4490 = vpop.permute.xlu0 %4489
      %4491 = vrot.lane.b32.xlu0 %v4414, 56
      %v4492 = vpop.permute.xlu0 %4491
      %4493 = vrot.lane.b32.xlu0 %v4415, 56
      %v4494 = vpop.permute.xlu0 %4493
      %4495 = vrot.lane.b32.xlu0 %v4416, 56
      %v4496 = vpop.permute.xlu0 %4495
      %4497 = vrot.lane.b32.xlu0 %v4417, 56
      %v4498 = vpop.permute.xlu0 %4497
      %4499 = vrot.lane.b32.xlu0 %v4418, 56
      %v4500 = vpop.permute.xlu0 %4499
      %4501 = vrot.lane.b32.xlu0 %v4419, 56
      %v4502 = vpop.permute.xlu0 %4501
      %4503 = vrot.lane.b32.xlu0 %v4420, 56
      %v4504 = vpop.permute.xlu0 %4503
      %4505 = vrot.lane.b32.xlu0 %v4421, 56
      %v4506 = vpop.permute.xlu0 %4505
      %4507 = vrot.lane.b32.xlu0 %v4422, 56
      %v4508 = vpop.permute.xlu0 %4507
      %4509 = vrot.lane.b32.xlu0 %v4423, 56
      %v4510 = vpop.permute.xlu0 %4509
      %4511 = vrot.lane.b32.xlu0 %v4424, 56
      %v4512 = vpop.permute.xlu0 %4511
      %4513 = vrot.lane.b32.xlu0 %v4425, 56
      %v4514 = vpop.permute.xlu0 %4513
      %4515 = vrot.lane.b32.xlu0 %v4426, 56
      %v4516 = vpop.permute.xlu0 %4515
      %4517 = vrot.lane.b32.xlu0 %v4427, 56
      %v4518 = vpop.permute.xlu0 %4517
      %4519 = vrot.lane.b32.xlu0 %v4428, 56
      %v4520 = vpop.permute.xlu0 %4519
      %4521 = vrot.lane.b32.xlu0 %v4429, 56
      %v4522 = vpop.permute.xlu0 %4521
      %4523 = vrot.lane.b32.xlu0 %v4430, 56
      %v4524 = vpop.permute.xlu0 %4523
      %4525 = vrot.lane.b32.xlu0 %v4431, 56
      %v4526 = vpop.permute.xlu0 %4525
      %4527 = vrot.lane.b32.xlu0 %v4432, 56
      %v4528 = vpop.permute.xlu0 %4527
      %v4561 = vadd.f32 %v4369, %v4466
      %v4562 = vadd.f32 %v4370, %v4468
      %v4563 = vadd.f32 %v4371, %v4470
      %v4564 = vadd.f32 %v4372, %v4472
      %v4565 = vadd.f32 %v4373, %v4474
      %v4566 = vadd.f32 %v4374, %v4476
      %v4567 = vadd.f32 %v4375, %v4478
      %v4568 = vadd.f32 %v4376, %v4480
      %v4569 = vadd.f32 %v4377, %v4482
      %v4570 = vadd.f32 %v4378, %v4484
      %v4571 = vadd.f32 %v4379, %v4486
      %v4572 = vadd.f32 %v4380, %v4488
      %v4573 = vadd.f32 %v4381, %v4490
      %v4574 = vadd.f32 %v4382, %v4492
      %v4575 = vadd.f32 %v4383, %v4494
      %v4576 = vadd.f32 %v4384, %v4496
      %v4577 = vadd.f32 %v4385, %v4498
      %v4578 = vadd.f32 %v4386, %v4500
      %v4579 = vadd.f32 %v4387, %v4502
      %v4580 = vadd.f32 %v4388, %v4504
      %v4581 = vadd.f32 %v4389, %v4506
      %v4582 = vadd.f32 %v4390, %v4508
      %v4583 = vadd.f32 %v4391, %v4510
      %v4584 = vadd.f32 %v4392, %v4512
      %v4585 = vadd.f32 %v4393, %v4514
      %v4586 = vadd.f32 %v4394, %v4516
      %v4587 = vadd.f32 %v4395, %v4518
      %v4588 = vadd.f32 %v4396, %v4520
      %v4589 = vadd.f32 %v4397, %v4522
      %v4590 = vadd.f32 %v4398, %v4524
      %v4591 = vadd.f32 %v4399, %v4526
      %v4592 = vadd.f32 %v4400, %v4528
      %4593 = vst.msk [vmem:[#allocation3] sm:$0xff] %vm1371, %v4561
      %4594 = vst.msk [vmem:[#allocation3 + $0x8] sm:$0xff] %vm1371, %v4562
      %4595 = vst.msk [vmem:[#allocation3 + $0x10] sm:$0xff] %vm1371, %v4563
      %4596 = vst.msk [vmem:[#allocation3 + $0x18] sm:$0xff] %vm1371, %v4564
      %4597 = vst.msk [vmem:[#allocation3 + $0x20] sm:$0xff] %vm1371, %v4565
      %4598 = vst.msk [vmem:[#allocation3 + $0x28] sm:$0xff] %vm1371, %v4566
      %4599 = vst.msk [vmem:[#allocation3 + $0x30] sm:$0xff] %vm1371, %v4567
      %4600 = vst.msk [vmem:[#allocation3 + $0x38] sm:$0xff] %vm1371, %v4568
      %4601 = vst.msk [vmem:[#allocation3 + $0x40] sm:$0xff] %vm1371, %v4569
      %4602 = vst.msk [vmem:[#allocation3 + $0x48] sm:$0xff] %vm1371, %v4570
      %4603 = vst.msk [vmem:[#allocation3 + $0x50] sm:$0xff] %vm1371, %v4571
      %4604 = vst.msk [vmem:[#allocation3 + $0x58] sm:$0xff] %vm1371, %v4572
      %4605 = vst.msk [vmem:[#allocation3 + $0x60] sm:$0xff] %vm1371, %v4573
      %4606 = vst.msk [vmem:[#allocation3 + $0x68] sm:$0xff] %vm1371, %v4574
      %4607 = vst.msk [vmem:[#allocation3 + $0x70] sm:$0xff] %vm1371, %v4575
      %4608 = vst.msk [vmem:[#allocation3 + $0x78] sm:$0xff] %vm1371, %v4576
      %4609 = vst.msk [vmem:[#allocation3 + $0x80] sm:$0xff] %vm1371, %v4577
      %4610 = vst.msk [vmem:[#allocation3 + $0x88] sm:$0xff] %vm1371, %v4578
      %4611 = vst.msk [vmem:[#allocation3 + $0x90] sm:$0xff] %vm1371, %v4579
      %4612 = vst.msk [vmem:[#allocation3 + $0x98] sm:$0xff] %vm1371, %v4580
      %4613 = vst.msk [vmem:[#allocation3 + $0xa0] sm:$0xff] %vm1371, %v4581
      %4614 = vst.msk [vmem:[#allocation3 + $0xa8] sm:$0xff] %vm1371, %v4582
      %4615 = vst.msk [vmem:[#allocation3 + $0xb0] sm:$0xff] %vm1371, %v4583
      %4616 = vst.msk [vmem:[#allocation3 + $0xb8] sm:$0xff] %vm1371, %v4584
      %4617 = vst.msk [vmem:[#allocation3 + $0xc0] sm:$0xff] %vm1371, %v4585
      %4618 = vst.msk [vmem:[#allocation3 + $0xc8] sm:$0xff] %vm1371, %v4586
      %4619 = vst.msk [vmem:[#allocation3 + $0xd0] sm:$0xff] %vm1371, %v4587
      %4620 = vst.msk [vmem:[#allocation3 + $0xd8] sm:$0xff] %vm1371, %v4588
      %4621 = vst.msk [vmem:[#allocation3 + $0xe0] sm:$0xff] %vm1371, %v4589
      %4622 = vst.msk [vmem:[#allocation3 + $0xe8] sm:$0xff] %vm1371, %v4590
      %4623 = vst.msk [vmem:[#allocation3 + $0xf0] sm:$0xff] %vm1371, %v4591
      %4624 = vst.msk [vmem:[#allocation3 + $0xf8] sm:$0xff] %vm1371, %v4592
      %v4625 = vld [vmem:[#allocation3] sm:$0xff]
      %v4626 = vld [vmem:[#allocation3 + $0x8] sm:$0xff]
      %v4627 = vld [vmem:[#allocation3 + $0x10] sm:$0xff]
      %v4628 = vld [vmem:[#allocation3 + $0x18] sm:$0xff]
      %v4629 = vld [vmem:[#allocation3 + $0x20] sm:$0xff]
      %v4630 = vld [vmem:[#allocation3 + $0x28] sm:$0xff]
      %v4631 = vld [vmem:[#allocation3 + $0x30] sm:$0xff]
      %v4632 = vld [vmem:[#allocation3 + $0x38] sm:$0xff]
      %v4633 = vld [vmem:[#allocation3 + $0x40] sm:$0xff]
      %v4634 = vld [vmem:[#allocation3 + $0x48] sm:$0xff]
      %v4635 = vld [vmem:[#allocation3 + $0x50] sm:$0xff]
      %v4636 = vld [vmem:[#allocation3 + $0x58] sm:$0xff]
      %v4637 = vld [vmem:[#allocation3 + $0x60] sm:$0xff]
      %v4638 = vld [vmem:[#allocation3 + $0x68] sm:$0xff]
      %v4639 = vld [vmem:[#allocation3 + $0x70] sm:$0xff]
      %v4640 = vld [vmem:[#allocation3 + $0x78] sm:$0xff]
      %v4641 = vld [vmem:[#allocation3 + $0x80] sm:$0xff]
      %v4642 = vld [vmem:[#allocation3 + $0x88] sm:$0xff]
      %v4643 = vld [vmem:[#allocation3 + $0x90] sm:$0xff]
      %v4644 = vld [vmem:[#allocation3 + $0x98] sm:$0xff]
      %v4645 = vld [vmem:[#allocation3 + $0xa0] sm:$0xff]
      %v4646 = vld [vmem:[#allocation3 + $0xa8] sm:$0xff]
      %v4647 = vld [vmem:[#allocation3 + $0xb0] sm:$0xff]
      %v4648 = vld [vmem:[#allocation3 + $0xb8] sm:$0xff]
      %v4649 = vld [vmem:[#allocation3 + $0xc0] sm:$0xff]
      %v4650 = vld [vmem:[#allocation3 + $0xc8] sm:$0xff]
      %v4651 = vld [vmem:[#allocation3 + $0xd0] sm:$0xff]
      %v4652 = vld [vmem:[#allocation3 + $0xd8] sm:$0xff]
      %v4653 = vld [vmem:[#allocation3 + $0xe0] sm:$0xff]
      %v4654 = vld [vmem:[#allocation3 + $0xe8] sm:$0xff]
      %v4655 = vld [vmem:[#allocation3 + $0xf0] sm:$0xff]
      %v4656 = vld [vmem:[#allocation3 + $0xf8] sm:$0xff]
      %v4657 = vld [vmem:[#allocation2] sm:$0xfc]
      %v4658 = vld [vmem:[#allocation2 + $0x10] sm:$0xff]
      %v4659 = vld [vmem:[#allocation2 + $0x20] sm:$0x3]
      %v4660 = vld [vmem:[#allocation2 + $0x30] sm:$0xfc]
      %v4661 = vld [vmem:[#allocation2 + $0x40] sm:$0xff]
      %v4662 = vld [vmem:[#allocation2 + $0x50] sm:$0x3]
      %v4663 = vld [vmem:[#allocation2 + $0x60] sm:$0xfc]
      %v4664 = vld [vmem:[#allocation2 + $0x70] sm:$0xff]
      %v4665 = vld [vmem:[#allocation2 + $0x80] sm:$0x3]
      %v4666 = vld [vmem:[#allocation2 + $0x90] sm:$0xfc]
      %v4667 = vld [vmem:[#allocation2 + $0xa0] sm:$0xff]
      %v4668 = vld [vmem:[#allocation2 + $0xb0] sm:$0x3]
      %v4669 = vld [vmem:[#allocation2 + $0xc0] sm:$0xfc]
      %v4670 = vld [vmem:[#allocation2 + $0xd0] sm:$0xff]
      %v4671 = vld [vmem:[#allocation2 + $0xe0] sm:$0x3]
      %v4672 = vld [vmem:[#allocation2 + $0xf0] sm:$0xfc]
      %v4673 = vld [vmem:[#allocation2 + $0x100] sm:$0xff]
      %v4674 = vld [vmem:[#allocation2 + $0x110] sm:$0x3]
      %v4675 = vld [vmem:[#allocation2 + $0x120] sm:$0xfc]
      %v4676 = vld [vmem:[#allocation2 + $0x130] sm:$0xff]
      %v4677 = vld [vmem:[#allocation2 + $0x140] sm:$0x3]
      %v4678 = vld [vmem:[#allocation2 + $0x150] sm:$0xfc]
      %v4679 = vld [vmem:[#allocation2 + $0x160] sm:$0xff]
      %v4680 = vld [vmem:[#allocation2 + $0x170] sm:$0x3]
      %v4681 = vld [vmem:[#allocation2 + $0x180] sm:$0xfc]
      %v4682 = vld [vmem:[#allocation2 + $0x190] sm:$0xff]
      %v4683 = vld [vmem:[#allocation2 + $0x1a0] sm:$0x3]
      %v4684 = vld [vmem:[#allocation2 + $0x1b0] sm:$0xfc]
      %v4685 = vld [vmem:[#allocation2 + $0x1c0] sm:$0xff]
      %v4686 = vld [vmem:[#allocation2 + $0x1d0] sm:$0x3]
      %v4687 = vld [vmem:[#allocation2 + $0x1e0] sm:$0xfc]
      %v4688 = vld [vmem:[#allocation2 + $0x1f0] sm:$0xff]
      %v4689 = vld [vmem:[#allocation2 + $0x200] sm:$0x3]
      %v4690 = vld [vmem:[#allocation2 + $0x210] sm:$0xfc]
      %v4691 = vld [vmem:[#allocation2 + $0x220] sm:$0xff]
      %v4692 = vld [vmem:[#allocation2 + $0x230] sm:$0x3]
      %v4693 = vld [vmem:[#allocation2 + $0x240] sm:$0xfc]
      %v4694 = vld [vmem:[#allocation2 + $0x250] sm:$0xff]
      %v4695 = vld [vmem:[#allocation2 + $0x260] sm:$0x3]
      %v4696 = vld [vmem:[#allocation2 + $0x270] sm:$0xfc]
      %v4697 = vld [vmem:[#allocation2 + $0x280] sm:$0xff]
      %v4698 = vld [vmem:[#allocation2 + $0x290] sm:$0x3]
      %v4699 = vld [vmem:[#allocation2 + $0x2a0] sm:$0xfc]
      %v4700 = vld [vmem:[#allocation2 + $0x2b0] sm:$0xff]
      %v4701 = vld [vmem:[#allocation2 + $0x2c0] sm:$0x3]
      %v4702 = vld [vmem:[#allocation2 + $0x2d0] sm:$0xfc]
      %v4703 = vld [vmem:[#allocation2 + $0x2e0] sm:$0xff]
      %v4704 = vld [vmem:[#allocation2 + $0x2f0] sm:$0x3]
      %v4753 = vrot.slane %v4657, 2
      %v4754 = vrot.slane %v4658, 2
      %v4755 = vsel %vm1548, %v4753, %v4754
      %v4756 = vrot.slane %v4659, 2
      %v4757 = vsel %vm1548, %v4754, %v4756
      %v4758 = vrot.slane %v4660, 2
      %v4759 = vrot.slane %v4661, 2
      %v4760 = vsel %vm1548, %v4758, %v4759
      %v4761 = vrot.slane %v4662, 2
      %v4762 = vsel %vm1548, %v4759, %v4761
      %v4763 = vrot.slane %v4663, 2
      %v4764 = vrot.slane %v4664, 2
      %v4765 = vsel %vm1548, %v4763, %v4764
      %v4766 = vrot.slane %v4665, 2
      %v4767 = vsel %vm1548, %v4764, %v4766
      %v4768 = vrot.slane %v4666, 2
      %v4769 = vrot.slane %v4667, 2
      %v4770 = vsel %vm1548, %v4768, %v4769
      %v4771 = vrot.slane %v4668, 2
      %v4772 = vsel %vm1548, %v4769, %v4771
      %v4773 = vrot.slane %v4669, 2
      %v4774 = vrot.slane %v4670, 2
      %v4775 = vsel %vm1548, %v4773, %v4774
      %v4776 = vrot.slane %v4671, 2
      %v4777 = vsel %vm1548, %v4774, %v4776
      %v4778 = vrot.slane %v4672, 2
      %v4779 = vrot.slane %v4673, 2
      %v4780 = vsel %vm1548, %v4778, %v4779
      %v4781 = vrot.slane %v4674, 2
      %v4782 = vsel %vm1548, %v4779, %v4781
      %v4783 = vrot.slane %v4675, 2
      %v4784 = vrot.slane %v4676, 2
      %v4785 = vsel %vm1548, %v4783, %v4784
      %v4786 = vrot.slane %v4677, 2
      %v4787 = vsel %vm1548, %v4784, %v4786
      %v4788 = vrot.slane %v4678, 2
      %v4789 = vrot.slane %v4679, 2
      %v4790 = vsel %vm1548, %v4788, %v4789
      %v4791 = vrot.slane %v4680, 2
      %v4792 = vsel %vm1548, %v4789, %v4791
      %v4793 = vrot.slane %v4681, 2
      %v4794 = vrot.slane %v4682, 2
      %v4795 = vsel %vm1548, %v4793, %v4794
      %v4796 = vrot.slane %v4683, 2
      %v4797 = vsel %vm1548, %v4794, %v4796
      %v4798 = vrot.slane %v4684, 2
      %v4799 = vrot.slane %v4685, 2
      %v4800 = vsel %vm1548, %v4798, %v4799
      %v4801 = vrot.slane %v4686, 2
      %v4802 = vsel %vm1548, %v4799, %v4801
      %v4803 = vrot.slane %v4687, 2
      %v4804 = vrot.slane %v4688, 2
      %v4805 = vsel %vm1548, %v4803, %v4804
      %v4806 = vrot.slane %v4689, 2
      %v4807 = vsel %vm1548, %v4804, %v4806
      %v4808 = vrot.slane %v4690, 2
      %v4809 = vrot.slane %v4691, 2
      %v4810 = vsel %vm1548, %v4808, %v4809
      %v4811 = vrot.slane %v4692, 2
      %v4812 = vsel %vm1548, %v4809, %v4811
      %v4813 = vrot.slane %v4693, 2
      %v4814 = vrot.slane %v4694, 2
      %v4815 = vsel %vm1548, %v4813, %v4814
      %v4816 = vrot.slane %v4695, 2
      %v4817 = vsel %vm1548, %v4814, %v4816
      %v4818 = vrot.slane %v4696, 2
      %v4819 = vrot.slane %v4697, 2
      %v4820 = vsel %vm1548, %v4818, %v4819
      %v4821 = vrot.slane %v4698, 2
      %v4822 = vsel %vm1548, %v4819, %v4821
      %v4823 = vrot.slane %v4699, 2
      %v4824 = vrot.slane %v4700, 2
      %v4825 = vsel %vm1548, %v4823, %v4824
      %v4826 = vrot.slane %v4701, 2
      %v4827 = vsel %vm1548, %v4824, %v4826
      %v4828 = vrot.slane %v4702, 2
      %v4829 = vrot.slane %v4703, 2
      %v4830 = vsel %vm1548, %v4828, %v4829
      %v4831 = vrot.slane %v4704, 2
      %v4832 = vsel %vm1548, %v4829, %v4831
      %4833 = vrot.lane.b32.xlu0 %v4755, 48
      %v4834 = vpop.permute.xlu0 %4833
      %4835 = vrot.lane.b32.xlu0 %v4757, 48
      %v4836 = vpop.permute.xlu0 %4835
      %4837 = vrot.lane.b32.xlu0 %v4760, 48
      %v4838 = vpop.permute.xlu0 %4837
      %4839 = vrot.lane.b32.xlu0 %v4762, 48
      %v4840 = vpop.permute.xlu0 %4839
      %4841 = vrot.lane.b32.xlu0 %v4765, 48
      %v4842 = vpop.permute.xlu0 %4841
      %4843 = vrot.lane.b32.xlu0 %v4767, 48
      %v4844 = vpop.permute.xlu0 %4843
      %4845 = vrot.lane.b32.xlu0 %v4770, 48
      %v4846 = vpop.permute.xlu0 %4845
      %4847 = vrot.lane.b32.xlu0 %v4772, 48
      %v4848 = vpop.permute.xlu0 %4847
      %4849 = vrot.lane.b32.xlu0 %v4775, 48
      %v4850 = vpop.permute.xlu0 %4849
      %4851 = vrot.lane.b32.xlu0 %v4777, 48
      %v4852 = vpop.permute.xlu0 %4851
      %4853 = vrot.lane.b32.xlu0 %v4780, 48
      %v4854 = vpop.permute.xlu0 %4853
      %4855 = vrot.lane.b32.xlu0 %v4782, 48
      %v4856 = vpop.permute.xlu0 %4855
      %4857 = vrot.lane.b32.xlu0 %v4785, 48
      %v4858 = vpop.permute.xlu0 %4857
      %4859 = vrot.lane.b32.xlu0 %v4787, 48
      %v4860 = vpop.permute.xlu0 %4859
      %4861 = vrot.lane.b32.xlu0 %v4790, 48
      %v4862 = vpop.permute.xlu0 %4861
      %4863 = vrot.lane.b32.xlu0 %v4792, 48
      %v4864 = vpop.permute.xlu0 %4863
      %4865 = vrot.lane.b32.xlu0 %v4795, 48
      %v4866 = vpop.permute.xlu0 %4865
      %4867 = vrot.lane.b32.xlu0 %v4797, 48
      %v4868 = vpop.permute.xlu0 %4867
      %4869 = vrot.lane.b32.xlu0 %v4800, 48
      %v4870 = vpop.permute.xlu0 %4869
      %4871 = vrot.lane.b32.xlu0 %v4802, 48
      %v4872 = vpop.permute.xlu0 %4871
      %4873 = vrot.lane.b32.xlu0 %v4805, 48
      %v4874 = vpop.permute.xlu0 %4873
      %4875 = vrot.lane.b32.xlu0 %v4807, 48
      %v4876 = vpop.permute.xlu0 %4875
      %4877 = vrot.lane.b32.xlu0 %v4810, 48
      %v4878 = vpop.permute.xlu0 %4877
      %4879 = vrot.lane.b32.xlu0 %v4812, 48
      %v4880 = vpop.permute.xlu0 %4879
      %4881 = vrot.lane.b32.xlu0 %v4815, 48
      %v4882 = vpop.permute.xlu0 %4881
      %4883 = vrot.lane.b32.xlu0 %v4817, 48
      %v4884 = vpop.permute.xlu0 %4883
      %4885 = vrot.lane.b32.xlu0 %v4820, 48
      %v4886 = vpop.permute.xlu0 %4885
      %4887 = vrot.lane.b32.xlu0 %v4822, 48
      %v4888 = vpop.permute.xlu0 %4887
      %4889 = vrot.lane.b32.xlu0 %v4825, 48
      %v4890 = vpop.permute.xlu0 %4889
      %4891 = vrot.lane.b32.xlu0 %v4827, 48
      %v4892 = vpop.permute.xlu0 %4891
      %4893 = vrot.lane.b32.xlu0 %v4830, 48
      %v4894 = vpop.permute.xlu0 %4893
      %4895 = vrot.lane.b32.xlu0 %v4832, 48
      %v4896 = vpop.permute.xlu0 %4895
      %v4929 = vadd.f32 %v4625, %v4834
      %v4930 = vadd.f32 %v4626, %v4836
      %v4931 = vadd.f32 %v4627, %v4838
      %v4932 = vadd.f32 %v4628, %v4840
      %v4933 = vadd.f32 %v4629, %v4842
      %v4934 = vadd.f32 %v4630, %v4844
      %v4935 = vadd.f32 %v4631, %v4846
      %v4936 = vadd.f32 %v4632, %v4848
      %v4937 = vadd.f32 %v4633, %v4850
      %v4938 = vadd.f32 %v4634, %v4852
      %v4939 = vadd.f32 %v4635, %v4854
      %v4940 = vadd.f32 %v4636, %v4856
      %v4941 = vadd.f32 %v4637, %v4858
      %v4942 = vadd.f32 %v4638, %v4860
      %v4943 = vadd.f32 %v4639, %v4862
      %v4944 = vadd.f32 %v4640, %v4864
      %v4945 = vadd.f32 %v4641, %v4866
      %v4946 = vadd.f32 %v4642, %v4868
      %v4947 = vadd.f32 %v4643, %v4870
      %v4948 = vadd.f32 %v4644, %v4872
      %v4949 = vadd.f32 %v4645, %v4874
      %v4950 = vadd.f32 %v4646, %v4876
      %v4951 = vadd.f32 %v4647, %v4878
      %v4952 = vadd.f32 %v4648, %v4880
      %v4953 = vadd.f32 %v4649, %v4882
      %v4954 = vadd.f32 %v4650, %v4884
      %v4955 = vadd.f32 %v4651, %v4886
      %v4956 = vadd.f32 %v4652, %v4888
      %v4957 = vadd.f32 %v4653, %v4890
      %v4958 = vadd.f32 %v4654, %v4892
      %v4959 = vadd.f32 %v4655, %v4894
      %v4960 = vadd.f32 %v4656, %v4896
      %4961 = vst.msk [vmem:[#allocation3] sm:$0xff] %vm1371, %v4929
      %4962 = vst.msk [vmem:[#allocation3 + $0x8] sm:$0xff] %vm1371, %v4930
      %4963 = vst.msk [vmem:[#allocation3 + $0x10] sm:$0xff] %vm1371, %v4931
      %4964 = vst.msk [vmem:[#allocation3 + $0x18] sm:$0xff] %vm1371, %v4932
      %4965 = vst.msk [vmem:[#allocation3 + $0x20] sm:$0xff] %vm1371, %v4933
      %4966 = vst.msk [vmem:[#allocation3 + $0x28] sm:$0xff] %vm1371, %v4934
      %4967 = vst.msk [vmem:[#allocation3 + $0x30] sm:$0xff] %vm1371, %v4935
      %4968 = vst.msk [vmem:[#allocation3 + $0x38] sm:$0xff] %vm1371, %v4936
      %4969 = vst.msk [vmem:[#allocation3 + $0x40] sm:$0xff] %vm1371, %v4937
      %4970 = vst.msk [vmem:[#allocation3 + $0x48] sm:$0xff] %vm1371, %v4938
      %4971 = vst.msk [vmem:[#allocation3 + $0x50] sm:$0xff] %vm1371, %v4939
      %4972 = vst.msk [vmem:[#allocation3 + $0x58] sm:$0xff] %vm1371, %v4940
      %4973 = vst.msk [vmem:[#allocation3 + $0x60] sm:$0xff] %vm1371, %v4941
      %4974 = vst.msk [vmem:[#allocation3 + $0x68] sm:$0xff] %vm1371, %v4942
      %4975 = vst.msk [vmem:[#allocation3 + $0x70] sm:$0xff] %vm1371, %v4943
      %4976 = vst.msk [vmem:[#allocation3 + $0x78] sm:$0xff] %vm1371, %v4944
      %4977 = vst.msk [vmem:[#allocation3 + $0x80] sm:$0xff] %vm1371, %v4945
      %4978 = vst.msk [vmem:[#allocation3 + $0x88] sm:$0xff] %vm1371, %v4946
      %4979 = vst.msk [vmem:[#allocation3 + $0x90] sm:$0xff] %vm1371, %v4947
      %4980 = vst.msk [vmem:[#allocation3 + $0x98] sm:$0xff] %vm1371, %v4948
      %4981 = vst.msk [vmem:[#allocation3 + $0xa0] sm:$0xff] %vm1371, %v4949
      %4982 = vst.msk [vmem:[#allocation3 + $0xa8] sm:$0xff] %vm1371, %v4950
      %4983 = vst.msk [vmem:[#allocation3 + $0xb0] sm:$0xff] %vm1371, %v4951
      %4984 = vst.msk [vmem:[#allocation3 + $0xb8] sm:$0xff] %vm1371, %v4952
      %4985 = vst.msk [vmem:[#allocation3 + $0xc0] sm:$0xff] %vm1371, %v4953
      %4986 = vst.msk [vmem:[#allocation3 + $0xc8] sm:$0xff] %vm1371, %v4954
      %4987 = vst.msk [vmem:[#allocation3 + $0xd0] sm:$0xff] %vm1371, %v4955
      %4988 = vst.msk [vmem:[#allocation3 + $0xd8] sm:$0xff] %vm1371, %v4956
      %4989 = vst.msk [vmem:[#allocation3 + $0xe0] sm:$0xff] %vm1371, %v4957
      %4990 = vst.msk [vmem:[#allocation3 + $0xe8] sm:$0xff] %vm1371, %v4958
      %4991 = vst.msk [vmem:[#allocation3 + $0xf0] sm:$0xff] %vm1371, %v4959
      %4992 = vst.msk [vmem:[#allocation3 + $0xf8] sm:$0xff] %vm1371, %v4960
      %v4993 = vld [vmem:[#allocation3] sm:$0xff]
      %v4994 = vld [vmem:[#allocation3 + $0x8] sm:$0xff]
      %v4995 = vld [vmem:[#allocation3 + $0x10] sm:$0xff]
      %v4996 = vld [vmem:[#allocation3 + $0x18] sm:$0xff]
      %v4997 = vld [vmem:[#allocation3 + $0x20] sm:$0xff]
      %v4998 = vld [vmem:[#allocation3 + $0x28] sm:$0xff]
      %v4999 = vld [vmem:[#allocation3 + $0x30] sm:$0xff]
      %v5000 = vld [vmem:[#allocation3 + $0x38] sm:$0xff]
      %v5001 = vld [vmem:[#allocation3 + $0x40] sm:$0xff]
      %v5002 = vld [vmem:[#allocation3 + $0x48] sm:$0xff]
      %v5003 = vld [vmem:[#allocation3 + $0x50] sm:$0xff]
      %v5004 = vld [vmem:[#allocation3 + $0x58] sm:$0xff]
      %v5005 = vld [vmem:[#allocation3 + $0x60] sm:$0xff]
      %v5006 = vld [vmem:[#allocation3 + $0x68] sm:$0xff]
      %v5007 = vld [vmem:[#allocation3 + $0x70] sm:$0xff]
      %v5008 = vld [vmem:[#allocation3 + $0x78] sm:$0xff]
      %v5009 = vld [vmem:[#allocation3 + $0x80] sm:$0xff]
      %v5010 = vld [vmem:[#allocation3 + $0x88] sm:$0xff]
      %v5011 = vld [vmem:[#allocation3 + $0x90] sm:$0xff]
      %v5012 = vld [vmem:[#allocation3 + $0x98] sm:$0xff]
      %v5013 = vld [vmem:[#allocation3 + $0xa0] sm:$0xff]
      %v5014 = vld [vmem:[#allocation3 + $0xa8] sm:$0xff]
      %v5015 = vld [vmem:[#allocation3 + $0xb0] sm:$0xff]
      %v5016 = vld [vmem:[#allocation3 + $0xb8] sm:$0xff]
      %v5017 = vld [vmem:[#allocation3 + $0xc0] sm:$0xff]
      %v5018 = vld [vmem:[#allocation3 + $0xc8] sm:$0xff]
      %v5019 = vld [vmem:[#allocation3 + $0xd0] sm:$0xff]
      %v5020 = vld [vmem:[#allocation3 + $0xd8] sm:$0xff]
      %v5021 = vld [vmem:[#allocation3 + $0xe0] sm:$0xff]
      %v5022 = vld [vmem:[#allocation3 + $0xe8] sm:$0xff]
      %v5023 = vld [vmem:[#allocation3 + $0xf0] sm:$0xff]
      %v5024 = vld [vmem:[#allocation3 + $0xf8] sm:$0xff]
      %v5025 = vld [vmem:[#allocation2] sm:$0xf0]
      %v5026 = vld [vmem:[#allocation2 + $0x10] sm:$0xff]
      %v5027 = vld [vmem:[#allocation2 + $0x20] sm:$0xf]
      %v5028 = vld [vmem:[#allocation2 + $0x30] sm:$0xf0]
      %v5029 = vld [vmem:[#allocation2 + $0x40] sm:$0xff]
      %v5030 = vld [vmem:[#allocation2 + $0x50] sm:$0xf]
      %v5031 = vld [vmem:[#allocation2 + $0x60] sm:$0xf0]
      %v5032 = vld [vmem:[#allocation2 + $0x70] sm:$0xff]
      %v5033 = vld [vmem:[#allocation2 + $0x80] sm:$0xf]
      %v5034 = vld [vmem:[#allocation2 + $0x90] sm:$0xf0]
      %v5035 = vld [vmem:[#allocation2 + $0xa0] sm:$0xff]
      %v5036 = vld [vmem:[#allocation2 + $0xb0] sm:$0xf]
      %v5037 = vld [vmem:[#allocation2 + $0xc0] sm:$0xf0]
      %v5038 = vld [vmem:[#allocation2 + $0xd0] sm:$0xff]
      %v5039 = vld [vmem:[#allocation2 + $0xe0] sm:$0xf]
      %v5040 = vld [vmem:[#allocation2 + $0xf0] sm:$0xf0]
      %v5041 = vld [vmem:[#allocation2 + $0x100] sm:$0xff]
      %v5042 = vld [vmem:[#allocation2 + $0x110] sm:$0xf]
      %v5043 = vld [vmem:[#allocation2 + $0x120] sm:$0xf0]
      %v5044 = vld [vmem:[#allocation2 + $0x130] sm:$0xff]
      %v5045 = vld [vmem:[#allocation2 + $0x140] sm:$0xf]
      %v5046 = vld [vmem:[#allocation2 + $0x150] sm:$0xf0]
      %v5047 = vld [vmem:[#allocation2 + $0x160] sm:$0xff]
      %v5048 = vld [vmem:[#allocation2 + $0x170] sm:$0xf]
      %v5049 = vld [vmem:[#allocation2 + $0x180] sm:$0xf0]
      %v5050 = vld [vmem:[#allocation2 + $0x190] sm:$0xff]
      %v5051 = vld [vmem:[#allocation2 + $0x1a0] sm:$0xf]
      %v5052 = vld [vmem:[#allocation2 + $0x1b0] sm:$0xf0]
      %v5053 = vld [vmem:[#allocation2 + $0x1c0] sm:$0xff]
      %v5054 = vld [vmem:[#allocation2 + $0x1d0] sm:$0xf]
      %v5055 = vld [vmem:[#allocation2 + $0x1e0] sm:$0xf0]
      %v5056 = vld [vmem:[#allocation2 + $0x1f0] sm:$0xff]
      %v5057 = vld [vmem:[#allocation2 + $0x200] sm:$0xf]
      %v5058 = vld [vmem:[#allocation2 + $0x210] sm:$0xf0]
      %v5059 = vld [vmem:[#allocation2 + $0x220] sm:$0xff]
      %v5060 = vld [vmem:[#allocation2 + $0x230] sm:$0xf]
      %v5061 = vld [vmem:[#allocation2 + $0x240] sm:$0xf0]
      %v5062 = vld [vmem:[#allocation2 + $0x250] sm:$0xff]
      %v5063 = vld [vmem:[#allocation2 + $0x260] sm:$0xf]
      %v5064 = vld [vmem:[#allocation2 + $0x270] sm:$0xf0]
      %v5065 = vld [vmem:[#allocation2 + $0x280] sm:$0xff]
      %v5066 = vld [vmem:[#allocation2 + $0x290] sm:$0xf]
      %v5067 = vld [vmem:[#allocation2 + $0x2a0] sm:$0xf0]
      %v5068 = vld [vmem:[#allocation2 + $0x2b0] sm:$0xff]
      %v5069 = vld [vmem:[#allocation2 + $0x2c0] sm:$0xf]
      %v5070 = vld [vmem:[#allocation2 + $0x2d0] sm:$0xf0]
      %v5071 = vld [vmem:[#allocation2 + $0x2e0] sm:$0xff]
      %v5072 = vld [vmem:[#allocation2 + $0x2f0] sm:$0xf]
      %vm5121 = vcmask 1043456
      %v5122 = vrot.slane %v5025, 4
      %v5123 = vrot.slane %v5026, 4
      %v5124 = vsel %vm5121, %v5122, %v5123
      %v5125 = vrot.slane %v5027, 4
      %v5126 = vsel %vm5121, %v5123, %v5125
      %v5127 = vrot.slane %v5028, 4
      %v5128 = vrot.slane %v5029, 4
      %v5129 = vsel %vm5121, %v5127, %v5128
      %v5130 = vrot.slane %v5030, 4
      %v5131 = vsel %vm5121, %v5128, %v5130
      %v5132 = vrot.slane %v5031, 4
      %v5133 = vrot.slane %v5032, 4
      %v5134 = vsel %vm5121, %v5132, %v5133
      %v5135 = vrot.slane %v5033, 4
      %v5136 = vsel %vm5121, %v5133, %v5135
      %v5137 = vrot.slane %v5034, 4
      %v5138 = vrot.slane %v5035, 4
      %v5139 = vsel %vm5121, %v5137, %v5138
      %v5140 = vrot.slane %v5036, 4
      %v5141 = vsel %vm5121, %v5138, %v5140
      %v5142 = vrot.slane %v5037, 4
      %v5143 = vrot.slane %v5038, 4
      %v5144 = vsel %vm5121, %v5142, %v5143
      %v5145 = vrot.slane %v5039, 4
      %v5146 = vsel %vm5121, %v5143, %v5145
      %v5147 = vrot.slane %v5040, 4
      %v5148 = vrot.slane %v5041, 4
      %v5149 = vsel %vm5121, %v5147, %v5148
      %v5150 = vrot.slane %v5042, 4
      %v5151 = vsel %vm5121, %v5148, %v5150
      %v5152 = vrot.slane %v5043, 4
      %v5153 = vrot.slane %v5044, 4
      %v5154 = vsel %vm5121, %v5152, %v5153
      %v5155 = vrot.slane %v5045, 4
      %v5156 = vsel %vm5121, %v5153, %v5155
      %v5157 = vrot.slane %v5046, 4
      %v5158 = vrot.slane %v5047, 4
      %v5159 = vsel %vm5121, %v5157, %v5158
      %v5160 = vrot.slane %v5048, 4
      %v5161 = vsel %vm5121, %v5158, %v5160
      %v5162 = vrot.slane %v5049, 4
      %v5163 = vrot.slane %v5050, 4
      %v5164 = vsel %vm5121, %v5162, %v5163
      %v5165 = vrot.slane %v5051, 4
      %v5166 = vsel %vm5121, %v5163, %v5165
      %v5167 = vrot.slane %v5052, 4
      %v5168 = vrot.slane %v5053, 4
      %v5169 = vsel %vm5121, %v5167, %v5168
      %v5170 = vrot.slane %v5054, 4
      %v5171 = vsel %vm5121, %v5168, %v5170
      %v5172 = vrot.slane %v5055, 4
      %v5173 = vrot.slane %v5056, 4
      %v5174 = vsel %vm5121, %v5172, %v5173
      %v5175 = vrot.slane %v5057, 4
      %v5176 = vsel %vm5121, %v5173, %v5175
      %v5177 = vrot.slane %v5058, 4
      %v5178 = vrot.slane %v5059, 4
      %v5179 = vsel %vm5121, %v5177, %v5178
      %v5180 = vrot.slane %v5060, 4
      %v5181 = vsel %vm5121, %v5178, %v5180
      %v5182 = vrot.slane %v5061, 4
      %v5183 = vrot.slane %v5062, 4
      %v5184 = vsel %vm5121, %v5182, %v5183
      %v5185 = vrot.slane %v5063, 4
      %v5186 = vsel %vm5121, %v5183, %v5185
      %v5187 = vrot.slane %v5064, 4
      %v5188 = vrot.slane %v5065, 4
      %v5189 = vsel %vm5121, %v5187, %v5188
      %v5190 = vrot.slane %v5066, 4
      %v5191 = vsel %vm5121, %v5188, %v5190
      %v5192 = vrot.slane %v5067, 4
      %v5193 = vrot.slane %v5068, 4
      %v5194 = vsel %vm5121, %v5192, %v5193
      %v5195 = vrot.slane %v5069, 4
      %v5196 = vsel %vm5121, %v5193, %v5195
      %v5197 = vrot.slane %v5070, 4
      %v5198 = vrot.slane %v5071, 4
      %v5199 = vsel %vm5121, %v5197, %v5198
      %v5200 = vrot.slane %v5072, 4
      %v5201 = vsel %vm5121, %v5198, %v5200
      %5202 = vrot.lane.b32.xlu0 %v5124, 40
      %v5203 = vpop.permute.xlu0 %5202
      %5204 = vrot.lane.b32.xlu0 %v5126, 40
      %v5205 = vpop.permute.xlu0 %5204
      %5206 = vrot.lane.b32.xlu0 %v5129, 40
      %v5207 = vpop.permute.xlu0 %5206
      %5208 = vrot.lane.b32.xlu0 %v5131, 40
      %v5209 = vpop.permute.xlu0 %5208
      %5210 = vrot.lane.b32.xlu0 %v5134, 40
      %v5211 = vpop.permute.xlu0 %5210
      %5212 = vrot.lane.b32.xlu0 %v5136, 40
      %v5213 = vpop.permute.xlu0 %5212
      %5214 = vrot.lane.b32.xlu0 %v5139, 40
      %v5215 = vpop.permute.xlu0 %5214
      %5216 = vrot.lane.b32.xlu0 %v5141, 40
      %v5217 = vpop.permute.xlu0 %5216
      %5218 = vrot.lane.b32.xlu0 %v5144, 40
      %v5219 = vpop.permute.xlu0 %5218
      %5220 = vrot.lane.b32.xlu0 %v5146, 40
      %v5221 = vpop.permute.xlu0 %5220
      %5222 = vrot.lane.b32.xlu0 %v5149, 40
      %v5223 = vpop.permute.xlu0 %5222
      %5224 = vrot.lane.b32.xlu0 %v5151, 40
      %v5225 = vpop.permute.xlu0 %5224
      %5226 = vrot.lane.b32.xlu0 %v5154, 40
      %v5227 = vpop.permute.xlu0 %5226
      %5228 = vrot.lane.b32.xlu0 %v5156, 40
      %v5229 = vpop.permute.xlu0 %5228
      %5230 = vrot.lane.b32.xlu0 %v5159, 40
      %v5231 = vpop.permute.xlu0 %5230
      %5232 = vrot.lane.b32.xlu0 %v5161, 40
      %v5233 = vpop.permute.xlu0 %5232
      %5234 = vrot.lane.b32.xlu0 %v5164, 40
      %v5235 = vpop.permute.xlu0 %5234
      %5236 = vrot.lane.b32.xlu0 %v5166, 40
      %v5237 = vpop.permute.xlu0 %5236
      %5238 = vrot.lane.b32.xlu0 %v5169, 40
      %v5239 = vpop.permute.xlu0 %5238
      %5240 = vrot.lane.b32.xlu0 %v5171, 40
      %v5241 = vpop.permute.xlu0 %5240
      %5242 = vrot.lane.b32.xlu0 %v5174, 40
      %v5243 = vpop.permute.xlu0 %5242
      %5244 = vrot.lane.b32.xlu0 %v5176, 40
      %v5245 = vpop.permute.xlu0 %5244
      %5246 = vrot.lane.b32.xlu0 %v5179, 40
      %v5247 = vpop.permute.xlu0 %5246
      %5248 = vrot.lane.b32.xlu0 %v5181, 40
      %v5249 = vpop.permute.xlu0 %5248
      %5250 = vrot.lane.b32.xlu0 %v5184, 40
      %v5251 = vpop.permute.xlu0 %5250
      %5252 = vrot.lane.b32.xlu0 %v5186, 40
      %v5253 = vpop.permute.xlu0 %5252
      %5254 = vrot.lane.b32.xlu0 %v5189, 40
      %v5255 = vpop.permute.xlu0 %5254
      %5256 = vrot.lane.b32.xlu0 %v5191, 40
      %v5257 = vpop.permute.xlu0 %5256
      %5258 = vrot.lane.b32.xlu0 %v5194, 40
      %v5259 = vpop.permute.xlu0 %5258
      %5260 = vrot.lane.b32.xlu0 %v5196, 40
      %v5261 = vpop.permute.xlu0 %5260
      %5262 = vrot.lane.b32.xlu0 %v5199, 40
      %v5263 = vpop.permute.xlu0 %5262
      %5264 = vrot.lane.b32.xlu0 %v5201, 40
      %v5265 = vpop.permute.xlu0 %5264
      %v5298 = vadd.f32 %v4993, %v5203
      %v5299 = vadd.f32 %v4994, %v5205
      %v5300 = vadd.f32 %v4995, %v5207
      %v5301 = vadd.f32 %v4996, %v5209
      %v5302 = vadd.f32 %v4997, %v5211
      %v5303 = vadd.f32 %v4998, %v5213
      %v5304 = vadd.f32 %v4999, %v5215
      %v5305 = vadd.f32 %v5000, %v5217
      %v5306 = vadd.f32 %v5001, %v5219
      %v5307 = vadd.f32 %v5002, %v5221
      %v5308 = vadd.f32 %v5003, %v5223
      %v5309 = vadd.f32 %v5004, %v5225
      %v5310 = vadd.f32 %v5005, %v5227
      %v5311 = vadd.f32 %v5006, %v5229
      %v5312 = vadd.f32 %v5007, %v5231
      %v5313 = vadd.f32 %v5008, %v5233
      %v5314 = vadd.f32 %v5009, %v5235
      %v5315 = vadd.f32 %v5010, %v5237
      %v5316 = vadd.f32 %v5011, %v5239
      %v5317 = vadd.f32 %v5012, %v5241
      %v5318 = vadd.f32 %v5013, %v5243
      %v5319 = vadd.f32 %v5014, %v5245
      %v5320 = vadd.f32 %v5015, %v5247
      %v5321 = vadd.f32 %v5016, %v5249
      %v5322 = vadd.f32 %v5017, %v5251
      %v5323 = vadd.f32 %v5018, %v5253
      %v5324 = vadd.f32 %v5019, %v5255
      %v5325 = vadd.f32 %v5020, %v5257
      %v5326 = vadd.f32 %v5021, %v5259
      %v5327 = vadd.f32 %v5022, %v5261
      %v5328 = vadd.f32 %v5023, %v5263
      %v5329 = vadd.f32 %v5024, %v5265
      %5330 = vst.msk [vmem:[#allocation3] sm:$0xff] %vm1371, %v5298
      %5331 = vst.msk [vmem:[#allocation3 + $0x8] sm:$0xff] %vm1371, %v5299
      %5332 = vst.msk [vmem:[#allocation3 + $0x10] sm:$0xff] %vm1371, %v5300
      %5333 = vst.msk [vmem:[#allocation3 + $0x18] sm:$0xff] %vm1371, %v5301
      %5334 = vst.msk [vmem:[#allocation3 + $0x20] sm:$0xff] %vm1371, %v5302
      %5335 = vst.msk [vmem:[#allocation3 + $0x28] sm:$0xff] %vm1371, %v5303
      %5336 = vst.msk [vmem:[#allocation3 + $0x30] sm:$0xff] %vm1371, %v5304
      %5337 = vst.msk [vmem:[#allocation3 + $0x38] sm:$0xff] %vm1371, %v5305
      %5338 = vst.msk [vmem:[#allocation3 + $0x40] sm:$0xff] %vm1371, %v5306
      %5339 = vst.msk [vmem:[#allocation3 + $0x48] sm:$0xff] %vm1371, %v5307
      %5340 = vst.msk [vmem:[#allocation3 + $0x50] sm:$0xff] %vm1371, %v5308
      %5341 = vst.msk [vmem:[#allocation3 + $0x58] sm:$0xff] %vm1371, %v5309
      %5342 = vst.msk [vmem:[#allocation3 + $0x60] sm:$0xff] %vm1371, %v5310
      %5343 = vst.msk [vmem:[#allocation3 + $0x68] sm:$0xff] %vm1371, %v5311
      %5344 = vst.msk [vmem:[#allocation3 + $0x70] sm:$0xff] %vm1371, %v5312
      %5345 = vst.msk [vmem:[#allocation3 + $0x78] sm:$0xff] %vm1371, %v5313
      %5346 = vst.msk [vmem:[#allocation3 + $0x80] sm:$0xff] %vm1371, %v5314
      %5347 = vst.msk [vmem:[#allocation3 + $0x88] sm:$0xff] %vm1371, %v5315
      %5348 = vst.msk [vmem:[#allocation3 + $0x90] sm:$0xff] %vm1371, %v5316
      %5349 = vst.msk [vmem:[#allocation3 + $0x98] sm:$0xff] %vm1371, %v5317
      %5350 = vst.msk [vmem:[#allocation3 + $0xa0] sm:$0xff] %vm1371, %v5318
      %5351 = vst.msk [vmem:[#allocation3 + $0xa8] sm:$0xff] %vm1371, %v5319
      %5352 = vst.msk [vmem:[#allocation3 + $0xb0] sm:$0xff] %vm1371, %v5320
      %5353 = vst.msk [vmem:[#allocation3 + $0xb8] sm:$0xff] %vm1371, %v5321
      %5354 = vst.msk [vmem:[#allocation3 + $0xc0] sm:$0xff] %vm1371, %v5322
      %5355 = vst.msk [vmem:[#allocation3 + $0xc8] sm:$0xff] %vm1371, %v5323
      %5356 = vst.msk [vmem:[#allocation3 + $0xd0] sm:$0xff] %vm1371, %v5324
      %5357 = vst.msk [vmem:[#allocation3 + $0xd8] sm:$0xff] %vm1371, %v5325
      %5358 = vst.msk [vmem:[#allocation3 + $0xe0] sm:$0xff] %vm1371, %v5326
      %5359 = vst.msk [vmem:[#allocation3 + $0xe8] sm:$0xff] %vm1371, %v5327
      %5360 = vst.msk [vmem:[#allocation3 + $0xf0] sm:$0xff] %vm1371, %v5328
      %5361 = vst.msk [vmem:[#allocation3 + $0xf8] sm:$0xff] %vm1371, %v5329
      %v5362 = vld [vmem:[#allocation3] sm:$0xff]
      %v5363 = vld [vmem:[#allocation3 + $0x8] sm:$0xff]
      %v5364 = vld [vmem:[#allocation3 + $0x10] sm:$0xff]
      %v5365 = vld [vmem:[#allocation3 + $0x18] sm:$0xff]
      %v5366 = vld [vmem:[#allocation3 + $0x20] sm:$0xff]
      %v5367 = vld [vmem:[#allocation3 + $0x28] sm:$0xff]
      %v5368 = vld [vmem:[#allocation3 + $0x30] sm:$0xff]
      %v5369 = vld [vmem:[#allocation3 + $0x38] sm:$0xff]
      %v5370 = vld [vmem:[#allocation3 + $0x40] sm:$0xff]
      %v5371 = vld [vmem:[#allocation3 + $0x48] sm:$0xff]
      %v5372 = vld [vmem:[#allocation3 + $0x50] sm:$0xff]
      %v5373 = vld [vmem:[#allocation3 + $0x58] sm:$0xff]
      %v5374 = vld [vmem:[#allocation3 + $0x60] sm:$0xff]
      %v5375 = vld [vmem:[#allocation3 + $0x68] sm:$0xff]
      %v5376 = vld [vmem:[#allocation3 + $0x70] sm:$0xff]
      %v5377 = vld [vmem:[#allocation3 + $0x78] sm:$0xff]
      %v5378 = vld [vmem:[#allocation3 + $0x80] sm:$0xff]
      %v5379 = vld [vmem:[#allocation3 + $0x88] sm:$0xff]
      %v5380 = vld [vmem:[#allocation3 + $0x90] sm:$0xff]
      %v5381 = vld [vmem:[#allocation3 + $0x98] sm:$0xff]
      %v5382 = vld [vmem:[#allocation3 + $0xa0] sm:$0xff]
      %v5383 = vld [vmem:[#allocation3 + $0xa8] sm:$0xff]
      %v5384 = vld [vmem:[#allocation3 + $0xb0] sm:$0xff]
      %v5385 = vld [vmem:[#allocation3 + $0xb8] sm:$0xff]
      %v5386 = vld [vmem:[#allocation3 + $0xc0] sm:$0xff]
      %v5387 = vld [vmem:[#allocation3 + $0xc8] sm:$0xff]
      %v5388 = vld [vmem:[#allocation3 + $0xd0] sm:$0xff]
      %v5389 = vld [vmem:[#allocation3 + $0xd8] sm:$0xff]
      %v5390 = vld [vmem:[#allocation3 + $0xe0] sm:$0xff]
      %v5391 = vld [vmem:[#allocation3 + $0xe8] sm:$0xff]
      %v5392 = vld [vmem:[#allocation3 + $0xf0] sm:$0xff]
      %v5393 = vld [vmem:[#allocation3 + $0xf8] sm:$0xff]
      %v5394 = vld [vmem:[%s2190] sm:$0xff]
      %v5395 = vld [vmem:[%s2190 + $0x10] sm:$0xff]
      %v5396 = vld [vmem:[%s2190 + $0x30] sm:$0xff]
      %v5397 = vld [vmem:[%s2190 + $0x40] sm:$0xff]
      %v5398 = vld [vmem:[%s2190 + $0x60] sm:$0xff]
      %v5399 = vld [vmem:[%s2190 + $0x70] sm:$0xff]
      %v5400 = vld [vmem:[%s2190 + $0x90] sm:$0xff]
      %v5401 = vld [vmem:[%s2190 + $0xa0] sm:$0xff]
      %v5402 = vld [vmem:[%s2190 + $0xc0] sm:$0xff]
      %v5403 = vld [vmem:[%s2190 + $0xd0] sm:$0xff]
      %v5404 = vld [vmem:[%s2190 + $0xf0] sm:$0xff]
      %v5405 = vld [vmem:[%s2190 + $0x100] sm:$0xff]
      %v5406 = vld [vmem:[%s2190 + $0x120] sm:$0xff]
      %v5407 = vld [vmem:[%s2190 + $0x130] sm:$0xff]
      %v5408 = vld [vmem:[%s2190 + $0x150] sm:$0xff]
      %v5409 = vld [vmem:[%s2190 + $0x160] sm:$0xff]
      %v5410 = vld [vmem:[%s2190 + $0x180] sm:$0xff]
      %v5411 = vld [vmem:[%s2190 + $0x190] sm:$0xff]
      %v5412 = vld [vmem:[%s2190 + $0x1b0] sm:$0xff]
      %v5413 = vld [vmem:[%s2190 + $0x1c0] sm:$0xff]
      %v5414 = vld [vmem:[%s2190 + $0x1e0] sm:$0xff]
      %v5415 = vld [vmem:[%s2190 + $0x1f0] sm:$0xff]
      %v5416 = vld [vmem:[%s2190 + $0x210] sm:$0xff]
      %v5417 = vld [vmem:[%s2190 + $0x220] sm:$0xff]
      %v5418 = vld [vmem:[%s2190 + $0x240] sm:$0xff]
      %v5419 = vld [vmem:[%s2190 + $0x250] sm:$0xff]
      %v5420 = vld [vmem:[%s2190 + $0x270] sm:$0xff]
      %v5421 = vld [vmem:[%s2190 + $0x280] sm:$0xff]
      %v5422 = vld [vmem:[%s2190 + $0x2a0] sm:$0xff]
      %v5423 = vld [vmem:[%s2190 + $0x2b0] sm:$0xff]
      %v5424 = vld [vmem:[%s2190 + $0x2d0] sm:$0xff]
      %v5425 = vld [vmem:[%s2190 + $0x2e0] sm:$0xff]
      %5458 = vrot.lane.b32.xlu0 %v5394, 32
      %v5459 = vpop.permute.xlu0 %5458
      %5460 = vrot.lane.b32.xlu0 %v5395, 32
      %v5461 = vpop.permute.xlu0 %5460
      %5462 = vrot.lane.b32.xlu0 %v5396, 32
      %v5463 = vpop.permute.xlu0 %5462
      %5464 = vrot.lane.b32.xlu0 %v5397, 32
      %v5465 = vpop.permute.xlu0 %5464
      %5466 = vrot.lane.b32.xlu0 %v5398, 32
      %v5467 = vpop.permute.xlu0 %5466
      %5468 = vrot.lane.b32.xlu0 %v5399, 32
      %v5469 = vpop.permute.xlu0 %5468
      %5470 = vrot.lane.b32.xlu0 %v5400, 32
      %v5471 = vpop.permute.xlu0 %5470
      %5472 = vrot.lane.b32.xlu0 %v5401, 32
      %v5473 = vpop.permute.xlu0 %5472
      %5474 = vrot.lane.b32.xlu0 %v5402, 32
      %v5475 = vpop.permute.xlu0 %5474
      %5476 = vrot.lane.b32.xlu0 %v5403, 32
      %v5477 = vpop.permute.xlu0 %5476
      %5478 = vrot.lane.b32.xlu0 %v5404, 32
      %v5479 = vpop.permute.xlu0 %5478
      %5480 = vrot.lane.b32.xlu0 %v5405, 32
      %v5481 = vpop.permute.xlu0 %5480
      %5482 = vrot.lane.b32.xlu0 %v5406, 32
      %v5483 = vpop.permute.xlu0 %5482
      %5484 = vrot.lane.b32.xlu0 %v5407, 32
      %v5485 = vpop.permute.xlu0 %5484
      %5486 = vrot.lane.b32.xlu0 %v5408, 32
      %v5487 = vpop.permute.xlu0 %5486
      %5488 = vrot.lane.b32.xlu0 %v5409, 32
      %v5489 = vpop.permute.xlu0 %5488
      %5490 = vrot.lane.b32.xlu0 %v5410, 32
      %v5491 = vpop.permute.xlu0 %5490
      %5492 = vrot.lane.b32.xlu0 %v5411, 32
      %v5493 = vpop.permute.xlu0 %5492
      %5494 = vrot.lane.b32.xlu0 %v5412, 32
      %v5495 = vpop.permute.xlu0 %5494
      %5496 = vrot.lane.b32.xlu0 %v5413, 32
      %v5497 = vpop.permute.xlu0 %5496
      %5498 = vrot.lane.b32.xlu0 %v5414, 32
      %v5499 = vpop.permute.xlu0 %5498
      %5500 = vrot.lane.b32.xlu0 %v5415, 32
      %v5501 = vpop.permute.xlu0 %5500
      %5502 = vrot.lane.b32.xlu0 %v5416, 32
      %v5503 = vpop.permute.xlu0 %5502
      %5504 = vrot.lane.b32.xlu0 %v5417, 32
      %v5505 = vpop.permute.xlu0 %5504
      %5506 = vrot.lane.b32.xlu0 %v5418, 32
      %v5507 = vpop.permute.xlu0 %5506
      %5508 = vrot.lane.b32.xlu0 %v5419, 32
      %v5509 = vpop.permute.xlu0 %5508
      %5510 = vrot.lane.b32.xlu0 %v5420, 32
      %v5511 = vpop.permute.xlu0 %5510
      %5512 = vrot.lane.b32.xlu0 %v5421, 32
      %v5513 = vpop.permute.xlu0 %5512
      %5514 = vrot.lane.b32.xlu0 %v5422, 32
      %v5515 = vpop.permute.xlu0 %5514
      %5516 = vrot.lane.b32.xlu0 %v5423, 32
      %v5517 = vpop.permute.xlu0 %5516
      %5518 = vrot.lane.b32.xlu0 %v5424, 32
      %v5519 = vpop.permute.xlu0 %5518
      %5520 = vrot.lane.b32.xlu0 %v5425, 32
      %v5521 = vpop.permute.xlu0 %5520
      %v5554 = vadd.f32 %v5362, %v5459
      %v5555 = vadd.f32 %v5363, %v5461
      %v5556 = vadd.f32 %v5364, %v5463
      %v5557 = vadd.f32 %v5365, %v5465
      %v5558 = vadd.f32 %v5366, %v5467
      %v5559 = vadd.f32 %v5367, %v5469
      %v5560 = vadd.f32 %v5368, %v5471
      %v5561 = vadd.f32 %v5369, %v5473
      %v5562 = vadd.f32 %v5370, %v5475
      %v5563 = vadd.f32 %v5371, %v5477
      %v5564 = vadd.f32 %v5372, %v5479
      %v5565 = vadd.f32 %v5373, %v5481
      %v5566 = vadd.f32 %v5374, %v5483
      %v5567 = vadd.f32 %v5375, %v5485
      %v5568 = vadd.f32 %v5376, %v5487
      %v5569 = vadd.f32 %v5377, %v5489
      %v5570 = vadd.f32 %v5378, %v5491
      %v5571 = vadd.f32 %v5379, %v5493
      %v5572 = vadd.f32 %v5380, %v5495
      %v5573 = vadd.f32 %v5381, %v5497
      %v5574 = vadd.f32 %v5382, %v5499
      %v5575 = vadd.f32 %v5383, %v5501
      %v5576 = vadd.f32 %v5384, %v5503
      %v5577 = vadd.f32 %v5385, %v5505
      %v5578 = vadd.f32 %v5386, %v5507
      %v5579 = vadd.f32 %v5387, %v5509
      %v5580 = vadd.f32 %v5388, %v5511
      %v5581 = vadd.f32 %v5389, %v5513
      %v5582 = vadd.f32 %v5390, %v5515
      %v5583 = vadd.f32 %v5391, %v5517
      %v5584 = vadd.f32 %v5392, %v5519
      %v5585 = vadd.f32 %v5393, %v5521
      %5586 = vst.msk [vmem:[#allocation3] sm:$0xff] %vm1371, %v5554
      %5587 = vst.msk [vmem:[#allocation3 + $0x8] sm:$0xff] %vm1371, %v5555
      %5588 = vst.msk [vmem:[#allocation3 + $0x10] sm:$0xff] %vm1371, %v5556
      %5589 = vst.msk [vmem:[#allocation3 + $0x18] sm:$0xff] %vm1371, %v5557
      %5590 = vst.msk [vmem:[#allocation3 + $0x20] sm:$0xff] %vm1371, %v5558
      %5591 = vst.msk [vmem:[#allocation3 + $0x28] sm:$0xff] %vm1371, %v5559
      %5592 = vst.msk [vmem:[#allocation3 + $0x30] sm:$0xff] %vm1371, %v5560
      %5593 = vst.msk [vmem:[#allocation3 + $0x38] sm:$0xff] %vm1371, %v5561
      %5594 = vst.msk [vmem:[#allocation3 + $0x40] sm:$0xff] %vm1371, %v5562
      %5595 = vst.msk [vmem:[#allocation3 + $0x48] sm:$0xff] %vm1371, %v5563
      %5596 = vst.msk [vmem:[#allocation3 + $0x50] sm:$0xff] %vm1371, %v5564
      %5597 = vst.msk [vmem:[#allocation3 + $0x58] sm:$0xff] %vm1371, %v5565
      %5598 = vst.msk [vmem:[#allocation3 + $0x60] sm:$0xff] %vm1371, %v5566
      %5599 = vst.msk [vmem:[#allocation3 + $0x68] sm:$0xff] %vm1371, %v5567
      %5600 = vst.msk [vmem:[#allocation3 + $0x70] sm:$0xff] %vm1371, %v5568
      %5601 = vst.msk [vmem:[#allocation3 + $0x78] sm:$0xff] %vm1371, %v5569
      %5602 = vst.msk [vmem:[#allocation3 + $0x80] sm:$0xff] %vm1371, %v5570
      %5603 = vst.msk [vmem:[#allocation3 + $0x88] sm:$0xff] %vm1371, %v5571
      %5604 = vst.msk [vmem:[#allocation3 + $0x90] sm:$0xff] %vm1371, %v5572
      %5605 = vst.msk [vmem:[#allocation3 + $0x98] sm:$0xff] %vm1371, %v5573
      %5606 = vst.msk [vmem:[#allocation3 + $0xa0] sm:$0xff] %vm1371, %v5574
      %5607 = vst.msk [vmem:[#allocation3 + $0xa8] sm:$0xff] %vm1371, %v5575
      %5608 = vst.msk [vmem:[#allocation3 + $0xb0] sm:$0xff] %vm1371, %v5576
      %5609 = vst.msk [vmem:[#allocation3 + $0xb8] sm:$0xff] %vm1371, %v5577
      %5610 = vst.msk [vmem:[#allocation3 + $0xc0] sm:$0xff] %vm1371, %v5578
      %5611 = vst.msk [vmem:[#allocation3 + $0xc8] sm:$0xff] %vm1371, %v5579
      %5612 = vst.msk [vmem:[#allocation3 + $0xd0] sm:$0xff] %vm1371, %v5580
      %5613 = vst.msk [vmem:[#allocation3 + $0xd8] sm:$0xff] %vm1371, %v5581
      %5614 = vst.msk [vmem:[#allocation3 + $0xe0] sm:$0xff] %vm1371, %v5582
      %5615 = vst.msk [vmem:[#allocation3 + $0xe8] sm:$0xff] %vm1371, %v5583
      %5616 = vst.msk [vmem:[#allocation3 + $0xf0] sm:$0xff] %vm1371, %v5584
      %5617 = vst.msk [vmem:[#allocation3 + $0xf8] sm:$0xff] %vm1371, %v5585
      %v5618 = vld [vmem:[#allocation3] sm:$0xff]
      %v5619 = vld [vmem:[#allocation3 + $0x8] sm:$0xff]
      %v5620 = vld [vmem:[#allocation3 + $0x10] sm:$0xff]
      %v5621 = vld [vmem:[#allocation3 + $0x18] sm:$0xff]
      %v5622 = vld [vmem:[#allocation3 + $0x20] sm:$0xff]
      %v5623 = vld [vmem:[#allocation3 + $0x28] sm:$0xff]
      %v5624 = vld [vmem:[#allocation3 + $0x30] sm:$0xff]
      %v5625 = vld [vmem:[#allocation3 + $0x38] sm:$0xff]
      %v5626 = vld [vmem:[#allocation3 + $0x40] sm:$0xff]
      %v5627 = vld [vmem:[#allocation3 + $0x48] sm:$0xff]
      %v5628 = vld [vmem:[#allocation3 + $0x50] sm:$0xff]
      %v5629 = vld [vmem:[#allocation3 + $0x58] sm:$0xff]
      %v5630 = vld [vmem:[#allocation3 + $0x60] sm:$0xff]
      %v5631 = vld [vmem:[#allocation3 + $0x68] sm:$0xff]
      %v5632 = vld [vmem:[#allocation3 + $0x70] sm:$0xff]
      %v5633 = vld [vmem:[#allocation3 + $0x78] sm:$0xff]
      %v5634 = vld [vmem:[#allocation3 + $0x80] sm:$0xff]
      %v5635 = vld [vmem:[#allocation3 + $0x88] sm:$0xff]
      %v5636 = vld [vmem:[#allocation3 + $0x90] sm:$0xff]
      %v5637 = vld [vmem:[#allocation3 + $0x98] sm:$0xff]
      %v5638 = vld [vmem:[#allocation3 + $0xa0] sm:$0xff]
      %v5639 = vld [vmem:[#allocation3 + $0xa8] sm:$0xff]
      %v5640 = vld [vmem:[#allocation3 + $0xb0] sm:$0xff]
      %v5641 = vld [vmem:[#allocation3 + $0xb8] sm:$0xff]
      %v5642 = vld [vmem:[#allocation3 + $0xc0] sm:$0xff]
      %v5643 = vld [vmem:[#allocation3 + $0xc8] sm:$0xff]
      %v5644 = vld [vmem:[#allocation3 + $0xd0] sm:$0xff]
      %v5645 = vld [vmem:[#allocation3 + $0xd8] sm:$0xff]
      %v5646 = vld [vmem:[#allocation3 + $0xe0] sm:$0xff]
      %v5647 = vld [vmem:[#allocation3 + $0xe8] sm:$0xff]
      %v5648 = vld [vmem:[#allocation3 + $0xf0] sm:$0xff]
      %v5649 = vld [vmem:[#allocation3 + $0xf8] sm:$0xff]
      %v5650 = vld [vmem:[%s2190] sm:$0xfc]
      %v5651 = vld [vmem:[%s2190 + $0x10] sm:$0xff]
      %v5652 = vld [vmem:[%s2190 + $0x20] sm:$0x3]
      %v5653 = vld [vmem:[%s2190 + $0x30] sm:$0xfc]
      %v5654 = vld [vmem:[%s2190 + $0x40] sm:$0xff]
      %v5655 = vld [vmem:[%s2190 + $0x50] sm:$0x3]
      %v5656 = vld [vmem:[%s2190 + $0x60] sm:$0xfc]
      %v5657 = vld [vmem:[%s2190 + $0x70] sm:$0xff]
      %v5658 = vld [vmem:[%s2190 + $0x80] sm:$0x3]
      %v5659 = vld [vmem:[%s2190 + $0x90] sm:$0xfc]
      %v5660 = vld [vmem:[%s2190 + $0xa0] sm:$0xff]
      %v5661 = vld [vmem:[%s2190 + $0xb0] sm:$0x3]
      %v5662 = vld [vmem:[%s2190 + $0xc0] sm:$0xfc]
      %v5663 = vld [vmem:[%s2190 + $0xd0] sm:$0xff]
      %v5664 = vld [vmem:[%s2190 + $0xe0] sm:$0x3]
      %v5665 = vld [vmem:[%s2190 + $0xf0] sm:$0xfc]
      %v5666 = vld [vmem:[%s2190 + $0x100] sm:$0xff]
      %v5667 = vld [vmem:[%s2190 + $0x110] sm:$0x3]
      %v5668 = vld [vmem:[%s2190 + $0x120] sm:$0xfc]
      %v5669 = vld [vmem:[%s2190 + $0x130] sm:$0xff]
      %v5670 = vld [vmem:[%s2190 + $0x140] sm:$0x3]
      %v5671 = vld [vmem:[%s2190 + $0x150] sm:$0xfc]
      %v5672 = vld [vmem:[%s2190 + $0x160] sm:$0xff]
      %v5673 = vld [vmem:[%s2190 + $0x170] sm:$0x3]
      %v5674 = vld [vmem:[%s2190 + $0x180] sm:$0xfc]
      %v5675 = vld [vmem:[%s2190 + $0x190] sm:$0xff]
      %v5676 = vld [vmem:[%s2190 + $0x1a0] sm:$0x3]
      %v5677 = vld [vmem:[%s2190 + $0x1b0] sm:$0xfc]
      %v5678 = vld [vmem:[%s2190 + $0x1c0] sm:$0xff]
      %v5679 = vld [vmem:[%s2190 + $0x1d0] sm:$0x3]
      %v5680 = vld [vmem:[%s2190 + $0x1e0] sm:$0xfc]
      %v5681 = vld [vmem:[%s2190 + $0x1f0] sm:$0xff]
      %v5682 = vld [vmem:[%s2190 + $0x200] sm:$0x3]
      %v5683 = vld [vmem:[%s2190 + $0x210] sm:$0xfc]
      %v5684 = vld [vmem:[%s2190 + $0x220] sm:$0xff]
      %v5685 = vld [vmem:[%s2190 + $0x230] sm:$0x3]
      %v5686 = vld [vmem:[%s2190 + $0x240] sm:$0xfc]
      %v5687 = vld [vmem:[%s2190 + $0x250] sm:$0xff]
      %v5688 = vld [vmem:[%s2190 + $0x260] sm:$0x3]
      %v5689 = vld [vmem:[%s2190 + $0x270] sm:$0xfc]
      %v5690 = vld [vmem:[%s2190 + $0x280] sm:$0xff]
      %v5691 = vld [vmem:[%s2190 + $0x290] sm:$0x3]
      %v5692 = vld [vmem:[%s2190 + $0x2a0] sm:$0xfc]
      %v5693 = vld [vmem:[%s2190 + $0x2b0] sm:$0xff]
      %v5694 = vld [vmem:[%s2190 + $0x2c0] sm:$0x3]
      %v5695 = vld [vmem:[%s2190 + $0x2d0] sm:$0xfc]
      %v5696 = vld [vmem:[%s2190 + $0x2e0] sm:$0xff]
      %v5697 = vld [vmem:[%s2190 + $0x2f0] sm:$0x3]
      %v5746 = vrot.slane %v5650, 2
      %v5747 = vrot.slane %v5651, 2
      %v5748 = vsel %vm1548, %v5746, %v5747
      %v5749 = vrot.slane %v5652, 2
      %v5750 = vsel %vm1548, %v5747, %v5749
      %v5751 = vrot.slane %v5653, 2
      %v5752 = vrot.slane %v5654, 2
      %v5753 = vsel %vm1548, %v5751, %v5752
      %v5754 = vrot.slane %v5655, 2
      %v5755 = vsel %vm1548, %v5752, %v5754
      %v5756 = vrot.slane %v5656, 2
      %v5757 = vrot.slane %v5657, 2
      %v5758 = vsel %vm1548, %v5756, %v5757
      %v5759 = vrot.slane %v5658, 2
      %v5760 = vsel %vm1548, %v5757, %v5759
      %v5761 = vrot.slane %v5659, 2
      %v5762 = vrot.slane %v5660, 2
      %v5763 = vsel %vm1548, %v5761, %v5762
      %v5764 = vrot.slane %v5661, 2
      %v5765 = vsel %vm1548, %v5762, %v5764
      %v5766 = vrot.slane %v5662, 2
      %v5767 = vrot.slane %v5663, 2
      %v5768 = vsel %vm1548, %v5766, %v5767
      %v5769 = vrot.slane %v5664, 2
      %v5770 = vsel %vm1548, %v5767, %v5769
      %v5771 = vrot.slane %v5665, 2
      %v5772 = vrot.slane %v5666, 2
      %v5773 = vsel %vm1548, %v5771, %v5772
      %v5774 = vrot.slane %v5667, 2
      %v5775 = vsel %vm1548, %v5772, %v5774
      %v5776 = vrot.slane %v5668, 2
      %v5777 = vrot.slane %v5669, 2
      %v5778 = vsel %vm1548, %v5776, %v5777
      %v5779 = vrot.slane %v5670, 2
      %v5780 = vsel %vm1548, %v5777, %v5779
      %v5781 = vrot.slane %v5671, 2
      %v5782 = vrot.slane %v5672, 2
      %v5783 = vsel %vm1548, %v5781, %v5782
      %v5784 = vrot.slane %v5673, 2
      %v5785 = vsel %vm1548, %v5782, %v5784
      %v5786 = vrot.slane %v5674, 2
      %v5787 = vrot.slane %v5675, 2
      %v5788 = vsel %vm1548, %v5786, %v5787
      %v5789 = vrot.slane %v5676, 2
      %v5790 = vsel %vm1548, %v5787, %v5789
      %v5791 = vrot.slane %v5677, 2
      %v5792 = vrot.slane %v5678, 2
      %v5793 = vsel %vm1548, %v5791, %v5792
      %v5794 = vrot.slane %v5679, 2
      %v5795 = vsel %vm1548, %v5792, %v5794
      %v5796 = vrot.slane %v5680, 2
      %v5797 = vrot.slane %v5681, 2
      %v5798 = vsel %vm1548, %v5796, %v5797
      %v5799 = vrot.slane %v5682, 2
      %v5800 = vsel %vm1548, %v5797, %v5799
      %v5801 = vrot.slane %v5683, 2
      %v5802 = vrot.slane %v5684, 2
      %v5803 = vsel %vm1548, %v5801, %v5802
      %v5804 = vrot.slane %v5685, 2
      %v5805 = vsel %vm1548, %v5802, %v5804
      %v5806 = vrot.slane %v5686, 2
      %v5807 = vrot.slane %v5687, 2
      %v5808 = vsel %vm1548, %v5806, %v5807
      %v5809 = vrot.slane %v5688, 2
      %v5810 = vsel %vm1548, %v5807, %v5809
      %v5811 = vrot.slane %v5689, 2
      %v5812 = vrot.slane %v5690, 2
      %v5813 = vsel %vm1548, %v5811, %v5812
      %v5814 = vrot.slane %v5691, 2
      %v5815 = vsel %vm1548, %v5812, %v5814
      %v5816 = vrot.slane %v5692, 2
      %v5817 = vrot.slane %v5693, 2
      %v5818 = vsel %vm1548, %v5816, %v5817
      %v5819 = vrot.slane %v5694, 2
      %v5820 = vsel %vm1548, %v5817, %v5819
      %v5821 = vrot.slane %v5695, 2
      %v5822 = vrot.slane %v5696, 2
      %v5823 = vsel %vm1548, %v5821, %v5822
      %v5824 = vrot.slane %v5697, 2
      %v5825 = vsel %vm1548, %v5822, %v5824
      %5826 = vrot.lane.b32.xlu0 %v5748, 24
      %v5827 = vpop.permute.xlu0 %5826
      %5828 = vrot.lane.b32.xlu0 %v5750, 24
      %v5829 = vpop.permute.xlu0 %5828
      %5830 = vrot.lane.b32.xlu0 %v5753, 24
      %v5831 = vpop.permute.xlu0 %5830
      %5832 = vrot.lane.b32.xlu0 %v5755, 24
      %v5833 = vpop.permute.xlu0 %5832
      %5834 = vrot.lane.b32.xlu0 %v5758, 24
      %v5835 = vpop.permute.xlu0 %5834
      %5836 = vrot.lane.b32.xlu0 %v5760, 24
      %v5837 = vpop.permute.xlu0 %5836
      %5838 = vrot.lane.b32.xlu0 %v5763, 24
      %v5839 = vpop.permute.xlu0 %5838
      %5840 = vrot.lane.b32.xlu0 %v5765, 24
      %v5841 = vpop.permute.xlu0 %5840
      %5842 = vrot.lane.b32.xlu0 %v5768, 24
      %v5843 = vpop.permute.xlu0 %5842
      %5844 = vrot.lane.b32.xlu0 %v5770, 24
      %v5845 = vpop.permute.xlu0 %5844
      %5846 = vrot.lane.b32.xlu0 %v5773, 24
      %v5847 = vpop.permute.xlu0 %5846
      %5848 = vrot.lane.b32.xlu0 %v5775, 24
      %v5849 = vpop.permute.xlu0 %5848
      %5850 = vrot.lane.b32.xlu0 %v5778, 24
      %v5851 = vpop.permute.xlu0 %5850
      %5852 = vrot.lane.b32.xlu0 %v5780, 24
      %v5853 = vpop.permute.xlu0 %5852
      %5854 = vrot.lane.b32.xlu0 %v5783, 24
      %v5855 = vpop.permute.xlu0 %5854
      %5856 = vrot.lane.b32.xlu0 %v5785, 24
      %v5857 = vpop.permute.xlu0 %5856
      %5858 = vrot.lane.b32.xlu0 %v5788, 24
      %v5859 = vpop.permute.xlu0 %5858
      %5860 = vrot.lane.b32.xlu0 %v5790, 24
      %v5861 = vpop.permute.xlu0 %5860
      %5862 = vrot.lane.b32.xlu0 %v5793, 24
      %v5863 = vpop.permute.xlu0 %5862
      %5864 = vrot.lane.b32.xlu0 %v5795, 24
      %v5865 = vpop.permute.xlu0 %5864
      %5866 = vrot.lane.b32.xlu0 %v5798, 24
      %v5867 = vpop.permute.xlu0 %5866
      %5868 = vrot.lane.b32.xlu0 %v5800, 24
      %v5869 = vpop.permute.xlu0 %5868
      %5870 = vrot.lane.b32.xlu0 %v5803, 24
      %v5871 = vpop.permute.xlu0 %5870
      %5872 = vrot.lane.b32.xlu0 %v5805, 24
      %v5873 = vpop.permute.xlu0 %5872
      %5874 = vrot.lane.b32.xlu0 %v5808, 24
      %v5875 = vpop.permute.xlu0 %5874
      %5876 = vrot.lane.b32.xlu0 %v5810, 24
      %v5877 = vpop.permute.xlu0 %5876
      %5878 = vrot.lane.b32.xlu0 %v5813, 24
      %v5879 = vpop.permute.xlu0 %5878
      %5880 = vrot.lane.b32.xlu0 %v5815, 24
      %v5881 = vpop.permute.xlu0 %5880
      %5882 = vrot.lane.b32.xlu0 %v5818, 24
      %v5883 = vpop.permute.xlu0 %5882
      %5884 = vrot.lane.b32.xlu0 %v5820, 24
      %v5885 = vpop.permute.xlu0 %5884
      %5886 = vrot.lane.b32.xlu0 %v5823, 24
      %v5887 = vpop.permute.xlu0 %5886
      %5888 = vrot.lane.b32.xlu0 %v5825, 24
      %v5889 = vpop.permute.xlu0 %5888
      %v5922 = vadd.f32 %v5618, %v5827
      %v5923 = vadd.f32 %v5619, %v5829
      %v5924 = vadd.f32 %v5620, %v5831
      %v5925 = vadd.f32 %v5621, %v5833
      %v5926 = vadd.f32 %v5622, %v5835
      %v5927 = vadd.f32 %v5623, %v5837
      %v5928 = vadd.f32 %v5624, %v5839
      %v5929 = vadd.f32 %v5625, %v5841
      %v5930 = vadd.f32 %v5626, %v5843
      %v5931 = vadd.f32 %v5627, %v5845
      %v5932 = vadd.f32 %v5628, %v5847
      %v5933 = vadd.f32 %v5629, %v5849
      %v5934 = vadd.f32 %v5630, %v5851
      %v5935 = vadd.f32 %v5631, %v5853
      %v5936 = vadd.f32 %v5632, %v5855
      %v5937 = vadd.f32 %v5633, %v5857
      %v5938 = vadd.f32 %v5634, %v5859
      %v5939 = vadd.f32 %v5635, %v5861
      %v5940 = vadd.f32 %v5636, %v5863
      %v5941 = vadd.f32 %v5637, %v5865
      %v5942 = vadd.f32 %v5638, %v5867
      %v5943 = vadd.f32 %v5639, %v5869
      %v5944 = vadd.f32 %v5640, %v5871
      %v5945 = vadd.f32 %v5641, %v5873
      %v5946 = vadd.f32 %v5642, %v5875
      %v5947 = vadd.f32 %v5643, %v5877
      %v5948 = vadd.f32 %v5644, %v5879
      %v5949 = vadd.f32 %v5645, %v5881
      %v5950 = vadd.f32 %v5646, %v5883
      %v5951 = vadd.f32 %v5647, %v5885
      %v5952 = vadd.f32 %v5648, %v5887
      %v5953 = vadd.f32 %v5649, %v5889
      %5954 = vst.msk [vmem:[#allocation3] sm:$0xff] %vm1371, %v5922
      %5955 = vst.msk [vmem:[#allocation3 + $0x8] sm:$0xff] %vm1371, %v5923
      %5956 = vst.msk [vmem:[#allocation3 + $0x10] sm:$0xff] %vm1371, %v5924
      %5957 = vst.msk [vmem:[#allocation3 + $0x18] sm:$0xff] %vm1371, %v5925
      %5958 = vst.msk [vmem:[#allocation3 + $0x20] sm:$0xff] %vm1371, %v5926
      %5959 = vst.msk [vmem:[#allocation3 + $0x28] sm:$0xff] %vm1371, %v5927
      %5960 = vst.msk [vmem:[#allocation3 + $0x30] sm:$0xff] %vm1371, %v5928
      %5961 = vst.msk [vmem:[#allocation3 + $0x38] sm:$0xff] %vm1371, %v5929
      %5962 = vst.msk [vmem:[#allocation3 + $0x40] sm:$0xff] %vm1371, %v5930
      %5963 = vst.msk [vmem:[#allocation3 + $0x48] sm:$0xff] %vm1371, %v5931
      %5964 = vst.msk [vmem:[#allocation3 + $0x50] sm:$0xff] %vm1371, %v5932
      %5965 = vst.msk [vmem:[#allocation3 + $0x58] sm:$0xff] %vm1371, %v5933
      %5966 = vst.msk [vmem:[#allocation3 + $0x60] sm:$0xff] %vm1371, %v5934
      %5967 = vst.msk [vmem:[#allocation3 + $0x68] sm:$0xff] %vm1371, %v5935
      %5968 = vst.msk [vmem:[#allocation3 + $0x70] sm:$0xff] %vm1371, %v5936
      %5969 = vst.msk [vmem:[#allocation3 + $0x78] sm:$0xff] %vm1371, %v5937
      %5970 = vst.msk [vmem:[#allocation3 + $0x80] sm:$0xff] %vm1371, %v5938
      %5971 = vst.msk [vmem:[#allocation3 + $0x88] sm:$0xff] %vm1371, %v5939
      %5972 = vst.msk [vmem:[#allocation3 + $0x90] sm:$0xff] %vm1371, %v5940
      %5973 = vst.msk [vmem:[#allocation3 + $0x98] sm:$0xff] %vm1371, %v5941
      %5974 = vst.msk [vmem:[#allocation3 + $0xa0] sm:$0xff] %vm1371, %v5942
      %5975 = vst.msk [vmem:[#allocation3 + $0xa8] sm:$0xff] %vm1371, %v5943
      %5976 = vst.msk [vmem:[#allocation3 + $0xb0] sm:$0xff] %vm1371, %v5944
      %5977 = vst.msk [vmem:[#allocation3 + $0xb8] sm:$0xff] %vm1371, %v5945
      %5978 = vst.msk [vmem:[#allocation3 + $0xc0] sm:$0xff] %vm1371, %v5946
      %5979 = vst.msk [vmem:[#allocation3 + $0xc8] sm:$0xff] %vm1371, %v5947
      %5980 = vst.msk [vmem:[#allocation3 + $0xd0] sm:$0xff] %vm1371, %v5948
      %5981 = vst.msk [vmem:[#allocation3 + $0xd8] sm:$0xff] %vm1371, %v5949
      %5982 = vst.msk [vmem:[#allocation3 + $0xe0] sm:$0xff] %vm1371, %v5950
      %5983 = vst.msk [vmem:[#allocation3 + $0xe8] sm:$0xff] %vm1371, %v5951
      %5984 = vst.msk [vmem:[#allocation3 + $0xf0] sm:$0xff] %vm1371, %v5952
      %5985 = vst.msk [vmem:[#allocation3 + $0xf8] sm:$0xff] %vm1371, %v5953
      %v5986 = vld [vmem:[#allocation3] sm:$0xff]
      %v5987 = vld [vmem:[#allocation3 + $0x8] sm:$0xff]
      %v5988 = vld [vmem:[#allocation3 + $0x10] sm:$0xff]
      %v5989 = vld [vmem:[#allocation3 + $0x18] sm:$0xff]
      %v5990 = vld [vmem:[#allocation3 + $0x20] sm:$0xff]
      %v5991 = vld [vmem:[#allocation3 + $0x28] sm:$0xff]
      %v5992 = vld [vmem:[#allocation3 + $0x30] sm:$0xff]
      %v5993 = vld [vmem:[#allocation3 + $0x38] sm:$0xff]
      %v5994 = vld [vmem:[#allocation3 + $0x40] sm:$0xff]
      %v5995 = vld [vmem:[#allocation3 + $0x48] sm:$0xff]
      %v5996 = vld [vmem:[#allocation3 + $0x50] sm:$0xff]
      %v5997 = vld [vmem:[#allocation3 + $0x58] sm:$0xff]
      %v5998 = vld [vmem:[#allocation3 + $0x60] sm:$0xff]
      %v5999 = vld [vmem:[#allocation3 + $0x68] sm:$0xff]
      %v6000 = vld [vmem:[#allocation3 + $0x70] sm:$0xff]
      %v6001 = vld [vmem:[#allocation3 + $0x78] sm:$0xff]
      %v6002 = vld [vmem:[#allocation3 + $0x80] sm:$0xff]
      %v6003 = vld [vmem:[#allocation3 + $0x88] sm:$0xff]
      %v6004 = vld [vmem:[#allocation3 + $0x90] sm:$0xff]
      %v6005 = vld [vmem:[#allocation3 + $0x98] sm:$0xff]
      %v6006 = vld [vmem:[#allocation3 + $0xa0] sm:$0xff]
      %v6007 = vld [vmem:[#allocation3 + $0xa8] sm:$0xff]
      %v6008 = vld [vmem:[#allocation3 + $0xb0] sm:$0xff]
      %v6009 = vld [vmem:[#allocation3 + $0xb8] sm:$0xff]
      %v6010 = vld [vmem:[#allocation3 + $0xc0] sm:$0xff]
      %v6011 = vld [vmem:[#allocation3 + $0xc8] sm:$0xff]
      %v6012 = vld [vmem:[#allocation3 + $0xd0] sm:$0xff]
      %v6013 = vld [vmem:[#allocation3 + $0xd8] sm:$0xff]
      %v6014 = vld [vmem:[#allocation3 + $0xe0] sm:$0xff]
      %v6015 = vld [vmem:[#allocation3 + $0xe8] sm:$0xff]
      %v6016 = vld [vmem:[#allocation3 + $0xf0] sm:$0xff]
      %v6017 = vld [vmem:[#allocation3 + $0xf8] sm:$0xff]
      %v6018 = vld [vmem:[%s2190] sm:$0xf0]
      %v6019 = vld [vmem:[%s2190 + $0x10] sm:$0xff]
      %v6020 = vld [vmem:[%s2190 + $0x20] sm:$0xf]
      %v6021 = vld [vmem:[%s2190 + $0x30] sm:$0xf0]
      %v6022 = vld [vmem:[%s2190 + $0x40] sm:$0xff]
      %v6023 = vld [vmem:[%s2190 + $0x50] sm:$0xf]
      %v6024 = vld [vmem:[%s2190 + $0x60] sm:$0xf0]
      %v6025 = vld [vmem:[%s2190 + $0x70] sm:$0xff]
      %v6026 = vld [vmem:[%s2190 + $0x80] sm:$0xf]
      %v6027 = vld [vmem:[%s2190 + $0x90] sm:$0xf0]
      %v6028 = vld [vmem:[%s2190 + $0xa0] sm:$0xff]
      %v6029 = vld [vmem:[%s2190 + $0xb0] sm:$0xf]
      %v6030 = vld [vmem:[%s2190 + $0xc0] sm:$0xf0]
      %v6031 = vld [vmem:[%s2190 + $0xd0] sm:$0xff]
      %v6032 = vld [vmem:[%s2190 + $0xe0] sm:$0xf]
      %v6033 = vld [vmem:[%s2190 + $0xf0] sm:$0xf0]
      %v6034 = vld [vmem:[%s2190 + $0x100] sm:$0xff]
      %v6035 = vld [vmem:[%s2190 + $0x110] sm:$0xf]
      %v6036 = vld [vmem:[%s2190 + $0x120] sm:$0xf0]
      %v6037 = vld [vmem:[%s2190 + $0x130] sm:$0xff]
      %v6038 = vld [vmem:[%s2190 + $0x140] sm:$0xf]
      %v6039 = vld [vmem:[%s2190 + $0x150] sm:$0xf0]
      %v6040 = vld [vmem:[%s2190 + $0x160] sm:$0xff]
      %v6041 = vld [vmem:[%s2190 + $0x170] sm:$0xf]
      %v6042 = vld [vmem:[%s2190 + $0x180] sm:$0xf0]
      %v6043 = vld [vmem:[%s2190 + $0x190] sm:$0xff]
      %v6044 = vld [vmem:[%s2190 + $0x1a0] sm:$0xf]
      %v6045 = vld [vmem:[%s2190 + $0x1b0] sm:$0xf0]
      %v6046 = vld [vmem:[%s2190 + $0x1c0] sm:$0xff]
      %v6047 = vld [vmem:[%s2190 + $0x1d0] sm:$0xf]
      %v6048 = vld [vmem:[%s2190 + $0x1e0] sm:$0xf0]
      %v6049 = vld [vmem:[%s2190 + $0x1f0] sm:$0xff]
      %v6050 = vld [vmem:[%s2190 + $0x200] sm:$0xf]
      %v6051 = vld [vmem:[%s2190 + $0x210] sm:$0xf0]
      %v6052 = vld [vmem:[%s2190 + $0x220] sm:$0xff]
      %v6053 = vld [vmem:[%s2190 + $0x230] sm:$0xf]
      %v6054 = vld [vmem:[%s2190 + $0x240] sm:$0xf0]
      %v6055 = vld [vmem:[%s2190 + $0x250] sm:$0xff]
      %v6056 = vld [vmem:[%s2190 + $0x260] sm:$0xf]
      %v6057 = vld [vmem:[%s2190 + $0x270] sm:$0xf0]
      %v6058 = vld [vmem:[%s2190 + $0x280] sm:$0xff]
      %v6059 = vld [vmem:[%s2190 + $0x290] sm:$0xf]
      %v6060 = vld [vmem:[%s2190 + $0x2a0] sm:$0xf0]
      %v6061 = vld [vmem:[%s2190 + $0x2b0] sm:$0xff]
      %v6062 = vld [vmem:[%s2190 + $0x2c0] sm:$0xf]
      %v6063 = vld [vmem:[%s2190 + $0x2d0] sm:$0xf0]
      %v6064 = vld [vmem:[%s2190 + $0x2e0] sm:$0xff]
      %v6065 = vld [vmem:[%s2190 + $0x2f0] sm:$0xf]
      %v6114 = vrot.slane %v6018, 4
      %v6115 = vrot.slane %v6019, 4
      %v6116 = vsel %vm5121, %v6114, %v6115
      %v6117 = vrot.slane %v6020, 4
      %v6118 = vsel %vm5121, %v6115, %v6117
      %v6119 = vrot.slane %v6021, 4
      %v6120 = vrot.slane %v6022, 4
      %v6121 = vsel %vm5121, %v6119, %v6120
      %v6122 = vrot.slane %v6023, 4
      %v6123 = vsel %vm5121, %v6120, %v6122
      %v6124 = vrot.slane %v6024, 4
      %v6125 = vrot.slane %v6025, 4
      %v6126 = vsel %vm5121, %v6124, %v6125
      %v6127 = vrot.slane %v6026, 4
      %v6128 = vsel %vm5121, %v6125, %v6127
      %v6129 = vrot.slane %v6027, 4
      %v6130 = vrot.slane %v6028, 4
      %v6131 = vsel %vm5121, %v6129, %v6130
      %v6132 = vrot.slane %v6029, 4
      %v6133 = vsel %vm5121, %v6130, %v6132
      %v6134 = vrot.slane %v6030, 4
      %v6135 = vrot.slane %v6031, 4
      %v6136 = vsel %vm5121, %v6134, %v6135
      %v6137 = vrot.slane %v6032, 4
      %v6138 = vsel %vm5121, %v6135, %v6137
      %v6139 = vrot.slane %v6033, 4
      %v6140 = vrot.slane %v6034, 4
      %v6141 = vsel %vm5121, %v6139, %v6140
      %v6142 = vrot.slane %v6035, 4
      %v6143 = vsel %vm5121, %v6140, %v6142
      %v6144 = vrot.slane %v6036, 4
      %v6145 = vrot.slane %v6037, 4
      %v6146 = vsel %vm5121, %v6144, %v6145
      %v6147 = vrot.slane %v6038, 4
      %v6148 = vsel %vm5121, %v6145, %v6147
      %v6149 = vrot.slane %v6039, 4
      %v6150 = vrot.slane %v6040, 4
      %v6151 = vsel %vm5121, %v6149, %v6150
      %v6152 = vrot.slane %v6041, 4
      %v6153 = vsel %vm5121, %v6150, %v6152
      %v6154 = vrot.slane %v6042, 4
      %v6155 = vrot.slane %v6043, 4
      %v6156 = vsel %vm5121, %v6154, %v6155
      %v6157 = vrot.slane %v6044, 4
      %v6158 = vsel %vm5121, %v6155, %v6157
      %v6159 = vrot.slane %v6045, 4
      %v6160 = vrot.slane %v6046, 4
      %v6161 = vsel %vm5121, %v6159, %v6160
      %v6162 = vrot.slane %v6047, 4
      %v6163 = vsel %vm5121, %v6160, %v6162
      %v6164 = vrot.slane %v6048, 4
      %v6165 = vrot.slane %v6049, 4
      %v6166 = vsel %vm5121, %v6164, %v6165
      %v6167 = vrot.slane %v6050, 4
      %v6168 = vsel %vm5121, %v6165, %v6167
      %v6169 = vrot.slane %v6051, 4
      %v6170 = vrot.slane %v6052, 4
      %v6171 = vsel %vm5121, %v6169, %v6170
      %v6172 = vrot.slane %v6053, 4
      %v6173 = vsel %vm5121, %v6170, %v6172
      %v6174 = vrot.slane %v6054, 4
      %v6175 = vrot.slane %v6055, 4
      %v6176 = vsel %vm5121, %v6174, %v6175
      %v6177 = vrot.slane %v6056, 4
      %v6178 = vsel %vm5121, %v6175, %v6177
      %v6179 = vrot.slane %v6057, 4
      %v6180 = vrot.slane %v6058, 4
      %v6181 = vsel %vm5121, %v6179, %v6180
      %v6182 = vrot.slane %v6059, 4
      %v6183 = vsel %vm5121, %v6180, %v6182
      %v6184 = vrot.slane %v6060, 4
      %v6185 = vrot.slane %v6061, 4
      %v6186 = vsel %vm5121, %v6184, %v6185
      %v6187 = vrot.slane %v6062, 4
      %v6188 = vsel %vm5121, %v6185, %v6187
      %v6189 = vrot.slane %v6063, 4
      %v6190 = vrot.slane %v6064, 4
      %v6191 = vsel %vm5121, %v6189, %v6190
      %v6192 = vrot.slane %v6065, 4
      %v6193 = vsel %vm5121, %v6190, %v6192
      %6194 = vrot.lane.b32.xlu0 %v6116, 16
      %v6195 = vpop.permute.xlu0 %6194
      %6196 = vrot.lane.b32.xlu0 %v6118, 16
      %v6197 = vpop.permute.xlu0 %6196
      %6198 = vrot.lane.b32.xlu0 %v6121, 16
      %v6199 = vpop.permute.xlu0 %6198
      %6200 = vrot.lane.b32.xlu0 %v6123, 16
      %v6201 = vpop.permute.xlu0 %6200
      %6202 = vrot.lane.b32.xlu0 %v6126, 16
      %v6203 = vpop.permute.xlu0 %6202
      %6204 = vrot.lane.b32.xlu0 %v6128, 16
      %v6205 = vpop.permute.xlu0 %6204
      %6206 = vrot.lane.b32.xlu0 %v6131, 16
      %v6207 = vpop.permute.xlu0 %6206
      %6208 = vrot.lane.b32.xlu0 %v6133, 16
      %v6209 = vpop.permute.xlu0 %6208
      %6210 = vrot.lane.b32.xlu0 %v6136, 16
      %v6211 = vpop.permute.xlu0 %6210
      %6212 = vrot.lane.b32.xlu0 %v6138, 16
      %v6213 = vpop.permute.xlu0 %6212
      %6214 = vrot.lane.b32.xlu0 %v6141, 16
      %v6215 = vpop.permute.xlu0 %6214
      %6216 = vrot.lane.b32.xlu0 %v6143, 16
      %v6217 = vpop.permute.xlu0 %6216
      %6218 = vrot.lane.b32.xlu0 %v6146, 16
      %v6219 = vpop.permute.xlu0 %6218
      %6220 = vrot.lane.b32.xlu0 %v6148, 16
      %v6221 = vpop.permute.xlu0 %6220
      %6222 = vrot.lane.b32.xlu0 %v6151, 16
      %v6223 = vpop.permute.xlu0 %6222
      %6224 = vrot.lane.b32.xlu0 %v6153, 16
      %v6225 = vpop.permute.xlu0 %6224
      %6226 = vrot.lane.b32.xlu0 %v6156, 16
      %v6227 = vpop.permute.xlu0 %6226
      %6228 = vrot.lane.b32.xlu0 %v6158, 16
      %v6229 = vpop.permute.xlu0 %6228
      %6230 = vrot.lane.b32.xlu0 %v6161, 16
      %v6231 = vpop.permute.xlu0 %6230
      %6232 = vrot.lane.b32.xlu0 %v6163, 16
      %v6233 = vpop.permute.xlu0 %6232
      %6234 = vrot.lane.b32.xlu0 %v6166, 16
      %v6235 = vpop.permute.xlu0 %6234
      %6236 = vrot.lane.b32.xlu0 %v6168, 16
      %v6237 = vpop.permute.xlu0 %6236
      %6238 = vrot.lane.b32.xlu0 %v6171, 16
      %v6239 = vpop.permute.xlu0 %6238
      %6240 = vrot.lane.b32.xlu0 %v6173, 16
      %v6241 = vpop.permute.xlu0 %6240
      %6242 = vrot.lane.b32.xlu0 %v6176, 16
      %v6243 = vpop.permute.xlu0 %6242
      %6244 = vrot.lane.b32.xlu0 %v6178, 16
      %v6245 = vpop.permute.xlu0 %6244
      %6246 = vrot.lane.b32.xlu0 %v6181, 16
      %v6247 = vpop.permute.xlu0 %6246
      %6248 = vrot.lane.b32.xlu0 %v6183, 16
      %v6249 = vpop.permute.xlu0 %6248
      %6250 = vrot.lane.b32.xlu0 %v6186, 16
      %v6251 = vpop.permute.xlu0 %6250
      %6252 = vrot.lane.b32.xlu0 %v6188, 16
      %v6253 = vpop.permute.xlu0 %6252
      %6254 = vrot.lane.b32.xlu0 %v6191, 16
      %v6255 = vpop.permute.xlu0 %6254
      %6256 = vrot.lane.b32.xlu0 %v6193, 16
      %v6257 = vpop.permute.xlu0 %6256
      %v6290 = vadd.f32 %v5986, %v6195
      %v6291 = vadd.f32 %v5987, %v6197
      %v6292 = vadd.f32 %v5988, %v6199
      %v6293 = vadd.f32 %v5989, %v6201
      %v6294 = vadd.f32 %v5990, %v6203
      %v6295 = vadd.f32 %v5991, %v6205
      %v6296 = vadd.f32 %v5992, %v6207
      %v6297 = vadd.f32 %v5993, %v6209
      %v6298 = vadd.f32 %v5994, %v6211
      %v6299 = vadd.f32 %v5995, %v6213
      %v6300 = vadd.f32 %v5996, %v6215
      %v6301 = vadd.f32 %v5997, %v6217
      %v6302 = vadd.f32 %v5998, %v6219
      %v6303 = vadd.f32 %v5999, %v6221
      %v6304 = vadd.f32 %v6000, %v6223
      %v6305 = vadd.f32 %v6001, %v6225
      %v6306 = vadd.f32 %v6002, %v6227
      %v6307 = vadd.f32 %v6003, %v6229
      %v6308 = vadd.f32 %v6004, %v6231
      %v6309 = vadd.f32 %v6005, %v6233
      %v6310 = vadd.f32 %v6006, %v6235
      %v6311 = vadd.f32 %v6007, %v6237
      %v6312 = vadd.f32 %v6008, %v6239
      %v6313 = vadd.f32 %v6009, %v6241
      %v6314 = vadd.f32 %v6010, %v6243
      %v6315 = vadd.f32 %v6011, %v6245
      %v6316 = vadd.f32 %v6012, %v6247
      %v6317 = vadd.f32 %v6013, %v6249
      %v6318 = vadd.f32 %v6014, %v6251
      %v6319 = vadd.f32 %v6015, %v6253
      %v6320 = vadd.f32 %v6016, %v6255
      %v6321 = vadd.f32 %v6017, %v6257
      %6322 = vst.msk [vmem:[#allocation3] sm:$0xff] %vm1371, %v6290
      %6323 = vst.msk [vmem:[#allocation3 + $0x8] sm:$0xff] %vm1371, %v6291
      %6324 = vst.msk [vmem:[#allocation3 + $0x10] sm:$0xff] %vm1371, %v6292
      %6325 = vst.msk [vmem:[#allocation3 + $0x18] sm:$0xff] %vm1371, %v6293
      %6326 = vst.msk [vmem:[#allocation3 + $0x20] sm:$0xff] %vm1371, %v6294
      %6327 = vst.msk [vmem:[#allocation3 + $0x28] sm:$0xff] %vm1371, %v6295
      %6328 = vst.msk [vmem:[#allocation3 + $0x30] sm:$0xff] %vm1371, %v6296
      %6329 = vst.msk [vmem:[#allocation3 + $0x38] sm:$0xff] %vm1371, %v6297
      %6330 = vst.msk [vmem:[#allocation3 + $0x40] sm:$0xff] %vm1371, %v6298
      %6331 = vst.msk [vmem:[#allocation3 + $0x48] sm:$0xff] %vm1371, %v6299
      %6332 = vst.msk [vmem:[#allocation3 + $0x50] sm:$0xff] %vm1371, %v6300
      %6333 = vst.msk [vmem:[#allocation3 + $0x58] sm:$0xff] %vm1371, %v6301
      %6334 = vst.msk [vmem:[#allocation3 + $0x60] sm:$0xff] %vm1371, %v6302
      %6335 = vst.msk [vmem:[#allocation3 + $0x68] sm:$0xff] %vm1371, %v6303
      %6336 = vst.msk [vmem:[#allocation3 + $0x70] sm:$0xff] %vm1371, %v6304
      %6337 = vst.msk [vmem:[#allocation3 + $0x78] sm:$0xff] %vm1371, %v6305
      %6338 = vst.msk [vmem:[#allocation3 + $0x80] sm:$0xff] %vm1371, %v6306
      %6339 = vst.msk [vmem:[#allocation3 + $0x88] sm:$0xff] %vm1371, %v6307
      %6340 = vst.msk [vmem:[#allocation3 + $0x90] sm:$0xff] %vm1371, %v6308
      %6341 = vst.msk [vmem:[#allocation3 + $0x98] sm:$0xff] %vm1371, %v6309
      %6342 = vst.msk [vmem:[#allocation3 + $0xa0] sm:$0xff] %vm1371, %v6310
      %6343 = vst.msk [vmem:[#allocation3 + $0xa8] sm:$0xff] %vm1371, %v6311
      %6344 = vst.msk [vmem:[#allocation3 + $0xb0] sm:$0xff] %vm1371, %v6312
      %6345 = vst.msk [vmem:[#allocation3 + $0xb8] sm:$0xff] %vm1371, %v6313
      %6346 = vst.msk [vmem:[#allocation3 + $0xc0] sm:$0xff] %vm1371, %v6314
      %6347 = vst.msk [vmem:[#allocation3 + $0xc8] sm:$0xff] %vm1371, %v6315
      %6348 = vst.msk [vmem:[#allocation3 + $0xd0] sm:$0xff] %vm1371, %v6316
      %6349 = vst.msk [vmem:[#allocation3 + $0xd8] sm:$0xff] %vm1371, %v6317
      %6350 = vst.msk [vmem:[#allocation3 + $0xe0] sm:$0xff] %vm1371, %v6318
      %6351 = vst.msk [vmem:[#allocation3 + $0xe8] sm:$0xff] %vm1371, %v6319
      %6352 = vst.msk [vmem:[#allocation3 + $0xf0] sm:$0xff] %vm1371, %v6320
      %6353 = vst.msk [vmem:[#allocation3 + $0xf8] sm:$0xff] %vm1371, %v6321
      %v6354 = vld [vmem:[#allocation3] sm:$0xff]
      %v6355 = vld [vmem:[#allocation3 + $0x8] sm:$0xff]
      %v6356 = vld [vmem:[#allocation3 + $0x10] sm:$0xff]
      %v6357 = vld [vmem:[#allocation3 + $0x18] sm:$0xff]
      %v6358 = vld [vmem:[#allocation3 + $0x20] sm:$0xff]
      %v6359 = vld [vmem:[#allocation3 + $0x28] sm:$0xff]
      %v6360 = vld [vmem:[#allocation3 + $0x30] sm:$0xff]
      %v6361 = vld [vmem:[#allocation3 + $0x38] sm:$0xff]
      %v6362 = vld [vmem:[#allocation3 + $0x40] sm:$0xff]
      %v6363 = vld [vmem:[#allocation3 + $0x48] sm:$0xff]
      %v6364 = vld [vmem:[#allocation3 + $0x50] sm:$0xff]
      %v6365 = vld [vmem:[#allocation3 + $0x58] sm:$0xff]
      %v6366 = vld [vmem:[#allocation3 + $0x60] sm:$0xff]
      %v6367 = vld [vmem:[#allocation3 + $0x68] sm:$0xff]
      %v6368 = vld [vmem:[#allocation3 + $0x70] sm:$0xff]
      %v6369 = vld [vmem:[#allocation3 + $0x78] sm:$0xff]
      %v6370 = vld [vmem:[#allocation3 + $0x80] sm:$0xff]
      %v6371 = vld [vmem:[#allocation3 + $0x88] sm:$0xff]
      %v6372 = vld [vmem:[#allocation3 + $0x90] sm:$0xff]
      %v6373 = vld [vmem:[#allocation3 + $0x98] sm:$0xff]
      %v6374 = vld [vmem:[#allocation3 + $0xa0] sm:$0xff]
      %v6375 = vld [vmem:[#allocation3 + $0xa8] sm:$0xff]
      %v6376 = vld [vmem:[#allocation3 + $0xb0] sm:$0xff]
      %v6377 = vld [vmem:[#allocation3 + $0xb8] sm:$0xff]
      %v6378 = vld [vmem:[#allocation3 + $0xc0] sm:$0xff]
      %v6379 = vld [vmem:[#allocation3 + $0xc8] sm:$0xff]
      %v6380 = vld [vmem:[#allocation3 + $0xd0] sm:$0xff]
      %v6381 = vld [vmem:[#allocation3 + $0xd8] sm:$0xff]
      %v6382 = vld [vmem:[#allocation3 + $0xe0] sm:$0xff]
      %v6383 = vld [vmem:[#allocation3 + $0xe8] sm:$0xff]
      %v6384 = vld [vmem:[#allocation3 + $0xf0] sm:$0xff]
      %v6385 = vld [vmem:[#allocation3 + $0xf8] sm:$0xff]
      %s6386 = scalar_lea.vmem [#allocation2], 192
      %v6387 = vld [vmem:[%s6386] sm:$0xff]
      %v6388 = vld [vmem:[%s6386 + $0x10] sm:$0xff]
      %v6389 = vld [vmem:[%s6386 + $0x30] sm:$0xff]
      %v6390 = vld [vmem:[%s6386 + $0x40] sm:$0xff]
      %v6391 = vld [vmem:[%s6386 + $0x60] sm:$0xff]
      %v6392 = vld [vmem:[%s6386 + $0x70] sm:$0xff]
      %v6393 = vld [vmem:[%s6386 + $0x90] sm:$0xff]
      %v6394 = vld [vmem:[%s6386 + $0xa0] sm:$0xff]
      %v6395 = vld [vmem:[%s6386 + $0xc0] sm:$0xff]
      %v6396 = vld [vmem:[%s6386 + $0xd0] sm:$0xff]
      %v6397 = vld [vmem:[%s6386 + $0xf0] sm:$0xff]
      %v6398 = vld [vmem:[%s6386 + $0x100] sm:$0xff]
      %v6399 = vld [vmem:[%s6386 + $0x120] sm:$0xff]
      %v6400 = vld [vmem:[%s6386 + $0x130] sm:$0xff]
      %v6401 = vld [vmem:[%s6386 + $0x150] sm:$0xff]
      %v6402 = vld [vmem:[%s6386 + $0x160] sm:$0xff]
      %v6403 = vld [vmem:[%s6386 + $0x180] sm:$0xff]
      %v6404 = vld [vmem:[%s6386 + $0x190] sm:$0xff]
      %v6405 = vld [vmem:[%s6386 + $0x1b0] sm:$0xff]
      %v6406 = vld [vmem:[%s6386 + $0x1c0] sm:$0xff]
      %v6407 = vld [vmem:[%s6386 + $0x1e0] sm:$0xff]
      %v6408 = vld [vmem:[%s6386 + $0x1f0] sm:$0xff]
      %v6409 = vld [vmem:[%s6386 + $0x210] sm:$0xff]
      %v6410 = vld [vmem:[%s6386 + $0x220] sm:$0xff]
      %v6411 = vld [vmem:[%s6386 + $0x240] sm:$0xff]
      %v6412 = vld [vmem:[%s6386 + $0x250] sm:$0xff]
      %v6413 = vld [vmem:[%s6386 + $0x270] sm:$0xff]
      %v6414 = vld [vmem:[%s6386 + $0x280] sm:$0xff]
      %v6415 = vld [vmem:[%s6386 + $0x2a0] sm:$0xff]
      %v6416 = vld [vmem:[%s6386 + $0x2b0] sm:$0xff]
      %v6417 = vld [vmem:[%s6386 + $0x2d0] sm:$0xff]
      %v6418 = vld [vmem:[%s6386 + $0x2e0] sm:$0xff]
      %6451 = vrot.lane.b32.xlu0 %v6387, 8
      %v6452 = vpop.permute.xlu0 %6451
      %6453 = vrot.lane.b32.xlu0 %v6388, 8
      %v6454 = vpop.permute.xlu0 %6453
      %6455 = vrot.lane.b32.xlu0 %v6389, 8
      %v6456 = vpop.permute.xlu0 %6455
      %6457 = vrot.lane.b32.xlu0 %v6390, 8
      %v6458 = vpop.permute.xlu0 %6457
      %6459 = vrot.lane.b32.xlu0 %v6391, 8
      %v6460 = vpop.permute.xlu0 %6459
      %6461 = vrot.lane.b32.xlu0 %v6392, 8
      %v6462 = vpop.permute.xlu0 %6461
      %6463 = vrot.lane.b32.xlu0 %v6393, 8
      %v6464 = vpop.permute.xlu0 %6463
      %6465 = vrot.lane.b32.xlu0 %v6394, 8
      %v6466 = vpop.permute.xlu0 %6465
      %6467 = vrot.lane.b32.xlu0 %v6395, 8
      %v6468 = vpop.permute.xlu0 %6467
      %6469 = vrot.lane.b32.xlu0 %v6396, 8
      %v6470 = vpop.permute.xlu0 %6469
      %6471 = vrot.lane.b32.xlu0 %v6397, 8
      %v6472 = vpop.permute.xlu0 %6471
      %6473 = vrot.lane.b32.xlu0 %v6398, 8
      %v6474 = vpop.permute.xlu0 %6473
      %6475 = vrot.lane.b32.xlu0 %v6399, 8
      %v6476 = vpop.permute.xlu0 %6475
      %6477 = vrot.lane.b32.xlu0 %v6400, 8
      %v6478 = vpop.permute.xlu0 %6477
      %6479 = vrot.lane.b32.xlu0 %v6401, 8
      %v6480 = vpop.permute.xlu0 %6479
      %6481 = vrot.lane.b32.xlu0 %v6402, 8
      %v6482 = vpop.permute.xlu0 %6481
      %6483 = vrot.lane.b32.xlu0 %v6403, 8
      %v6484 = vpop.permute.xlu0 %6483
      %6485 = vrot.lane.b32.xlu0 %v6404, 8
      %v6486 = vpop.permute.xlu0 %6485
      %6487 = vrot.lane.b32.xlu0 %v6405, 8
      %v6488 = vpop.permute.xlu0 %6487
      %6489 = vrot.lane.b32.xlu0 %v6406, 8
      %v6490 = vpop.permute.xlu0 %6489
      %6491 = vrot.lane.b32.xlu0 %v6407, 8
      %v6492 = vpop.permute.xlu0 %6491
      %6493 = vrot.lane.b32.xlu0 %v6408, 8
      %v6494 = vpop.permute.xlu0 %6493
      %6495 = vrot.lane.b32.xlu0 %v6409, 8
      %v6496 = vpop.permute.xlu0 %6495
      %6497 = vrot.lane.b32.xlu0 %v6410, 8
      %v6498 = vpop.permute.xlu0 %6497
      %6499 = vrot.lane.b32.xlu0 %v6411, 8
      %v6500 = vpop.permute.xlu0 %6499
      %6501 = vrot.lane.b32.xlu0 %v6412, 8
      %v6502 = vpop.permute.xlu0 %6501
      %6503 = vrot.lane.b32.xlu0 %v6413, 8
      %v6504 = vpop.permute.xlu0 %6503
      %6505 = vrot.lane.b32.xlu0 %v6414, 8
      %v6506 = vpop.permute.xlu0 %6505
      %6507 = vrot.lane.b32.xlu0 %v6415, 8
      %v6508 = vpop.permute.xlu0 %6507
      %6509 = vrot.lane.b32.xlu0 %v6416, 8
      %v6510 = vpop.permute.xlu0 %6509
      %6511 = vrot.lane.b32.xlu0 %v6417, 8
      %v6512 = vpop.permute.xlu0 %6511
      %6513 = vrot.lane.b32.xlu0 %v6418, 8
      %v6514 = vpop.permute.xlu0 %6513
      %v6547 = vadd.f32 %v6354, %v6452
      %v6548 = vadd.f32 %v6355, %v6454
      %v6549 = vadd.f32 %v6356, %v6456
      %v6550 = vadd.f32 %v6357, %v6458
      %v6551 = vadd.f32 %v6358, %v6460
      %v6552 = vadd.f32 %v6359, %v6462
      %v6553 = vadd.f32 %v6360, %v6464
      %v6554 = vadd.f32 %v6361, %v6466
      %v6555 = vadd.f32 %v6362, %v6468
      %v6556 = vadd.f32 %v6363, %v6470
      %v6557 = vadd.f32 %v6364, %v6472
      %v6558 = vadd.f32 %v6365, %v6474
      %v6559 = vadd.f32 %v6366, %v6476
      %v6560 = vadd.f32 %v6367, %v6478
      %v6561 = vadd.f32 %v6368, %v6480
      %v6562 = vadd.f32 %v6369, %v6482
      %v6563 = vadd.f32 %v6370, %v6484
      %v6564 = vadd.f32 %v6371, %v6486
      %v6565 = vadd.f32 %v6372, %v6488
      %v6566 = vadd.f32 %v6373, %v6490
      %v6567 = vadd.f32 %v6374, %v6492
      %v6568 = vadd.f32 %v6375, %v6494
      %v6569 = vadd.f32 %v6376, %v6496
      %v6570 = vadd.f32 %v6377, %v6498
      %v6571 = vadd.f32 %v6378, %v6500
      %v6572 = vadd.f32 %v6379, %v6502
      %v6573 = vadd.f32 %v6380, %v6504
      %v6574 = vadd.f32 %v6381, %v6506
      %v6575 = vadd.f32 %v6382, %v6508
      %v6576 = vadd.f32 %v6383, %v6510
      %v6577 = vadd.f32 %v6384, %v6512
      %v6578 = vadd.f32 %v6385, %v6514
      %6579 = vst.msk [vmem:[#allocation3] sm:$0xff] %vm1371, %v6547
      %6580 = vst.msk [vmem:[#allocation3 + $0x8] sm:$0xff] %vm1371, %v6548
      %6581 = vst.msk [vmem:[#allocation3 + $0x10] sm:$0xff] %vm1371, %v6549
      %6582 = vst.msk [vmem:[#allocation3 + $0x18] sm:$0xff] %vm1371, %v6550
      %6583 = vst.msk [vmem:[#allocation3 + $0x20] sm:$0xff] %vm1371, %v6551
      %6584 = vst.msk [vmem:[#allocation3 + $0x28] sm:$0xff] %vm1371, %v6552
      %6585 = vst.msk [vmem:[#allocation3 + $0x30] sm:$0xff] %vm1371, %v6553
      %6586 = vst.msk [vmem:[#allocation3 + $0x38] sm:$0xff] %vm1371, %v6554
      %6587 = vst.msk [vmem:[#allocation3 + $0x40] sm:$0xff] %vm1371, %v6555
      %6588 = vst.msk [vmem:[#allocation3 + $0x48] sm:$0xff] %vm1371, %v6556
      %6589 = vst.msk [vmem:[#allocation3 + $0x50] sm:$0xff] %vm1371, %v6557
      %6590 = vst.msk [vmem:[#allocation3 + $0x58] sm:$0xff] %vm1371, %v6558
      %6591 = vst.msk [vmem:[#allocation3 + $0x60] sm:$0xff] %vm1371, %v6559
      %6592 = vst.msk [vmem:[#allocation3 + $0x68] sm:$0xff] %vm1371, %v6560
      %6593 = vst.msk [vmem:[#allocation3 + $0x70] sm:$0xff] %vm1371, %v6561
      %6594 = vst.msk [vmem:[#allocation3 + $0x78] sm:$0xff] %vm1371, %v6562
      %6595 = vst.msk [vmem:[#allocation3 + $0x80] sm:$0xff] %vm1371, %v6563
      %6596 = vst.msk [vmem:[#allocation3 + $0x88] sm:$0xff] %vm1371, %v6564
      %6597 = vst.msk [vmem:[#allocation3 + $0x90] sm:$0xff] %vm1371, %v6565
      %6598 = vst.msk [vmem:[#allocation3 + $0x98] sm:$0xff] %vm1371, %v6566
      %6599 = vst.msk [vmem:[#allocation3 + $0xa0] sm:$0xff] %vm1371, %v6567
      %6600 = vst.msk [vmem:[#allocation3 + $0xa8] sm:$0xff] %vm1371, %v6568
      %6601 = vst.msk [vmem:[#allocation3 + $0xb0] sm:$0xff] %vm1371, %v6569
      %6602 = vst.msk [vmem:[#allocation3 + $0xb8] sm:$0xff] %vm1371, %v6570
      %6603 = vst.msk [vmem:[#allocation3 + $0xc0] sm:$0xff] %vm1371, %v6571
      %6604 = vst.msk [vmem:[#allocation3 + $0xc8] sm:$0xff] %vm1371, %v6572
      %6605 = vst.msk [vmem:[#allocation3 + $0xd0] sm:$0xff] %vm1371, %v6573
      %6606 = vst.msk [vmem:[#allocation3 + $0xd8] sm:$0xff] %vm1371, %v6574
      %6607 = vst.msk [vmem:[#allocation3 + $0xe0] sm:$0xff] %vm1371, %v6575
      %6608 = vst.msk [vmem:[#allocation3 + $0xe8] sm:$0xff] %vm1371, %v6576
      %6609 = vst.msk [vmem:[#allocation3 + $0xf0] sm:$0xff] %vm1371, %v6577
      %6610 = vst.msk [vmem:[#allocation3 + $0xf8] sm:$0xff] %vm1371, %v6578
      %v6611 = vld [vmem:[#allocation3] sm:$0xff]
      %v6612 = vld [vmem:[#allocation3 + $0x8] sm:$0xff]
      %v6613 = vld [vmem:[#allocation3 + $0x10] sm:$0xff]
      %v6614 = vld [vmem:[#allocation3 + $0x18] sm:$0xff]
      %v6615 = vld [vmem:[#allocation3 + $0x20] sm:$0xff]
      %v6616 = vld [vmem:[#allocation3 + $0x28] sm:$0xff]
      %v6617 = vld [vmem:[#allocation3 + $0x30] sm:$0xff]
      %v6618 = vld [vmem:[#allocation3 + $0x38] sm:$0xff]
      %v6619 = vld [vmem:[#allocation3 + $0x40] sm:$0xff]
      %v6620 = vld [vmem:[#allocation3 + $0x48] sm:$0xff]
      %v6621 = vld [vmem:[#allocation3 + $0x50] sm:$0xff]
      %v6622 = vld [vmem:[#allocation3 + $0x58] sm:$0xff]
      %v6623 = vld [vmem:[#allocation3 + $0x60] sm:$0xff]
      %v6624 = vld [vmem:[#allocation3 + $0x68] sm:$0xff]
      %v6625 = vld [vmem:[#allocation3 + $0x70] sm:$0xff]
      %v6626 = vld [vmem:[#allocation3 + $0x78] sm:$0xff]
      %v6627 = vld [vmem:[#allocation3 + $0x80] sm:$0xff]
      %v6628 = vld [vmem:[#allocation3 + $0x88] sm:$0xff]
      %v6629 = vld [vmem:[#allocation3 + $0x90] sm:$0xff]
      %v6630 = vld [vmem:[#allocation3 + $0x98] sm:$0xff]
      %v6631 = vld [vmem:[#allocation3 + $0xa0] sm:$0xff]
      %v6632 = vld [vmem:[#allocation3 + $0xa8] sm:$0xff]
      %v6633 = vld [vmem:[#allocation3 + $0xb0] sm:$0xff]
      %v6634 = vld [vmem:[#allocation3 + $0xb8] sm:$0xff]
      %v6635 = vld [vmem:[#allocation3 + $0xc0] sm:$0xff]
      %v6636 = vld [vmem:[#allocation3 + $0xc8] sm:$0xff]
      %v6637 = vld [vmem:[#allocation3 + $0xd0] sm:$0xff]
      %v6638 = vld [vmem:[#allocation3 + $0xd8] sm:$0xff]
      %v6639 = vld [vmem:[#allocation3 + $0xe0] sm:$0xff]
      %v6640 = vld [vmem:[#allocation3 + $0xe8] sm:$0xff]
      %v6641 = vld [vmem:[#allocation3 + $0xf0] sm:$0xff]
      %v6642 = vld [vmem:[#allocation3 + $0xf8] sm:$0xff]
      %v6643 = vld [vmem:[%s6386 + $0x8] sm:$0xfc]
      %v6644 = vld [vmem:[%s6386 + $0x18] sm:$0xff]
      %v6645 = vld [vmem:[%s6386 + $0x28] sm:$0x3]
      %v6646 = vld [vmem:[%s6386 + $0x38] sm:$0xfc]
      %v6647 = vld [vmem:[%s6386 + $0x48] sm:$0xff]
      %v6648 = vld [vmem:[%s6386 + $0x58] sm:$0x3]
      %v6649 = vld [vmem:[%s6386 + $0x68] sm:$0xfc]
      %v6650 = vld [vmem:[%s6386 + $0x78] sm:$0xff]
      %v6651 = vld [vmem:[%s6386 + $0x88] sm:$0x3]
      %v6652 = vld [vmem:[%s6386 + $0x98] sm:$0xfc]
      %v6653 = vld [vmem:[%s6386 + $0xa8] sm:$0xff]
      %v6654 = vld [vmem:[%s6386 + $0xb8] sm:$0x3]
      %v6655 = vld [vmem:[%s6386 + $0xc8] sm:$0xfc]
      %v6656 = vld [vmem:[%s6386 + $0xd8] sm:$0xff]
      %v6657 = vld [vmem:[%s6386 + $0xe8] sm:$0x3]
      %v6658 = vld [vmem:[%s6386 + $0xf8] sm:$0xfc]
      %v6659 = vld [vmem:[%s6386 + $0x108] sm:$0xff]
      %v6660 = vld [vmem:[%s6386 + $0x118] sm:$0x3]
      %v6661 = vld [vmem:[%s6386 + $0x128] sm:$0xfc]
      %v6662 = vld [vmem:[%s6386 + $0x138] sm:$0xff]
      %v6663 = vld [vmem:[%s6386 + $0x148] sm:$0x3]
      %v6664 = vld [vmem:[%s6386 + $0x158] sm:$0xfc]
      %v6665 = vld [vmem:[%s6386 + $0x168] sm:$0xff]
      %v6666 = vld [vmem:[%s6386 + $0x178] sm:$0x3]
      %v6667 = vld [vmem:[%s6386 + $0x188] sm:$0xfc]
      %v6668 = vld [vmem:[%s6386 + $0x198] sm:$0xff]
      %v6669 = vld [vmem:[%s6386 + $0x1a8] sm:$0x3]
      %v6670 = vld [vmem:[%s6386 + $0x1b8] sm:$0xfc]
      %v6671 = vld [vmem:[%s6386 + $0x1c8] sm:$0xff]
      %v6672 = vld [vmem:[%s6386 + $0x1d8] sm:$0x3]
      %v6673 = vld [vmem:[%s6386 + $0x1e8] sm:$0xfc]
      %v6674 = vld [vmem:[%s6386 + $0x1f8] sm:$0xff]
      %v6675 = vld [vmem:[%s6386 + $0x208] sm:$0x3]
      %v6676 = vld [vmem:[%s6386 + $0x218] sm:$0xfc]
      %v6677 = vld [vmem:[%s6386 + $0x228] sm:$0xff]
      %v6678 = vld [vmem:[%s6386 + $0x238] sm:$0x3]
      %v6679 = vld [vmem:[%s6386 + $0x248] sm:$0xfc]
      %v6680 = vld [vmem:[%s6386 + $0x258] sm:$0xff]
      %v6681 = vld [vmem:[%s6386 + $0x268] sm:$0x3]
      %v6682 = vld [vmem:[%s6386 + $0x278] sm:$0xfc]
      %v6683 = vld [vmem:[%s6386 + $0x288] sm:$0xff]
      %v6684 = vld [vmem:[%s6386 + $0x298] sm:$0x3]
      %v6685 = vld [vmem:[%s6386 + $0x2a8] sm:$0xfc]
      %v6686 = vld [vmem:[%s6386 + $0x2b8] sm:$0xff]
      %v6687 = vld [vmem:[%s6386 + $0x2c8] sm:$0x3]
      %v6688 = vld [vmem:[%s6386 + $0x2d8] sm:$0xfc]
      %v6689 = vld [vmem:[%s6386 + $0x2e8] sm:$0xff]
      %v6690 = vld [vmem:[%s6386 + $0x2f8] sm:$0x3]
      %v6739 = vrot.slane %v6643, 2
      %v6740 = vrot.slane %v6644, 2
      %v6741 = vsel %vm1548, %v6739, %v6740
      %v6742 = vrot.slane %v6645, 2
      %v6743 = vsel %vm1548, %v6740, %v6742
      %v6744 = vrot.slane %v6646, 2
      %v6745 = vrot.slane %v6647, 2
      %v6746 = vsel %vm1548, %v6744, %v6745
      %v6747 = vrot.slane %v6648, 2
      %v6748 = vsel %vm1548, %v6745, %v6747
      %v6749 = vrot.slane %v6649, 2
      %v6750 = vrot.slane %v6650, 2
      %v6751 = vsel %vm1548, %v6749, %v6750
      %v6752 = vrot.slane %v6651, 2
      %v6753 = vsel %vm1548, %v6750, %v6752
      %v6754 = vrot.slane %v6652, 2
      %v6755 = vrot.slane %v6653, 2
      %v6756 = vsel %vm1548, %v6754, %v6755
      %v6757 = vrot.slane %v6654, 2
      %v6758 = vsel %vm1548, %v6755, %v6757
      %v6759 = vrot.slane %v6655, 2
      %v6760 = vrot.slane %v6656, 2
      %v6761 = vsel %vm1548, %v6759, %v6760
      %v6762 = vrot.slane %v6657, 2
      %v6763 = vsel %vm1548, %v6760, %v6762
      %v6764 = vrot.slane %v6658, 2
      %v6765 = vrot.slane %v6659, 2
      %v6766 = vsel %vm1548, %v6764, %v6765
      %v6767 = vrot.slane %v6660, 2
      %v6768 = vsel %vm1548, %v6765, %v6767
      %v6769 = vrot.slane %v6661, 2
      %v6770 = vrot.slane %v6662, 2
      %v6771 = vsel %vm1548, %v6769, %v6770
      %v6772 = vrot.slane %v6663, 2
      %v6773 = vsel %vm1548, %v6770, %v6772
      %v6774 = vrot.slane %v6664, 2
      %v6775 = vrot.slane %v6665, 2
      %v6776 = vsel %vm1548, %v6774, %v6775
      %v6777 = vrot.slane %v6666, 2
      %v6778 = vsel %vm1548, %v6775, %v6777
      %v6779 = vrot.slane %v6667, 2
      %v6780 = vrot.slane %v6668, 2
      %v6781 = vsel %vm1548, %v6779, %v6780
      %v6782 = vrot.slane %v6669, 2
      %v6783 = vsel %vm1548, %v6780, %v6782
      %v6784 = vrot.slane %v6670, 2
      %v6785 = vrot.slane %v6671, 2
      %v6786 = vsel %vm1548, %v6784, %v6785
      %v6787 = vrot.slane %v6672, 2
      %v6788 = vsel %vm1548, %v6785, %v6787
      %v6789 = vrot.slane %v6673, 2
      %v6790 = vrot.slane %v6674, 2
      %v6791 = vsel %vm1548, %v6789, %v6790
      %v6792 = vrot.slane %v6675, 2
      %v6793 = vsel %vm1548, %v6790, %v6792
      %v6794 = vrot.slane %v6676, 2
      %v6795 = vrot.slane %v6677, 2
      %v6796 = vsel %vm1548, %v6794, %v6795
      %v6797 = vrot.slane %v6678, 2
      %v6798 = vsel %vm1548, %v6795, %v6797
      %v6799 = vrot.slane %v6679, 2
      %v6800 = vrot.slane %v6680, 2
      %v6801 = vsel %vm1548, %v6799, %v6800
      %v6802 = vrot.slane %v6681, 2
      %v6803 = vsel %vm1548, %v6800, %v6802
      %v6804 = vrot.slane %v6682, 2
      %v6805 = vrot.slane %v6683, 2
      %v6806 = vsel %vm1548, %v6804, %v6805
      %v6807 = vrot.slane %v6684, 2
      %v6808 = vsel %vm1548, %v6805, %v6807
      %v6809 = vrot.slane %v6685, 2
      %v6810 = vrot.slane %v6686, 2
      %v6811 = vsel %vm1548, %v6809, %v6810
      %v6812 = vrot.slane %v6687, 2
      %v6813 = vsel %vm1548, %v6810, %v6812
      %v6814 = vrot.slane %v6688, 2
      %v6815 = vrot.slane %v6689, 2
      %v6816 = vsel %vm1548, %v6814, %v6815
      %v6817 = vrot.slane %v6690, 2
      %v6818 = vsel %vm1548, %v6815, %v6817
      %v6851 = vadd.f32 %v6611, %v6741
      %v6852 = vadd.f32 %v6612, %v6743
      %v6853 = vadd.f32 %v6613, %v6746
      %v6854 = vadd.f32 %v6614, %v6748
      %v6855 = vadd.f32 %v6615, %v6751
      %v6856 = vadd.f32 %v6616, %v6753
      %v6857 = vadd.f32 %v6617, %v6756
      %v6858 = vadd.f32 %v6618, %v6758
      %v6859 = vadd.f32 %v6619, %v6761
      %v6860 = vadd.f32 %v6620, %v6763
      %v6861 = vadd.f32 %v6621, %v6766
      %v6862 = vadd.f32 %v6622, %v6768
      %v6863 = vadd.f32 %v6623, %v6771
      %v6864 = vadd.f32 %v6624, %v6773
      %v6865 = vadd.f32 %v6625, %v6776
      %v6866 = vadd.f32 %v6626, %v6778
      %v6867 = vadd.f32 %v6627, %v6781
      %v6868 = vadd.f32 %v6628, %v6783
      %v6869 = vadd.f32 %v6629, %v6786
      %v6870 = vadd.f32 %v6630, %v6788
      %v6871 = vadd.f32 %v6631, %v6791
      %v6872 = vadd.f32 %v6632, %v6793
      %v6873 = vadd.f32 %v6633, %v6796
      %v6874 = vadd.f32 %v6634, %v6798
      %v6875 = vadd.f32 %v6635, %v6801
      %v6876 = vadd.f32 %v6636, %v6803
      %v6877 = vadd.f32 %v6637, %v6806
      %v6878 = vadd.f32 %v6638, %v6808
      %v6879 = vadd.f32 %v6639, %v6811
      %v6880 = vadd.f32 %v6640, %v6813
      %v6881 = vadd.f32 %v6641, %v6816
      %v6882 = vadd.f32 %v6642, %v6818
      %6883 = vst.msk [vmem:[#allocation3] sm:$0xff] %vm1371, %v6851
      %6884 = vst.msk [vmem:[#allocation3 + $0x8] sm:$0xff] %vm1371, %v6852
      %6885 = vst.msk [vmem:[#allocation3 + $0x10] sm:$0xff] %vm1371, %v6853
      %6886 = vst.msk [vmem:[#allocation3 + $0x18] sm:$0xff] %vm1371, %v6854
      %6887 = vst.msk [vmem:[#allocation3 + $0x20] sm:$0xff] %vm1371, %v6855
      %6888 = vst.msk [vmem:[#allocation3 + $0x28] sm:$0xff] %vm1371, %v6856
      %6889 = vst.msk [vmem:[#allocation3 + $0x30] sm:$0xff] %vm1371, %v6857
      %6890 = vst.msk [vmem:[#allocation3 + $0x38] sm:$0xff] %vm1371, %v6858
      %6891 = vst.msk [vmem:[#allocation3 + $0x40] sm:$0xff] %vm1371, %v6859
      %6892 = vst.msk [vmem:[#allocation3 + $0x48] sm:$0xff] %vm1371, %v6860
      %6893 = vst.msk [vmem:[#allocation3 + $0x50] sm:$0xff] %vm1371, %v6861
      %6894 = vst.msk [vmem:[#allocation3 + $0x58] sm:$0xff] %vm1371, %v6862
      %6895 = vst.msk [vmem:[#allocation3 + $0x60] sm:$0xff] %vm1371, %v6863
      %6896 = vst.msk [vmem:[#allocation3 + $0x68] sm:$0xff] %vm1371, %v6864
      %6897 = vst.msk [vmem:[#allocation3 + $0x70] sm:$0xff] %vm1371, %v6865
      %6898 = vst.msk [vmem:[#allocation3 + $0x78] sm:$0xff] %vm1371, %v6866
      %6899 = vst.msk [vmem:[#allocation3 + $0x80] sm:$0xff] %vm1371, %v6867
      %6900 = vst.msk [vmem:[#allocation3 + $0x88] sm:$0xff] %vm1371, %v6868
      %6901 = vst.msk [vmem:[#allocation3 + $0x90] sm:$0xff] %vm1371, %v6869
      %6902 = vst.msk [vmem:[#allocation3 + $0x98] sm:$0xff] %vm1371, %v6870
      %6903 = vst.msk [vmem:[#allocation3 + $0xa0] sm:$0xff] %vm1371, %v6871
      %6904 = vst.msk [vmem:[#allocation3 + $0xa8] sm:$0xff] %vm1371, %v6872
      %6905 = vst.msk [vmem:[#allocation3 + $0xb0] sm:$0xff] %vm1371, %v6873
      %6906 = vst.msk [vmem:[#allocation3 + $0xb8] sm:$0xff] %vm1371, %v6874
      %6907 = vst.msk [vmem:[#allocation3 + $0xc0] sm:$0xff] %vm1371, %v6875
      %6908 = vst.msk [vmem:[#allocation3 + $0xc8] sm:$0xff] %vm1371, %v6876
      %6909 = vst.msk [vmem:[#allocation3 + $0xd0] sm:$0xff] %vm1371, %v6877
      %6910 = vst.msk [vmem:[#allocation3 + $0xd8] sm:$0xff] %vm1371, %v6878
      %6911 = vst.msk [vmem:[#allocation3 + $0xe0] sm:$0xff] %vm1371, %v6879
      %6912 = vst.msk [vmem:[#allocation3 + $0xe8] sm:$0xff] %vm1371, %v6880
      %6913 = vst.msk [vmem:[#allocation3 + $0xf0] sm:$0xff] %vm1371, %v6881
      %6914 = vst.msk [vmem:[#allocation3 + $0xf8] sm:$0xff] %vm1371, %v6882
      %v6915 = vld [vmem:[#allocation3] sm:$0xff]
      %v6916 = vld [vmem:[#allocation3 + $0x8] sm:$0xff]
      %v6917 = vld [vmem:[#allocation3 + $0x10] sm:$0xff]
      %v6918 = vld [vmem:[#allocation3 + $0x18] sm:$0xff]
      %v6919 = vld [vmem:[#allocation3 + $0x20] sm:$0xff]
      %v6920 = vld [vmem:[#allocation3 + $0x28] sm:$0xff]
      %v6921 = vld [vmem:[#allocation3 + $0x30] sm:$0xff]
      %v6922 = vld [vmem:[#allocation3 + $0x38] sm:$0xff]
      %v6923 = vld [vmem:[#allocation3 + $0x40] sm:$0xff]
      %v6924 = vld [vmem:[#allocation3 + $0x48] sm:$0xff]
      %v6925 = vld [vmem:[#allocation3 + $0x50] sm:$0xff]
      %v6926 = vld [vmem:[#allocation3 + $0x58] sm:$0xff]
      %v6927 = vld [vmem:[#allocation3 + $0x60] sm:$0xff]
      %v6928 = vld [vmem:[#allocation3 + $0x68] sm:$0xff]
      %v6929 = vld [vmem:[#allocation3 + $0x70] sm:$0xff]
      %v6930 = vld [vmem:[#allocation3 + $0x78] sm:$0xff]
      %v6931 = vld [vmem:[#allocation3 + $0x80] sm:$0xff]
      %v6932 = vld [vmem:[#allocation3 + $0x88] sm:$0xff]
      %v6933 = vld [vmem:[#allocation3 + $0x90] sm:$0xff]
      %v6934 = vld [vmem:[#allocation3 + $0x98] sm:$0xff]
      %v6935 = vld [vmem:[#allocation3 + $0xa0] sm:$0xff]
      %v6936 = vld [vmem:[#allocation3 + $0xa8] sm:$0xff]
      %v6937 = vld [vmem:[#allocation3 + $0xb0] sm:$0xff]
      %v6938 = vld [vmem:[#allocation3 + $0xb8] sm:$0xff]
      %v6939 = vld [vmem:[#allocation3 + $0xc0] sm:$0xff]
      %v6940 = vld [vmem:[#allocation3 + $0xc8] sm:$0xff]
      %v6941 = vld [vmem:[#allocation3 + $0xd0] sm:$0xff]
      %v6942 = vld [vmem:[#allocation3 + $0xd8] sm:$0xff]
      %v6943 = vld [vmem:[#allocation3 + $0xe0] sm:$0xff]
      %v6944 = vld [vmem:[#allocation3 + $0xe8] sm:$0xff]
      %v6945 = vld [vmem:[#allocation3 + $0xf0] sm:$0xff]
      %v6946 = vld [vmem:[#allocation3 + $0xf8] sm:$0xff]
      %v6947 = vld [vmem:[%s6386 + $0x8] sm:$0xf0]
      %v6948 = vld [vmem:[%s6386 + $0x18] sm:$0xff]
      %v6949 = vld [vmem:[%s6386 + $0x28] sm:$0xf]
      %v6950 = vld [vmem:[%s6386 + $0x38] sm:$0xf0]
      %v6951 = vld [vmem:[%s6386 + $0x48] sm:$0xff]
      %v6952 = vld [vmem:[%s6386 + $0x58] sm:$0xf]
      %v6953 = vld [vmem:[%s6386 + $0x68] sm:$0xf0]
      %v6954 = vld [vmem:[%s6386 + $0x78] sm:$0xff]
      %v6955 = vld [vmem:[%s6386 + $0x88] sm:$0xf]
      %v6956 = vld [vmem:[%s6386 + $0x98] sm:$0xf0]
      %v6957 = vld [vmem:[%s6386 + $0xa8] sm:$0xff]
      %v6958 = vld [vmem:[%s6386 + $0xb8] sm:$0xf]
      %v6959 = vld [vmem:[%s6386 + $0xc8] sm:$0xf0]
      %v6960 = vld [vmem:[%s6386 + $0xd8] sm:$0xff]
      %v6961 = vld [vmem:[%s6386 + $0xe8] sm:$0xf]
      %v6962 = vld [vmem:[%s6386 + $0xf8] sm:$0xf0]
      %v6963 = vld [vmem:[%s6386 + $0x108] sm:$0xff]
      %v6964 = vld [vmem:[%s6386 + $0x118] sm:$0xf]
      %v6965 = vld [vmem:[%s6386 + $0x128] sm:$0xf0]
      %v6966 = vld [vmem:[%s6386 + $0x138] sm:$0xff]
      %v6967 = vld [vmem:[%s6386 + $0x148] sm:$0xf]
      %v6968 = vld [vmem:[%s6386 + $0x158] sm:$0xf0]
      %v6969 = vld [vmem:[%s6386 + $0x168] sm:$0xff]
      %v6970 = vld [vmem:[%s6386 + $0x178] sm:$0xf]
      %v6971 = vld [vmem:[%s6386 + $0x188] sm:$0xf0]
      %v6972 = vld [vmem:[%s6386 + $0x198] sm:$0xff]
      %v6973 = vld [vmem:[%s6386 + $0x1a8] sm:$0xf]
      %v6974 = vld [vmem:[%s6386 + $0x1b8] sm:$0xf0]
      %v6975 = vld [vmem:[%s6386 + $0x1c8] sm:$0xff]
      %v6976 = vld [vmem:[%s6386 + $0x1d8] sm:$0xf]
      %v6977 = vld [vmem:[%s6386 + $0x1e8] sm:$0xf0]
      %v6978 = vld [vmem:[%s6386 + $0x1f8] sm:$0xff]
      %v6979 = vld [vmem:[%s6386 + $0x208] sm:$0xf]
      %v6980 = vld [vmem:[%s6386 + $0x218] sm:$0xf0]
      %v6981 = vld [vmem:[%s6386 + $0x228] sm:$0xff]
      %v6982 = vld [vmem:[%s6386 + $0x238] sm:$0xf]
      %v6983 = vld [vmem:[%s6386 + $0x248] sm:$0xf0]
      %v6984 = vld [vmem:[%s6386 + $0x258] sm:$0xff]
      %v6985 = vld [vmem:[%s6386 + $0x268] sm:$0xf]
      %v6986 = vld [vmem:[%s6386 + $0x278] sm:$0xf0]
      %v6987 = vld [vmem:[%s6386 + $0x288] sm:$0xff]
      %v6988 = vld [vmem:[%s6386 + $0x298] sm:$0xf]
      %v6989 = vld [vmem:[%s6386 + $0x2a8] sm:$0xf0]
      %v6990 = vld [vmem:[%s6386 + $0x2b8] sm:$0xff]
      %v6991 = vld [vmem:[%s6386 + $0x2c8] sm:$0xf]
      %v6992 = vld [vmem:[%s6386 + $0x2d8] sm:$0xf0]
      %v6993 = vld [vmem:[%s6386 + $0x2e8] sm:$0xff]
      %v6994 = vld [vmem:[%s6386 + $0x2f8] sm:$0xf]
      %v7043 = vrot.slane %v6947, 4
      %v7044 = vrot.slane %v6948, 4
      %v7045 = vsel %vm5121, %v7043, %v7044
      %v7046 = vrot.slane %v6949, 4
      %v7047 = vsel %vm5121, %v7044, %v7046
      %v7048 = vrot.slane %v6950, 4
      %v7049 = vrot.slane %v6951, 4
      %v7050 = vsel %vm5121, %v7048, %v7049
      %v7051 = vrot.slane %v6952, 4
      %v7052 = vsel %vm5121, %v7049, %v7051
      %v7053 = vrot.slane %v6953, 4
      %v7054 = vrot.slane %v6954, 4
      %v7055 = vsel %vm5121, %v7053, %v7054
      %v7056 = vrot.slane %v6955, 4
      %v7057 = vsel %vm5121, %v7054, %v7056
      %v7058 = vrot.slane %v6956, 4
      %v7059 = vrot.slane %v6957, 4
      %v7060 = vsel %vm5121, %v7058, %v7059
      %v7061 = vrot.slane %v6958, 4
      %v7062 = vsel %vm5121, %v7059, %v7061
      %v7063 = vrot.slane %v6959, 4
      %v7064 = vrot.slane %v6960, 4
      %v7065 = vsel %vm5121, %v7063, %v7064
      %v7066 = vrot.slane %v6961, 4
      %v7067 = vsel %vm5121, %v7064, %v7066
      %v7068 = vrot.slane %v6962, 4
      %v7069 = vrot.slane %v6963, 4
      %v7070 = vsel %vm5121, %v7068, %v7069
      %v7071 = vrot.slane %v6964, 4
      %v7072 = vsel %vm5121, %v7069, %v7071
      %v7073 = vrot.slane %v6965, 4
      %v7074 = vrot.slane %v6966, 4
      %v7075 = vsel %vm5121, %v7073, %v7074
      %v7076 = vrot.slane %v6967, 4
      %v7077 = vsel %vm5121, %v7074, %v7076
      %v7078 = vrot.slane %v6968, 4
      %v7079 = vrot.slane %v6969, 4
      %v7080 = vsel %vm5121, %v7078, %v7079
      %v7081 = vrot.slane %v6970, 4
      %v7082 = vsel %vm5121, %v7079, %v7081
      %v7083 = vrot.slane %v6971, 4
      %v7084 = vrot.slane %v6972, 4
      %v7085 = vsel %vm5121, %v7083, %v7084
      %v7086 = vrot.slane %v6973, 4
      %v7087 = vsel %vm5121, %v7084, %v7086
      %v7088 = vrot.slane %v6974, 4
      %v7089 = vrot.slane %v6975, 4
      %v7090 = vsel %vm5121, %v7088, %v7089
      %v7091 = vrot.slane %v6976, 4
      %v7092 = vsel %vm5121, %v7089, %v7091
      %v7093 = vrot.slane %v6977, 4
      %v7094 = vrot.slane %v6978, 4
      %v7095 = vsel %vm5121, %v7093, %v7094
      %v7096 = vrot.slane %v6979, 4
      %v7097 = vsel %vm5121, %v7094, %v7096
      %v7098 = vrot.slane %v6980, 4
      %v7099 = vrot.slane %v6981, 4
      %v7100 = vsel %vm5121, %v7098, %v7099
      %v7101 = vrot.slane %v6982, 4
      %v7102 = vsel %vm5121, %v7099, %v7101
      %v7103 = vrot.slane %v6983, 4
      %v7104 = vrot.slane %v6984, 4
      %v7105 = vsel %vm5121, %v7103, %v7104
      %v7106 = vrot.slane %v6985, 4
      %v7107 = vsel %vm5121, %v7104, %v7106
      %v7108 = vrot.slane %v6986, 4
      %v7109 = vrot.slane %v6987, 4
      %v7110 = vsel %vm5121, %v7108, %v7109
      %v7111 = vrot.slane %v6988, 4
      %v7112 = vsel %vm5121, %v7109, %v7111
      %v7113 = vrot.slane %v6989, 4
      %v7114 = vrot.slane %v6990, 4
      %v7115 = vsel %vm5121, %v7113, %v7114
      %v7116 = vrot.slane %v6991, 4
      %v7117 = vsel %vm5121, %v7114, %v7116
      %v7118 = vrot.slane %v6992, 4
      %v7119 = vrot.slane %v6993, 4
      %v7120 = vsel %vm5121, %v7118, %v7119
      %v7121 = vrot.slane %v6994, 4
      %v7122 = vsel %vm5121, %v7119, %v7121
      %7123 = vrot.lane.b32.xlu0 %v7045, 120
      %v7124 = vpop.permute.xlu0 %7123
      %7125 = vrot.lane.b32.xlu0 %v7047, 120
      %v7126 = vpop.permute.xlu0 %7125
      %7127 = vrot.lane.b32.xlu0 %v7050, 120
      %v7128 = vpop.permute.xlu0 %7127
      %7129 = vrot.lane.b32.xlu0 %v7052, 120
      %v7130 = vpop.permute.xlu0 %7129
      %7131 = vrot.lane.b32.xlu0 %v7055, 120
      %v7132 = vpop.permute.xlu0 %7131
      %7133 = vrot.lane.b32.xlu0 %v7057, 120
      %v7134 = vpop.permute.xlu0 %7133
      %7135 = vrot.lane.b32.xlu0 %v7060, 120
      %v7136 = vpop.permute.xlu0 %7135
      %7137 = vrot.lane.b32.xlu0 %v7062, 120
      %v7138 = vpop.permute.xlu0 %7137
      %7139 = vrot.lane.b32.xlu0 %v7065, 120
      %v7140 = vpop.permute.xlu0 %7139
      %7141 = vrot.lane.b32.xlu0 %v7067, 120
      %v7142 = vpop.permute.xlu0 %7141
      %7143 = vrot.lane.b32.xlu0 %v7070, 120
      %v7144 = vpop.permute.xlu0 %7143
      %7145 = vrot.lane.b32.xlu0 %v7072, 120
      %v7146 = vpop.permute.xlu0 %7145
      %7147 = vrot.lane.b32.xlu0 %v7075, 120
      %v7148 = vpop.permute.xlu0 %7147
      %7149 = vrot.lane.b32.xlu0 %v7077, 120
      %v7150 = vpop.permute.xlu0 %7149
      %7151 = vrot.lane.b32.xlu0 %v7080, 120
      %v7152 = vpop.permute.xlu0 %7151
      %7153 = vrot.lane.b32.xlu0 %v7082, 120
      %v7154 = vpop.permute.xlu0 %7153
      %7155 = vrot.lane.b32.xlu0 %v7085, 120
      %v7156 = vpop.permute.xlu0 %7155
      %7157 = vrot.lane.b32.xlu0 %v7087, 120
      %v7158 = vpop.permute.xlu0 %7157
      %7159 = vrot.lane.b32.xlu0 %v7090, 120
      %v7160 = vpop.permute.xlu0 %7159
      %7161 = vrot.lane.b32.xlu0 %v7092, 120
      %v7162 = vpop.permute.xlu0 %7161
      %7163 = vrot.lane.b32.xlu0 %v7095, 120
      %v7164 = vpop.permute.xlu0 %7163
      %7165 = vrot.lane.b32.xlu0 %v7097, 120
      %v7166 = vpop.permute.xlu0 %7165
      %7167 = vrot.lane.b32.xlu0 %v7100, 120
      %v7168 = vpop.permute.xlu0 %7167
      %7169 = vrot.lane.b32.xlu0 %v7102, 120
      %v7170 = vpop.permute.xlu0 %7169
      %7171 = vrot.lane.b32.xlu0 %v7105, 120
      %v7172 = vpop.permute.xlu0 %7171
      %7173 = vrot.lane.b32.xlu0 %v7107, 120
      %v7174 = vpop.permute.xlu0 %7173
      %7175 = vrot.lane.b32.xlu0 %v7110, 120
      %v7176 = vpop.permute.xlu0 %7175
      %7177 = vrot.lane.b32.xlu0 %v7112, 120
      %v7178 = vpop.permute.xlu0 %7177
      %7179 = vrot.lane.b32.xlu0 %v7115, 120
      %v7180 = vpop.permute.xlu0 %7179
      %7181 = vrot.lane.b32.xlu0 %v7117, 120
      %v7182 = vpop.permute.xlu0 %7181
      %7183 = vrot.lane.b32.xlu0 %v7120, 120
      %v7184 = vpop.permute.xlu0 %7183
      %7185 = vrot.lane.b32.xlu0 %v7122, 120
      %v7186 = vpop.permute.xlu0 %7185
      %v7219 = vadd.f32 %v6915, %v7124
      %v7220 = vadd.f32 %v6916, %v7126
      %v7221 = vadd.f32 %v6917, %v7128
      %v7222 = vadd.f32 %v6918, %v7130
      %v7223 = vadd.f32 %v6919, %v7132
      %v7224 = vadd.f32 %v6920, %v7134
      %v7225 = vadd.f32 %v6921, %v7136
      %v7226 = vadd.f32 %v6922, %v7138
      %v7227 = vadd.f32 %v6923, %v7140
      %v7228 = vadd.f32 %v6924, %v7142
      %v7229 = vadd.f32 %v6925, %v7144
      %v7230 = vadd.f32 %v6926, %v7146
      %v7231 = vadd.f32 %v6927, %v7148
      %v7232 = vadd.f32 %v6928, %v7150
      %v7233 = vadd.f32 %v6929, %v7152
      %v7234 = vadd.f32 %v6930, %v7154
      %v7235 = vadd.f32 %v6931, %v7156
      %v7236 = vadd.f32 %v6932, %v7158
      %v7237 = vadd.f32 %v6933, %v7160
      %v7238 = vadd.f32 %v6934, %v7162
      %v7239 = vadd.f32 %v6935, %v7164
      %v7240 = vadd.f32 %v6936, %v7166
      %v7241 = vadd.f32 %v6937, %v7168
      %v7242 = vadd.f32 %v6938, %v7170
      %v7243 = vadd.f32 %v6939, %v7172
      %v7244 = vadd.f32 %v6940, %v7174
      %v7245 = vadd.f32 %v6941, %v7176
      %v7246 = vadd.f32 %v6942, %v7178
      %v7247 = vadd.f32 %v6943, %v7180
      %v7248 = vadd.f32 %v6944, %v7182
      %v7249 = vadd.f32 %v6945, %v7184
      %v7250 = vadd.f32 %v6946, %v7186
      %7251 = vst.msk [vmem:[#allocation3] sm:$0xff] %vm1371, %v7219
      %7252 = vst.msk [vmem:[#allocation3 + $0x8] sm:$0xff] %vm1371, %v7220
      %7253 = vst.msk [vmem:[#allocation3 + $0x10] sm:$0xff] %vm1371, %v7221
      %7254 = vst.msk [vmem:[#allocation3 + $0x18] sm:$0xff] %vm1371, %v7222
      %7255 = vst.msk [vmem:[#allocation3 + $0x20] sm:$0xff] %vm1371, %v7223
      %7256 = vst.msk [vmem:[#allocation3 + $0x28] sm:$0xff] %vm1371, %v7224
      %7257 = vst.msk [vmem:[#allocation3 + $0x30] sm:$0xff] %vm1371, %v7225
      %7258 = vst.msk [vmem:[#allocation3 + $0x38] sm:$0xff] %vm1371, %v7226
      %7259 = vst.msk [vmem:[#allocation3 + $0x40] sm:$0xff] %vm1371, %v7227
      %7260 = vst.msk [vmem:[#allocation3 + $0x48] sm:$0xff] %vm1371, %v7228
      %7261 = vst.msk [vmem:[#allocation3 + $0x50] sm:$0xff] %vm1371, %v7229
      %7262 = vst.msk [vmem:[#allocation3 + $0x58] sm:$0xff] %vm1371, %v7230
      %7263 = vst.msk [vmem:[#allocation3 + $0x60] sm:$0xff] %vm1371, %v7231
      %7264 = vst.msk [vmem:[#allocation3 + $0x68] sm:$0xff] %vm1371, %v7232
      %7265 = vst.msk [vmem:[#allocation3 + $0x70] sm:$0xff] %vm1371, %v7233
      %7266 = vst.msk [vmem:[#allocation3 + $0x78] sm:$0xff] %vm1371, %v7234
      %7267 = vst.msk [vmem:[#allocation3 + $0x80] sm:$0xff] %vm1371, %v7235
      %7268 = vst.msk [vmem:[#allocation3 + $0x88] sm:$0xff] %vm1371, %v7236
      %7269 = vst.msk [vmem:[#allocation3 + $0x90] sm:$0xff] %vm1371, %v7237
      %7270 = vst.msk [vmem:[#allocation3 + $0x98] sm:$0xff] %vm1371, %v7238
      %7271 = vst.msk [vmem:[#allocation3 + $0xa0] sm:$0xff] %vm1371, %v7239
      %7272 = vst.msk [vmem:[#allocation3 + $0xa8] sm:$0xff] %vm1371, %v7240
      %7273 = vst.msk [vmem:[#allocation3 + $0xb0] sm:$0xff] %vm1371, %v7241
      %7274 = vst.msk [vmem:[#allocation3 + $0xb8] sm:$0xff] %vm1371, %v7242
      %7275 = vst.msk [vmem:[#allocation3 + $0xc0] sm:$0xff] %vm1371, %v7243
      %7276 = vst.msk [vmem:[#allocation3 + $0xc8] sm:$0xff] %vm1371, %v7244
      %7277 = vst.msk [vmem:[#allocation3 + $0xd0] sm:$0xff] %vm1371, %v7245
      %7278 = vst.msk [vmem:[#allocation3 + $0xd8] sm:$0xff] %vm1371, %v7246
      %7279 = vst.msk [vmem:[#allocation3 + $0xe0] sm:$0xff] %vm1371, %v7247
      %7280 = vst.msk [vmem:[#allocation3 + $0xe8] sm:$0xff] %vm1371, %v7248
      %7281 = vst.msk [vmem:[#allocation3 + $0xf0] sm:$0xff] %vm1371, %v7249
      %7282 = vst.msk [vmem:[#allocation3 + $0xf8] sm:$0xff] %vm1371, %v7250
      %v7283 = vld [vmem:[#allocation3] sm:$0xff]
      %v7284 = vld [vmem:[#allocation3 + $0x8] sm:$0xff]
      %v7285 = vld [vmem:[#allocation3 + $0x10] sm:$0xff]
      %v7286 = vld [vmem:[#allocation3 + $0x18] sm:$0xff]
      %v7287 = vld [vmem:[#allocation3 + $0x20] sm:$0xff]
      %v7288 = vld [vmem:[#allocation3 + $0x28] sm:$0xff]
      %v7289 = vld [vmem:[#allocation3 + $0x30] sm:$0xff]
      %v7290 = vld [vmem:[#allocation3 + $0x38] sm:$0xff]
      %v7291 = vld [vmem:[#allocation3 + $0x40] sm:$0xff]
      %v7292 = vld [vmem:[#allocation3 + $0x48] sm:$0xff]
      %v7293 = vld [vmem:[#allocation3 + $0x50] sm:$0xff]
      %v7294 = vld [vmem:[#allocation3 + $0x58] sm:$0xff]
      %v7295 = vld [vmem:[#allocation3 + $0x60] sm:$0xff]
      %v7296 = vld [vmem:[#allocation3 + $0x68] sm:$0xff]
      %v7297 = vld [vmem:[#allocation3 + $0x70] sm:$0xff]
      %v7298 = vld [vmem:[#allocation3 + $0x78] sm:$0xff]
      %v7299 = vld [vmem:[#allocation3 + $0x80] sm:$0xff]
      %v7300 = vld [vmem:[#allocation3 + $0x88] sm:$0xff]
      %v7301 = vld [vmem:[#allocation3 + $0x90] sm:$0xff]
      %v7302 = vld [vmem:[#allocation3 + $0x98] sm:$0xff]
      %v7303 = vld [vmem:[#allocation3 + $0xa0] sm:$0xff]
      %v7304 = vld [vmem:[#allocation3 + $0xa8] sm:$0xff]
      %v7305 = vld [vmem:[#allocation3 + $0xb0] sm:$0xff]
      %v7306 = vld [vmem:[#allocation3 + $0xb8] sm:$0xff]
      %v7307 = vld [vmem:[#allocation3 + $0xc0] sm:$0xff]
      %v7308 = vld [vmem:[#allocation3 + $0xc8] sm:$0xff]
      %v7309 = vld [vmem:[#allocation3 + $0xd0] sm:$0xff]
      %v7310 = vld [vmem:[#allocation3 + $0xd8] sm:$0xff]
      %v7311 = vld [vmem:[#allocation3 + $0xe0] sm:$0xff]
      %v7312 = vld [vmem:[#allocation3 + $0xe8] sm:$0xff]
      %v7313 = vld [vmem:[#allocation3 + $0xf0] sm:$0xff]
      %v7314 = vld [vmem:[#allocation3 + $0xf8] sm:$0xff]
      %7315 = vst.msk [vmem:[%s170] sm:$0xff] %vm1371, %v7283
      %7316 = vst.msk [vmem:[%s170 + $0x8] sm:$0xff] %vm1371, %v7284
      %7317 = vst.msk [vmem:[%s170 + $0x10] sm:$0xff] %vm1371, %v7285
      %7318 = vst.msk [vmem:[%s170 + $0x18] sm:$0xff] %vm1371, %v7286
      %7319 = vst.msk [vmem:[%s170 + $0x20] sm:$0xff] %vm1371, %v7287
      %7320 = vst.msk [vmem:[%s170 + $0x28] sm:$0xff] %vm1371, %v7288
      %7321 = vst.msk [vmem:[%s170 + $0x30] sm:$0xff] %vm1371, %v7289
      %7322 = vst.msk [vmem:[%s170 + $0x38] sm:$0xff] %vm1371, %v7290
      %7323 = vst.msk [vmem:[%s170 + $0x40] sm:$0xff] %vm1371, %v7291
      %7324 = vst.msk [vmem:[%s170 + $0x48] sm:$0xff] %vm1371, %v7292
      %7325 = vst.msk [vmem:[%s170 + $0x50] sm:$0xff] %vm1371, %v7293
      %7326 = vst.msk [vmem:[%s170 + $0x58] sm:$0xff] %vm1371, %v7294
      %7327 = vst.msk [vmem:[%s170 + $0x60] sm:$0xff] %vm1371, %v7295
      %7328 = vst.msk [vmem:[%s170 + $0x68] sm:$0xff] %vm1371, %v7296
      %7329 = vst.msk [vmem:[%s170 + $0x70] sm:$0xff] %vm1371, %v7297
      %7330 = vst.msk [vmem:[%s170 + $0x78] sm:$0xff] %vm1371, %v7298
      %7331 = vst.msk [vmem:[%s170 + $0x80] sm:$0xff] %vm1371, %v7299
      %7332 = vst.msk [vmem:[%s170 + $0x88] sm:$0xff] %vm1371, %v7300
      %7333 = vst.msk [vmem:[%s170 + $0x90] sm:$0xff] %vm1371, %v7301
      %7334 = vst.msk [vmem:[%s170 + $0x98] sm:$0xff] %vm1371, %v7302
      %7335 = vst.msk [vmem:[%s170 + $0xa0] sm:$0xff] %vm1371, %v7303
      %7336 = vst.msk [vmem:[%s170 + $0xa8] sm:$0xff] %vm1371, %v7304
      %7337 = vst.msk [vmem:[%s170 + $0xb0] sm:$0xff] %vm1371, %v7305
      %7338 = vst.msk [vmem:[%s170 + $0xb8] sm:$0xff] %vm1371, %v7306
      %7339 = vst.msk [vmem:[%s170 + $0xc0] sm:$0xff] %vm1371, %v7307
      %7340 = vst.msk [vmem:[%s170 + $0xc8] sm:$0xff] %vm1371, %v7308
      %7341 = vst.msk [vmem:[%s170 + $0xd0] sm:$0xff] %vm1371, %v7309
      %7342 = vst.msk [vmem:[%s170 + $0xd8] sm:$0xff] %vm1371, %v7310
      %7343 = vst.msk [vmem:[%s170 + $0xe0] sm:$0xff] %vm1371, %v7311
      %7344 = vst.msk [vmem:[%s170 + $0xe8] sm:$0xff] %vm1371, %v7312
      %7345 = vst.msk [vmem:[%s170 + $0xf0] sm:$0xff] %vm1371, %v7313
      %7346 = vst.msk [vmem:[%s170 + $0xf8] sm:$0xff] %vm1371, %v7314
      %p7347 = scmp.lt.s32.totalorder %s14, 1
      %s7348 = scalar_select %p7347, %s14, 1
      %s7349 = smul.addr %s7348, 32
      %s7350 = smul.addr %s7349, 8
      %s7351 = scalar_lea.vmem %s3, %s7350
      // Predicated region
      $region33: #{tpu_custom_call.1} parent=31 // pred_check
        %p7352 = pneg %p100
      $region34: #{tpu_custom_call.1} parent=31 // pred_check_branch
        %7354 = sbr.rel (%p7352) target = $region36
      $region35: #{tpu_custom_call.1} parent=31 // pred_region
        _
      $region36: #{tpu_custom_call.1} parent=31 // pred_fallthru
        _
    $region32: #{tpu_custom_call.1} parent=5 // pred_fallthru
      _
    %p7355 = scmp.le.s32.totalorder 2, %s9
    // Predicated region
    $region37: #{tpu_custom_call.1} parent=5 // pred_check
      %p7356 = pneg %p7355
    $region38: #{tpu_custom_call.1} parent=5 // pred_check_branch
      %7358 = sbr.rel (%p7356) target = $region40
    $region39: #{tpu_custom_call.1} parent=5 // pred_region
      %s7359 = ssub.s32 %s9, 2
      // Predicated region
      $region41: #{tpu_custom_call.1} parent=39 // pred_check
        %p7360 = pneg %p106
      $region42: #{tpu_custom_call.1} parent=39 // pred_check_branch
        %7362 = sbr.rel (%p7360) target = $region44
      $region43: #{tpu_custom_call.1} parent=39 // pred_region
        %p7363 = scmp.lt.s32.totalorder %s15, 1
        %s7364 = scalar_select %p7363, %s15, 1
        %s7365 = smul.addr %s7364, 32
        %s7366 = smul.addr %s7365, 8
        %s7367 = scalar_lea.vmem %s3, %s7366
      $region44: #{tpu_custom_call.1} parent=39 // pred_fallthru
        _
    $region40: #{tpu_custom_call.1} parent=5 // pred_fallthru
      _
  $region6: #{tpu_custom_call.1} parent=0 // loop_footer
    %s13 = sadd.s32 1, %s9
  $region7: #{tpu_custom_call.1} parent=0 // loop_footer_branch
    %8 = sbr.rel target = $region3
  $region8: #{tpu_custom_call.1} parent=0 // loop_exit
    _

</llo_original>
